<compile_context>
chip_gen: v6e
topology: v6e:2x2x1
jax: 0.10.0
libtpu: 0.0.40
codegen_flags: <defaults>
</compile_context>

<pallas_src>
import math
import functools

import jax
import jax.numpy as jnp
from jax.experimental import pallas as pl
from jax.experimental.pallas import tpu as pltpu


# ---------------------------------------------------------------------------
# Fused kernel: one grid step = one batch element, the full hierarchical attn.
# ---------------------------------------------------------------------------
def _hier_attn_kernel(*refs, n_levels, n_head, d_head):
    dec_ref = refs[0]
    enc_refs = refs[1:1 + n_levels]
    wq_ref, bq_ref, wkv_ref, bkv_ref, wo_ref, bo_ref = refs[1 + n_levels:7 + n_levels]
    out_ref = refs[7 + n_levels]
    attnw_ref = refs[8 + n_levels]

    hdh = n_head * d_head
    scale = 1.0 / math.sqrt(d_head)

    dec = dec_ref[0]                                            # (Lq, Dq)

    # All Q projections (n_levels per-level attns + level_attn) in one MXU pass;
    # softmax scale folded in once here (instead of per head per level).
    qcat = (jnp.dot(dec, wq_ref[...], preferred_element_type=jnp.float32)
            + bq_ref[...]) * scale                              # (Lq, (n_levels+1)*hdh)

    def attend(qp, kp, vp):
        """Multi-head scaled-dot-product attention with heads batched."""
        lq, lk = qp.shape[0], kp.shape[0]
        qh = qp.reshape(lq, n_head, d_head)
        kh = kp.reshape(lk, n_head, d_head)
        vh = vp.reshape(lk, n_head, d_head)
        s = jnp.einsum('qhd,khd->hqk', qh, kh,
                       preferred_element_type=jnp.float32)      # (H, Lq, Lk)
        s = s - jnp.max(s, axis=-1, keepdims=True)
        e = jnp.exp(s)
        p = e * pl.reciprocal(jnp.sum(e, axis=-1, keepdims=True), approx=True)
        o = jnp.einsum('hqk,khd->qhd', p, vh,
                       preferred_element_type=jnp.float32)      # (Lq, H, Dh)
        return o.reshape(lq, hdh), p

    # Per-level cross attention.  Outputs stay VMEM/vreg resident and their
    # attention probabilities are never materialized to HBM.
    level_vals = []
    for i in range(n_levels):                                   # static unroll
        enc = enc_refs[i][0]                                    # (Lk_i, Dq)
        kvp = (jnp.dot(enc, wkv_ref[i], preferred_element_type=jnp.float32)
               + bkv_ref[i])                                    # (Lk_i, 2*hdh)
        o, _ = attend(qcat[:, i * hdh:(i + 1) * hdh],
                      kvp[:, :hdh], kvp[:, hdh:])
        level_vals.append(
            jnp.dot(o, wo_ref[i], preferred_element_type=jnp.float32)
            + bo_ref[i])                                        # (Lq, Dq)

    # torch.cat(encoder_attented, dim=1) — stays on-chip.
    enc_att = jnp.concatenate(level_vals, axis=0)               # (n_levels*Lq, Dq)

    # Level attention over the concatenated per-level values.
    kvp = (jnp.dot(enc_att, wkv_ref[n_levels], preferred_element_type=jnp.float32)
           + bkv_ref[n_levels])
    o, p = attend(qcat[:, n_levels * hdh:], kvp[:, :hdh], kvp[:, hdh:])
    out = (jnp.dot(o, wo_ref[n_levels], preferred_element_type=jnp.float32)
           + bo_ref[n_levels])

    out_ref[0] = out.astype(out_ref.dtype)
    # TODO(synk): original Attention class not shown; returned weights are the
    #             head-averaged softmax probabilities of the level attention.
    attnw_ref[0] = (jnp.sum(p, axis=0) * (1.0 / n_head)).astype(attnw_ref.dtype)


# ---------------------------------------------------------------------------
# Wrapper: pack weights once, single pallas_call for the whole forward.
# ---------------------------------------------------------------------------
def _pack_params(params):
    all_p = list(params["attns"]) + [params["level_attn"]]
    wq_cat = jnp.concatenate([p["wq"] for p in all_p], axis=1)              # (Dq, (n+1)*hdh)
    bq_cat = jnp.concatenate([p["bq"] for p in all_p], axis=1)              # (1, (n+1)*hdh)
    wkv = jnp.stack([jnp.concatenate([p["wk"], p["wv"]], axis=1)
                     for p in all_p])                                       # (n+1, Dq, 2*hdh)
    bkv = jnp.stack([jnp.concatenate([p["bk"], p["bv"]], axis=1)
                     for p in all_p])                                       # (n+1, 1, 2*hdh)
    wo = jnp.stack([p["wo"] for p in all_p])                                # (n+1, hdh, Dq)
    bo = jnp.stack([p["bo"] for p in all_p])                                # (n+1, 1, Dq)
    return wq_cat, bq_cat, wkv, bkv, wo, bo


def hierarchical_attn(dec_out, enc_compresses, params, *, n_head, d_head):
    B, Lq, Dq = dec_out.shape
    n_levels = len(enc_compresses)
    kv_lens = tuple(int(e.shape[1]) for e in enc_compresses)
    hdh = n_head * d_head
    nq = (n_levels + 1) * hdh
    Lc = n_levels * Lq

    wq_cat, bq_cat, wkv, bkv, wo, bo = _pack_params(params)

    kernel = functools.partial(_hier_attn_kernel,
                               n_levels=n_levels, n_head=n_head, d_head=d_head)

    rep2 = lambda b: (0, 0)
    rep3 = lambda b: (0, 0, 0)
    per_batch = lambda b: (b, 0, 0)

    in_specs = (
        [pl.BlockSpec((1, Lq, Dq), per_batch)]                              # dec_out
        + [pl.BlockSpec((1, L, Dq), per_batch) for L in kv_lens]            # enc levels
        + [pl.BlockSpec((Dq, nq), rep2),                                    # wq (all attns)
           pl.BlockSpec((1, nq), rep2),                                     # bq (all attns)
           pl.BlockSpec((n_levels + 1, Dq, 2 * hdh), rep3),                 # wkv stacked
           pl.BlockSpec((n_levels + 1, 1, 2 * hdh), rep3),                  # bkv stacked
           pl.BlockSpec((n_levels + 1, hdh, Dq), rep3),                     # wo stacked
           pl.BlockSpec((n_levels + 1, 1, Dq), rep3)])                      # bo stacked

    out, attnw = pl.pallas_call(
        kernel,
        out_shape=(jax.ShapeDtypeStruct((B, Lq, Dq), jnp.float32),
                   jax.ShapeDtypeStruct((B, Lq, Lc), jnp.float32)),
        grid_spec=pltpu.PrefetchScalarGridSpec(
            num_scalar_prefetch=0,
            grid=(B,),
            in_specs=in_specs,
            out_specs=[pl.BlockSpec((1, Lq, Dq), per_batch),
                       pl.BlockSpec((1, Lq, Lc), per_batch)]),
        compiler_params=pltpu.CompilerParams(
            dimension_semantics=("parallel",)),
    )(dec_out, *enc_compresses, wq_cat, bq_cat, wkv, bkv, wo, bo)
    return out, attnw


# ---------------------------------------------------------------------------
# Deterministic parameter init (synthetic weights; no checkpoint loading)
# ---------------------------------------------------------------------------
def init_attn_params(key, d_model, n_head, d_head):
    hdh = n_head * d_head
    ks = jax.random.split(key, 4)

    def lin(k, din, dout):
        w = jax.random.normal(k, (din, dout), jnp.float32) / jnp.sqrt(float(din))
        b = jnp.zeros((1, dout), jnp.float32)
        return w, b

    wq, bq = lin(ks[0], d_model, hdh)
    wk, bk = lin(ks[1], d_model, hdh)
    wv, bv = lin(ks[2], d_model, hdh)
    wo, bo = lin(ks[3], hdh, d_model)
    return dict(wq=wq, bq=bq, wk=wk, bk=bk, wv=wv, bv=bv, wo=wo, bo=bo)


def init_hierarchical_params(key, d_model, n_head, d_head, n_levels):
    keys = jax.random.split(key, n_levels + 1)
    return {
        "attns": [init_attn_params(keys[i], d_model, n_head, d_head)
                  for i in range(n_levels)],
        "level_attn": init_attn_params(keys[n_levels], d_model, n_head, d_head),
    }


if __name__ == "__main__":
    # Small shapes consistent with the module:
    #   attn_heads=4, attn_size=16 (per-head dim), query_size=32,
    #   kv_sizes=[15, 7, 3, 3] (encoder-compress sequence lengths)
    B, Lq = 2, 8
    query_size = 32
    attn_heads, attn_size = 4, 16
    kv_sizes = [15, 7, 3, 3]

    root = jax.random.PRNGKey(0)
    k_dec, k_enc, k_par = jax.random.split(root, 3)

    dec_out = jax.random.normal(k_dec, (B, Lq, query_size), jnp.float32)
    enc_keys = jax.random.split(k_enc, len(kv_sizes))
    enc_compresses = [
        jax.random.normal(ek, (B, L, query_size), jnp.float32)
        for ek, L in zip(enc_keys, kv_sizes)
    ]

    params = init_hierarchical_params(
        k_par, query_size, attn_heads, attn_size, len(kv_sizes))

    hier = jax.jit(functools.partial(hierarchical_attn,
                                     n_head=attn_heads, d_head=attn_size))
    out, weights = hier(dec_out, enc_compresses, params)

    jax.block_until_ready((out, weights))
    assert out.shape == (B, Lq, query_size)
    assert weights.shape == (B, Lq, len(kv_sizes) * Lq)
    print("KERNEL_OK")
</pallas_src>

<mosaic_0001>
module attributes {stable_mosaic.version = 11 : i64} {
  func.func @_hier_attn_kernel(%arg0: i32, %arg1: memref<1x8x32xf32, #tpu.memory_space<vmem>>, %arg2: memref<1x15x32xf32, #tpu.memory_space<vmem>>, %arg3: memref<1x7x32xf32, #tpu.memory_space<vmem>>, %arg4: memref<1x3x32xf32, #tpu.memory_space<vmem>>, %arg5: memref<1x3x32xf32, #tpu.memory_space<vmem>>, %arg6: memref<32x320xf32, #tpu.memory_space<vmem>>, %arg7: memref<1x320xf32, #tpu.memory_space<vmem>>, %arg8: memref<5x32x128xf32, #tpu.memory_space<vmem>>, %arg9: memref<5x1x128xf32, #tpu.memory_space<vmem>>, %arg10: memref<5x64x32xf32, #tpu.memory_space<vmem>>, %arg11: memref<5x1x32xf32, #tpu.memory_space<vmem>>, %arg12: memref<1x8x32xf32, #tpu.memory_space<vmem>>, %arg13: memref<1x8x32xf32, #tpu.memory_space<vmem>>) attributes {dimension_semantics = [#tpu.dimension_semantics<parallel>], iteration_bounds = array<i64: 2>, scalar_prefetch = 0 : i64, scratch_operands = 0 : i64, tpu.core_type = #tpu.core_type<tc>, window_params = [{transform_indices = @transform_0, window_bounds = array<i64: 1, 8, 32>}, {transform_indices = @transform_1, window_bounds = array<i64: 1, 15, 32>}, {transform_indices = @transform_2, window_bounds = array<i64: 1, 7, 32>}, {transform_indices = @transform_3, window_bounds = array<i64: 1, 3, 32>}, {transform_indices = @transform_4, window_bounds = array<i64: 1, 3, 32>}, {pipeline_mode = #tpu.pipeline_mode<synchronous>, transform_indices = @transform_5, window_bounds = array<i64: 32, 320>}, {pipeline_mode = #tpu.pipeline_mode<synchronous>, transform_indices = @transform_6, window_bounds = array<i64: 1, 320>}, {pipeline_mode = #tpu.pipeline_mode<synchronous>, transform_indices = @transform_7, window_bounds = array<i64: 5, 32, 128>}, {pipeline_mode = #tpu.pipeline_mode<synchronous>, transform_indices = @transform_8, window_bounds = array<i64: 5, 1, 128>}, {pipeline_mode = #tpu.pipeline_mode<synchronous>, transform_indices = @transform_9, window_bounds = array<i64: 5, 64, 32>}, {pipeline_mode = #tpu.pipeline_mode<synchronous>, transform_indices = @transform_10, window_bounds = array<i64: 5, 1, 32>}, {transform_indices = @transform_11, window_bounds = array<i64: 1, 8, 32>}, {transform_indices = @transform_12, window_bounds = array<i64: 1, 8, 32>}]} {
    %c0 = arith.constant 0 : index
    %c0_0 = arith.constant 0 : index
    %c0_1 = arith.constant 0 : index
    %0 = vector.load %arg1[%c0, %c0_0, %c0_1] : memref<1x8x32xf32, #tpu.memory_space<vmem>>, vector<1x8x32xf32>
    %1 = vector.shape_cast %0 : vector<1x8x32xf32> to vector<8x32xf32>
    %c0_2 = arith.constant 0 : index
    %c0_3 = arith.constant 0 : index
    %2 = vector.load %arg6[%c0_2, %c0_3] : memref<32x320xf32, #tpu.memory_space<vmem>>, vector<32x320xf32>
    %cst = arith.constant dense<0.000000e+00> : vector<8x320xf32>
    %3 = tpu.matmul %1, %2, %cst {dimension_numbers = #tpu.dot_dimension_numbers<[1], [0], [0], [1], [0, 0, 1, 1], [], []>} : vector<8x32xf32>, vector<32x320xf32>, vector<8x320xf32> -> vector<8x320xf32>
    %c0_4 = arith.constant 0 : index
    %c0_5 = arith.constant 0 : index
    %4 = vector.load %arg7[%c0_4, %c0_5] : memref<1x320xf32, #tpu.memory_space<vmem>>, vector<1x320xf32>
    %5 = vector.broadcast %4 : vector<1x320xf32> to vector<8x320xf32>
    %6 = arith.addf %3, %5 : vector<8x320xf32>
    %cst_6 = arith.constant 2.500000e-01 : f32
    %7 = vector.broadcast %cst_6 : f32 to vector<8x320xf32>
    %8 = arith.mulf %6, %7 : vector<8x320xf32>
    %c0_7 = arith.constant 0 : index
    %c0_8 = arith.constant 0 : index
    %c0_9 = arith.constant 0 : index
    %9 = vector.load %arg2[%c0_7, %c0_8, %c0_9] : memref<1x15x32xf32, #tpu.memory_space<vmem>>, vector<1x15x32xf32>
    %10 = vector.shape_cast %9 : vector<1x15x32xf32> to vector<15x32xf32>
    %c0_10 = arith.constant 0 : index
    %c0_11 = arith.constant 0 : index
    %c0_12 = arith.constant 0 : index
    %11 = vector.load %arg8[%c0_10, %c0_11, %c0_12] : memref<5x32x128xf32, #tpu.memory_space<vmem>>, vector<1x32x128xf32>
    %12 = vector.shape_cast %11 : vector<1x32x128xf32> to vector<32x128xf32>
    %cst_13 = arith.constant dense<0.000000e+00> : vector<15x128xf32>
    %13 = tpu.matmul %10, %12, %cst_13 {dimension_numbers = #tpu.dot_dimension_numbers<[1], [0], [0], [1], [0, 0, 1, 1], [], []>} : vector<15x32xf32>, vector<32x128xf32>, vector<15x128xf32> -> vector<15x128xf32>
    %c0_14 = arith.constant 0 : index
    %c0_15 = arith.constant 0 : index
    %c0_16 = arith.constant 0 : index
    %14 = vector.load %arg9[%c0_14, %c0_15, %c0_16] : memref<5x1x128xf32, #tpu.memory_space<vmem>>, vector<1x1x128xf32>
    %15 = vector.shape_cast %14 : vector<1x1x128xf32> to vector<1x128xf32>
    %16 = vector.broadcast %15 : vector<1x128xf32> to vector<15x128xf32>
    %17 = arith.addf %13, %16 : vector<15x128xf32>
    %18 = vector.extract_strided_slice %8 {offsets = [0, 0], sizes = [8, 64], strides = [1, 1]} : vector<8x320xf32> to vector<8x64xf32>
    %19 = vector.extract_strided_slice %17 {offsets = [0, 0], sizes = [15, 64], strides = [1, 1]} : vector<15x128xf32> to vector<15x64xf32>
    %20 = vector.extract_strided_slice %17 {offsets = [0, 64], sizes = [15, 64], strides = [1, 1]} : vector<15x128xf32> to vector<15x64xf32>
    %21 = vector.shape_cast %18 : vector<8x64xf32> to vector<8x4x16xf32>
    %22 = vector.shape_cast %19 : vector<15x64xf32> to vector<15x4x16xf32>
    %23 = vector.shape_cast %20 : vector<15x64xf32> to vector<15x4x16xf32>
    "tpu.trace_start"() <{level = 10 : i32, message = "qhd,khd->hqk"}> : () -> ()
    %cst_17 = arith.constant dense<0.000000e+00> : vector<4x8x15xf32>
    %24 = tpu.matmul %21, %22, %cst_17 {dimension_numbers = #tpu.dot_dimension_numbers<[2], [2], [0], [0], [0, 1, 0, 0, 1, 0], [1], [1]>} : vector<8x4x16xf32>, vector<15x4x16xf32>, vector<4x8x15xf32> -> vector<4x8x15xf32>
    "tpu.trace_stop"() : () -> ()
    %cst_18 = arith.constant dense<0xFF800000> : vector<4x8xf32>
    %25 = vector.multi_reduction <maximumf>, %24, %cst_18 [2] : vector<4x8x15xf32> to vector<4x8xf32>
    %26 = vector.shape_cast %25 : vector<4x8xf32> to vector<4x8x1xf32>
    %27 = vector.broadcast %26 : vector<4x8x1xf32> to vector<4x8x15xf32>
    %28 = arith.subf %24, %27 : vector<4x8x15xf32>
    %29 = math.exp %28 : vector<4x8x15xf32>
    %cst_19 = arith.constant dense<0.000000e+00> : vector<4x8xf32>
    %30 = vector.multi_reduction <add>, %29, %cst_19 [2] : vector<4x8x15xf32> to vector<4x8xf32>
    %31 = vector.shape_cast %30 : vector<4x8xf32> to vector<4x8x1xf32>
    %32 = tpu.reciprocal %31 {approx = true} : vector<4x8x1xf32> -> vector<4x8x1xf32>
    %33 = vector.broadcast %32 : vector<4x8x1xf32> to vector<4x8x15xf32>
    %34 = arith.mulf %29, %33 : vector<4x8x15xf32>
    "tpu.trace_start"() <{level = 10 : i32, message = "hqk,khd->qhd"}> : () -> ()
    %cst_20 = arith.constant dense<0.000000e+00> : vector<4x16x8xf32>
    %35 = tpu.matmul %23, %34, %cst_20 {dimension_numbers = #tpu.dot_dimension_numbers<[0], [2], [2], [1], [0, 1, 0, 2, 1, 1], [1], [0]>} : vector<15x4x16xf32>, vector<4x8x15xf32>, vector<4x16x8xf32> -> vector<4x16x8xf32>
    %36 = tpu.transpose %35, [2, 0, 1] : vector<4x16x8xf32> -> vector<8x4x16xf32>
    "tpu.trace_stop"() : () -> ()
    %37 = vector.shape_cast %36 : vector<8x4x16xf32> to vector<8x64xf32>
    %c0_21 = arith.constant 0 : index
    %c0_22 = arith.constant 0 : index
    %c0_23 = arith.constant 0 : index
    %38 = vector.load %arg10[%c0_21, %c0_22, %c0_23] : memref<5x64x32xf32, #tpu.memory_space<vmem>>, vector<1x64x32xf32>
    %39 = vector.shape_cast %38 : vector<1x64x32xf32> to vector<64x32xf32>
    %cst_24 = arith.constant dense<0.000000e+00> : vector<8x32xf32>
    %40 = tpu.matmul %37, %39, %cst_24 {dimension_numbers = #tpu.dot_dimension_numbers<[1], [0], [0], [1], [0, 0, 1, 1], [], []>} : vector<8x64xf32>, vector<64x32xf32>, vector<8x32xf32> -> vector<8x32xf32>
    %c0_25 = arith.constant 0 : index
    %c0_26 = arith.constant 0 : index
    %c0_27 = arith.constant 0 : index
    %41 = vector.load %arg11[%c0_25, %c0_26, %c0_27] : memref<5x1x32xf32, #tpu.memory_space<vmem>>, vector<1x1x32xf32>
    %42 = vector.shape_cast %41 : vector<1x1x32xf32> to vector<1x32xf32>
    %43 = vector.broadcast %42 : vector<1x32xf32> to vector<8x32xf32>
    %44 = arith.addf %40, %43 : vector<8x32xf32>
    %c0_28 = arith.constant 0 : index
    %c0_29 = arith.constant 0 : index
    %c0_30 = arith.constant 0 : index
    %45 = vector.load %arg3[%c0_28, %c0_29, %c0_30] : memref<1x7x32xf32, #tpu.memory_space<vmem>>, vector<1x7x32xf32>
    %46 = vector.shape_cast %45 : vector<1x7x32xf32> to vector<7x32xf32>
    %c1 = arith.constant 1 : index
    %c0_31 = arith.constant 0 : index
    %c0_32 = arith.constant 0 : index
    %47 = vector.load %arg8[%c1, %c0_31, %c0_32] : memref<5x32x128xf32, #tpu.memory_space<vmem>>, vector<1x32x128xf32>
    %48 = vector.shape_cast %47 : vector<1x32x128xf32> to vector<32x128xf32>
    %cst_33 = arith.constant dense<0.000000e+00> : vector<7x128xf32>
    %49 = tpu.matmul %46, %48, %cst_33 {dimension_numbers = #tpu.dot_dimension_numbers<[1], [0], [0], [1], [0, 0, 1, 1], [], []>} : vector<7x32xf32>, vector<32x128xf32>, vector<7x128xf32> -> vector<7x128xf32>
    %c1_34 = arith.constant 1 : index
    %c0_35 = arith.constant 0 : index
    %c0_36 = arith.constant 0 : index
    %50 = vector.load %arg9[%c1_34, %c0_35, %c0_36] : memref<5x1x128xf32, #tpu.memory_space<vmem>>, vector<1x1x128xf32>
    %51 = vector.shape_cast %50 : vector<1x1x128xf32> to vector<1x128xf32>
    %52 = vector.broadcast %51 : vector<1x128xf32> to vector<7x128xf32>
    %53 = arith.addf %49, %52 : vector<7x128xf32>
    %54 = vector.extract_strided_slice %8 {offsets = [0, 64], sizes = [8, 64], strides = [1, 1]} : vector<8x320xf32> to vector<8x64xf32>
    %55 = vector.extract_strided_slice %53 {offsets = [0, 0], sizes = [7, 64], strides = [1, 1]} : vector<7x128xf32> to vector<7x64xf32>
    %56 = vector.extract_strided_slice %53 {offsets = [0, 64], sizes = [7, 64], strides = [1, 1]} : vector<7x128xf32> to vector<7x64xf32>
    %57 = vector.shape_cast %54 : vector<8x64xf32> to vector<8x4x16xf32>
    %58 = vector.shape_cast %55 : vector<7x64xf32> to vector<7x4x16xf32>
    %59 = vector.shape_cast %56 : vector<7x64xf32> to vector<7x4x16xf32>
    "tpu.trace_start"() <{level = 10 : i32, message = "qhd,khd->hqk"}> : () -> ()
    %cst_37 = arith.constant dense<0.000000e+00> : vector<4x8x7xf32>
    %60 = tpu.matmul %57, %58, %cst_37 {dimension_numbers = #tpu.dot_dimension_numbers<[2], [2], [0], [0], [0, 1, 0, 0, 1, 0], [1], [1]>} : vector<8x4x16xf32>, vector<7x4x16xf32>, vector<4x8x7xf32> -> vector<4x8x7xf32>
    "tpu.trace_stop"() : () -> ()
    %cst_38 = arith.constant dense<0xFF800000> : vector<4x8xf32>
    %61 = vector.multi_reduction <maximumf>, %60, %cst_38 [2] : vector<4x8x7xf32> to vector<4x8xf32>
    %62 = vector.shape_cast %61 : vector<4x8xf32> to vector<4x8x1xf32>
    %63 = vector.broadcast %62 : vector<4x8x1xf32> to vector<4x8x7xf32>
    %64 = arith.subf %60, %63 : vector<4x8x7xf32>
    %65 = math.exp %64 : vector<4x8x7xf32>
    %cst_39 = arith.constant dense<0.000000e+00> : vector<4x8xf32>
    %66 = vector.multi_reduction <add>, %65, %cst_39 [2] : vector<4x8x7xf32> to vector<4x8xf32>
    %67 = vector.shape_cast %66 : vector<4x8xf32> to vector<4x8x1xf32>
    %68 = tpu.reciprocal %67 {approx = true} : vector<4x8x1xf32> -> vector<4x8x1xf32>
    %69 = vector.broadcast %68 : vector<4x8x1xf32> to vector<4x8x7xf32>
    %70 = arith.mulf %65, %69 : vector<4x8x7xf32>
    "tpu.trace_start"() <{level = 10 : i32, message = "hqk,khd->qhd"}> : () -> ()
    %cst_40 = arith.constant dense<0.000000e+00> : vector<4x16x8xf32>
    %71 = tpu.matmul %59, %70, %cst_40 {dimension_numbers = #tpu.dot_dimension_numbers<[0], [2], [2], [1], [0, 1, 0, 2, 1, 1], [1], [0]>} : vector<7x4x16xf32>, vector<4x8x7xf32>, vector<4x16x8xf32> -> vector<4x16x8xf32>
    %72 = tpu.transpose %71, [2, 0, 1] : vector<4x16x8xf32> -> vector<8x4x16xf32>
    "tpu.trace_stop"() : () -> ()
    %73 = vector.shape_cast %72 : vector<8x4x16xf32> to vector<8x64xf32>
    %c1_41 = arith.constant 1 : index
    %c0_42 = arith.constant 0 : index
    %c0_43 = arith.constant 0 : index
    %74 = vector.load %arg10[%c1_41, %c0_42, %c0_43] : memref<5x64x32xf32, #tpu.memory_space<vmem>>, vector<1x64x32xf32>
    %75 = vector.shape_cast %74 : vector<1x64x32xf32> to vector<64x32xf32>
    %cst_44 = arith.constant dense<0.000000e+00> : vector<8x32xf32>
    %76 = tpu.matmul %73, %75, %cst_44 {dimension_numbers = #tpu.dot_dimension_numbers<[1], [0], [0], [1], [0, 0, 1, 1], [], []>} : vector<8x64xf32>, vector<64x32xf32>, vector<8x32xf32> -> vector<8x32xf32>
    %c1_45 = arith.constant 1 : index
    %c0_46 = arith.constant 0 : index
    %c0_47 = arith.constant 0 : index
    %77 = vector.load %arg11[%c1_45, %c0_46, %c0_47] : memref<5x1x32xf32, #tpu.memory_space<vmem>>, vector<1x1x32xf32>
    %78 = vector.shape_cast %77 : vector<1x1x32xf32> to vector<1x32xf32>
    %79 = vector.broadcast %78 : vector<1x32xf32> to vector<8x32xf32>
    %80 = arith.addf %76, %79 : vector<8x32xf32>
    %c0_48 = arith.constant 0 : index
    %c0_49 = arith.constant 0 : index
    %c0_50 = arith.constant 0 : index
    %81 = vector.load %arg4[%c0_48, %c0_49, %c0_50] : memref<1x3x32xf32, #tpu.memory_space<vmem>>, vector<1x3x32xf32>
    %82 = vector.shape_cast %81 : vector<1x3x32xf32> to vector<3x32xf32>
    %c2 = arith.constant 2 : index
    %c0_51 = arith.constant 0 : index
    %c0_52 = arith.constant 0 : index
    %83 = vector.load %arg8[%c2, %c0_51, %c0_52] : memref<5x32x128xf32, #tpu.memory_space<vmem>>, vector<1x32x128xf32>
    %84 = vector.shape_cast %83 : vector<1x32x128xf32> to vector<32x128xf32>
    %cst_53 = arith.constant dense<0.000000e+00> : vector<3x128xf32>
    %85 = tpu.matmul %82, %84, %cst_53 {dimension_numbers = #tpu.dot_dimension_numbers<[1], [0], [0], [1], [0, 0, 1, 1], [], []>} : vector<3x32xf32>, vector<32x128xf32>, vector<3x128xf32> -> vector<3x128xf32>
    %c2_54 = arith.constant 2 : index
    %c0_55 = arith.constant 0 : index
    %c0_56 = arith.constant 0 : index
    %86 = vector.load %arg9[%c2_54, %c0_55, %c0_56] : memref<5x1x128xf32, #tpu.memory_space<vmem>>, vector<1x1x128xf32>
    %87 = vector.shape_cast %86 : vector<1x1x128xf32> to vector<1x128xf32>
    %88 = vector.broadcast %87 : vector<1x128xf32> to vector<3x128xf32>
    %89 = arith.addf %85, %88 : vector<3x128xf32>
    %90 = vector.extract_strided_slice %8 {offsets = [0, 128], sizes = [8, 64], strides = [1, 1]} : vector<8x320xf32> to vector<8x64xf32>
    %91 = vector.extract_strided_slice %89 {offsets = [0, 0], sizes = [3, 64], strides = [1, 1]} : vector<3x128xf32> to vector<3x64xf32>
    %92 = vector.extract_strided_slice %89 {offsets = [0, 64], sizes = [3, 64], strides = [1, 1]} : vector<3x128xf32> to vector<3x64xf32>
    %93 = vector.shape_cast %90 : vector<8x64xf32> to vector<8x4x16xf32>
    %94 = vector.shape_cast %91 : vector<3x64xf32> to vector<3x4x16xf32>
    %95 = vector.shape_cast %92 : vector<3x64xf32> to vector<3x4x16xf32>
    "tpu.trace_start"() <{level = 10 : i32, message = "qhd,khd->hqk"}> : () -> ()
    %cst_57 = arith.constant dense<0.000000e+00> : vector<4x8x3xf32>
    %96 = tpu.matmul %93, %94, %cst_57 {dimension_numbers = #tpu.dot_dimension_numbers<[2], [2], [0], [0], [0, 1, 0, 0, 1, 0], [1], [1]>} : vector<8x4x16xf32>, vector<3x4x16xf32>, vector<4x8x3xf32> -> vector<4x8x3xf32>
    "tpu.trace_stop"() : () -> ()
    %cst_58 = arith.constant dense<0xFF800000> : vector<4x8xf32>
    %97 = vector.multi_reduction <maximumf>, %96, %cst_58 [2] : vector<4x8x3xf32> to vector<4x8xf32>
    %98 = vector.shape_cast %97 : vector<4x8xf32> to vector<4x8x1xf32>
    %99 = vector.broadcast %98 : vector<4x8x1xf32> to vector<4x8x3xf32>
    %100 = arith.subf %96, %99 : vector<4x8x3xf32>
    %101 = math.exp %100 : vector<4x8x3xf32>
    %cst_59 = arith.constant dense<0.000000e+00> : vector<4x8xf32>
    %102 = vector.multi_reduction <add>, %101, %cst_59 [2] : vector<4x8x3xf32> to vector<4x8xf32>
    %103 = vector.shape_cast %102 : vector<4x8xf32> to vector<4x8x1xf32>
    %104 = tpu.reciprocal %103 {approx = true} : vector<4x8x1xf32> -> vector<4x8x1xf32>
    %105 = vector.broadcast %104 : vector<4x8x1xf32> to vector<4x8x3xf32>
    %106 = arith.mulf %101, %105 : vector<4x8x3xf32>
    "tpu.trace_start"() <{level = 10 : i32, message = "hqk,khd->qhd"}> : () -> ()
    %cst_60 = arith.constant dense<0.000000e+00> : vector<4x16x8xf32>
    %107 = tpu.matmul %95, %106, %cst_60 {dimension_numbers = #tpu.dot_dimension_numbers<[0], [2], [2], [1], [0, 1, 0, 2, 1, 1], [1], [0]>} : vector<3x4x16xf32>, vector<4x8x3xf32>, vector<4x16x8xf32> -> vector<4x16x8xf32>
    %108 = tpu.transpose %107, [2, 0, 1] : vector<4x16x8xf32> -> vector<8x4x16xf32>
    "tpu.trace_stop"() : () -> ()
    %109 = vector.shape_cast %108 : vector<8x4x16xf32> to vector<8x64xf32>
    %c2_61 = arith.constant 2 : index
    %c0_62 = arith.constant 0 : index
    %c0_63 = arith.constant 0 : index
    %110 = vector.load %arg10[%c2_61, %c0_62, %c0_63] : memref<5x64x32xf32, #tpu.memory_space<vmem>>, vector<1x64x32xf32>
    %111 = vector.shape_cast %110 : vector<1x64x32xf32> to vector<64x32xf32>
    %cst_64 = arith.constant dense<0.000000e+00> : vector<8x32xf32>
    %112 = tpu.matmul %109, %111, %cst_64 {dimension_numbers = #tpu.dot_dimension_numbers<[1], [0], [0], [1], [0, 0, 1, 1], [], []>} : vector<8x64xf32>, vector<64x32xf32>, vector<8x32xf32> -> vector<8x32xf32>
    %c2_65 = arith.constant 2 : index
    %c0_66 = arith.constant 0 : index
    %c0_67 = arith.constant 0 : index
    %113 = vector.load %arg11[%c2_65, %c0_66, %c0_67] : memref<5x1x32xf32, #tpu.memory_space<vmem>>, vector<1x1x32xf32>
    %114 = vector.shape_cast %113 : vector<1x1x32xf32> to vector<1x32xf32>
    %115 = vector.broadcast %114 : vector<1x32xf32> to vector<8x32xf32>
    %116 = arith.addf %112, %115 : vector<8x32xf32>
    %c0_68 = arith.constant 0 : index
    %c0_69 = arith.constant 0 : index
    %c0_70 = arith.constant 0 : index
    %117 = vector.load %arg5[%c0_68, %c0_69, %c0_70] : memref<1x3x32xf32, #tpu.memory_space<vmem>>, vector<1x3x32xf32>
    %118 = vector.shape_cast %117 : vector<1x3x32xf32> to vector<3x32xf32>
    %c3 = arith.constant 3 : index
    %c0_71 = arith.constant 0 : index
    %c0_72 = arith.constant 0 : index
    %119 = vector.load %arg8[%c3, %c0_71, %c0_72] : memref<5x32x128xf32, #tpu.memory_space<vmem>>, vector<1x32x128xf32>
    %120 = vector.shape_cast %119 : vector<1x32x128xf32> to vector<32x128xf32>
    %cst_73 = arith.constant dense<0.000000e+00> : vector<3x128xf32>
    %121 = tpu.matmul %118, %120, %cst_73 {dimension_numbers = #tpu.dot_dimension_numbers<[1], [0], [0], [1], [0, 0, 1, 1], [], []>} : vector<3x32xf32>, vector<32x128xf32>, vector<3x128xf32> -> vector<3x128xf32>
    %c3_74 = arith.constant 3 : index
    %c0_75 = arith.constant 0 : index
    %c0_76 = arith.constant 0 : index
    %122 = vector.load %arg9[%c3_74, %c0_75, %c0_76] : memref<5x1x128xf32, #tpu.memory_space<vmem>>, vector<1x1x128xf32>
    %123 = vector.shape_cast %122 : vector<1x1x128xf32> to vector<1x128xf32>
    %124 = vector.broadcast %123 : vector<1x128xf32> to vector<3x128xf32>
    %125 = arith.addf %121, %124 : vector<3x128xf32>
    %126 = vector.extract_strided_slice %8 {offsets = [0, 192], sizes = [8, 64], strides = [1, 1]} : vector<8x320xf32> to vector<8x64xf32>
    %127 = vector.extract_strided_slice %125 {offsets = [0, 0], sizes = [3, 64], strides = [1, 1]} : vector<3x128xf32> to vector<3x64xf32>
    %128 = vector.extract_strided_slice %125 {offsets = [0, 64], sizes = [3, 64], strides = [1, 1]} : vector<3x128xf32> to vector<3x64xf32>
    %129 = vector.shape_cast %126 : vector<8x64xf32> to vector<8x4x16xf32>
    %130 = vector.shape_cast %127 : vector<3x64xf32> to vector<3x4x16xf32>
    %131 = vector.shape_cast %128 : vector<3x64xf32> to vector<3x4x16xf32>
    "tpu.trace_start"() <{level = 10 : i32, message = "qhd,khd->hqk"}> : () -> ()
    %cst_77 = arith.constant dense<0.000000e+00> : vector<4x8x3xf32>
    %132 = tpu.matmul %129, %130, %cst_77 {dimension_numbers = #tpu.dot_dimension_numbers<[2], [2], [0], [0], [0, 1, 0, 0, 1, 0], [1], [1]>} : vector<8x4x16xf32>, vector<3x4x16xf32>, vector<4x8x3xf32> -> vector<4x8x3xf32>
    "tpu.trace_stop"() : () -> ()
    %cst_78 = arith.constant dense<0xFF800000> : vector<4x8xf32>
    %133 = vector.multi_reduction <maximumf>, %132, %cst_78 [2] : vector<4x8x3xf32> to vector<4x8xf32>
    %134 = vector.shape_cast %133 : vector<4x8xf32> to vector<4x8x1xf32>
    %135 = vector.broadcast %134 : vector<4x8x1xf32> to vector<4x8x3xf32>
    %136 = arith.subf %132, %135 : vector<4x8x3xf32>
    %137 = math.exp %136 : vector<4x8x3xf32>
    %cst_79 = arith.constant dense<0.000000e+00> : vector<4x8xf32>
    %138 = vector.multi_reduction <add>, %137, %cst_79 [2] : vector<4x8x3xf32> to vector<4x8xf32>
    %139 = vector.shape_cast %138 : vector<4x8xf32> to vector<4x8x1xf32>
    %140 = tpu.reciprocal %139 {approx = true} : vector<4x8x1xf32> -> vector<4x8x1xf32>
    %141 = vector.broadcast %140 : vector<4x8x1xf32> to vector<4x8x3xf32>
    %142 = arith.mulf %137, %141 : vector<4x8x3xf32>
    "tpu.trace_start"() <{level = 10 : i32, message = "hqk,khd->qhd"}> : () -> ()
    %cst_80 = arith.constant dense<0.000000e+00> : vector<4x16x8xf32>
    %143 = tpu.matmul %131, %142, %cst_80 {dimension_numbers = #tpu.dot_dimension_numbers<[0], [2], [2], [1], [0, 1, 0, 2, 1, 1], [1], [0]>} : vector<3x4x16xf32>, vector<4x8x3xf32>, vector<4x16x8xf32> -> vector<4x16x8xf32>
    %144 = tpu.transpose %143, [2, 0, 1] : vector<4x16x8xf32> -> vector<8x4x16xf32>
    "tpu.trace_stop"() : () -> ()
    %145 = vector.shape_cast %144 : vector<8x4x16xf32> to vector<8x64xf32>
    %c3_81 = arith.constant 3 : index
    %c0_82 = arith.constant 0 : index
    %c0_83 = arith.constant 0 : index
    %146 = vector.load %arg10[%c3_81, %c0_82, %c0_83] : memref<5x64x32xf32, #tpu.memory_space<vmem>>, vector<1x64x32xf32>
    %147 = vector.shape_cast %146 : vector<1x64x32xf32> to vector<64x32xf32>
    %cst_84 = arith.constant dense<0.000000e+00> : vector<8x32xf32>
    %148 = tpu.matmul %145, %147, %cst_84 {dimension_numbers = #tpu.dot_dimension_numbers<[1], [0], [0], [1], [0, 0, 1, 1], [], []>} : vector<8x64xf32>, vector<64x32xf32>, vector<8x32xf32> -> vector<8x32xf32>
    %c3_85 = arith.constant 3 : index
    %c0_86 = arith.constant 0 : index
    %c0_87 = arith.constant 0 : index
    %149 = vector.load %arg11[%c3_85, %c0_86, %c0_87] : memref<5x1x32xf32, #tpu.memory_space<vmem>>, vector<1x1x32xf32>
    %150 = vector.shape_cast %149 : vector<1x1x32xf32> to vector<1x32xf32>
    %151 = vector.broadcast %150 : vector<1x32xf32> to vector<8x32xf32>
    %152 = arith.addf %148, %151 : vector<8x32xf32>
    %153 = tpu.concatenate %44, %80, %116, %152 in 0 : vector<8x32xf32>, vector<8x32xf32>, vector<8x32xf32>, vector<8x32xf32> -> vector<32x32xf32>
    %c4 = arith.constant 4 : index
    %c0_88 = arith.constant 0 : index
    %c0_89 = arith.constant 0 : index
    %154 = vector.load %arg8[%c4, %c0_88, %c0_89] : memref<5x32x128xf32, #tpu.memory_space<vmem>>, vector<1x32x128xf32>
    %155 = vector.shape_cast %154 : vector<1x32x128xf32> to vector<32x128xf32>
    %cst_90 = arith.constant dense<0.000000e+00> : vector<32x128xf32>
    %156 = tpu.matmul %153, %155, %cst_90 {dimension_numbers = #tpu.dot_dimension_numbers<[1], [0], [0], [1], [0, 0, 1, 1], [], []>} : vector<32x32xf32>, vector<32x128xf32>, vector<32x128xf32> -> vector<32x128xf32>
    %c4_91 = arith.constant 4 : index
    %c0_92 = arith.constant 0 : index
    %c0_93 = arith.constant 0 : index
    %157 = vector.load %arg9[%c4_91, %c0_92, %c0_93] : memref<5x1x128xf32, #tpu.memory_space<vmem>>, vector<1x1x128xf32>
    %158 = vector.shape_cast %157 : vector<1x1x128xf32> to vector<1x128xf32>
    %159 = vector.broadcast %158 : vector<1x128xf32> to vector<32x128xf32>
    %160 = arith.addf %156, %159 : vector<32x128xf32>
    %161 = vector.extract_strided_slice %8 {offsets = [0, 256], sizes = [8, 64], strides = [1, 1]} : vector<8x320xf32> to vector<8x64xf32>
    %162 = vector.extract_strided_slice %160 {offsets = [0, 0], sizes = [32, 64], strides = [1, 1]} : vector<32x128xf32> to vector<32x64xf32>
    %163 = vector.extract_strided_slice %160 {offsets = [0, 64], sizes = [32, 64], strides = [1, 1]} : vector<32x128xf32> to vector<32x64xf32>
    %164 = vector.shape_cast %161 : vector<8x64xf32> to vector<8x4x16xf32>
    %165 = vector.shape_cast %162 : vector<32x64xf32> to vector<32x4x16xf32>
    %166 = vector.shape_cast %163 : vector<32x64xf32> to vector<32x4x16xf32>
    "tpu.trace_start"() <{level = 10 : i32, message = "qhd,khd->hqk"}> : () -> ()
    %cst_94 = arith.constant dense<0.000000e+00> : vector<4x8x32xf32>
    %167 = tpu.matmul %164, %165, %cst_94 {dimension_numbers = #tpu.dot_dimension_numbers<[2], [2], [0], [0], [0, 1, 0, 0, 1, 0], [1], [1]>} : vector<8x4x16xf32>, vector<32x4x16xf32>, vector<4x8x32xf32> -> vector<4x8x32xf32>
    "tpu.trace_stop"() : () -> ()
    %cst_95 = arith.constant dense<0xFF800000> : vector<4x8xf32>
    %168 = vector.multi_reduction <maximumf>, %167, %cst_95 [2] : vector<4x8x32xf32> to vector<4x8xf32>
    %169 = vector.shape_cast %168 : vector<4x8xf32> to vector<4x8x1xf32>
    %170 = vector.broadcast %169 : vector<4x8x1xf32> to vector<4x8x32xf32>
    %171 = arith.subf %167, %170 : vector<4x8x32xf32>
    %172 = math.exp %171 : vector<4x8x32xf32>
    %cst_96 = arith.constant dense<0.000000e+00> : vector<4x8xf32>
    %173 = vector.multi_reduction <add>, %172, %cst_96 [2] : vector<4x8x32xf32> to vector<4x8xf32>
    %174 = vector.shape_cast %173 : vector<4x8xf32> to vector<4x8x1xf32>
    %175 = tpu.reciprocal %174 {approx = true} : vector<4x8x1xf32> -> vector<4x8x1xf32>
    %176 = vector.broadcast %175 : vector<4x8x1xf32> to vector<4x8x32xf32>
    %177 = arith.mulf %172, %176 : vector<4x8x32xf32>
    "tpu.trace_start"() <{level = 10 : i32, message = "hqk,khd->qhd"}> : () -> ()
    %cst_97 = arith.constant dense<0.000000e+00> : vector<4x16x8xf32>
    %178 = tpu.matmul %166, %177, %cst_97 {dimension_numbers = #tpu.dot_dimension_numbers<[0], [2], [2], [1], [0, 1, 0, 2, 1, 1], [1], [0]>} : vector<32x4x16xf32>, vector<4x8x32xf32>, vector<4x16x8xf32> -> vector<4x16x8xf32>
    %179 = tpu.transpose %178, [2, 0, 1] : vector<4x16x8xf32> -> vector<8x4x16xf32>
    "tpu.trace_stop"() : () -> ()
    %180 = vector.shape_cast %179 : vector<8x4x16xf32> to vector<8x64xf32>
    %c4_98 = arith.constant 4 : index
    %c0_99 = arith.constant 0 : index
    %c0_100 = arith.constant 0 : index
    %181 = vector.load %arg10[%c4_98, %c0_99, %c0_100] : memref<5x64x32xf32, #tpu.memory_space<vmem>>, vector<1x64x32xf32>
    %182 = vector.shape_cast %181 : vector<1x64x32xf32> to vector<64x32xf32>
    %cst_101 = arith.constant dense<0.000000e+00> : vector<8x32xf32>
    %183 = tpu.matmul %180, %182, %cst_101 {dimension_numbers = #tpu.dot_dimension_numbers<[1], [0], [0], [1], [0, 0, 1, 1], [], []>} : vector<8x64xf32>, vector<64x32xf32>, vector<8x32xf32> -> vector<8x32xf32>
    %c4_102 = arith.constant 4 : index
    %c0_103 = arith.constant 0 : index
    %c0_104 = arith.constant 0 : index
    %184 = vector.load %arg11[%c4_102, %c0_103, %c0_104] : memref<5x1x32xf32, #tpu.memory_space<vmem>>, vector<1x1x32xf32>
    %185 = vector.shape_cast %184 : vector<1x1x32xf32> to vector<1x32xf32>
    %186 = vector.broadcast %185 : vector<1x32xf32> to vector<8x32xf32>
    %187 = arith.addf %183, %186 : vector<8x32xf32>
    %c0_105 = arith.constant 0 : index
    %c0_106 = arith.constant 0 : index
    %c0_107 = arith.constant 0 : index
    %188 = vector.load %arg12[%c0_105, %c0_106, %c0_107] : memref<1x8x32xf32, #tpu.memory_space<vmem>>, vector<1x8x32xf32>
    %189 = vector.shape_cast %188 : vector<1x8x32xf32> to vector<8x32xf32>
    %190 = vector.shape_cast %187 : vector<8x32xf32> to vector<1x8x32xf32>
    tpu.vector_store %arg12[%c0_105, %c0_106, %c0_107], %190 {strides = array<i32>} : memref<1x8x32xf32, #tpu.memory_space<vmem>>, vector<1x8x32xf32>,
    %cst_108 = arith.constant dense<0.000000e+00> : vector<8x32xf32>
    %191 = vector.multi_reduction <add>, %177, %cst_108 [0] : vector<4x8x32xf32> to vector<8x32xf32>
    %cst_109 = arith.constant 2.500000e-01 : f32
    %192 = vector.broadcast %cst_109 : f32 to vector<8x32xf32>
    %193 = arith.mulf %191, %192 : vector<8x32xf32>
    %c0_110 = arith.constant 0 : index
    %c0_111 = arith.constant 0 : index
    %c0_112 = arith.constant 0 : index
    %194 = vector.load %arg13[%c0_110, %c0_111, %c0_112] : memref<1x8x32xf32, #tpu.memory_space<vmem>>, vector<1x8x32xf32>
    %195 = vector.shape_cast %194 : vector<1x8x32xf32> to vector<8x32xf32>
    %196 = vector.shape_cast %193 : vector<8x32xf32> to vector<1x8x32xf32>
    tpu.vector_store %arg13[%c0_110, %c0_111, %c0_112], %196 {strides = array<i32>} : memref<1x8x32xf32, #tpu.memory_space<vmem>>, vector<1x8x32xf32>,
    return
  }
  func.func @transform_0(%arg0: i32) -> (i32, i32, i32) {
    %c0_i32 = arith.constant 0 : i32
    %c0_i32_0 = arith.constant 0 : i32
    %c0_i32_1 = arith.constant 0 : i32
    return %arg0, %c0_i32, %c0_i32_0 : i32, i32, i32
  }
  func.func @transform_1(%arg0: i32) -> (i32, i32, i32) {
    %c0_i32 = arith.constant 0 : i32
    %c0_i32_0 = arith.constant 0 : i32
    %c0_i32_1 = arith.constant 0 : i32
    return %arg0, %c0_i32, %c0_i32_0 : i32, i32, i32
  }
  func.func @transform_2(%arg0: i32) -> (i32, i32, i32) {
    %c0_i32 = arith.constant 0 : i32
    %c0_i32_0 = arith.constant 0 : i32
    %c0_i32_1 = arith.constant 0 : i32
    return %arg0, %c0_i32, %c0_i32_0 : i32, i32, i32
  }
  func.func @transform_3(%arg0: i32) -> (i32, i32, i32) {
    %c0_i32 = arith.constant 0 : i32
    %c0_i32_0 = arith.constant 0 : i32
    %c0_i32_1 = arith.constant 0 : i32
    return %arg0, %c0_i32, %c0_i32_0 : i32, i32, i32
  }
  func.func @transform_4(%arg0: i32) -> (i32, i32, i32) {
    %c0_i32 = arith.constant 0 : i32
    %c0_i32_0 = arith.constant 0 : i32
    %c0_i32_1 = arith.constant 0 : i32
    return %arg0, %c0_i32, %c0_i32_0 : i32, i32, i32
  }
  func.func @transform_5(%arg0: i32) -> (i32, i32) {
    %c0_i32 = arith.constant 0 : i32
    %c0_i32_0 = arith.constant 0 : i32
    %c0_i32_1 = arith.constant 0 : i32
    return %c0_i32, %c0_i32_0 : i32, i32
  }
  func.func @transform_6(%arg0: i32) -> (i32, i32) {
    %c0_i32 = arith.constant 0 : i32
    %c0_i32_0 = arith.constant 0 : i32
    %c0_i32_1 = arith.constant 0 : i32
    return %c0_i32, %c0_i32_0 : i32, i32
  }
  func.func @transform_7(%arg0: i32) -> (i32, i32, i32) {
    %c0_i32 = arith.constant 0 : i32
    %c0_i32_0 = arith.constant 0 : i32
    %c0_i32_1 = arith.constant 0 : i32
    %c0_i32_2 = arith.constant 0 : i32
    return %c0_i32, %c0_i32_0, %c0_i32_1 : i32, i32, i32
  }
  func.func @transform_8(%arg0: i32) -> (i32, i32, i32) {
    %c0_i32 = arith.constant 0 : i32
    %c0_i32_0 = arith.constant 0 : i32
    %c0_i32_1 = arith.constant 0 : i32
    %c0_i32_2 = arith.constant 0 : i32
    return %c0_i32, %c0_i32_0, %c0_i32_1 : i32, i32, i32
  }
  func.func @transform_9(%arg0: i32) -> (i32, i32, i32) {
    %c0_i32 = arith.constant 0 : i32
    %c0_i32_0 = arith.constant 0 : i32
    %c0_i32_1 = arith.constant 0 : i32
    %c0_i32_2 = arith.constant 0 : i32
    return %c0_i32, %c0_i32_0, %c0_i32_1 : i32, i32, i32
  }
  func.func @transform_10(%arg0: i32) -> (i32, i32, i32) {
    %c0_i32 = arith.constant 0 : i32
    %c0_i32_0 = arith.constant 0 : i32
    %c0_i32_1 = arith.constant 0 : i32
    %c0_i32_2 = arith.constant 0 : i32
    return %c0_i32, %c0_i32_0, %c0_i32_1 : i32, i32, i32
  }
  func.func @transform_11(%arg0: i32) -> (i32, i32, i32) {
    %c0_i32 = arith.constant 0 : i32
    %c0_i32_0 = arith.constant 0 : i32
    %c0_i32_1 = arith.constant 0 : i32
    return %arg0, %c0_i32, %c0_i32_0 : i32, i32, i32
  }
  func.func @transform_12(%arg0: i32) -> (i32, i32, i32) {
    %c0_i32 = arith.constant 0 : i32
    %c0_i32_0 = arith.constant 0 : i32
    %c0_i32_1 = arith.constant 0 : i32
    return %arg0, %c0_i32, %c0_i32_0 : i32, i32, i32
  }
}

</mosaic_0001>

<llo_original>
// kernel: hierarchical_attn.1
$region0: #{hierarchical_attn.1}
  #allocation0 [shape = 'u32[]', space=smem, size = 0x4, offset = 0x4, fixed_abs, tag = 'smem constant byte address 0x4 - core index']
  #allocation1 [shape = 'u32[144,128]{1,0:T(1,128)}', space=vmem, size = 0x12000, scoped, tag = 'internal scratch']
  %s0 = inlined_call_operand.vmem [shape: f32[2,8,32], index: 0, kind: input, shape index: {}]
  %s1 = inlined_call_operand.vmem [shape: f32[2,15,32], index: 1, kind: input, shape index: {}]
  %s2 = inlined_call_operand.vmem [shape: f32[2,7,32], index: 2, kind: input, shape index: {}]
  %s3 = inlined_call_operand.vmem [shape: f32[2,3,32], index: 3, kind: input, shape index: {}]
  %s4 = inlined_call_operand.vmem [shape: f32[2,3,32], index: 4, kind: input, shape index: {}]
  %s5 = inlined_call_operand.vmem [shape: f32[32,320], index: 5, kind: input, shape index: {}]
  %s6 = inlined_call_operand.vmem [shape: f32[1,320], index: 6, kind: input, shape index: {}]
  %s7 = inlined_call_operand.vmem [shape: f32[5,32,128], index: 7, kind: input, shape index: {}]
  %s8 = inlined_call_operand.vmem [shape: f32[5,1,128], index: 8, kind: input, shape index: {}]
  %s9 = inlined_call_operand.vmem [shape: f32[5,64,32], index: 9, kind: input, shape index: {}]
  %s10 = inlined_call_operand.vmem [shape: f32[5,1,32], index: 10, kind: input, shape index: {}]
  %s11 = inlined_call_operand.hbm [shape: f32[2,8,32], index: 11, kind: output, shape index: {0}]
  %s12 = inlined_call_operand.hbm [shape: f32[2,8,32], index: 12, kind: output, shape index: {1}]
  %13 = xla_tuple %s11, %s12
  %s14 = sld [smem:[#allocation0]]
  $region85: #{hierarchical_attn.1} parent=0
    _
  %s16 = ssub.s32 1, %s14
  %s17 = scalar_select 0, %s16, %s14
  $region1: #{hierarchical_attn.1} parent=0
    #allocation2 [shape = 'u8[8192]{0}', space=vmem, size = 0x2000, scoped, tag = 'output window, operand 0']
    #allocation3 [shape = 's32[2]{0}', space=sflag, size = 0x8, scoped, tag = 'scoped memory for hierarchical_attn.1']
    #allocation4 [shape = 'u8[8192]{0}', space=vmem, size = 0x2000, scoped, tag = 'output window, operand 1']
    #allocation5 [shape = 's32[2]{0}', space=sflag, size = 0x8, scoped, tag = 'scoped memory for hierarchical_attn.1']
    %18 = vsyncpa [#allocation3], 0
    %s19 = scalar_lea.sflag [#allocation3], 1
    %20 = vsyncpa %s19, 0
    %21 = vsyncpa [#allocation5], 0
    %s22 = scalar_lea.sflag [#allocation5], 1
    %23 = vsyncpa %s22, 0
    loop: start=0, step=1, limit=4
    $region2: #{hierarchical_attn.1} parent=1 // loop_pre_header
      _
    $region3: #{hierarchical_attn.1} parent=1 // loop_header
      %s25 = sphi 0, %s29
      %p26 = scmp.ge.s32.totalorder %s25, 4
      %s35 = sphi 0, %s37
      %s38 = sphi 0, %s35
      %s39 = sphi 0, %s38
      %s55 = sphi 0, %s39
      %s61 = sphi 0, %s63
      %s64 = sphi 0, %s61
      %s65 = sphi 0, %s64
      %s81 = sphi 0, %s65
      %s87 = sphi 0, %s89
      %s90 = sphi 0, %s87
      %s91 = sphi 0, %s90
      %s107 = sphi 0, %s91
      %s113 = sphi 0, %s115
      %s116 = sphi 0, %s113
      %s117 = sphi 0, %s116
      %s133 = sphi 0, %s117
      %s139 = sphi 0, %s141
      %s142 = sphi 0, %s139
      %s143 = sphi 0, %s142
      %s159 = sphi 0, %s143
      %s163 = sphi 0, %s163
      %s165 = sphi 0, %s163
      %s166 = sphi 0, %s165
      %s180 = sphi 0, %s166
      %s184 = sphi 0, %s184
      %s186 = sphi 0, %s184
      %s187 = sphi 0, %s186
      %s201 = sphi 0, %s187
      %s205 = sphi 0, %s205
      %s207 = sphi 0, %s205
      %s208 = sphi 0, %s207
      %s222 = sphi 0, %s208
      %s226 = sphi 0, %s226
      %s228 = sphi 0, %s226
      %s229 = sphi 0, %s228
      %s243 = sphi 0, %s229
      %s247 = sphi 0, %s247
      %s249 = sphi 0, %s247
      %s250 = sphi 0, %s249
      %s264 = sphi 0, %s250
      %s268 = sphi 0, %s268
      %s270 = sphi 0, %s268
      %s271 = sphi 0, %s270
      %s285 = sphi 0, %s271
      %s291 = sphi 0, %s293
      %s294 = sphi 0, %s291
      %s295 = sphi 0, %s294
      %s311 = sphi 0, %s295
      %s317 = sphi 0, %s319
      %s320 = sphi 0, %s317
      %s321 = sphi 0, %s320
      %s337 = sphi 0, %s321
    $region4: #{hierarchical_attn.1} parent=1 // loop_header_branch
      %28 = sbr.rel (%p26) target = $region8
    $region5: #{hierarchical_attn.1} parent=1 // loop_body
      %s30 = ssub.s32 %s25, 1
      %s31 = ssub.s32 %s25, 2
      %s32 = sadd.s32 %s25, 1
      %s33 = ssub.s32 %s25, %s32
      %p34 = scmp.eq.s32.totalorder %s33, 0
      %s36 = sadd.s32 %s35, 1
      %s37 = scalar_select %p34, %s35, %s36
      %p40 = pneg %p34
      %p41 = scmp.eq.s32.totalorder %s25, 1
      %p42 = por %p40, %p41
      %p43 = scmp.ne.s32.totalorder %s35, %s38
      %p44 = scmp.eq.s32.totalorder %s25, 0
      %p45 = por %p43, %p44
      %p46 = scmp.ne.s32.totalorder %s35, %s38
      %p47 = scmp.eq.s32.totalorder %s30, 1
      %p48 = por %p46, %p47
      %p49 = scmp.ne.s32.totalorder %s38, %s39
      %p50 = scmp.eq.s32.totalorder %s30, 0
      %p51 = por %p49, %p50
      %p52 = scmp.ne.s32.totalorder %s38, %s39
      %p53 = scmp.eq.s32.totalorder %s31, 1
      %p54 = por %p52, %p53
      %p56 = scmp.ne.s32.totalorder %s39, %s55
      %p57 = scmp.eq.s32.totalorder %s31, 0
      %p58 = por %p56, %p57
      %s59 = ssub.s32 %s25, %s32
      %p60 = scmp.eq.s32.totalorder %s59, 0
      %s62 = sadd.s32 %s61, 1
      %s63 = scalar_select %p60, %s61, %s62
      %p66 = pneg %p60
      %p67 = scmp.eq.s32.totalorder %s25, 1
      %p68 = por %p66, %p67
      %p69 = scmp.ne.s32.totalorder %s61, %s64
      %p70 = scmp.eq.s32.totalorder %s25, 0
      %p71 = por %p69, %p70
      %p72 = scmp.ne.s32.totalorder %s61, %s64
      %p73 = scmp.eq.s32.totalorder %s30, 1
      %p74 = por %p72, %p73
      %p75 = scmp.ne.s32.totalorder %s64, %s65
      %p76 = scmp.eq.s32.totalorder %s30, 0
      %p77 = por %p75, %p76
      %p78 = scmp.ne.s32.totalorder %s64, %s65
      %p79 = scmp.eq.s32.totalorder %s31, 1
      %p80 = por %p78, %p79
      %p82 = scmp.ne.s32.totalorder %s65, %s81
      %p83 = scmp.eq.s32.totalorder %s31, 0
      %p84 = por %p82, %p83
      %s85 = ssub.s32 %s25, %s32
      %p86 = scmp.eq.s32.totalorder %s85, 0
      %s88 = sadd.s32 %s87, 1
      %s89 = scalar_select %p86, %s87, %s88
      %p92 = pneg %p86
      %p93 = scmp.eq.s32.totalorder %s25, 1
      %p94 = por %p92, %p93
      %p95 = scmp.ne.s32.totalorder %s87, %s90
      %p96 = scmp.eq.s32.totalorder %s25, 0
      %p97 = por %p95, %p96
      %p98 = scmp.ne.s32.totalorder %s87, %s90
      %p99 = scmp.eq.s32.totalorder %s30, 1
      %p100 = por %p98, %p99
      %p101 = scmp.ne.s32.totalorder %s90, %s91
      %p102 = scmp.eq.s32.totalorder %s30, 0
      %p103 = por %p101, %p102
      %p104 = scmp.ne.s32.totalorder %s90, %s91
      %p105 = scmp.eq.s32.totalorder %s31, 1
      %p106 = por %p104, %p105
      %p108 = scmp.ne.s32.totalorder %s91, %s107
      %p109 = scmp.eq.s32.totalorder %s31, 0
      %p110 = por %p108, %p109
      %s111 = ssub.s32 %s25, %s32
      %p112 = scmp.eq.s32.totalorder %s111, 0
      %s114 = sadd.s32 %s113, 1
      %s115 = scalar_select %p112, %s113, %s114
      %p118 = pneg %p112
      %p119 = scmp.eq.s32.totalorder %s25, 1
      %p120 = por %p118, %p119
      %p121 = scmp.ne.s32.totalorder %s113, %s116
      %p122 = scmp.eq.s32.totalorder %s25, 0
      %p123 = por %p121, %p122
      %p124 = scmp.ne.s32.totalorder %s113, %s116
      %p125 = scmp.eq.s32.totalorder %s30, 1
      %p126 = por %p124, %p125
      %p127 = scmp.ne.s32.totalorder %s116, %s117
      %p128 = scmp.eq.s32.totalorder %s30, 0
      %p129 = por %p127, %p128
      %p130 = scmp.ne.s32.totalorder %s116, %s117
      %p131 = scmp.eq.s32.totalorder %s31, 1
      %p132 = por %p130, %p131
      %p134 = scmp.ne.s32.totalorder %s117, %s133
      %p135 = scmp.eq.s32.totalorder %s31, 0
      %p136 = por %p134, %p135
      %s137 = ssub.s32 %s25, %s32
      %p138 = scmp.eq.s32.totalorder %s137, 0
      %s140 = sadd.s32 %s139, 1
      %s141 = scalar_select %p138, %s139, %s140
      %p144 = pneg %p138
      %p145 = scmp.eq.s32.totalorder %s25, 1
      %p146 = por %p144, %p145
      %p147 = scmp.ne.s32.totalorder %s139, %s142
      %p148 = scmp.eq.s32.totalorder %s25, 0
      %p149 = por %p147, %p148
      %p150 = scmp.ne.s32.totalorder %s139, %s142
      %p151 = scmp.eq.s32.totalorder %s30, 1
      %p152 = por %p150, %p151
      %p153 = scmp.ne.s32.totalorder %s142, %s143
      %p154 = scmp.eq.s32.totalorder %s30, 0
      %p155 = por %p153, %p154
      %p156 = scmp.ne.s32.totalorder %s142, %s143
      %p157 = scmp.eq.s32.totalorder %s31, 1
      %p158 = por %p156, %p157
      %p160 = scmp.ne.s32.totalorder %s143, %s159
      %p161 = scmp.eq.s32.totalorder %s31, 0
      %p162 = por %p160, %p161
      %s164 = sadd.s32 %s163, 1
      %p167 = scmp.eq.s32.totalorder %s25, 1
      %p168 = scmp.ne.s32.totalorder %s163, %s165
      %p169 = scmp.eq.s32.totalorder %s25, 0
      %p170 = por %p168, %p169
      %p171 = scmp.ne.s32.totalorder %s163, %s165
      %p172 = scmp.eq.s32.totalorder %s30, 1
      %p173 = por %p171, %p172
      %p174 = scmp.ne.s32.totalorder %s165, %s166
      %p175 = scmp.eq.s32.totalorder %s30, 0
      %p176 = por %p174, %p175
      %p177 = scmp.ne.s32.totalorder %s165, %s166
      %p178 = scmp.eq.s32.totalorder %s31, 1
      %p179 = por %p177, %p178
      %p181 = scmp.ne.s32.totalorder %s166, %s180
      %p182 = scmp.eq.s32.totalorder %s31, 0
      %p183 = por %p181, %p182
      %s185 = sadd.s32 %s184, 1
      %p188 = scmp.eq.s32.totalorder %s25, 1
      %p189 = scmp.ne.s32.totalorder %s184, %s186
      %p190 = scmp.eq.s32.totalorder %s25, 0
      %p191 = por %p189, %p190
      %p192 = scmp.ne.s32.totalorder %s184, %s186
      %p193 = scmp.eq.s32.totalorder %s30, 1
      %p194 = por %p192, %p193
      %p195 = scmp.ne.s32.totalorder %s186, %s187
      %p196 = scmp.eq.s32.totalorder %s30, 0
      %p197 = por %p195, %p196
      %p198 = scmp.ne.s32.totalorder %s186, %s187
      %p199 = scmp.eq.s32.totalorder %s31, 1
      %p200 = por %p198, %p199
      %p202 = scmp.ne.s32.totalorder %s187, %s201
      %p203 = scmp.eq.s32.totalorder %s31, 0
      %p204 = por %p202, %p203
      %s206 = sadd.s32 %s205, 1
      %p209 = scmp.eq.s32.totalorder %s25, 1
      %p210 = scmp.ne.s32.totalorder %s205, %s207
      %p211 = scmp.eq.s32.totalorder %s25, 0
      %p212 = por %p210, %p211
      %p213 = scmp.ne.s32.totalorder %s205, %s207
      %p214 = scmp.eq.s32.totalorder %s30, 1
      %p215 = por %p213, %p214
      %p216 = scmp.ne.s32.totalorder %s207, %s208
      %p217 = scmp.eq.s32.totalorder %s30, 0
      %p218 = por %p216, %p217
      %p219 = scmp.ne.s32.totalorder %s207, %s208
      %p220 = scmp.eq.s32.totalorder %s31, 1
      %p221 = por %p219, %p220
      %p223 = scmp.ne.s32.totalorder %s208, %s222
      %p224 = scmp.eq.s32.totalorder %s31, 0
      %p225 = por %p223, %p224
      %s227 = sadd.s32 %s226, 1
      %p230 = scmp.eq.s32.totalorder %s25, 1
      %p231 = scmp.ne.s32.totalorder %s226, %s228
      %p232 = scmp.eq.s32.totalorder %s25, 0
      %p233 = por %p231, %p232
      %p234 = scmp.ne.s32.totalorder %s226, %s228
      %p235 = scmp.eq.s32.totalorder %s30, 1
      %p236 = por %p234, %p235
      %p237 = scmp.ne.s32.totalorder %s228, %s229
      %p238 = scmp.eq.s32.totalorder %s30, 0
      %p239 = por %p237, %p238
      %p240 = scmp.ne.s32.totalorder %s228, %s229
      %p241 = scmp.eq.s32.totalorder %s31, 1
      %p242 = por %p240, %p241
      %p244 = scmp.ne.s32.totalorder %s229, %s243
      %p245 = scmp.eq.s32.totalorder %s31, 0
      %p246 = por %p244, %p245
      %s248 = sadd.s32 %s247, 1
      %p251 = scmp.eq.s32.totalorder %s25, 1
      %p252 = scmp.ne.s32.totalorder %s247, %s249
      %p253 = scmp.eq.s32.totalorder %s25, 0
      %p254 = por %p252, %p253
      %p255 = scmp.ne.s32.totalorder %s247, %s249
      %p256 = scmp.eq.s32.totalorder %s30, 1
      %p257 = por %p255, %p256
      %p258 = scmp.ne.s32.totalorder %s249, %s250
      %p259 = scmp.eq.s32.totalorder %s30, 0
      %p260 = por %p258, %p259
      %p261 = scmp.ne.s32.totalorder %s249, %s250
      %p262 = scmp.eq.s32.totalorder %s31, 1
      %p263 = por %p261, %p262
      %p265 = scmp.ne.s32.totalorder %s250, %s264
      %p266 = scmp.eq.s32.totalorder %s31, 0
      %p267 = por %p265, %p266
      %s269 = sadd.s32 %s268, 1
      %p272 = scmp.eq.s32.totalorder %s25, 1
      %p273 = scmp.ne.s32.totalorder %s268, %s270
      %p274 = scmp.eq.s32.totalorder %s25, 0
      %p275 = por %p273, %p274
      %p276 = scmp.ne.s32.totalorder %s268, %s270
      %p277 = scmp.eq.s32.totalorder %s30, 1
      %p278 = por %p276, %p277
      %p279 = scmp.ne.s32.totalorder %s270, %s271
      %p280 = scmp.eq.s32.totalorder %s30, 0
      %p281 = por %p279, %p280
      %p282 = scmp.ne.s32.totalorder %s270, %s271
      %p283 = scmp.eq.s32.totalorder %s31, 1
      %p284 = por %p282, %p283
      %p286 = scmp.ne.s32.totalorder %s271, %s285
      %p287 = scmp.eq.s32.totalorder %s31, 0
      %p288 = por %p286, %p287
      %s289 = ssub.s32 %s25, %s32
      %p290 = scmp.eq.s32.totalorder %s289, 0
      %s292 = sadd.s32 %s291, 1
      %s293 = scalar_select %p290, %s291, %s292
      %p296 = pneg %p290
      %p297 = scmp.eq.s32.totalorder %s25, 1
      %p298 = por %p296, %p297
      %p299 = scmp.ne.s32.totalorder %s291, %s294
      %p300 = scmp.eq.s32.totalorder %s25, 0
      %p301 = por %p299, %p300
      %p302 = scmp.ne.s32.totalorder %s291, %s294
      %p303 = scmp.eq.s32.totalorder %s30, 1
      %p304 = por %p302, %p303
      %p305 = scmp.ne.s32.totalorder %s294, %s295
      %p306 = scmp.eq.s32.totalorder %s30, 0
      %p307 = por %p305, %p306
      %p308 = scmp.ne.s32.totalorder %s294, %s295
      %p309 = scmp.eq.s32.totalorder %s31, 1
      %p310 = por %p308, %p309
      %p312 = scmp.ne.s32.totalorder %s295, %s311
      %p313 = scmp.eq.s32.totalorder %s31, 0
      %p314 = por %p312, %p313
      %s315 = ssub.s32 %s25, %s32
      %p316 = scmp.eq.s32.totalorder %s315, 0
      %s318 = sadd.s32 %s317, 1
      %s319 = scalar_select %p316, %s317, %s318
      %p322 = pneg %p316
      %p323 = scmp.eq.s32.totalorder %s25, 1
      %p324 = por %p322, %p323
      %p325 = scmp.ne.s32.totalorder %s317, %s320
      %p326 = scmp.eq.s32.totalorder %s25, 0
      %p327 = por %p325, %p326
      %p328 = scmp.ne.s32.totalorder %s317, %s320
      %p329 = scmp.eq.s32.totalorder %s30, 1
      %p330 = por %p328, %p329
      %p331 = scmp.ne.s32.totalorder %s320, %s321
      %p332 = scmp.eq.s32.totalorder %s30, 0
      %p333 = por %p331, %p332
      %p334 = scmp.ne.s32.totalorder %s320, %s321
      %p335 = scmp.eq.s32.totalorder %s31, 1
      %p336 = por %p334, %p335
      %p338 = scmp.ne.s32.totalorder %s321, %s337
      %p339 = scmp.eq.s32.totalorder %s31, 0
      %p340 = por %p338, %p339
      %p341 = scmp.le.s32.totalorder 1, %s25
      %p342 = scmp.lt.s32.totalorder %s25, 3
      %p343 = pnand %p341, %p342
      %p344 = pneg %p343
      // Predicated region
      $region9: #{hierarchical_attn.1} parent=5 // pred_check
        _
      $region10: #{hierarchical_attn.1} parent=5 // pred_check_branch
        %346 = sbr.rel (%p343) target = $region12
      $region11: #{hierarchical_attn.1} parent=5 // pred_region
        %s347 = ssub.s32 %s25, 1
        // Predicated region
        $region13: #{hierarchical_attn.1} parent=11 // pred_check
          %p348 = pneg %p176
        $region14: #{hierarchical_attn.1} parent=11 // pred_check_branch
          %350 = sbr.rel (%p348) target = $region16
        $region15: #{hierarchical_attn.1} parent=11 // pred_region
          _
        $region16: #{hierarchical_attn.1} parent=11 // pred_fallthru
          _
        // Predicated region
        $region17: #{hierarchical_attn.1} parent=11 // pred_check
          %p351 = pneg %p197
        $region18: #{hierarchical_attn.1} parent=11 // pred_check_branch
          %353 = sbr.rel (%p351) target = $region20
        $region19: #{hierarchical_attn.1} parent=11 // pred_region
          _
        $region20: #{hierarchical_attn.1} parent=11 // pred_fallthru
          _
        // Predicated region
        $region21: #{hierarchical_attn.1} parent=11 // pred_check
          %p354 = pneg %p218
        $region22: #{hierarchical_attn.1} parent=11 // pred_check_branch
          %356 = sbr.rel (%p354) target = $region24
        $region23: #{hierarchical_attn.1} parent=11 // pred_region
          _
        $region24: #{hierarchical_attn.1} parent=11 // pred_fallthru
          _
        // Predicated region
        $region25: #{hierarchical_attn.1} parent=11 // pred_check
          %p357 = pneg %p239
        $region26: #{hierarchical_attn.1} parent=11 // pred_check_branch
          %359 = sbr.rel (%p357) target = $region28
        $region27: #{hierarchical_attn.1} parent=11 // pred_region
          _
        $region28: #{hierarchical_attn.1} parent=11 // pred_fallthru
          _
        // Predicated region
        $region29: #{hierarchical_attn.1} parent=11 // pred_check
          %p360 = pneg %p260
        $region30: #{hierarchical_attn.1} parent=11 // pred_check_branch
          %362 = sbr.rel (%p360) target = $region32
        $region31: #{hierarchical_attn.1} parent=11 // pred_region
          _
        $region32: #{hierarchical_attn.1} parent=11 // pred_fallthru
          _
        // Predicated region
        $region33: #{hierarchical_attn.1} parent=11 // pred_check
          %p363 = pneg %p281
        $region34: #{hierarchical_attn.1} parent=11 // pred_check_branch
          %365 = sbr.rel (%p363) target = $region36
        $region35: #{hierarchical_attn.1} parent=11 // pred_region
          _
        $region36: #{hierarchical_attn.1} parent=11 // pred_fallthru
          _
      $region12: #{hierarchical_attn.1} parent=5 // pred_fallthru
        _
      %p366 = scmp.lt.s32.totalorder %s25, 2
      // Predicated region
      $region37: #{hierarchical_attn.1} parent=5 // pred_check
        %p367 = pneg %p366
      $region38: #{hierarchical_attn.1} parent=5 // pred_check_branch
        %369 = sbr.rel (%p367) target = $region40
      $region39: #{hierarchical_attn.1} parent=5 // pred_region
        // Predicated region
        $region41: #{hierarchical_attn.1} parent=39 // pred_check
          %p370 = pneg %p45
        $region42: #{hierarchical_attn.1} parent=39 // pred_check_branch
          %372 = sbr.rel (%p370) target = $region44
        $region43: #{hierarchical_attn.1} parent=39 // pred_region
          %p373 = scmp.lt.s32.totalorder %s25, 1
          %s374 = scalar_select %p373, %s25, 1
          %s375 = smul.addr %s374, 8
          %s376 = scalar_lea.vmem %s0, %s375
        $region44: #{hierarchical_attn.1} parent=39 // pred_fallthru
          _
        // Predicated region
        $region45: #{hierarchical_attn.1} parent=39 // pred_check
          %p377 = pneg %p71
        $region46: #{hierarchical_attn.1} parent=39 // pred_check_branch
          %379 = sbr.rel (%p377) target = $region48
        $region47: #{hierarchical_attn.1} parent=39 // pred_region
          %p380 = scmp.lt.s32.totalorder %s25, 1
          %s381 = scalar_select %p380, %s25, 1
          %s382 = smul.addr %s381, 2
          %s383 = smul.addr %s382, 8
          %s384 = scalar_lea.vmem %s1, %s383
        $region48: #{hierarchical_attn.1} parent=39 // pred_fallthru
          _
        // Predicated region
        $region49: #{hierarchical_attn.1} parent=39 // pred_check
          %p385 = pneg %p97
        $region50: #{hierarchical_attn.1} parent=39 // pred_check_branch
          %387 = sbr.rel (%p385) target = $region52
        $region51: #{hierarchical_attn.1} parent=39 // pred_region
          %p388 = scmp.lt.s32.totalorder %s25, 1
          %s389 = scalar_select %p388, %s25, 1
          %s390 = smul.addr %s389, 8
          %s391 = scalar_lea.vmem %s2, %s390
        $region52: #{hierarchical_attn.1} parent=39 // pred_fallthru
          _
        // Predicated region
        $region53: #{hierarchical_attn.1} parent=39 // pred_check
          %p392 = pneg %p123
        $region54: #{hierarchical_attn.1} parent=39 // pred_check_branch
          %394 = sbr.rel (%p392) target = $region56
        $region55: #{hierarchical_attn.1} parent=39 // pred_region
          %p395 = scmp.lt.s32.totalorder %s25, 1
          %s396 = scalar_select %p395, %s25, 1
          %s397 = smul.addr %s396, 4
          %s398 = scalar_lea.vmem %s3, %s397
        $region56: #{hierarchical_attn.1} parent=39 // pred_fallthru
          _
        // Predicated region
        $region57: #{hierarchical_attn.1} parent=39 // pred_check
          %p399 = pneg %p149
        $region58: #{hierarchical_attn.1} parent=39 // pred_check_branch
          %401 = sbr.rel (%p399) target = $region60
        $region59: #{hierarchical_attn.1} parent=39 // pred_region
          %p402 = scmp.lt.s32.totalorder %s25, 1
          %s403 = scalar_select %p402, %s25, 1
          %s404 = smul.addr %s403, 4
          %s405 = scalar_lea.vmem %s4, %s404
        $region60: #{hierarchical_attn.1} parent=39 // pred_fallthru
          _
      $region40: #{hierarchical_attn.1} parent=5 // pred_fallthru
        _
      %p406 = scmp.le.s32.totalorder 1, %s25
      %p407 = scmp.lt.s32.totalorder %s25, 3
      %p408 = pnand %p406, %p407
      %p409 = pneg %p408
      // Predicated region
      $region61: #{hierarchical_attn.1} parent=5 // pred_check
        _
      $region62: #{hierarchical_attn.1} parent=5 // pred_check_branch
        %411 = sbr.rel (%p408) target = $region64
      $region63: #{hierarchical_attn.1} parent=5 // pred_region
        %s412 = ssub.s32 %s25, 1
        %p413 = scmp.lt.s32.totalorder %s30, 1
        %s414 = scalar_select %p413, %s30, 1
        %s415 = smul.addr %s414, 8
        %s416 = scalar_lea.vmem %s0, %s415
        %p417 = pneg %p51
        %p418 = pneg %p48
        %p419 = scmp.lt.s32.totalorder %s30, 1
        %s420 = scalar_select %p419, %s30, 1
        %s421 = smul.addr %s420, 2
        %s422 = smul.addr %s421, 8
        %s423 = scalar_lea.vmem %s1, %s422
        %p424 = pneg %p77
        %p425 = pneg %p74
        %p426 = scmp.lt.s32.totalorder %s30, 1
        %s427 = scalar_select %p426, %s30, 1
        %s428 = smul.addr %s427, 8
        %s429 = scalar_lea.vmem %s2, %s428
        %p430 = pneg %p103
        %p431 = pneg %p100
        %p432 = scmp.lt.s32.totalorder %s30, 1
        %s433 = scalar_select %p432, %s30, 1
        %s434 = smul.addr %s433, 4
        %s435 = scalar_lea.vmem %s3, %s434
        %p436 = pneg %p129
        %p437 = pneg %p126
        %p438 = scmp.lt.s32.totalorder %s30, 1
        %s439 = scalar_select %p438, %s30, 1
        %s440 = smul.addr %s439, 4
        %s441 = scalar_lea.vmem %s4, %s440
        %p442 = pneg %p155
        %p443 = pneg %p152
        %p444 = pneg %p176
        %p445 = pneg %p173
        %p446 = pneg %p197
        %p447 = pneg %p194
        %p448 = pneg %p218
        %p449 = pneg %p215
        %p450 = pneg %p239
        %p451 = pneg %p236
        %p452 = pneg %p260
        %p453 = pneg %p257
        %p454 = pneg %p281
        %p455 = pneg %p278
        %p456 = pneg %p307
        %p457 = pneg %p304
        %s458 = sand.u32 %s294, 1
        %s459 = scalar_lea.sflag [#allocation3], %s458
        %s460 = sand.u32 %s294, 1
        %s461 = smul.addr %s460, 8
        %s462 = scalar_lea.vmem [#allocation2], %s461
        %p463 = pneg %p333
        %p464 = pneg %p330
        %s465 = sand.u32 %s320, 1
        %s466 = scalar_lea.sflag [#allocation5], %s465
        %s467 = sand.u32 %s320, 1
        %s468 = smul.addr %s467, 8
        %s469 = scalar_lea.vmem [#allocation4], %s468
        %p470 = scmp.lt.s32.totalorder %s30, 1
        %s471 = scalar_select %p470, %s30, 1
        %s472 = smul.addr %s471, 8
        %s473 = scalar_lea.vmem %s0, %s472
        %p474 = scmp.lt.s32.totalorder %s30, 1
        %s475 = scalar_select %p474, %s30, 1
        %s476 = smul.addr %s475, 2
        %s477 = smul.addr %s476, 8
        %s478 = scalar_lea.vmem %s1, %s477
        %p479 = scmp.lt.s32.totalorder %s30, 1
        %s480 = scalar_select %p479, %s30, 1
        %s481 = smul.addr %s480, 8
        %s482 = scalar_lea.vmem %s2, %s481
        %p483 = scmp.lt.s32.totalorder %s30, 1
        %s484 = scalar_select %p483, %s30, 1
        %s485 = smul.addr %s484, 4
        %s486 = scalar_lea.vmem %s3, %s485
        %p487 = scmp.lt.s32.totalorder %s30, 1
        %s488 = scalar_select %p487, %s30, 1
        %s489 = smul.addr %s488, 4
        %s490 = scalar_lea.vmem %s4, %s489
        %v491 = vld [vmem:[%s473] sm:$0xff]
        %v492 = vld [vmem:[%s5] sm:$0xff]
        %v493 = vld [vmem:[%s5 + $0x8] sm:$0xff]
        %v494 = vld [vmem:[%s5 + $0x10] sm:$0xff]
        %v495 = vld [vmem:[%s5 + $0x18] sm:$0xff]
        %v496 = vld [vmem:[%s5 + $0x20] sm:$0xff]
        %v497 = vld [vmem:[%s5 + $0x28] sm:$0xff]
        %v498 = vld [vmem:[%s5 + $0x30] sm:$0xff]
        %v499 = vld [vmem:[%s5 + $0x38] sm:$0xff]
        %v500 = vld [vmem:[%s5 + $0x40] sm:$0xff]
        %v501 = vld [vmem:[%s5 + $0x48] sm:$0xff]
        %v502 = vld [vmem:[%s5 + $0x50] sm:$0xff]
        %v503 = vld [vmem:[%s5 + $0x58] sm:$0xff]
        %v504 = vld [vmem:[%s6] sm:$0x7]
        %v506 = vlaneseq
        %v507 = vshrl.u32 %v506, 7
        %v508 = vsub.s32 0, %v507
        %v509 = vrot.slane %v504, %v508
        %v510 = vlaneseq
        %v511 = vshrl.u32 %v510, 7
        %v512 = vsub.s32 1, %v511
        %v513 = vrot.slane %v504, %v512
        %v514 = vlaneseq
        %v515 = vshrl.u32 %v514, 7
        %v516 = vsub.s32 2, %v515
        %v517 = vrot.slane %v504, %v516
        %vm521 = vcmask 261120
        %v523 = vsel %vm521, %v491, 0
        %525 = vmatprep.subr.mxu0 0.0
        %526 = vmatpush1.msra.mxu0 0.0
        %527 = vmatprep.subr.mxu0 0.0
        %528 = vmatpush1.msra.mxu0 0.0
        %529 = vmatprep.subr.mxu0 0.0
        %530 = vmatpush1.msra.mxu0 0.0
        %531 = vmatprep.subr.mxu0 0.0
        %532 = vmatpush1.msra.mxu0 0.0
        %533 = vmatprep.subr.mxu0 0.0
        %534 = vmatpush1.msra.mxu0 0.0
        %535 = vmatprep.subr.mxu0 0.0
        %536 = vmatpush1.msra.mxu0 0.0
        %537 = vmatprep.subr.mxu0 0.0
        %538 = vmatpush1.msra.mxu0 0.0
        %539 = vmatprep.subr.mxu0 0.0
        %540 = vmatpush1.msra.mxu0 0.0
        %541 = vmatprep.subr.mxu0 0.0
        %542 = vmatpush1.msra.mxu0 0.0
        %543 = vmatprep.subr.mxu0 0.0
        %544 = vmatpush1.msra.mxu0 0.0
        %545 = vmatprep.subr.mxu0 0.0
        %546 = vmatpush1.msra.mxu0 0.0
        %547 = vmatprep.subr.mxu0 0.0
        %548 = vmatpush1.msra.mxu0 0.0
        %549 = vmatprep.subr.mxu0 %v502
        %550 = vmatpush1.msra.mxu0 %v501
        %551 = vmatprep.subr.mxu0 %v499
        %552 = vmatpush1.msra.mxu0 %v498
        %553 = vmatprep.subr.mxu0 %v496
        %554 = vmatpush1.msra.mxu0 %v495
        %555 = vmatprep.subr.mxu0 %v493
        %556 = vmatpush1.msra.mxu0 %v492
        %557 = vmatprep.subr.mxu0 0.0
        %558 = vmatpush2.msra.mxu0 0.0
        %559 = vmatprep.subr.mxu0 0.0
        %560 = vmatpush2.msra.mxu0 0.0
        %561 = vmatprep.subr.mxu0 0.0
        %562 = vmatpush2.msra.mxu0 0.0
        %563 = vmatprep.subr.mxu0 0.0
        %564 = vmatpush2.msra.mxu0 0.0
        %565 = vmatprep.subr.mxu0 0.0
        %566 = vmatpush2.msra.mxu0 0.0
        %567 = vmatprep.subr.mxu0 0.0
        %568 = vmatpush2.msra.mxu0 0.0
        %569 = vmatprep.subr.mxu0 0.0
        %570 = vmatpush2.msra.mxu0 0.0
        %571 = vmatprep.subr.mxu0 0.0
        %572 = vmatpush2.msra.mxu0 0.0
        %573 = vmatprep.subr.mxu0 0.0
        %574 = vmatpush2.msra.mxu0 0.0
        %575 = vmatprep.subr.mxu0 0.0
        %576 = vmatpush2.msra.mxu0 0.0
        %577 = vmatprep.subr.mxu0 0.0
        %578 = vmatpush2.msra.mxu0 0.0
        %579 = vmatprep.subr.mxu0 0.0
        %580 = vmatpush2.msra.mxu0 0.0
        %581 = vmatprep.subr.mxu0 0.0
        %582 = vmatpush2.msra.mxu0 0.0
        %583 = vmatprep.subr.mxu0 0.0
        %584 = vmatpush2.msra.mxu0 0.0
        %585 = vmatprep.subr.mxu0 0.0
        %586 = vmatpush2.msra.mxu0 0.0
        %587 = vmatprep.subr.mxu0 0.0
        %588 = vmatpush2.msra.mxu0 0.0
        %589 = vmatprep.mubr.f32.mxu0 0.0
        %590 = vmatmul.mubr.f32.gmra.mxu0 %v523
        %v591 = vpop.f32.mrf.mxu0
        %v592 = vadd.f32 %v509, %v591
        %v593 = vpop.f32.mrf.mxu0
        %v594 = vadd.f32 %v513, %v593
        %595 = vdwg.mxu0
        %596 = vmatprep.subr.mxu0 0.0
        %597 = vmatpush1.msra.mxu0 0.0
        %598 = vmatprep.subr.mxu0 0.0
        %599 = vmatpush1.msra.mxu0 0.0
        %600 = vmatprep.subr.mxu0 0.0
        %601 = vmatpush1.msra.mxu0 0.0
        %602 = vmatprep.subr.mxu0 0.0
        %603 = vmatpush1.msra.mxu0 0.0
        %604 = vmatprep.subr.mxu0 0.0
        %605 = vmatpush1.msra.mxu0 0.0
        %606 = vmatprep.subr.mxu0 0.0
        %607 = vmatpush1.msra.mxu0 0.0
        %608 = vmatprep.subr.mxu0 0.0
        %609 = vmatpush1.msra.mxu0 0.0
        %610 = vmatprep.subr.mxu0 0.0
        %611 = vmatpush1.msra.mxu0 0.0
        %612 = vmatprep.subr.mxu0 0.0
        %613 = vmatpush1.msra.mxu0 0.0
        %614 = vmatprep.subr.mxu0 0.0
        %615 = vmatpush1.msra.mxu0 0.0
        %616 = vmatprep.subr.mxu0 0.0
        %617 = vmatpush1.msra.mxu0 0.0
        %618 = vmatprep.subr.mxu0 0.0
        %619 = vmatpush1.msra.mxu0 0.0
        %620 = vmatprep.subr.mxu0 0.0
        %621 = vmatpush1.msra.mxu0 %v503
        %622 = vmatprep.subr.mxu0 0.0
        %623 = vmatpush1.msra.mxu0 %v500
        %624 = vmatprep.subr.mxu0 0.0
        %625 = vmatpush1.msra.mxu0 %v497
        %626 = vmatprep.subr.mxu0 0.0
        %627 = vmatpush1.msra.mxu0 %v494
        %628 = vmatprep.subr.mxu0 0.0
        %629 = vmatpush2.msra.mxu0 0.0
        %630 = vmatprep.subr.mxu0 0.0
        %631 = vmatpush2.msra.mxu0 0.0
        %632 = vmatprep.subr.mxu0 0.0
        %633 = vmatpush2.msra.mxu0 0.0
        %634 = vmatprep.subr.mxu0 0.0
        %635 = vmatpush2.msra.mxu0 0.0
        %636 = vmatprep.subr.mxu0 0.0
        %637 = vmatpush2.msra.mxu0 0.0
        %638 = vmatprep.subr.mxu0 0.0
        %639 = vmatpush2.msra.mxu0 0.0
        %640 = vmatprep.subr.mxu0 0.0
        %641 = vmatpush2.msra.mxu0 0.0
        %642 = vmatprep.subr.mxu0 0.0
        %643 = vmatpush2.msra.mxu0 0.0
        %644 = vmatprep.subr.mxu0 0.0
        %645 = vmatpush2.msra.mxu0 0.0
        %646 = vmatprep.subr.mxu0 0.0
        %647 = vmatpush2.msra.mxu0 0.0
        %648 = vmatprep.subr.mxu0 0.0
        %649 = vmatpush2.msra.mxu0 0.0
        %650 = vmatprep.subr.mxu0 0.0
        %651 = vmatpush2.msra.mxu0 0.0
        %652 = vmatprep.subr.mxu0 0.0
        %653 = vmatpush2.msra.mxu0 0.0
        %654 = vmatprep.subr.mxu0 0.0
        %655 = vmatpush2.msra.mxu0 0.0
        %656 = vmatprep.subr.mxu0 0.0
        %657 = vmatpush2.msra.mxu0 0.0
        %658 = vmatprep.subr.mxu0 0.0
        %659 = vmatpush2.msra.mxu0 0.0
        %660 = vmatprep.mubr.f32.mxu0 0.0
        %661 = vmatmul.mubr.f32.gmra.mxu0 %v523
        %v662 = vpop.f32.mrf.mxu0
        %v663 = vadd.f32 %v517, %v662
        %v664 = vpop.f32.mrf.mxu0
        %665 = vdwg.mxu0
        %v666 = vmul.f32 %v592, 0.25
        %v667 = vmul.f32 %v594, 0.25
        %v668 = vmul.f32 %v663, 0.25
        %v669 = vld [vmem:[%s478] sm:$0xff]
        %v670 = vld [vmem:[%s478 + $0x8] sm:$0x7f]
        %v671 = vld [vmem:[%s7] sm:$0xff]
        %v672 = vld [vmem:[%s7 + $0x8] sm:$0xff]
        %v673 = vld [vmem:[%s7 + $0x10] sm:$0xff]
        %v674 = vld [vmem:[%s7 + $0x18] sm:$0xff]
        %v675 = vld [vmem:[%s8] sm:$0x1]
        %v677 = vlaneseq
        %v678 = vshrl.u32 %v677, 7
        %v679 = vsub.s32 0, %v678
        %v680 = vrot.slane %v675, %v679
        %v683 = vsel %vm521, %v669, 0
        %v686 = vsel %vm521, %v670, 0
        %688 = vmatprep.subr.mxu0 0.0
        %689 = vmatpush1.msra.mxu0 0.0
        %690 = vmatprep.subr.mxu0 0.0
        %691 = vmatpush1.msra.mxu0 0.0
        %692 = vmatprep.subr.mxu0 0.0
        %693 = vmatpush1.msra.mxu0 0.0
        %694 = vmatprep.subr.mxu0 0.0
        %695 = vmatpush1.msra.mxu0 0.0
        %696 = vmatprep.subr.mxu0 0.0
        %697 = vmatpush1.msra.mxu0 0.0
        %698 = vmatprep.subr.mxu0 0.0
        %699 = vmatpush1.msra.mxu0 0.0
        %700 = vmatprep.subr.mxu0 0.0
        %701 = vmatpush1.msra.mxu0 0.0
        %702 = vmatprep.subr.mxu0 0.0
        %703 = vmatpush1.msra.mxu0 0.0
        %704 = vmatprep.subr.mxu0 0.0
        %705 = vmatpush1.msra.mxu0 0.0
        %706 = vmatprep.subr.mxu0 0.0
        %707 = vmatpush1.msra.mxu0 0.0
        %708 = vmatprep.subr.mxu0 0.0
        %709 = vmatpush1.msra.mxu0 0.0
        %710 = vmatprep.subr.mxu0 0.0
        %711 = vmatpush1.msra.mxu0 0.0
        %712 = vmatprep.subr.mxu0 0.0
        %713 = vmatpush1.msra.mxu0 %v674
        %714 = vmatprep.subr.mxu0 0.0
        %715 = vmatpush1.msra.mxu0 %v673
        %716 = vmatprep.subr.mxu0 0.0
        %717 = vmatpush1.msra.mxu0 %v672
        %718 = vmatprep.subr.mxu0 0.0
        %719 = vmatpush1.msra.mxu0 %v671
        %720 = vmatprep.subr.mxu0 0.0
        %721 = vmatpush2.msra.mxu0 0.0
        %722 = vmatprep.subr.mxu0 0.0
        %723 = vmatpush2.msra.mxu0 0.0
        %724 = vmatprep.subr.mxu0 0.0
        %725 = vmatpush2.msra.mxu0 0.0
        %726 = vmatprep.subr.mxu0 0.0
        %727 = vmatpush2.msra.mxu0 0.0
        %728 = vmatprep.subr.mxu0 0.0
        %729 = vmatpush2.msra.mxu0 0.0
        %730 = vmatprep.subr.mxu0 0.0
        %731 = vmatpush2.msra.mxu0 0.0
        %732 = vmatprep.subr.mxu0 0.0
        %733 = vmatpush2.msra.mxu0 0.0
        %734 = vmatprep.subr.mxu0 0.0
        %735 = vmatpush2.msra.mxu0 0.0
        %736 = vmatprep.subr.mxu0 0.0
        %737 = vmatpush2.msra.mxu0 0.0
        %738 = vmatprep.subr.mxu0 0.0
        %739 = vmatpush2.msra.mxu0 0.0
        %740 = vmatprep.subr.mxu0 0.0
        %741 = vmatpush2.msra.mxu0 0.0
        %742 = vmatprep.subr.mxu0 0.0
        %743 = vmatpush2.msra.mxu0 0.0
        %744 = vmatprep.subr.mxu0 0.0
        %745 = vmatpush2.msra.mxu0 0.0
        %746 = vmatprep.subr.mxu0 0.0
        %747 = vmatpush2.msra.mxu0 0.0
        %748 = vmatprep.subr.mxu0 0.0
        %749 = vmatpush2.msra.mxu0 0.0
        %750 = vmatprep.subr.mxu0 0.0
        %751 = vmatpush2.msra.mxu0 0.0
        %752 = vmatprep.mubr.f32.mxu0 0.0
        %753 = vmatmul.mubr.f32.gmra.mxu0 %v683
        %v754 = vpop.f32.mrf.mxu0
        %v755 = vadd.f32 %v680, %v754
        %v756 = vpop.f32.mrf.mxu0
        %757 = vmatprep.mubr.f32.mxu0 0.0
        %758 = vmatmul.mubr.f32.gmra.mxu0 %v686
        %v759 = vpop.f32.mrf.mxu0
        %v760 = vadd.f32 %v680, %v759
        %v761 = vpop.f32.mrf.mxu0
        %762 = vdwg.mxu0
        %764 = vrot.lane.b32.xlu0 %v666, 112
        %v765 = vpop.permute.xlu0 %764
        %766 = vrot.lane.b32.xlu0 %v666, 96
        %v767 = vpop.permute.xlu0 %766
        %768 = vrot.lane.b32.xlu0 %v666, 80
        %v769 = vpop.permute.xlu0 %768
        %772 = vrot.lane.b32.xlu0 %v755, 112
        %v773 = vpop.permute.xlu0 %772
        %774 = vrot.lane.b32.xlu0 %v760, 112
        %v775 = vpop.permute.xlu0 %774
        %778 = vrot.lane.b32.xlu0 %v755, 96
        %v779 = vpop.permute.xlu0 %778
        %780 = vrot.lane.b32.xlu0 %v760, 96
        %v781 = vpop.permute.xlu0 %780
        %784 = vrot.lane.b32.xlu0 %v755, 80
        %v785 = vpop.permute.xlu0 %784
        %786 = vrot.lane.b32.xlu0 %v760, 80
        %v787 = vpop.permute.xlu0 %786
        %790 = vxpose.xlu0.b32.start [1/16] %v755, 128
        %791 = vxpose.xlu0.b32.cont [2/16] %v760, 128
        %792 = vxpose.xlu0.b32.cont [3/16] 0.0, 128
        %793 = vxpose.xlu0.b32.cont [4/16] 0.0, 128
        %794 = vxpose.xlu0.b32.cont [5/16] 0.0, 128
        %795 = vxpose.xlu0.b32.cont [6/16] 0.0, 128
        %796 = vxpose.xlu0.b32.cont [7/16] 0.0, 128
        %797 = vxpose.xlu0.b32.cont [8/16] 0.0, 128
        %798 = vxpose.xlu0.b32.cont [9/16] 0.0, 128
        %799 = vxpose.xlu0.b32.cont [10/16] 0.0, 128
        %800 = vxpose.xlu0.b32.cont [11/16] 0.0, 128
        %801 = vxpose.xlu0.b32.cont [12/16] 0.0, 128
        %802 = vxpose.xlu0.b32.cont [13/16] 0.0, 128
        %803 = vxpose.xlu0.b32.cont [14/16] 0.0, 128
        %804 = vxpose.xlu0.b32.cont [15/16] 0.0, 128
        %805 = vxpose.xlu0.b32.end [16/16] 0.0, 128
        %v806 = vpop.trf.xlu0
        %v807 = vpop.trf.xlu0
        %v808 = vpop.trf.xlu0
        %v809 = vpop.trf.xlu0
        %v810 = vpop.trf.xlu0
        %v811 = vpop.trf.xlu0
        %v812 = vpop.trf.xlu0
        %v813 = vpop.trf.xlu0
        %v814 = vpop.trf.xlu0
        %v815 = vpop.trf.xlu0
        %v816 = vpop.trf.xlu0
        %v817 = vpop.trf.xlu0
        %v818 = vpop.trf.xlu0
        %v819 = vpop.trf.xlu0
        %v820 = vpop.trf.xlu0
        %v821 = vpop.trf.xlu0
        %822 = vxpose.xlu0.b32.start [1/16] %v773, 128
        %823 = vxpose.xlu0.b32.cont [2/16] %v775, 128
        %824 = vxpose.xlu0.b32.cont [3/16] 0.0, 128
        %825 = vxpose.xlu0.b32.cont [4/16] 0.0, 128
        %826 = vxpose.xlu0.b32.cont [5/16] 0.0, 128
        %827 = vxpose.xlu0.b32.cont [6/16] 0.0, 128
        %828 = vxpose.xlu0.b32.cont [7/16] 0.0, 128
        %829 = vxpose.xlu0.b32.cont [8/16] 0.0, 128
        %830 = vxpose.xlu0.b32.cont [9/16] 0.0, 128
        %831 = vxpose.xlu0.b32.cont [10/16] 0.0, 128
        %832 = vxpose.xlu0.b32.cont [11/16] 0.0, 128
        %833 = vxpose.xlu0.b32.cont [12/16] 0.0, 128
        %834 = vxpose.xlu0.b32.cont [13/16] 0.0, 128
        %835 = vxpose.xlu0.b32.cont [14/16] 0.0, 128
        %836 = vxpose.xlu0.b32.cont [15/16] 0.0, 128
        %837 = vxpose.xlu0.b32.end [16/16] 0.0, 128
        %v838 = vpop.trf.xlu0
        %v839 = vpop.trf.xlu0
        %v840 = vpop.trf.xlu0
        %v841 = vpop.trf.xlu0
        %v842 = vpop.trf.xlu0
        %v843 = vpop.trf.xlu0
        %v844 = vpop.trf.xlu0
        %v845 = vpop.trf.xlu0
        %v846 = vpop.trf.xlu0
        %v847 = vpop.trf.xlu0
        %v848 = vpop.trf.xlu0
        %v849 = vpop.trf.xlu0
        %v850 = vpop.trf.xlu0
        %v851 = vpop.trf.xlu0
        %v852 = vpop.trf.xlu0
        %v853 = vpop.trf.xlu0
        %854 = vxpose.xlu0.b32.start [1/16] %v779, 128
        %855 = vxpose.xlu0.b32.cont [2/16] %v781, 128
        %856 = vxpose.xlu0.b32.cont [3/16] 0.0, 128
        %857 = vxpose.xlu0.b32.cont [4/16] 0.0, 128
        %858 = vxpose.xlu0.b32.cont [5/16] 0.0, 128
        %859 = vxpose.xlu0.b32.cont [6/16] 0.0, 128
        %860 = vxpose.xlu0.b32.cont [7/16] 0.0, 128
        %861 = vxpose.xlu0.b32.cont [8/16] 0.0, 128
        %862 = vxpose.xlu0.b32.cont [9/16] 0.0, 128
        %863 = vxpose.xlu0.b32.cont [10/16] 0.0, 128
        %864 = vxpose.xlu0.b32.cont [11/16] 0.0, 128
        %865 = vxpose.xlu0.b32.cont [12/16] 0.0, 128
        %866 = vxpose.xlu0.b32.cont [13/16] 0.0, 128
        %867 = vxpose.xlu0.b32.cont [14/16] 0.0, 128
        %868 = vxpose.xlu0.b32.cont [15/16] 0.0, 128
        %869 = vxpose.xlu0.b32.end [16/16] 0.0, 128
        %v870 = vpop.trf.xlu0
        %v871 = vpop.trf.xlu0
        %v872 = vpop.trf.xlu0
        %v873 = vpop.trf.xlu0
        %v874 = vpop.trf.xlu0
        %v875 = vpop.trf.xlu0
        %v876 = vpop.trf.xlu0
        %v877 = vpop.trf.xlu0
        %v878 = vpop.trf.xlu0
        %v879 = vpop.trf.xlu0
        %v880 = vpop.trf.xlu0
        %v881 = vpop.trf.xlu0
        %v882 = vpop.trf.xlu0
        %v883 = vpop.trf.xlu0
        %v884 = vpop.trf.xlu0
        %v885 = vpop.trf.xlu0
        %886 = vxpose.xlu0.b32.start [1/16] %v785, 128
        %887 = vxpose.xlu0.b32.cont [2/16] %v787, 128
        %888 = vxpose.xlu0.b32.cont [3/16] 0.0, 128
        %889 = vxpose.xlu0.b32.cont [4/16] 0.0, 128
        %890 = vxpose.xlu0.b32.cont [5/16] 0.0, 128
        %891 = vxpose.xlu0.b32.cont [6/16] 0.0, 128
        %892 = vxpose.xlu0.b32.cont [7/16] 0.0, 128
        %893 = vxpose.xlu0.b32.cont [8/16] 0.0, 128
        %894 = vxpose.xlu0.b32.cont [9/16] 0.0, 128
        %895 = vxpose.xlu0.b32.cont [10/16] 0.0, 128
        %896 = vxpose.xlu0.b32.cont [11/16] 0.0, 128
        %897 = vxpose.xlu0.b32.cont [12/16] 0.0, 128
        %898 = vxpose.xlu0.b32.cont [13/16] 0.0, 128
        %899 = vxpose.xlu0.b32.cont [14/16] 0.0, 128
        %900 = vxpose.xlu0.b32.cont [15/16] 0.0, 128
        %901 = vxpose.xlu0.b32.end [16/16] 0.0, 128
        %v902 = vpop.trf.xlu0
        %v903 = vpop.trf.xlu0
        %v904 = vpop.trf.xlu0
        %v905 = vpop.trf.xlu0
        %v906 = vpop.trf.xlu0
        %v907 = vpop.trf.xlu0
        %v908 = vpop.trf.xlu0
        %v909 = vpop.trf.xlu0
        %v910 = vpop.trf.xlu0
        %v911 = vpop.trf.xlu0
        %v912 = vpop.trf.xlu0
        %v913 = vpop.trf.xlu0
        %v914 = vpop.trf.xlu0
        %v915 = vpop.trf.xlu0
        %v916 = vpop.trf.xlu0
        %v917 = vpop.trf.xlu0
        %vm918 = vcmask 130048
        %v919 = vsel %vm918, %v666, 0
        %921 = vmatprep.subr.mxu0 0.0
        %922 = vmatpush1.msra.mxu0 0.0
        %923 = vmatprep.subr.mxu0 0.0
        %924 = vmatpush1.msra.mxu0 0.0
        %925 = vmatprep.subr.mxu0 0.0
        %926 = vmatpush1.msra.mxu0 0.0
        %927 = vmatprep.subr.mxu0 0.0
        %928 = vmatpush1.msra.mxu0 0.0
        %929 = vmatprep.subr.mxu0 0.0
        %930 = vmatpush1.msra.mxu0 0.0
        %931 = vmatprep.subr.mxu0 0.0
        %932 = vmatpush1.msra.mxu0 0.0
        %933 = vmatprep.subr.mxu0 0.0
        %934 = vmatpush1.msra.mxu0 0.0
        %935 = vmatprep.subr.mxu0 0.0
        %936 = vmatpush1.msra.mxu0 0.0
        %937 = vmatprep.subr.mxu0 0.0
        %938 = vmatpush1.msra.mxu0 0.0
        %939 = vmatprep.subr.mxu0 0.0
        %940 = vmatpush1.msra.mxu0 0.0
        %941 = vmatprep.subr.mxu0 0.0
        %942 = vmatpush1.msra.mxu0 0.0
        %943 = vmatprep.subr.mxu0 0.0
        %944 = vmatpush1.msra.mxu0 0.0
        %945 = vmatprep.subr.mxu0 0.0
        %946 = vmatpush1.msra.mxu0 0.0
        %947 = vmatprep.subr.mxu0 0.0
        %948 = vmatpush1.msra.mxu0 0.0
        %949 = vmatprep.subr.mxu0 0.0
        %950 = vmatpush1.msra.mxu0 %v807
        %951 = vmatprep.subr.mxu0 0.0
        %952 = vmatpush1.msra.mxu0 %v806
        %953 = vmatprep.subr.mxu0 0.0
        %954 = vmatpush2.msra.mxu0 0.0
        %955 = vmatprep.subr.mxu0 0.0
        %956 = vmatpush2.msra.mxu0 0.0
        %957 = vmatprep.subr.mxu0 0.0
        %958 = vmatpush2.msra.mxu0 0.0
        %959 = vmatprep.subr.mxu0 0.0
        %960 = vmatpush2.msra.mxu0 0.0
        %961 = vmatprep.subr.mxu0 0.0
        %962 = vmatpush2.msra.mxu0 0.0
        %963 = vmatprep.subr.mxu0 0.0
        %964 = vmatpush2.msra.mxu0 0.0
        %965 = vmatprep.subr.mxu0 0.0
        %966 = vmatpush2.msra.mxu0 0.0
        %967 = vmatprep.subr.mxu0 0.0
        %968 = vmatpush2.msra.mxu0 0.0
        %969 = vmatprep.subr.mxu0 0.0
        %970 = vmatpush2.msra.mxu0 0.0
        %971 = vmatprep.subr.mxu0 0.0
        %972 = vmatpush2.msra.mxu0 0.0
        %973 = vmatprep.subr.mxu0 0.0
        %974 = vmatpush2.msra.mxu0 0.0
        %975 = vmatprep.subr.mxu0 0.0
        %976 = vmatpush2.msra.mxu0 0.0
        %977 = vmatprep.subr.mxu0 0.0
        %978 = vmatpush2.msra.mxu0 0.0
        %979 = vmatprep.subr.mxu0 0.0
        %980 = vmatpush2.msra.mxu0 0.0
        %981 = vmatprep.subr.mxu0 0.0
        %982 = vmatpush2.msra.mxu0 0.0
        %983 = vmatprep.subr.mxu0 0.0
        %984 = vmatpush2.msra.mxu0 0.0
        %985 = vmatprep.mubr.f32.mxu0 0.0
        %986 = vmatmul.mubr.f32.gmra.mxu0 %v919
        %v987 = vpop.f32.mrf.mxu0
        %v988 = vadd.f32 0.0, %v987
        %v989 = vpop.f32.mrf.mxu0
        %990 = vdwg.mxu0
        %v991 = vsel %vm918, %v765, 0
        %993 = vmatprep.subr.mxu0 0.0
        %994 = vmatpush1.msra.mxu0 0.0
        %995 = vmatprep.subr.mxu0 0.0
        %996 = vmatpush1.msra.mxu0 0.0
        %997 = vmatprep.subr.mxu0 0.0
        %998 = vmatpush1.msra.mxu0 0.0
        %999 = vmatprep.subr.mxu0 0.0
        %1000 = vmatpush1.msra.mxu0 0.0
        %1001 = vmatprep.subr.mxu0 0.0
        %1002 = vmatpush1.msra.mxu0 0.0
        %1003 = vmatprep.subr.mxu0 0.0
        %1004 = vmatpush1.msra.mxu0 0.0
        %1005 = vmatprep.subr.mxu0 0.0
        %1006 = vmatpush1.msra.mxu0 0.0
        %1007 = vmatprep.subr.mxu0 0.0
        %1008 = vmatpush1.msra.mxu0 0.0
        %1009 = vmatprep.subr.mxu0 0.0
        %1010 = vmatpush1.msra.mxu0 0.0
        %1011 = vmatprep.subr.mxu0 0.0
        %1012 = vmatpush1.msra.mxu0 0.0
        %1013 = vmatprep.subr.mxu0 0.0
        %1014 = vmatpush1.msra.mxu0 0.0
        %1015 = vmatprep.subr.mxu0 0.0
        %1016 = vmatpush1.msra.mxu0 0.0
        %1017 = vmatprep.subr.mxu0 0.0
        %1018 = vmatpush1.msra.mxu0 0.0
        %1019 = vmatprep.subr.mxu0 0.0
        %1020 = vmatpush1.msra.mxu0 0.0
        %1021 = vmatprep.subr.mxu0 0.0
        %1022 = vmatpush1.msra.mxu0 %v839
        %1023 = vmatprep.subr.mxu0 0.0
        %1024 = vmatpush1.msra.mxu0 %v838
        %1025 = vmatprep.subr.mxu0 0.0
        %1026 = vmatpush2.msra.mxu0 0.0
        %1027 = vmatprep.subr.mxu0 0.0
        %1028 = vmatpush2.msra.mxu0 0.0
        %1029 = vmatprep.subr.mxu0 0.0
        %1030 = vmatpush2.msra.mxu0 0.0
        %1031 = vmatprep.subr.mxu0 0.0
        %1032 = vmatpush2.msra.mxu0 0.0
        %1033 = vmatprep.subr.mxu0 0.0
        %1034 = vmatpush2.msra.mxu0 0.0
        %1035 = vmatprep.subr.mxu0 0.0
        %1036 = vmatpush2.msra.mxu0 0.0
        %1037 = vmatprep.subr.mxu0 0.0
        %1038 = vmatpush2.msra.mxu0 0.0
        %1039 = vmatprep.subr.mxu0 0.0
        %1040 = vmatpush2.msra.mxu0 0.0
        %1041 = vmatprep.subr.mxu0 0.0
        %1042 = vmatpush2.msra.mxu0 0.0
        %1043 = vmatprep.subr.mxu0 0.0
        %1044 = vmatpush2.msra.mxu0 0.0
        %1045 = vmatprep.subr.mxu0 0.0
        %1046 = vmatpush2.msra.mxu0 0.0
        %1047 = vmatprep.subr.mxu0 0.0
        %1048 = vmatpush2.msra.mxu0 0.0
        %1049 = vmatprep.subr.mxu0 0.0
        %1050 = vmatpush2.msra.mxu0 0.0
        %1051 = vmatprep.subr.mxu0 0.0
        %1052 = vmatpush2.msra.mxu0 0.0
        %1053 = vmatprep.subr.mxu0 0.0
        %1054 = vmatpush2.msra.mxu0 0.0
        %1055 = vmatprep.subr.mxu0 0.0
        %1056 = vmatpush2.msra.mxu0 0.0
        %1057 = vmatprep.mubr.f32.mxu0 0.0
        %1058 = vmatmul.mubr.f32.gmra.mxu0 %v991
        %v1059 = vpop.f32.mrf.mxu0
        %v1060 = vadd.f32 0.0, %v1059
        %v1061 = vpop.f32.mrf.mxu0
        %1062 = vdwg.mxu0
        %v1063 = vsel %vm918, %v767, 0
        %1065 = vmatprep.subr.mxu0 0.0
        %1066 = vmatpush1.msra.mxu0 0.0
        %1067 = vmatprep.subr.mxu0 0.0
        %1068 = vmatpush1.msra.mxu0 0.0
        %1069 = vmatprep.subr.mxu0 0.0
        %1070 = vmatpush1.msra.mxu0 0.0
        %1071 = vmatprep.subr.mxu0 0.0
        %1072 = vmatpush1.msra.mxu0 0.0
        %1073 = vmatprep.subr.mxu0 0.0
        %1074 = vmatpush1.msra.mxu0 0.0
        %1075 = vmatprep.subr.mxu0 0.0
        %1076 = vmatpush1.msra.mxu0 0.0
        %1077 = vmatprep.subr.mxu0 0.0
        %1078 = vmatpush1.msra.mxu0 0.0
        %1079 = vmatprep.subr.mxu0 0.0
        %1080 = vmatpush1.msra.mxu0 0.0
        %1081 = vmatprep.subr.mxu0 0.0
        %1082 = vmatpush1.msra.mxu0 0.0
        %1083 = vmatprep.subr.mxu0 0.0
        %1084 = vmatpush1.msra.mxu0 0.0
        %1085 = vmatprep.subr.mxu0 0.0
        %1086 = vmatpush1.msra.mxu0 0.0
        %1087 = vmatprep.subr.mxu0 0.0
        %1088 = vmatpush1.msra.mxu0 0.0
        %1089 = vmatprep.subr.mxu0 0.0
        %1090 = vmatpush1.msra.mxu0 0.0
        %1091 = vmatprep.subr.mxu0 0.0
        %1092 = vmatpush1.msra.mxu0 0.0
        %1093 = vmatprep.subr.mxu0 0.0
        %1094 = vmatpush1.msra.mxu0 %v871
        %1095 = vmatprep.subr.mxu0 0.0
        %1096 = vmatpush1.msra.mxu0 %v870
        %1097 = vmatprep.subr.mxu0 0.0
        %1098 = vmatpush2.msra.mxu0 0.0
        %1099 = vmatprep.subr.mxu0 0.0
        %1100 = vmatpush2.msra.mxu0 0.0
        %1101 = vmatprep.subr.mxu0 0.0
        %1102 = vmatpush2.msra.mxu0 0.0
        %1103 = vmatprep.subr.mxu0 0.0
        %1104 = vmatpush2.msra.mxu0 0.0
        %1105 = vmatprep.subr.mxu0 0.0
        %1106 = vmatpush2.msra.mxu0 0.0
        %1107 = vmatprep.subr.mxu0 0.0
        %1108 = vmatpush2.msra.mxu0 0.0
        %1109 = vmatprep.subr.mxu0 0.0
        %1110 = vmatpush2.msra.mxu0 0.0
        %1111 = vmatprep.subr.mxu0 0.0
        %1112 = vmatpush2.msra.mxu0 0.0
        %1113 = vmatprep.subr.mxu0 0.0
        %1114 = vmatpush2.msra.mxu0 0.0
        %1115 = vmatprep.subr.mxu0 0.0
        %1116 = vmatpush2.msra.mxu0 0.0
        %1117 = vmatprep.subr.mxu0 0.0
        %1118 = vmatpush2.msra.mxu0 0.0
        %1119 = vmatprep.subr.mxu0 0.0
        %1120 = vmatpush2.msra.mxu0 0.0
        %1121 = vmatprep.subr.mxu0 0.0
        %1122 = vmatpush2.msra.mxu0 0.0
        %1123 = vmatprep.subr.mxu0 0.0
        %1124 = vmatpush2.msra.mxu0 0.0
        %1125 = vmatprep.subr.mxu0 0.0
        %1126 = vmatpush2.msra.mxu0 0.0
        %1127 = vmatprep.subr.mxu0 0.0
        %1128 = vmatpush2.msra.mxu0 0.0
        %1129 = vmatprep.mubr.f32.mxu0 0.0
        %1130 = vmatmul.mubr.f32.gmra.mxu0 %v1063
        %v1131 = vpop.f32.mrf.mxu0
        %v1132 = vadd.f32 0.0, %v1131
        %v1133 = vpop.f32.mrf.mxu0
        %1134 = vdwg.mxu0
        %v1135 = vsel %vm918, %v769, 0
        %1137 = vmatprep.subr.mxu0 0.0
        %1138 = vmatpush1.msra.mxu0 0.0
        %1139 = vmatprep.subr.mxu0 0.0
        %1140 = vmatpush1.msra.mxu0 0.0
        %1141 = vmatprep.subr.mxu0 0.0
        %1142 = vmatpush1.msra.mxu0 0.0
        %1143 = vmatprep.subr.mxu0 0.0
        %1144 = vmatpush1.msra.mxu0 0.0
        %1145 = vmatprep.subr.mxu0 0.0
        %1146 = vmatpush1.msra.mxu0 0.0
        %1147 = vmatprep.subr.mxu0 0.0
        %1148 = vmatpush1.msra.mxu0 0.0
        %1149 = vmatprep.subr.mxu0 0.0
        %1150 = vmatpush1.msra.mxu0 0.0
        %1151 = vmatprep.subr.mxu0 0.0
        %1152 = vmatpush1.msra.mxu0 0.0
        %1153 = vmatprep.subr.mxu0 0.0
        %1154 = vmatpush1.msra.mxu0 0.0
        %1155 = vmatprep.subr.mxu0 0.0
        %1156 = vmatpush1.msra.mxu0 0.0
        %1157 = vmatprep.subr.mxu0 0.0
        %1158 = vmatpush1.msra.mxu0 0.0
        %1159 = vmatprep.subr.mxu0 0.0
        %1160 = vmatpush1.msra.mxu0 0.0
        %1161 = vmatprep.subr.mxu0 0.0
        %1162 = vmatpush1.msra.mxu0 0.0
        %1163 = vmatprep.subr.mxu0 0.0
        %1164 = vmatpush1.msra.mxu0 0.0
        %1165 = vmatprep.subr.mxu0 0.0
        %1166 = vmatpush1.msra.mxu0 %v903
        %1167 = vmatprep.subr.mxu0 0.0
        %1168 = vmatpush1.msra.mxu0 %v902
        %1169 = vmatprep.subr.mxu0 0.0
        %1170 = vmatpush2.msra.mxu0 0.0
        %1171 = vmatprep.subr.mxu0 0.0
        %1172 = vmatpush2.msra.mxu0 0.0
        %1173 = vmatprep.subr.mxu0 0.0
        %1174 = vmatpush2.msra.mxu0 0.0
        %1175 = vmatprep.subr.mxu0 0.0
        %1176 = vmatpush2.msra.mxu0 0.0
        %1177 = vmatprep.subr.mxu0 0.0
        %1178 = vmatpush2.msra.mxu0 0.0
        %1179 = vmatprep.subr.mxu0 0.0
        %1180 = vmatpush2.msra.mxu0 0.0
        %1181 = vmatprep.subr.mxu0 0.0
        %1182 = vmatpush2.msra.mxu0 0.0
        %1183 = vmatprep.subr.mxu0 0.0
        %1184 = vmatpush2.msra.mxu0 0.0
        %1185 = vmatprep.subr.mxu0 0.0
        %1186 = vmatpush2.msra.mxu0 0.0
        %1187 = vmatprep.subr.mxu0 0.0
        %1188 = vmatpush2.msra.mxu0 0.0
        %1189 = vmatprep.subr.mxu0 0.0
        %1190 = vmatpush2.msra.mxu0 0.0
        %1191 = vmatprep.subr.mxu0 0.0
        %1192 = vmatpush2.msra.mxu0 0.0
        %1193 = vmatprep.subr.mxu0 0.0
        %1194 = vmatpush2.msra.mxu0 0.0
        %1195 = vmatprep.subr.mxu0 0.0
        %1196 = vmatpush2.msra.mxu0 0.0
        %1197 = vmatprep.subr.mxu0 0.0
        %1198 = vmatpush2.msra.mxu0 0.0
        %1199 = vmatprep.subr.mxu0 0.0
        %1200 = vmatpush2.msra.mxu0 0.0
        %1201 = vmatprep.mubr.f32.mxu0 0.0
        %1202 = vmatmul.mubr.f32.gmra.mxu0 %v1135
        %v1203 = vpop.f32.mrf.mxu0
        %v1204 = vadd.f32 0.0, %v1203
        %v1205 = vpop.f32.mrf.mxu0
        %1206 = vdwg.mxu0
        %vm1207 = vcmask 121856
        %v1208 = vsel %vm1207, %v988, -inf
        %1209 = vmax.xlane.f32.xlu0 %v1208
        %v1210 = vpop.xlane.xlu0 %1209
        %v1211 = vsel %vm1207, %v1060, -inf
        %1212 = vmax.xlane.f32.xlu0 %v1211
        %v1213 = vpop.xlane.xlu0 %1212
        %v1214 = vsel %vm1207, %v1132, -inf
        %1215 = vmax.xlane.f32.xlu0 %v1214
        %v1216 = vpop.xlane.xlu0 %1215
        %v1217 = vsel %vm1207, %v1204, -inf
        %1218 = vmax.xlane.f32.xlu0 %v1217
        %v1219 = vpop.xlane.xlu0 %1218
        %v1220 = vsub.f32 %v988, %v1210
        %v1221 = vsub.f32 %v1060, %v1213
        %v1222 = vsub.f32 %v1132, %v1216
        %v1223 = vsub.f32 %v1204, %v1219
        %v1224 = vmul.f32 %v1220, 1.442695
        %v1225 = vpow.pop %v1224
        %v1226 = vmul.f32 %v1221, 1.442695
        %v1227 = vpow.pop %v1226
        %v1228 = vmul.f32 %v1222, 1.442695
        %v1229 = vpow.pop %v1228
        %v1230 = vmul.f32 %v1223, 1.442695
        %v1231 = vpow.pop %v1230
        %v1232 = vsel %vm1207, %v1225, 0.0
        %1233 = vadd.xlane.f32.xlu0 %v1232
        %v1234 = vpop.xlane.xlu0 %1233
        %v1235 = vsel %vm1207, %v1227, 0.0
        %1236 = vadd.xlane.f32.xlu0 %v1235
        %v1237 = vpop.xlane.xlu0 %1236
        %v1238 = vsel %vm1207, %v1229, 0.0
        %1239 = vadd.xlane.f32.xlu0 %v1238
        %v1240 = vpop.xlane.xlu0 %1239
        %v1241 = vsel %vm1207, %v1231, 0.0
        %1242 = vadd.xlane.f32.xlu0 %v1241
        %v1243 = vpop.xlane.xlu0 %1242
        %v1244 = vrcp.pop %v1234
        %v1245 = vrcp.pop %v1237
        %v1246 = vrcp.pop %v1240
        %v1247 = vrcp.pop %v1243
        %v1248 = vmul.f32 %v1225, %v1244
        %v1249 = vmul.f32 %v1227, %v1245
        %v1250 = vmul.f32 %v1229, %v1246
        %v1251 = vmul.f32 %v1231, %v1247
        %1252 = vrot.lane.b32.xlu0 %v755, 64
        %v1253 = vpop.permute.xlu0 %1252
        %1254 = vrot.lane.b32.xlu0 %v760, 64
        %v1255 = vpop.permute.xlu0 %1254
        %1256 = vrot.lane.b32.xlu0 %v773, 64
        %v1257 = vpop.permute.xlu0 %1256
        %1258 = vrot.lane.b32.xlu0 %v775, 64
        %v1259 = vpop.permute.xlu0 %1258
        %1260 = vrot.lane.b32.xlu0 %v779, 64
        %v1261 = vpop.permute.xlu0 %1260
        %1262 = vrot.lane.b32.xlu0 %v781, 64
        %v1263 = vpop.permute.xlu0 %1262
        %1264 = vrot.lane.b32.xlu0 %v785, 64
        %v1265 = vpop.permute.xlu0 %1264
        %1266 = vrot.lane.b32.xlu0 %v787, 64
        %v1267 = vpop.permute.xlu0 %1266
        %1276 = vxpose.xlu0.b32.start [1/16] %v1253, 128
        %1277 = vxpose.xlu0.b32.cont [2/16] %v1255, 128
        %1278 = vxpose.xlu0.b32.cont [3/16] 0.0, 128
        %1279 = vxpose.xlu0.b32.cont [4/16] 0.0, 128
        %1280 = vxpose.xlu0.b32.cont [5/16] 0.0, 128
        %1281 = vxpose.xlu0.b32.cont [6/16] 0.0, 128
        %1282 = vxpose.xlu0.b32.cont [7/16] 0.0, 128
        %1283 = vxpose.xlu0.b32.cont [8/16] 0.0, 128
        %1284 = vxpose.xlu0.b32.cont [9/16] 0.0, 128
        %1285 = vxpose.xlu0.b32.cont [10/16] 0.0, 128
        %1286 = vxpose.xlu0.b32.cont [11/16] 0.0, 128
        %1287 = vxpose.xlu0.b32.cont [12/16] 0.0, 128
        %1288 = vxpose.xlu0.b32.cont [13/16] 0.0, 128
        %1289 = vxpose.xlu0.b32.cont [14/16] 0.0, 128
        %1290 = vxpose.xlu0.b32.cont [15/16] 0.0, 128
        %1291 = vxpose.xlu0.b32.end [16/16] 0.0, 128
        %v1292 = vpop.trf.xlu0
        %v1293 = vpop.trf.xlu0
        %v1294 = vpop.trf.xlu0
        %v1295 = vpop.trf.xlu0
        %v1296 = vpop.trf.xlu0
        %v1297 = vpop.trf.xlu0
        %v1298 = vpop.trf.xlu0
        %v1299 = vpop.trf.xlu0
        %v1300 = vpop.trf.xlu0
        %v1301 = vpop.trf.xlu0
        %v1302 = vpop.trf.xlu0
        %v1303 = vpop.trf.xlu0
        %v1304 = vpop.trf.xlu0
        %v1305 = vpop.trf.xlu0
        %v1306 = vpop.trf.xlu0
        %v1307 = vpop.trf.xlu0
        %1308 = vxpose.xlu0.b32.start [1/16] %v1257, 128
        %1309 = vxpose.xlu0.b32.cont [2/16] %v1259, 128
        %1310 = vxpose.xlu0.b32.cont [3/16] 0.0, 128
        %1311 = vxpose.xlu0.b32.cont [4/16] 0.0, 128
        %1312 = vxpose.xlu0.b32.cont [5/16] 0.0, 128
        %1313 = vxpose.xlu0.b32.cont [6/16] 0.0, 128
        %1314 = vxpose.xlu0.b32.cont [7/16] 0.0, 128
        %1315 = vxpose.xlu0.b32.cont [8/16] 0.0, 128
        %1316 = vxpose.xlu0.b32.cont [9/16] 0.0, 128
        %1317 = vxpose.xlu0.b32.cont [10/16] 0.0, 128
        %1318 = vxpose.xlu0.b32.cont [11/16] 0.0, 128
        %1319 = vxpose.xlu0.b32.cont [12/16] 0.0, 128
        %1320 = vxpose.xlu0.b32.cont [13/16] 0.0, 128
        %1321 = vxpose.xlu0.b32.cont [14/16] 0.0, 128
        %1322 = vxpose.xlu0.b32.cont [15/16] 0.0, 128
        %1323 = vxpose.xlu0.b32.end [16/16] 0.0, 128
        %v1324 = vpop.trf.xlu0
        %v1325 = vpop.trf.xlu0
        %v1326 = vpop.trf.xlu0
        %v1327 = vpop.trf.xlu0
        %v1328 = vpop.trf.xlu0
        %v1329 = vpop.trf.xlu0
        %v1330 = vpop.trf.xlu0
        %v1331 = vpop.trf.xlu0
        %v1332 = vpop.trf.xlu0
        %v1333 = vpop.trf.xlu0
        %v1334 = vpop.trf.xlu0
        %v1335 = vpop.trf.xlu0
        %v1336 = vpop.trf.xlu0
        %v1337 = vpop.trf.xlu0
        %v1338 = vpop.trf.xlu0
        %v1339 = vpop.trf.xlu0
        %1340 = vxpose.xlu0.b32.start [1/16] %v1261, 128
        %1341 = vxpose.xlu0.b32.cont [2/16] %v1263, 128
        %1342 = vxpose.xlu0.b32.cont [3/16] 0.0, 128
        %1343 = vxpose.xlu0.b32.cont [4/16] 0.0, 128
        %1344 = vxpose.xlu0.b32.cont [5/16] 0.0, 128
        %1345 = vxpose.xlu0.b32.cont [6/16] 0.0, 128
        %1346 = vxpose.xlu0.b32.cont [7/16] 0.0, 128
        %1347 = vxpose.xlu0.b32.cont [8/16] 0.0, 128
        %1348 = vxpose.xlu0.b32.cont [9/16] 0.0, 128
        %1349 = vxpose.xlu0.b32.cont [10/16] 0.0, 128
        %1350 = vxpose.xlu0.b32.cont [11/16] 0.0, 128
        %1351 = vxpose.xlu0.b32.cont [12/16] 0.0, 128
        %1352 = vxpose.xlu0.b32.cont [13/16] 0.0, 128
        %1353 = vxpose.xlu0.b32.cont [14/16] 0.0, 128
        %1354 = vxpose.xlu0.b32.cont [15/16] 0.0, 128
        %1355 = vxpose.xlu0.b32.end [16/16] 0.0, 128
        %v1356 = vpop.trf.xlu0
        %v1357 = vpop.trf.xlu0
        %v1358 = vpop.trf.xlu0
        %v1359 = vpop.trf.xlu0
        %v1360 = vpop.trf.xlu0
        %v1361 = vpop.trf.xlu0
        %v1362 = vpop.trf.xlu0
        %v1363 = vpop.trf.xlu0
        %v1364 = vpop.trf.xlu0
        %v1365 = vpop.trf.xlu0
        %v1366 = vpop.trf.xlu0
        %v1367 = vpop.trf.xlu0
        %v1368 = vpop.trf.xlu0
        %v1369 = vpop.trf.xlu0
        %v1370 = vpop.trf.xlu0
        %v1371 = vpop.trf.xlu0
        %1372 = vxpose.xlu0.b32.start [1/16] %v1265, 128
        %1373 = vxpose.xlu0.b32.cont [2/16] %v1267, 128
        %1374 = vxpose.xlu0.b32.cont [3/16] 0.0, 128
        %1375 = vxpose.xlu0.b32.cont [4/16] 0.0, 128
        %1376 = vxpose.xlu0.b32.cont [5/16] 0.0, 128
        %1377 = vxpose.xlu0.b32.cont [6/16] 0.0, 128
        %1378 = vxpose.xlu0.b32.cont [7/16] 0.0, 128
        %1379 = vxpose.xlu0.b32.cont [8/16] 0.0, 128
        %1380 = vxpose.xlu0.b32.cont [9/16] 0.0, 128
        %1381 = vxpose.xlu0.b32.cont [10/16] 0.0, 128
        %1382 = vxpose.xlu0.b32.cont [11/16] 0.0, 128
        %1383 = vxpose.xlu0.b32.cont [12/16] 0.0, 128
        %1384 = vxpose.xlu0.b32.cont [13/16] 0.0, 128
        %1385 = vxpose.xlu0.b32.cont [14/16] 0.0, 128
        %1386 = vxpose.xlu0.b32.cont [15/16] 0.0, 128
        %1387 = vxpose.xlu0.b32.end [16/16] 0.0, 128
        %v1388 = vpop.trf.xlu0
        %v1389 = vpop.trf.xlu0
        %v1390 = vpop.trf.xlu0
        %v1391 = vpop.trf.xlu0
        %v1392 = vpop.trf.xlu0
        %v1393 = vpop.trf.xlu0
        %v1394 = vpop.trf.xlu0
        %v1395 = vpop.trf.xlu0
        %v1396 = vpop.trf.xlu0
        %v1397 = vpop.trf.xlu0
        %v1398 = vpop.trf.xlu0
        %v1399 = vpop.trf.xlu0
        %v1400 = vpop.trf.xlu0
        %v1401 = vpop.trf.xlu0
        %v1402 = vpop.trf.xlu0
        %v1403 = vpop.trf.xlu0
        %v1405 = vsel %vm1207, %v1292, 0
        %v1408 = vsel %vm1207, %v1293, 0
        %v1411 = vsel %vm1207, %v1248, 0
        %1413 = vmatprep.subr.mxu0 0.0
        %1414 = vmatpush1.xpose.msra.mxu0 0.0
        %1415 = vmatprep.subr.mxu0 0.0
        %1416 = vmatpush1.xpose.msra.mxu0 0.0
        %1417 = vmatprep.subr.mxu0 0.0
        %1418 = vmatpush1.xpose.msra.mxu0 0.0
        %1419 = vmatprep.subr.mxu0 0.0
        %1420 = vmatpush1.xpose.msra.mxu0 0.0
        %1421 = vmatprep.subr.mxu0 0.0
        %1422 = vmatpush1.xpose.msra.mxu0 0.0
        %1423 = vmatprep.subr.mxu0 0.0
        %1424 = vmatpush1.xpose.msra.mxu0 0.0
        %1425 = vmatprep.subr.mxu0 0.0
        %1426 = vmatpush1.xpose.msra.mxu0 0.0
        %1427 = vmatprep.subr.mxu0 0.0
        %1428 = vmatpush1.xpose.msra.mxu0 0.0
        %1429 = vmatprep.subr.mxu0 0.0
        %1430 = vmatpush1.xpose.msra.mxu0 0.0
        %1431 = vmatprep.subr.mxu0 0.0
        %1432 = vmatpush1.xpose.msra.mxu0 0.0
        %1433 = vmatprep.subr.mxu0 0.0
        %1434 = vmatpush1.xpose.msra.mxu0 0.0
        %1435 = vmatprep.subr.mxu0 0.0
        %1436 = vmatpush1.xpose.msra.mxu0 0.0
        %1437 = vmatprep.subr.mxu0 0.0
        %1438 = vmatpush1.xpose.msra.mxu0 0.0
        %1439 = vmatprep.subr.mxu0 0.0
        %1440 = vmatpush1.xpose.msra.mxu0 0.0
        %1441 = vmatprep.subr.mxu0 0.0
        %1442 = vmatpush1.xpose.msra.mxu0 0.0
        %1443 = vmatprep.subr.mxu0 0.0
        %1444 = vmatpush1.xpose.msra.mxu0 %v1411
        %1445 = vmatprep.subr.mxu0 0.0
        %1446 = vmatpush2.xpose.msra.mxu0 0.0
        %1447 = vmatprep.subr.mxu0 0.0
        %1448 = vmatpush2.xpose.msra.mxu0 0.0
        %1449 = vmatprep.subr.mxu0 0.0
        %1450 = vmatpush2.xpose.msra.mxu0 0.0
        %1451 = vmatprep.subr.mxu0 0.0
        %1452 = vmatpush2.xpose.msra.mxu0 0.0
        %1453 = vmatprep.subr.mxu0 0.0
        %1454 = vmatpush2.xpose.msra.mxu0 0.0
        %1455 = vmatprep.subr.mxu0 0.0
        %1456 = vmatpush2.xpose.msra.mxu0 0.0
        %1457 = vmatprep.subr.mxu0 0.0
        %1458 = vmatpush2.xpose.msra.mxu0 0.0
        %1459 = vmatprep.subr.mxu0 0.0
        %1460 = vmatpush2.xpose.msra.mxu0 0.0
        %1461 = vmatprep.subr.mxu0 0.0
        %1462 = vmatpush2.xpose.msra.mxu0 0.0
        %1463 = vmatprep.subr.mxu0 0.0
        %1464 = vmatpush2.xpose.msra.mxu0 0.0
        %1465 = vmatprep.subr.mxu0 0.0
        %1466 = vmatpush2.xpose.msra.mxu0 0.0
        %1467 = vmatprep.subr.mxu0 0.0
        %1468 = vmatpush2.xpose.msra.mxu0 0.0
        %1469 = vmatprep.subr.mxu0 0.0
        %1470 = vmatpush2.xpose.msra.mxu0 0.0
        %1471 = vmatprep.subr.mxu0 0.0
        %1472 = vmatpush2.xpose.msra.mxu0 0.0
        %1473 = vmatprep.subr.mxu0 0.0
        %1474 = vmatpush2.xpose.msra.mxu0 0.0
        %1475 = vmatprep.subr.mxu0 0.0
        %1476 = vmatpush2.xpose.msra.mxu0 0.0
        %1477 = vmatprep.mubr.f32.mxu0 0.0
        %1478 = vmatmul.mubr.f32.gmra.mxu0 %v1405
        %v1479 = vpop.f32.mrf.mxu0
        %v1480 = vadd.f32 0.0, %v1479
        %v1481 = vpop.f32.mrf.mxu0
        %1482 = vmatprep.mubr.f32.mxu0 0.0
        %1483 = vmatmul.mubr.f32.gmra.mxu0 %v1408
        %v1484 = vpop.f32.mrf.mxu0
        %v1485 = vadd.f32 0.0, %v1484
        %v1486 = vpop.f32.mrf.mxu0
        %1487 = vdwg.mxu0
        %v1489 = vsel %vm1207, %v1324, 0
        %v1492 = vsel %vm1207, %v1325, 0
        %v1495 = vsel %vm1207, %v1249, 0
        %1497 = vmatprep.subr.mxu0 0.0
        %1498 = vmatpush1.xpose.msra.mxu0 0.0
        %1499 = vmatprep.subr.mxu0 0.0
        %1500 = vmatpush1.xpose.msra.mxu0 0.0
        %1501 = vmatprep.subr.mxu0 0.0
        %1502 = vmatpush1.xpose.msra.mxu0 0.0
        %1503 = vmatprep.subr.mxu0 0.0
        %1504 = vmatpush1.xpose.msra.mxu0 0.0
        %1505 = vmatprep.subr.mxu0 0.0
        %1506 = vmatpush1.xpose.msra.mxu0 0.0
        %1507 = vmatprep.subr.mxu0 0.0
        %1508 = vmatpush1.xpose.msra.mxu0 0.0
        %1509 = vmatprep.subr.mxu0 0.0
        %1510 = vmatpush1.xpose.msra.mxu0 0.0
        %1511 = vmatprep.subr.mxu0 0.0
        %1512 = vmatpush1.xpose.msra.mxu0 0.0
        %1513 = vmatprep.subr.mxu0 0.0
        %1514 = vmatpush1.xpose.msra.mxu0 0.0
        %1515 = vmatprep.subr.mxu0 0.0
        %1516 = vmatpush1.xpose.msra.mxu0 0.0
        %1517 = vmatprep.subr.mxu0 0.0
        %1518 = vmatpush1.xpose.msra.mxu0 0.0
        %1519 = vmatprep.subr.mxu0 0.0
        %1520 = vmatpush1.xpose.msra.mxu0 0.0
        %1521 = vmatprep.subr.mxu0 0.0
        %1522 = vmatpush1.xpose.msra.mxu0 0.0
        %1523 = vmatprep.subr.mxu0 0.0
        %1524 = vmatpush1.xpose.msra.mxu0 0.0
        %1525 = vmatprep.subr.mxu0 0.0
        %1526 = vmatpush1.xpose.msra.mxu0 0.0
        %1527 = vmatprep.subr.mxu0 0.0
        %1528 = vmatpush1.xpose.msra.mxu0 %v1495
        %1529 = vmatprep.subr.mxu0 0.0
        %1530 = vmatpush2.xpose.msra.mxu0 0.0
        %1531 = vmatprep.subr.mxu0 0.0
        %1532 = vmatpush2.xpose.msra.mxu0 0.0
        %1533 = vmatprep.subr.mxu0 0.0
        %1534 = vmatpush2.xpose.msra.mxu0 0.0
        %1535 = vmatprep.subr.mxu0 0.0
        %1536 = vmatpush2.xpose.msra.mxu0 0.0
        %1537 = vmatprep.subr.mxu0 0.0
        %1538 = vmatpush2.xpose.msra.mxu0 0.0
        %1539 = vmatprep.subr.mxu0 0.0
        %1540 = vmatpush2.xpose.msra.mxu0 0.0
        %1541 = vmatprep.subr.mxu0 0.0
        %1542 = vmatpush2.xpose.msra.mxu0 0.0
        %1543 = vmatprep.subr.mxu0 0.0
        %1544 = vmatpush2.xpose.msra.mxu0 0.0
        %1545 = vmatprep.subr.mxu0 0.0
        %1546 = vmatpush2.xpose.msra.mxu0 0.0
        %1547 = vmatprep.subr.mxu0 0.0
        %1548 = vmatpush2.xpose.msra.mxu0 0.0
        %1549 = vmatprep.subr.mxu0 0.0
        %1550 = vmatpush2.xpose.msra.mxu0 0.0
        %1551 = vmatprep.subr.mxu0 0.0
        %1552 = vmatpush2.xpose.msra.mxu0 0.0
        %1553 = vmatprep.subr.mxu0 0.0
        %1554 = vmatpush2.xpose.msra.mxu0 0.0
        %1555 = vmatprep.subr.mxu0 0.0
        %1556 = vmatpush2.xpose.msra.mxu0 0.0
        %1557 = vmatprep.subr.mxu0 0.0
        %1558 = vmatpush2.xpose.msra.mxu0 0.0
        %1559 = vmatprep.subr.mxu0 0.0
        %1560 = vmatpush2.xpose.msra.mxu0 0.0
        %1561 = vmatprep.mubr.f32.mxu0 0.0
        %1562 = vmatmul.mubr.f32.gmra.mxu0 %v1489
        %v1563 = vpop.f32.mrf.mxu0
        %v1564 = vadd.f32 0.0, %v1563
        %v1565 = vpop.f32.mrf.mxu0
        %1566 = vmatprep.mubr.f32.mxu0 0.0
        %1567 = vmatmul.mubr.f32.gmra.mxu0 %v1492
        %v1568 = vpop.f32.mrf.mxu0
        %v1569 = vadd.f32 0.0, %v1568
        %v1570 = vpop.f32.mrf.mxu0
        %1571 = vdwg.mxu0
        %v1573 = vsel %vm1207, %v1356, 0
        %v1576 = vsel %vm1207, %v1357, 0
        %v1579 = vsel %vm1207, %v1250, 0
        %1581 = vmatprep.subr.mxu0 0.0
        %1582 = vmatpush1.xpose.msra.mxu0 0.0
        %1583 = vmatprep.subr.mxu0 0.0
        %1584 = vmatpush1.xpose.msra.mxu0 0.0
        %1585 = vmatprep.subr.mxu0 0.0
        %1586 = vmatpush1.xpose.msra.mxu0 0.0
        %1587 = vmatprep.subr.mxu0 0.0
        %1588 = vmatpush1.xpose.msra.mxu0 0.0
        %1589 = vmatprep.subr.mxu0 0.0
        %1590 = vmatpush1.xpose.msra.mxu0 0.0
        %1591 = vmatprep.subr.mxu0 0.0
        %1592 = vmatpush1.xpose.msra.mxu0 0.0
        %1593 = vmatprep.subr.mxu0 0.0
        %1594 = vmatpush1.xpose.msra.mxu0 0.0
        %1595 = vmatprep.subr.mxu0 0.0
        %1596 = vmatpush1.xpose.msra.mxu0 0.0
        %1597 = vmatprep.subr.mxu0 0.0
        %1598 = vmatpush1.xpose.msra.mxu0 0.0
        %1599 = vmatprep.subr.mxu0 0.0
        %1600 = vmatpush1.xpose.msra.mxu0 0.0
        %1601 = vmatprep.subr.mxu0 0.0
        %1602 = vmatpush1.xpose.msra.mxu0 0.0
        %1603 = vmatprep.subr.mxu0 0.0
        %1604 = vmatpush1.xpose.msra.mxu0 0.0
        %1605 = vmatprep.subr.mxu0 0.0
        %1606 = vmatpush1.xpose.msra.mxu0 0.0
        %1607 = vmatprep.subr.mxu0 0.0
        %1608 = vmatpush1.xpose.msra.mxu0 0.0
        %1609 = vmatprep.subr.mxu0 0.0
        %1610 = vmatpush1.xpose.msra.mxu0 0.0
        %1611 = vmatprep.subr.mxu0 0.0
        %1612 = vmatpush1.xpose.msra.mxu0 %v1579
        %1613 = vmatprep.subr.mxu0 0.0
        %1614 = vmatpush2.xpose.msra.mxu0 0.0
        %1615 = vmatprep.subr.mxu0 0.0
        %1616 = vmatpush2.xpose.msra.mxu0 0.0
        %1617 = vmatprep.subr.mxu0 0.0
        %1618 = vmatpush2.xpose.msra.mxu0 0.0
        %1619 = vmatprep.subr.mxu0 0.0
        %1620 = vmatpush2.xpose.msra.mxu0 0.0
        %1621 = vmatprep.subr.mxu0 0.0
        %1622 = vmatpush2.xpose.msra.mxu0 0.0
        %1623 = vmatprep.subr.mxu0 0.0
        %1624 = vmatpush2.xpose.msra.mxu0 0.0
        %1625 = vmatprep.subr.mxu0 0.0
        %1626 = vmatpush2.xpose.msra.mxu0 0.0
        %1627 = vmatprep.subr.mxu0 0.0
        %1628 = vmatpush2.xpose.msra.mxu0 0.0
        %1629 = vmatprep.subr.mxu0 0.0
        %1630 = vmatpush2.xpose.msra.mxu0 0.0
        %1631 = vmatprep.subr.mxu0 0.0
        %1632 = vmatpush2.xpose.msra.mxu0 0.0
        %1633 = vmatprep.subr.mxu0 0.0
        %1634 = vmatpush2.xpose.msra.mxu0 0.0
        %1635 = vmatprep.subr.mxu0 0.0
        %1636 = vmatpush2.xpose.msra.mxu0 0.0
        %1637 = vmatprep.subr.mxu0 0.0
        %1638 = vmatpush2.xpose.msra.mxu0 0.0
        %1639 = vmatprep.subr.mxu0 0.0
        %1640 = vmatpush2.xpose.msra.mxu0 0.0
        %1641 = vmatprep.subr.mxu0 0.0
        %1642 = vmatpush2.xpose.msra.mxu0 0.0
        %1643 = vmatprep.subr.mxu0 0.0
        %1644 = vmatpush2.xpose.msra.mxu0 0.0
        %1645 = vmatprep.mubr.f32.mxu0 0.0
        %1646 = vmatmul.mubr.f32.gmra.mxu0 %v1573
        %v1647 = vpop.f32.mrf.mxu0
        %v1648 = vadd.f32 0.0, %v1647
        %v1649 = vpop.f32.mrf.mxu0
        %1650 = vmatprep.mubr.f32.mxu0 0.0
        %1651 = vmatmul.mubr.f32.gmra.mxu0 %v1576
        %v1652 = vpop.f32.mrf.mxu0
        %v1653 = vadd.f32 0.0, %v1652
        %v1654 = vpop.f32.mrf.mxu0
        %1655 = vdwg.mxu0
        %v1657 = vsel %vm1207, %v1388, 0
        %v1660 = vsel %vm1207, %v1389, 0
        %v1663 = vsel %vm1207, %v1251, 0
        %1665 = vmatprep.subr.mxu0 0.0
        %1666 = vmatpush1.xpose.msra.mxu0 0.0
        %1667 = vmatprep.subr.mxu0 0.0
        %1668 = vmatpush1.xpose.msra.mxu0 0.0
        %1669 = vmatprep.subr.mxu0 0.0
        %1670 = vmatpush1.xpose.msra.mxu0 0.0
        %1671 = vmatprep.subr.mxu0 0.0
        %1672 = vmatpush1.xpose.msra.mxu0 0.0
        %1673 = vmatprep.subr.mxu0 0.0
        %1674 = vmatpush1.xpose.msra.mxu0 0.0
        %1675 = vmatprep.subr.mxu0 0.0
        %1676 = vmatpush1.xpose.msra.mxu0 0.0
        %1677 = vmatprep.subr.mxu0 0.0
        %1678 = vmatpush1.xpose.msra.mxu0 0.0
        %1679 = vmatprep.subr.mxu0 0.0
        %1680 = vmatpush1.xpose.msra.mxu0 0.0
        %1681 = vmatprep.subr.mxu0 0.0
        %1682 = vmatpush1.xpose.msra.mxu0 0.0
        %1683 = vmatprep.subr.mxu0 0.0
        %1684 = vmatpush1.xpose.msra.mxu0 0.0
        %1685 = vmatprep.subr.mxu0 0.0
        %1686 = vmatpush1.xpose.msra.mxu0 0.0
        %1687 = vmatprep.subr.mxu0 0.0
        %1688 = vmatpush1.xpose.msra.mxu0 0.0
        %1689 = vmatprep.subr.mxu0 0.0
        %1690 = vmatpush1.xpose.msra.mxu0 0.0
        %1691 = vmatprep.subr.mxu0 0.0
        %1692 = vmatpush1.xpose.msra.mxu0 0.0
        %1693 = vmatprep.subr.mxu0 0.0
        %1694 = vmatpush1.xpose.msra.mxu0 0.0
        %1695 = vmatprep.subr.mxu0 0.0
        %1696 = vmatpush1.xpose.msra.mxu0 %v1663
        %1697 = vmatprep.subr.mxu0 0.0
        %1698 = vmatpush2.xpose.msra.mxu0 0.0
        %1699 = vmatprep.subr.mxu0 0.0
        %1700 = vmatpush2.xpose.msra.mxu0 0.0
        %1701 = vmatprep.subr.mxu0 0.0
        %1702 = vmatpush2.xpose.msra.mxu0 0.0
        %1703 = vmatprep.subr.mxu0 0.0
        %1704 = vmatpush2.xpose.msra.mxu0 0.0
        %1705 = vmatprep.subr.mxu0 0.0
        %1706 = vmatpush2.xpose.msra.mxu0 0.0
        %1707 = vmatprep.subr.mxu0 0.0
        %1708 = vmatpush2.xpose.msra.mxu0 0.0
        %1709 = vmatprep.subr.mxu0 0.0
        %1710 = vmatpush2.xpose.msra.mxu0 0.0
        %1711 = vmatprep.subr.mxu0 0.0
        %1712 = vmatpush2.xpose.msra.mxu0 0.0
        %1713 = vmatprep.subr.mxu0 0.0
        %1714 = vmatpush2.xpose.msra.mxu0 0.0
        %1715 = vmatprep.subr.mxu0 0.0
        %1716 = vmatpush2.xpose.msra.mxu0 0.0
        %1717 = vmatprep.subr.mxu0 0.0
        %1718 = vmatpush2.xpose.msra.mxu0 0.0
        %1719 = vmatprep.subr.mxu0 0.0
        %1720 = vmatpush2.xpose.msra.mxu0 0.0
        %1721 = vmatprep.subr.mxu0 0.0
        %1722 = vmatpush2.xpose.msra.mxu0 0.0
        %1723 = vmatprep.subr.mxu0 0.0
        %1724 = vmatpush2.xpose.msra.mxu0 0.0
        %1725 = vmatprep.subr.mxu0 0.0
        %1726 = vmatpush2.xpose.msra.mxu0 0.0
        %1727 = vmatprep.subr.mxu0 0.0
        %1728 = vmatpush2.xpose.msra.mxu0 0.0
        %1729 = vmatprep.mubr.f32.mxu0 0.0
        %1730 = vmatmul.mubr.f32.gmra.mxu0 %v1657
        %v1731 = vpop.f32.mrf.mxu0
        %v1732 = vadd.f32 0.0, %v1731
        %v1733 = vpop.f32.mrf.mxu0
        %1734 = vmatprep.mubr.f32.mxu0 0.0
        %1735 = vmatmul.mubr.f32.gmra.mxu0 %v1660
        %v1736 = vpop.f32.mrf.mxu0
        %v1737 = vadd.f32 0.0, %v1736
        %v1738 = vpop.f32.mrf.mxu0
        %1739 = vdwg.mxu0
        %1740 = vxpose.xlu0.b32.start [1/16] %v1480, 128
        %1741 = vxpose.xlu0.b32.cont [2/16] %v1485, 128
        %1742 = vxpose.xlu0.b32.cont [3/16] 0.0, 128
        %1743 = vxpose.xlu0.b32.cont [4/16] 0.0, 128
        %1744 = vxpose.xlu0.b32.cont [5/16] 0.0, 128
        %1745 = vxpose.xlu0.b32.cont [6/16] 0.0, 128
        %1746 = vxpose.xlu0.b32.cont [7/16] 0.0, 128
        %1747 = vxpose.xlu0.b32.cont [8/16] 0.0, 128
        %1748 = vxpose.xlu0.b32.cont [9/16] 0.0, 128
        %1749 = vxpose.xlu0.b32.cont [10/16] 0.0, 128
        %1750 = vxpose.xlu0.b32.cont [11/16] 0.0, 128
        %1751 = vxpose.xlu0.b32.cont [12/16] 0.0, 128
        %1752 = vxpose.xlu0.b32.cont [13/16] 0.0, 128
        %1753 = vxpose.xlu0.b32.cont [14/16] 0.0, 128
        %1754 = vxpose.xlu0.b32.cont [15/16] 0.0, 128
        %1755 = vxpose.xlu0.b32.end [16/16] 0.0, 128
        %v1756 = vpop.trf.xlu0
        %v1757 = vpop.trf.xlu0
        %v1758 = vpop.trf.xlu0
        %v1759 = vpop.trf.xlu0
        %v1760 = vpop.trf.xlu0
        %v1761 = vpop.trf.xlu0
        %v1762 = vpop.trf.xlu0
        %v1763 = vpop.trf.xlu0
        %v1764 = vpop.trf.xlu0
        %v1765 = vpop.trf.xlu0
        %v1766 = vpop.trf.xlu0
        %v1767 = vpop.trf.xlu0
        %v1768 = vpop.trf.xlu0
        %v1769 = vpop.trf.xlu0
        %v1770 = vpop.trf.xlu0
        %v1771 = vpop.trf.xlu0
        %1772 = vxpose.xlu0.b32.start [1/16] %v1564, 128
        %1773 = vxpose.xlu0.b32.cont [2/16] %v1569, 128
        %1774 = vxpose.xlu0.b32.cont [3/16] 0.0, 128
        %1775 = vxpose.xlu0.b32.cont [4/16] 0.0, 128
        %1776 = vxpose.xlu0.b32.cont [5/16] 0.0, 128
        %1777 = vxpose.xlu0.b32.cont [6/16] 0.0, 128
        %1778 = vxpose.xlu0.b32.cont [7/16] 0.0, 128
        %1779 = vxpose.xlu0.b32.cont [8/16] 0.0, 128
        %1780 = vxpose.xlu0.b32.cont [9/16] 0.0, 128
        %1781 = vxpose.xlu0.b32.cont [10/16] 0.0, 128
        %1782 = vxpose.xlu0.b32.cont [11/16] 0.0, 128
        %1783 = vxpose.xlu0.b32.cont [12/16] 0.0, 128
        %1784 = vxpose.xlu0.b32.cont [13/16] 0.0, 128
        %1785 = vxpose.xlu0.b32.cont [14/16] 0.0, 128
        %1786 = vxpose.xlu0.b32.cont [15/16] 0.0, 128
        %1787 = vxpose.xlu0.b32.end [16/16] 0.0, 128
        %v1788 = vpop.trf.xlu0
        %v1789 = vpop.trf.xlu0
        %v1790 = vpop.trf.xlu0
        %v1791 = vpop.trf.xlu0
        %v1792 = vpop.trf.xlu0
        %v1793 = vpop.trf.xlu0
        %v1794 = vpop.trf.xlu0
        %v1795 = vpop.trf.xlu0
        %v1796 = vpop.trf.xlu0
        %v1797 = vpop.trf.xlu0
        %v1798 = vpop.trf.xlu0
        %v1799 = vpop.trf.xlu0
        %v1800 = vpop.trf.xlu0
        %v1801 = vpop.trf.xlu0
        %v1802 = vpop.trf.xlu0
        %v1803 = vpop.trf.xlu0
        %1804 = vxpose.xlu0.b32.start [1/16] %v1648, 128
        %1805 = vxpose.xlu0.b32.cont [2/16] %v1653, 128
        %1806 = vxpose.xlu0.b32.cont [3/16] 0.0, 128
        %1807 = vxpose.xlu0.b32.cont [4/16] 0.0, 128
        %1808 = vxpose.xlu0.b32.cont [5/16] 0.0, 128
        %1809 = vxpose.xlu0.b32.cont [6/16] 0.0, 128
        %1810 = vxpose.xlu0.b32.cont [7/16] 0.0, 128
        %1811 = vxpose.xlu0.b32.cont [8/16] 0.0, 128
        %1812 = vxpose.xlu0.b32.cont [9/16] 0.0, 128
        %1813 = vxpose.xlu0.b32.cont [10/16] 0.0, 128
        %1814 = vxpose.xlu0.b32.cont [11/16] 0.0, 128
        %1815 = vxpose.xlu0.b32.cont [12/16] 0.0, 128
        %1816 = vxpose.xlu0.b32.cont [13/16] 0.0, 128
        %1817 = vxpose.xlu0.b32.cont [14/16] 0.0, 128
        %1818 = vxpose.xlu0.b32.cont [15/16] 0.0, 128
        %1819 = vxpose.xlu0.b32.end [16/16] 0.0, 128
        %v1820 = vpop.trf.xlu0
        %v1821 = vpop.trf.xlu0
        %v1822 = vpop.trf.xlu0
        %v1823 = vpop.trf.xlu0
        %v1824 = vpop.trf.xlu0
        %v1825 = vpop.trf.xlu0
        %v1826 = vpop.trf.xlu0
        %v1827 = vpop.trf.xlu0
        %v1828 = vpop.trf.xlu0
        %v1829 = vpop.trf.xlu0
        %v1830 = vpop.trf.xlu0
        %v1831 = vpop.trf.xlu0
        %v1832 = vpop.trf.xlu0
        %v1833 = vpop.trf.xlu0
        %v1834 = vpop.trf.xlu0
        %v1835 = vpop.trf.xlu0
        %1836 = vxpose.xlu0.b32.start [1/16] %v1732, 128
        %1837 = vxpose.xlu0.b32.cont [2/16] %v1737, 128
        %1838 = vxpose.xlu0.b32.cont [3/16] 0.0, 128
        %1839 = vxpose.xlu0.b32.cont [4/16] 0.0, 128
        %1840 = vxpose.xlu0.b32.cont [5/16] 0.0, 128
        %1841 = vxpose.xlu0.b32.cont [6/16] 0.0, 128
        %1842 = vxpose.xlu0.b32.cont [7/16] 0.0, 128
        %1843 = vxpose.xlu0.b32.cont [8/16] 0.0, 128
        %1844 = vxpose.xlu0.b32.cont [9/16] 0.0, 128
        %1845 = vxpose.xlu0.b32.cont [10/16] 0.0, 128
        %1846 = vxpose.xlu0.b32.cont [11/16] 0.0, 128
        %1847 = vxpose.xlu0.b32.cont [12/16] 0.0, 128
        %1848 = vxpose.xlu0.b32.cont [13/16] 0.0, 128
        %1849 = vxpose.xlu0.b32.cont [14/16] 0.0, 128
        %1850 = vxpose.xlu0.b32.cont [15/16] 0.0, 128
        %1851 = vxpose.xlu0.b32.end [16/16] 0.0, 128
        %v1852 = vpop.trf.xlu0
        %v1853 = vpop.trf.xlu0
        %v1854 = vpop.trf.xlu0
        %v1855 = vpop.trf.xlu0
        %v1856 = vpop.trf.xlu0
        %v1857 = vpop.trf.xlu0
        %v1858 = vpop.trf.xlu0
        %v1859 = vpop.trf.xlu0
        %v1860 = vpop.trf.xlu0
        %v1861 = vpop.trf.xlu0
        %v1862 = vpop.trf.xlu0
        %v1863 = vpop.trf.xlu0
        %v1864 = vpop.trf.xlu0
        %v1865 = vpop.trf.xlu0
        %v1866 = vpop.trf.xlu0
        %v1867 = vpop.trf.xlu0
        %v1868 = vcombine.low %v1756, %v1820
        %v1869 = vcombine.high %v1756, %v1820
        %v1871 = vunpack.c.l.s4 1983009808
        %v1872 = vunpack.c.0.s8 %v1871
        %v1873 = vlaneseq
        %v1874 = vshrl.u32 %v1873, 7
        %v1875 = vsub.s32 %v1872, %v1874
        %v1876 = vrot.slane %v1868, %v1875
        %v1878 = vunpack.c.l.s4 1983009808
        %v1879 = vunpack.c.0.s8 %v1878
        %v1880 = vlaneseq
        %v1881 = vshrl.u32 %v1880, 7
        %v1882 = vsub.s32 %v1879, %v1881
        %v1883 = vrot.slane %v1869, %v1882
        %v1884 = vcombine.low %v1788, %v1852
        %v1885 = vcombine.high %v1788, %v1852
        %v1887 = vunpack.c.l.s4 1983009808
        %v1888 = vunpack.c.0.s8 %v1887
        %v1889 = vlaneseq
        %v1890 = vshrl.u32 %v1889, 7
        %v1891 = vsub.s32 %v1888, %v1890
        %v1892 = vrot.slane %v1884, %v1891
        %v1894 = vunpack.c.l.s4 1983009808
        %v1895 = vunpack.c.0.s8 %v1894
        %v1896 = vlaneseq
        %v1897 = vshrl.u32 %v1896, 7
        %v1898 = vsub.s32 %v1895, %v1897
        %v1899 = vrot.slane %v1885, %v1898
        %v1900 = vcombine.low %v1876, %v1892
        %v1901 = vcombine.high %v1876, %v1892
        %v1903 = vunpack.c.l.s4 1934713408
        %v1904 = vunpack.c.0.s8 %v1903
        %v1905 = vlaneseq
        %v1906 = vshrl.u32 %v1905, 7
        %v1907 = vsub.s32 %v1904, %v1906
        %v1908 = vrot.slane %v1900, %v1907
        %v1910 = vunpack.c.l.s4 1934713408
        %v1911 = vunpack.c.0.s8 %v1910
        %v1912 = vlaneseq
        %v1913 = vshrl.u32 %v1912, 7
        %v1914 = vsub.s32 %v1911, %v1913
        %v1915 = vrot.slane %v1901, %v1914
        %v1916 = vcombine.low %v1883, %v1899
        %v1917 = vcombine.high %v1883, %v1899
        %v1919 = vunpack.c.l.s4 1934713408
        %v1920 = vunpack.c.0.s8 %v1919
        %v1921 = vlaneseq
        %v1922 = vshrl.u32 %v1921, 7
        %v1923 = vsub.s32 %v1920, %v1922
        %v1924 = vrot.slane %v1916, %v1923
        %v1926 = vunpack.c.l.s4 1934713408
        %v1927 = vunpack.c.0.s8 %v1926
        %v1928 = vlaneseq
        %v1929 = vshrl.u32 %v1928, 7
        %v1930 = vsub.s32 %v1927, %v1929
        %v1931 = vrot.slane %v1917, %v1930
        %v1932 = vcombine.high %v1908, 0.0
        %v1933 = vcombine.high %v1915, 0.0
        %v1934 = vcombine.high %v1924, 0.0
        %v1935 = vcombine.high %v1931, 0.0
        %v1936 = vcombine.low %v1908, %v1915
        %v1938 = vunpack.c.l.s4 1983009808
        %v1939 = vunpack.c.0.s8 %v1938
        %v1940 = vlaneseq
        %v1941 = vshrl.u32 %v1940, 7
        %v1942 = vsub.s32 %v1939, %v1941
        %v1943 = vrot.slane %v1936, %v1942
        %v1944 = vcombine.low %v1932, %v1933
        %v1946 = vunpack.c.l.s4 1983009808
        %v1947 = vunpack.c.0.s8 %v1946
        %v1948 = vlaneseq
        %v1949 = vshrl.u32 %v1948, 7
        %v1950 = vsub.s32 %v1947, %v1949
        %v1951 = vrot.slane %v1944, %v1950
        %v1952 = vcombine.low %v1924, %v1931
        %v1954 = vunpack.c.l.s4 1983009808
        %v1955 = vunpack.c.0.s8 %v1954
        %v1956 = vlaneseq
        %v1957 = vshrl.u32 %v1956, 7
        %v1958 = vsub.s32 %v1955, %v1957
        %v1959 = vrot.slane %v1952, %v1958
        %v1960 = vcombine.low %v1934, %v1935
        %v1962 = vunpack.c.l.s4 1983009808
        %v1963 = vunpack.c.0.s8 %v1962
        %v1964 = vlaneseq
        %v1965 = vshrl.u32 %v1964, 7
        %v1966 = vsub.s32 %v1963, %v1965
        %v1967 = vrot.slane %v1960, %v1966
        %v1968 = vcombine.low %v1943, %v1951
        %v1969 = vcombine.high %v1943, %v1951
        %v1971 = vunpack.c.l.s4 1934713408
        %v1972 = vunpack.c.0.s8 %v1971
        %v1973 = vlaneseq
        %v1974 = vshrl.u32 %v1973, 7
        %v1975 = vsub.s32 %v1972, %v1974
        %v1976 = vrot.slane %v1968, %v1975
        %v1978 = vunpack.c.l.s4 1934713408
        %v1979 = vunpack.c.0.s8 %v1978
        %v1980 = vlaneseq
        %v1981 = vshrl.u32 %v1980, 7
        %v1982 = vsub.s32 %v1979, %v1981
        %v1983 = vrot.slane %v1969, %v1982
        %v1984 = vcombine.low %v1959, %v1967
        %v1985 = vcombine.high %v1959, %v1967
        %v1987 = vunpack.c.l.s4 1934713408
        %v1988 = vunpack.c.0.s8 %v1987
        %v1989 = vlaneseq
        %v1990 = vshrl.u32 %v1989, 7
        %v1991 = vsub.s32 %v1988, %v1990
        %v1992 = vrot.slane %v1984, %v1991
        %v1994 = vunpack.c.l.s4 1934713408
        %v1995 = vunpack.c.0.s8 %v1994
        %v1996 = vlaneseq
        %v1997 = vshrl.u32 %v1996, 7
        %v1998 = vsub.s32 %v1995, %v1997
        %v1999 = vrot.slane %v1985, %v1998
        %v2000 = vcombine.low %v1976, %v1992
        %v2001 = vcombine.high %v1976, %v1992
        %v2002 = vcombine.low %v1983, %v1999
        %v2003 = vcombine.high %v1983, %v1999
        %2005 = vrot.lane.b32.xlu0 %v2001, 16
        %v2006 = vpop.permute.xlu0 %2005
        %2009 = vrot.lane.b32.xlu0 %v2002, 32
        %v2010 = vpop.permute.xlu0 %2009
        %2013 = vrot.lane.b32.xlu0 %v2003, 48
        %v2014 = vpop.permute.xlu0 %2013
        %v2016 = vsel %vm918, %v2000, %v2006
        %v2017 = vsel %vm521, %v2016, %v2010
        %vm2018 = vcmask 392192
        %v2019 = vsel %vm2018, %v2017, %v2014
        %v2020 = vld [vmem:[%s9] sm:$0xff]
        %v2021 = vld [vmem:[%s9 + $0x8] sm:$0xff]
        %v2022 = vld [vmem:[%s9 + $0x10] sm:$0xff]
        %v2023 = vld [vmem:[%s9 + $0x18] sm:$0xff]
        %v2024 = vld [vmem:[%s9 + $0x20] sm:$0xff]
        %v2025 = vld [vmem:[%s9 + $0x28] sm:$0xff]
        %v2026 = vld [vmem:[%s9 + $0x30] sm:$0xff]
        %v2027 = vld [vmem:[%s9 + $0x38] sm:$0xff]
        %v2028 = vld [vmem:[%s10] sm:$0x1]
        %v2030 = vlaneseq
        %v2031 = vshrl.u32 %v2030, 7
        %v2032 = vsub.s32 0, %v2031
        %v2033 = vrot.slane %v2028, %v2032
        %vm2035 = vcmask 523264
        %v2037 = vsel %vm2035, %v2019, 0
        %2039 = vmatprep.subr.mxu0 0.0
        %2040 = vmatpush1.msra.mxu0 0.0
        %2041 = vmatprep.subr.mxu0 0.0
        %2042 = vmatpush1.msra.mxu0 0.0
        %2043 = vmatprep.subr.mxu0 0.0
        %2044 = vmatpush1.msra.mxu0 0.0
        %2045 = vmatprep.subr.mxu0 0.0
        %2046 = vmatpush1.msra.mxu0 0.0
        %2047 = vmatprep.subr.mxu0 0.0
        %2048 = vmatpush1.msra.mxu0 0.0
        %2049 = vmatprep.subr.mxu0 0.0
        %2050 = vmatpush1.msra.mxu0 0.0
        %2051 = vmatprep.subr.mxu0 0.0
        %2052 = vmatpush1.msra.mxu0 0.0
        %2053 = vmatprep.subr.mxu0 0.0
        %2054 = vmatpush1.msra.mxu0 0.0
        %2055 = vmatprep.subr.mxu0 0.0
        %2056 = vmatpush1.msra.mxu0 %v2027
        %2057 = vmatprep.subr.mxu0 0.0
        %2058 = vmatpush1.msra.mxu0 %v2026
        %2059 = vmatprep.subr.mxu0 0.0
        %2060 = vmatpush1.msra.mxu0 %v2025
        %2061 = vmatprep.subr.mxu0 0.0
        %2062 = vmatpush1.msra.mxu0 %v2024
        %2063 = vmatprep.subr.mxu0 0.0
        %2064 = vmatpush1.msra.mxu0 %v2023
        %2065 = vmatprep.subr.mxu0 0.0
        %2066 = vmatpush1.msra.mxu0 %v2022
        %2067 = vmatprep.subr.mxu0 0.0
        %2068 = vmatpush1.msra.mxu0 %v2021
        %2069 = vmatprep.subr.mxu0 0.0
        %2070 = vmatpush1.msra.mxu0 %v2020
        %2071 = vmatprep.subr.mxu0 0.0
        %2072 = vmatpush2.msra.mxu0 0.0
        %2073 = vmatprep.subr.mxu0 0.0
        %2074 = vmatpush2.msra.mxu0 0.0
        %2075 = vmatprep.subr.mxu0 0.0
        %2076 = vmatpush2.msra.mxu0 0.0
        %2077 = vmatprep.subr.mxu0 0.0
        %2078 = vmatpush2.msra.mxu0 0.0
        %2079 = vmatprep.subr.mxu0 0.0
        %2080 = vmatpush2.msra.mxu0 0.0
        %2081 = vmatprep.subr.mxu0 0.0
        %2082 = vmatpush2.msra.mxu0 0.0
        %2083 = vmatprep.subr.mxu0 0.0
        %2084 = vmatpush2.msra.mxu0 0.0
        %2085 = vmatprep.subr.mxu0 0.0
        %2086 = vmatpush2.msra.mxu0 0.0
        %2087 = vmatprep.subr.mxu0 0.0
        %2088 = vmatpush2.msra.mxu0 0.0
        %2089 = vmatprep.subr.mxu0 0.0
        %2090 = vmatpush2.msra.mxu0 0.0
        %2091 = vmatprep.subr.mxu0 0.0
        %2092 = vmatpush2.msra.mxu0 0.0
        %2093 = vmatprep.subr.mxu0 0.0
        %2094 = vmatpush2.msra.mxu0 0.0
        %2095 = vmatprep.subr.mxu0 0.0
        %2096 = vmatpush2.msra.mxu0 0.0
        %2097 = vmatprep.subr.mxu0 0.0
        %2098 = vmatpush2.msra.mxu0 0.0
        %2099 = vmatprep.subr.mxu0 0.0
        %2100 = vmatpush2.msra.mxu0 0.0
        %2101 = vmatprep.subr.mxu0 0.0
        %2102 = vmatpush2.msra.mxu0 0.0
        %2103 = vmatprep.mubr.f32.mxu0 0.0
        %2104 = vmatmul.mubr.f32.gmra.mxu0 %v2037
        %v2105 = vpop.f32.mrf.mxu0
        %v2106 = vadd.f32 %v2033, %v2105
        %v2107 = vpop.f32.mrf.mxu0
        %2108 = vdwg.mxu0
        %v2109 = vld [vmem:[%s482] sm:$0x7f]
        %s2110 = scalar_lea.vmem %s7, 32
        %v2111 = vld [vmem:[%s2110] sm:$0xff]
        %v2112 = vld [vmem:[%s2110 + $0x8] sm:$0xff]
        %v2113 = vld [vmem:[%s2110 + $0x10] sm:$0xff]
        %v2114 = vld [vmem:[%s2110 + $0x18] sm:$0xff]
        %s2115 = scalar_lea.vmem %s8, 1
        %v2116 = vld [vmem:[%s2115] sm:$0x1]
        %v2118 = vlaneseq
        %v2119 = vshrl.u32 %v2118, 7
        %v2120 = vsub.s32 0, %v2119
        %v2121 = vrot.slane %v2116, %v2120
        %v2124 = vsel %vm521, %v2109, 0
        %2126 = vmatprep.subr.mxu0 0.0
        %2127 = vmatpush1.msra.mxu0 0.0
        %2128 = vmatprep.subr.mxu0 0.0
        %2129 = vmatpush1.msra.mxu0 0.0
        %2130 = vmatprep.subr.mxu0 0.0
        %2131 = vmatpush1.msra.mxu0 0.0
        %2132 = vmatprep.subr.mxu0 0.0
        %2133 = vmatpush1.msra.mxu0 0.0
        %2134 = vmatprep.subr.mxu0 0.0
        %2135 = vmatpush1.msra.mxu0 0.0
        %2136 = vmatprep.subr.mxu0 0.0
        %2137 = vmatpush1.msra.mxu0 0.0
        %2138 = vmatprep.subr.mxu0 0.0
        %2139 = vmatpush1.msra.mxu0 0.0
        %2140 = vmatprep.subr.mxu0 0.0
        %2141 = vmatpush1.msra.mxu0 0.0
        %2142 = vmatprep.subr.mxu0 0.0
        %2143 = vmatpush1.msra.mxu0 0.0
        %2144 = vmatprep.subr.mxu0 0.0
        %2145 = vmatpush1.msra.mxu0 0.0
        %2146 = vmatprep.subr.mxu0 0.0
        %2147 = vmatpush1.msra.mxu0 0.0
        %2148 = vmatprep.subr.mxu0 0.0
        %2149 = vmatpush1.msra.mxu0 0.0
        %2150 = vmatprep.subr.mxu0 0.0
        %2151 = vmatpush1.msra.mxu0 %v2114
        %2152 = vmatprep.subr.mxu0 0.0
        %2153 = vmatpush1.msra.mxu0 %v2113
        %2154 = vmatprep.subr.mxu0 0.0
        %2155 = vmatpush1.msra.mxu0 %v2112
        %2156 = vmatprep.subr.mxu0 0.0
        %2157 = vmatpush1.msra.mxu0 %v2111
        %2158 = vmatprep.subr.mxu0 0.0
        %2159 = vmatpush2.msra.mxu0 0.0
        %2160 = vmatprep.subr.mxu0 0.0
        %2161 = vmatpush2.msra.mxu0 0.0
        %2162 = vmatprep.subr.mxu0 0.0
        %2163 = vmatpush2.msra.mxu0 0.0
        %2164 = vmatprep.subr.mxu0 0.0
        %2165 = vmatpush2.msra.mxu0 0.0
        %2166 = vmatprep.subr.mxu0 0.0
        %2167 = vmatpush2.msra.mxu0 0.0
        %2168 = vmatprep.subr.mxu0 0.0
        %2169 = vmatpush2.msra.mxu0 0.0
        %2170 = vmatprep.subr.mxu0 0.0
        %2171 = vmatpush2.msra.mxu0 0.0
        %2172 = vmatprep.subr.mxu0 0.0
        %2173 = vmatpush2.msra.mxu0 0.0
        %2174 = vmatprep.subr.mxu0 0.0
        %2175 = vmatpush2.msra.mxu0 0.0
        %2176 = vmatprep.subr.mxu0 0.0
        %2177 = vmatpush2.msra.mxu0 0.0
        %2178 = vmatprep.subr.mxu0 0.0
        %2179 = vmatpush2.msra.mxu0 0.0
        %2180 = vmatprep.subr.mxu0 0.0
        %2181 = vmatpush2.msra.mxu0 0.0
        %2182 = vmatprep.subr.mxu0 0.0
        %2183 = vmatpush2.msra.mxu0 0.0
        %2184 = vmatprep.subr.mxu0 0.0
        %2185 = vmatpush2.msra.mxu0 0.0
        %2186 = vmatprep.subr.mxu0 0.0
        %2187 = vmatpush2.msra.mxu0 0.0
        %2188 = vmatprep.subr.mxu0 0.0
        %2189 = vmatpush2.msra.mxu0 0.0
        %2190 = vmatprep.mubr.f32.mxu0 0.0
        %2191 = vmatmul.mubr.f32.gmra.mxu0 %v2124
        %v2192 = vpop.f32.mrf.mxu0
        %v2193 = vadd.f32 %v2121, %v2192
        %v2194 = vpop.f32.mrf.mxu0
        %2195 = vdwg.mxu0
        %2197 = vrot.lane.b32.xlu0 %v2193, 112
        %v2198 = vpop.permute.xlu0 %2197
        %2200 = vrot.lane.b32.xlu0 %v2193, 96
        %v2201 = vpop.permute.xlu0 %2200
        %2203 = vrot.lane.b32.xlu0 %v2193, 80
        %v2204 = vpop.permute.xlu0 %2203
        %2206 = vxpose.xlu0.b32.start [1/16] %v2193, 128
        %2207 = vxpose.xlu0.b32.cont [2/16] 0.0, 128
        %2208 = vxpose.xlu0.b32.cont [3/16] 0.0, 128
        %2209 = vxpose.xlu0.b32.cont [4/16] 0.0, 128
        %2210 = vxpose.xlu0.b32.cont [5/16] 0.0, 128
        %2211 = vxpose.xlu0.b32.cont [6/16] 0.0, 128
        %2212 = vxpose.xlu0.b32.cont [7/16] 0.0, 128
        %2213 = vxpose.xlu0.b32.cont [8/16] 0.0, 128
        %2214 = vxpose.xlu0.b32.cont [9/16] 0.0, 128
        %2215 = vxpose.xlu0.b32.cont [10/16] 0.0, 128
        %2216 = vxpose.xlu0.b32.cont [11/16] 0.0, 128
        %2217 = vxpose.xlu0.b32.cont [12/16] 0.0, 128
        %2218 = vxpose.xlu0.b32.cont [13/16] 0.0, 128
        %2219 = vxpose.xlu0.b32.cont [14/16] 0.0, 128
        %2220 = vxpose.xlu0.b32.cont [15/16] 0.0, 128
        %2221 = vxpose.xlu0.b32.end [16/16] 0.0, 128
        %v2222 = vpop.trf.xlu0
        %v2223 = vpop.trf.xlu0
        %v2224 = vpop.trf.xlu0
        %v2225 = vpop.trf.xlu0
        %v2226 = vpop.trf.xlu0
        %v2227 = vpop.trf.xlu0
        %v2228 = vpop.trf.xlu0
        %v2229 = vpop.trf.xlu0
        %v2230 = vpop.trf.xlu0
        %v2231 = vpop.trf.xlu0
        %v2232 = vpop.trf.xlu0
        %v2233 = vpop.trf.xlu0
        %v2234 = vpop.trf.xlu0
        %v2235 = vpop.trf.xlu0
        %v2236 = vpop.trf.xlu0
        %v2237 = vpop.trf.xlu0
        %2238 = vxpose.xlu0.b32.start [1/16] %v2198, 128
        %2239 = vxpose.xlu0.b32.cont [2/16] 0.0, 128
        %2240 = vxpose.xlu0.b32.cont [3/16] 0.0, 128
        %2241 = vxpose.xlu0.b32.cont [4/16] 0.0, 128
        %2242 = vxpose.xlu0.b32.cont [5/16] 0.0, 128
        %2243 = vxpose.xlu0.b32.cont [6/16] 0.0, 128
        %2244 = vxpose.xlu0.b32.cont [7/16] 0.0, 128
        %2245 = vxpose.xlu0.b32.cont [8/16] 0.0, 128
        %2246 = vxpose.xlu0.b32.cont [9/16] 0.0, 128
        %2247 = vxpose.xlu0.b32.cont [10/16] 0.0, 128
        %2248 = vxpose.xlu0.b32.cont [11/16] 0.0, 128
        %2249 = vxpose.xlu0.b32.cont [12/16] 0.0, 128
        %2250 = vxpose.xlu0.b32.cont [13/16] 0.0, 128
        %2251 = vxpose.xlu0.b32.cont [14/16] 0.0, 128
        %2252 = vxpose.xlu0.b32.cont [15/16] 0.0, 128
        %2253 = vxpose.xlu0.b32.end [16/16] 0.0, 128
        %v2254 = vpop.trf.xlu0
        %v2255 = vpop.trf.xlu0
        %v2256 = vpop.trf.xlu0
        %v2257 = vpop.trf.xlu0
        %v2258 = vpop.trf.xlu0
        %v2259 = vpop.trf.xlu0
        %v2260 = vpop.trf.xlu0
        %v2261 = vpop.trf.xlu0
        %v2262 = vpop.trf.xlu0
        %v2263 = vpop.trf.xlu0
        %v2264 = vpop.trf.xlu0
        %v2265 = vpop.trf.xlu0
        %v2266 = vpop.trf.xlu0
        %v2267 = vpop.trf.xlu0
        %v2268 = vpop.trf.xlu0
        %v2269 = vpop.trf.xlu0
        %2270 = vxpose.xlu0.b32.start [1/16] %v2201, 128
        %2271 = vxpose.xlu0.b32.cont [2/16] 0.0, 128
        %2272 = vxpose.xlu0.b32.cont [3/16] 0.0, 128
        %2273 = vxpose.xlu0.b32.cont [4/16] 0.0, 128
        %2274 = vxpose.xlu0.b32.cont [5/16] 0.0, 128
        %2275 = vxpose.xlu0.b32.cont [6/16] 0.0, 128
        %2276 = vxpose.xlu0.b32.cont [7/16] 0.0, 128
        %2277 = vxpose.xlu0.b32.cont [8/16] 0.0, 128
        %2278 = vxpose.xlu0.b32.cont [9/16] 0.0, 128
        %2279 = vxpose.xlu0.b32.cont [10/16] 0.0, 128
        %2280 = vxpose.xlu0.b32.cont [11/16] 0.0, 128
        %2281 = vxpose.xlu0.b32.cont [12/16] 0.0, 128
        %2282 = vxpose.xlu0.b32.cont [13/16] 0.0, 128
        %2283 = vxpose.xlu0.b32.cont [14/16] 0.0, 128
        %2284 = vxpose.xlu0.b32.cont [15/16] 0.0, 128
        %2285 = vxpose.xlu0.b32.end [16/16] 0.0, 128
        %v2286 = vpop.trf.xlu0
        %v2287 = vpop.trf.xlu0
        %v2288 = vpop.trf.xlu0
        %v2289 = vpop.trf.xlu0
        %v2290 = vpop.trf.xlu0
        %v2291 = vpop.trf.xlu0
        %v2292 = vpop.trf.xlu0
        %v2293 = vpop.trf.xlu0
        %v2294 = vpop.trf.xlu0
        %v2295 = vpop.trf.xlu0
        %v2296 = vpop.trf.xlu0
        %v2297 = vpop.trf.xlu0
        %v2298 = vpop.trf.xlu0
        %v2299 = vpop.trf.xlu0
        %v2300 = vpop.trf.xlu0
        %v2301 = vpop.trf.xlu0
        %2302 = vxpose.xlu0.b32.start [1/16] %v2204, 128
        %2303 = vxpose.xlu0.b32.cont [2/16] 0.0, 128
        %2304 = vxpose.xlu0.b32.cont [3/16] 0.0, 128
        %2305 = vxpose.xlu0.b32.cont [4/16] 0.0, 128
        %2306 = vxpose.xlu0.b32.cont [5/16] 0.0, 128
        %2307 = vxpose.xlu0.b32.cont [6/16] 0.0, 128
        %2308 = vxpose.xlu0.b32.cont [7/16] 0.0, 128
        %2309 = vxpose.xlu0.b32.cont [8/16] 0.0, 128
        %2310 = vxpose.xlu0.b32.cont [9/16] 0.0, 128
        %2311 = vxpose.xlu0.b32.cont [10/16] 0.0, 128
        %2312 = vxpose.xlu0.b32.cont [11/16] 0.0, 128
        %2313 = vxpose.xlu0.b32.cont [12/16] 0.0, 128
        %2314 = vxpose.xlu0.b32.cont [13/16] 0.0, 128
        %2315 = vxpose.xlu0.b32.cont [14/16] 0.0, 128
        %2316 = vxpose.xlu0.b32.cont [15/16] 0.0, 128
        %2317 = vxpose.xlu0.b32.end [16/16] 0.0, 128
        %v2318 = vpop.trf.xlu0
        %v2319 = vpop.trf.xlu0
        %v2320 = vpop.trf.xlu0
        %v2321 = vpop.trf.xlu0
        %v2322 = vpop.trf.xlu0
        %v2323 = vpop.trf.xlu0
        %v2324 = vpop.trf.xlu0
        %v2325 = vpop.trf.xlu0
        %v2326 = vpop.trf.xlu0
        %v2327 = vpop.trf.xlu0
        %v2328 = vpop.trf.xlu0
        %v2329 = vpop.trf.xlu0
        %v2330 = vpop.trf.xlu0
        %v2331 = vpop.trf.xlu0
        %v2332 = vpop.trf.xlu0
        %v2333 = vpop.trf.xlu0
        %2334 = vrot.lane.b32.xlu0 %v666, 64
        %v2335 = vpop.permute.xlu0 %2334
        %v2336 = vsel %vm918, %v2335, 0
        %2338 = vmatprep.subr.mxu0 0.0
        %2339 = vmatpush1.msra.mxu0 0.0
        %2340 = vmatprep.subr.mxu0 0.0
        %2341 = vmatpush1.msra.mxu0 0.0
        %2342 = vmatprep.subr.mxu0 0.0
        %2343 = vmatpush1.msra.mxu0 0.0
        %2344 = vmatprep.subr.mxu0 0.0
        %2345 = vmatpush1.msra.mxu0 0.0
        %2346 = vmatprep.subr.mxu0 0.0
        %2347 = vmatpush1.msra.mxu0 0.0
        %2348 = vmatprep.subr.mxu0 0.0
        %2349 = vmatpush1.msra.mxu0 0.0
        %2350 = vmatprep.subr.mxu0 0.0
        %2351 = vmatpush1.msra.mxu0 0.0
        %2352 = vmatprep.subr.mxu0 0.0
        %2353 = vmatpush1.msra.mxu0 0.0
        %2354 = vmatprep.subr.mxu0 0.0
        %2355 = vmatpush1.msra.mxu0 0.0
        %2356 = vmatprep.subr.mxu0 0.0
        %2357 = vmatpush1.msra.mxu0 0.0
        %2358 = vmatprep.subr.mxu0 0.0
        %2359 = vmatpush1.msra.mxu0 0.0
        %2360 = vmatprep.subr.mxu0 0.0
        %2361 = vmatpush1.msra.mxu0 0.0
        %2362 = vmatprep.subr.mxu0 0.0
        %2363 = vmatpush1.msra.mxu0 0.0
        %2364 = vmatprep.subr.mxu0 0.0
        %2365 = vmatpush1.msra.mxu0 0.0
        %2366 = vmatprep.subr.mxu0 0.0
        %2367 = vmatpush1.msra.mxu0 %v2223
        %2368 = vmatprep.subr.mxu0 0.0
        %2369 = vmatpush1.msra.mxu0 %v2222
        %2370 = vmatprep.subr.mxu0 0.0
        %2371 = vmatpush2.msra.mxu0 0.0
        %2372 = vmatprep.subr.mxu0 0.0
        %2373 = vmatpush2.msra.mxu0 0.0
        %2374 = vmatprep.subr.mxu0 0.0
        %2375 = vmatpush2.msra.mxu0 0.0
        %2376 = vmatprep.subr.mxu0 0.0
        %2377 = vmatpush2.msra.mxu0 0.0
        %2378 = vmatprep.subr.mxu0 0.0
        %2379 = vmatpush2.msra.mxu0 0.0
        %2380 = vmatprep.subr.mxu0 0.0
        %2381 = vmatpush2.msra.mxu0 0.0
        %2382 = vmatprep.subr.mxu0 0.0
        %2383 = vmatpush2.msra.mxu0 0.0
        %2384 = vmatprep.subr.mxu0 0.0
        %2385 = vmatpush2.msra.mxu0 0.0
        %2386 = vmatprep.subr.mxu0 0.0
        %2387 = vmatpush2.msra.mxu0 0.0
        %2388 = vmatprep.subr.mxu0 0.0
        %2389 = vmatpush2.msra.mxu0 0.0
        %2390 = vmatprep.subr.mxu0 0.0
        %2391 = vmatpush2.msra.mxu0 0.0
        %2392 = vmatprep.subr.mxu0 0.0
        %2393 = vmatpush2.msra.mxu0 0.0
        %2394 = vmatprep.subr.mxu0 0.0
        %2395 = vmatpush2.msra.mxu0 0.0
        %2396 = vmatprep.subr.mxu0 0.0
        %2397 = vmatpush2.msra.mxu0 0.0
        %2398 = vmatprep.subr.mxu0 0.0
        %2399 = vmatpush2.msra.mxu0 0.0
        %2400 = vmatprep.subr.mxu0 0.0
        %2401 = vmatpush2.msra.mxu0 0.0
        %2402 = vmatprep.mubr.f32.mxu0 0.0
        %2403 = vmatmul.mubr.f32.gmra.mxu0 %v2336
        %v2404 = vpop.f32.mrf.mxu0
        %v2405 = vadd.f32 0.0, %v2404
        %v2406 = vpop.f32.mrf.mxu0
        %2407 = vdwg.mxu0
        %2408 = vrot.lane.b32.xlu0 %v765, 64
        %v2409 = vpop.permute.xlu0 %2408
        %v2410 = vsel %vm918, %v2409, 0
        %2412 = vmatprep.subr.mxu0 0.0
        %2413 = vmatpush1.msra.mxu0 0.0
        %2414 = vmatprep.subr.mxu0 0.0
        %2415 = vmatpush1.msra.mxu0 0.0
        %2416 = vmatprep.subr.mxu0 0.0
        %2417 = vmatpush1.msra.mxu0 0.0
        %2418 = vmatprep.subr.mxu0 0.0
        %2419 = vmatpush1.msra.mxu0 0.0
        %2420 = vmatprep.subr.mxu0 0.0
        %2421 = vmatpush1.msra.mxu0 0.0
        %2422 = vmatprep.subr.mxu0 0.0
        %2423 = vmatpush1.msra.mxu0 0.0
        %2424 = vmatprep.subr.mxu0 0.0
        %2425 = vmatpush1.msra.mxu0 0.0
        %2426 = vmatprep.subr.mxu0 0.0
        %2427 = vmatpush1.msra.mxu0 0.0
        %2428 = vmatprep.subr.mxu0 0.0
        %2429 = vmatpush1.msra.mxu0 0.0
        %2430 = vmatprep.subr.mxu0 0.0
        %2431 = vmatpush1.msra.mxu0 0.0
        %2432 = vmatprep.subr.mxu0 0.0
        %2433 = vmatpush1.msra.mxu0 0.0
        %2434 = vmatprep.subr.mxu0 0.0
        %2435 = vmatpush1.msra.mxu0 0.0
        %2436 = vmatprep.subr.mxu0 0.0
        %2437 = vmatpush1.msra.mxu0 0.0
        %2438 = vmatprep.subr.mxu0 0.0
        %2439 = vmatpush1.msra.mxu0 0.0
        %2440 = vmatprep.subr.mxu0 0.0
        %2441 = vmatpush1.msra.mxu0 %v2255
        %2442 = vmatprep.subr.mxu0 0.0
        %2443 = vmatpush1.msra.mxu0 %v2254
        %2444 = vmatprep.subr.mxu0 0.0
        %2445 = vmatpush2.msra.mxu0 0.0
        %2446 = vmatprep.subr.mxu0 0.0
        %2447 = vmatpush2.msra.mxu0 0.0
        %2448 = vmatprep.subr.mxu0 0.0
        %2449 = vmatpush2.msra.mxu0 0.0
        %2450 = vmatprep.subr.mxu0 0.0
        %2451 = vmatpush2.msra.mxu0 0.0
        %2452 = vmatprep.subr.mxu0 0.0
        %2453 = vmatpush2.msra.mxu0 0.0
        %2454 = vmatprep.subr.mxu0 0.0
        %2455 = vmatpush2.msra.mxu0 0.0
        %2456 = vmatprep.subr.mxu0 0.0
        %2457 = vmatpush2.msra.mxu0 0.0
        %2458 = vmatprep.subr.mxu0 0.0
        %2459 = vmatpush2.msra.mxu0 0.0
        %2460 = vmatprep.subr.mxu0 0.0
        %2461 = vmatpush2.msra.mxu0 0.0
        %2462 = vmatprep.subr.mxu0 0.0
        %2463 = vmatpush2.msra.mxu0 0.0
        %2464 = vmatprep.subr.mxu0 0.0
        %2465 = vmatpush2.msra.mxu0 0.0
        %2466 = vmatprep.subr.mxu0 0.0
        %2467 = vmatpush2.msra.mxu0 0.0
        %2468 = vmatprep.subr.mxu0 0.0
        %2469 = vmatpush2.msra.mxu0 0.0
        %2470 = vmatprep.subr.mxu0 0.0
        %2471 = vmatpush2.msra.mxu0 0.0
        %2472 = vmatprep.subr.mxu0 0.0
        %2473 = vmatpush2.msra.mxu0 0.0
        %2474 = vmatprep.subr.mxu0 0.0
        %2475 = vmatpush2.msra.mxu0 0.0
        %2476 = vmatprep.mubr.f32.mxu0 0.0
        %2477 = vmatmul.mubr.f32.gmra.mxu0 %v2410
        %v2478 = vpop.f32.mrf.mxu0
        %v2479 = vadd.f32 0.0, %v2478
        %v2480 = vpop.f32.mrf.mxu0
        %2481 = vdwg.mxu0
        %2482 = vrot.lane.b32.xlu0 %v767, 64
        %v2483 = vpop.permute.xlu0 %2482
        %v2484 = vsel %vm918, %v2483, 0
        %2486 = vmatprep.subr.mxu0 0.0
        %2487 = vmatpush1.msra.mxu0 0.0
        %2488 = vmatprep.subr.mxu0 0.0
        %2489 = vmatpush1.msra.mxu0 0.0
        %2490 = vmatprep.subr.mxu0 0.0
        %2491 = vmatpush1.msra.mxu0 0.0
        %2492 = vmatprep.subr.mxu0 0.0
        %2493 = vmatpush1.msra.mxu0 0.0
        %2494 = vmatprep.subr.mxu0 0.0
        %2495 = vmatpush1.msra.mxu0 0.0
        %2496 = vmatprep.subr.mxu0 0.0
        %2497 = vmatpush1.msra.mxu0 0.0
        %2498 = vmatprep.subr.mxu0 0.0
        %2499 = vmatpush1.msra.mxu0 0.0
        %2500 = vmatprep.subr.mxu0 0.0
        %2501 = vmatpush1.msra.mxu0 0.0
        %2502 = vmatprep.subr.mxu0 0.0
        %2503 = vmatpush1.msra.mxu0 0.0
        %2504 = vmatprep.subr.mxu0 0.0
        %2505 = vmatpush1.msra.mxu0 0.0
        %2506 = vmatprep.subr.mxu0 0.0
        %2507 = vmatpush1.msra.mxu0 0.0
        %2508 = vmatprep.subr.mxu0 0.0
        %2509 = vmatpush1.msra.mxu0 0.0
        %2510 = vmatprep.subr.mxu0 0.0
        %2511 = vmatpush1.msra.mxu0 0.0
        %2512 = vmatprep.subr.mxu0 0.0
        %2513 = vmatpush1.msra.mxu0 0.0
        %2514 = vmatprep.subr.mxu0 0.0
        %2515 = vmatpush1.msra.mxu0 %v2287
        %2516 = vmatprep.subr.mxu0 0.0
        %2517 = vmatpush1.msra.mxu0 %v2286
        %2518 = vmatprep.subr.mxu0 0.0
        %2519 = vmatpush2.msra.mxu0 0.0
        %2520 = vmatprep.subr.mxu0 0.0
        %2521 = vmatpush2.msra.mxu0 0.0
        %2522 = vmatprep.subr.mxu0 0.0
        %2523 = vmatpush2.msra.mxu0 0.0
        %2524 = vmatprep.subr.mxu0 0.0
        %2525 = vmatpush2.msra.mxu0 0.0
        %2526 = vmatprep.subr.mxu0 0.0
        %2527 = vmatpush2.msra.mxu0 0.0
        %2528 = vmatprep.subr.mxu0 0.0
        %2529 = vmatpush2.msra.mxu0 0.0
        %2530 = vmatprep.subr.mxu0 0.0
        %2531 = vmatpush2.msra.mxu0 0.0
        %2532 = vmatprep.subr.mxu0 0.0
        %2533 = vmatpush2.msra.mxu0 0.0
        %2534 = vmatprep.subr.mxu0 0.0
        %2535 = vmatpush2.msra.mxu0 0.0
        %2536 = vmatprep.subr.mxu0 0.0
        %2537 = vmatpush2.msra.mxu0 0.0
        %2538 = vmatprep.subr.mxu0 0.0
        %2539 = vmatpush2.msra.mxu0 0.0
        %2540 = vmatprep.subr.mxu0 0.0
        %2541 = vmatpush2.msra.mxu0 0.0
        %2542 = vmatprep.subr.mxu0 0.0
        %2543 = vmatpush2.msra.mxu0 0.0
        %2544 = vmatprep.subr.mxu0 0.0
        %2545 = vmatpush2.msra.mxu0 0.0
        %2546 = vmatprep.subr.mxu0 0.0
        %2547 = vmatpush2.msra.mxu0 0.0
        %2548 = vmatprep.subr.mxu0 0.0
        %2549 = vmatpush2.msra.mxu0 0.0
        %2550 = vmatprep.mubr.f32.mxu0 0.0
        %2551 = vmatmul.mubr.f32.gmra.mxu0 %v2484
        %v2552 = vpop.f32.mrf.mxu0
        %v2553 = vadd.f32 0.0, %v2552
        %v2554 = vpop.f32.mrf.mxu0
        %2555 = vdwg.mxu0
        %2556 = vrot.lane.b32.xlu0 %v769, 64
        %v2557 = vpop.permute.xlu0 %2556
        %v2558 = vsel %vm918, %v2557, 0
        %2560 = vmatprep.subr.mxu0 0.0
        %2561 = vmatpush1.msra.mxu0 0.0
        %2562 = vmatprep.subr.mxu0 0.0
        %2563 = vmatpush1.msra.mxu0 0.0
        %2564 = vmatprep.subr.mxu0 0.0
        %2565 = vmatpush1.msra.mxu0 0.0
        %2566 = vmatprep.subr.mxu0 0.0
        %2567 = vmatpush1.msra.mxu0 0.0
        %2568 = vmatprep.subr.mxu0 0.0
        %2569 = vmatpush1.msra.mxu0 0.0
        %2570 = vmatprep.subr.mxu0 0.0
        %2571 = vmatpush1.msra.mxu0 0.0
        %2572 = vmatprep.subr.mxu0 0.0
        %2573 = vmatpush1.msra.mxu0 0.0
        %2574 = vmatprep.subr.mxu0 0.0
        %2575 = vmatpush1.msra.mxu0 0.0
        %2576 = vmatprep.subr.mxu0 0.0
        %2577 = vmatpush1.msra.mxu0 0.0
        %2578 = vmatprep.subr.mxu0 0.0
        %2579 = vmatpush1.msra.mxu0 0.0
        %2580 = vmatprep.subr.mxu0 0.0
        %2581 = vmatpush1.msra.mxu0 0.0
        %2582 = vmatprep.subr.mxu0 0.0
        %2583 = vmatpush1.msra.mxu0 0.0
        %2584 = vmatprep.subr.mxu0 0.0
        %2585 = vmatpush1.msra.mxu0 0.0
        %2586 = vmatprep.subr.mxu0 0.0
        %2587 = vmatpush1.msra.mxu0 0.0
        %2588 = vmatprep.subr.mxu0 0.0
        %2589 = vmatpush1.msra.mxu0 %v2319
        %2590 = vmatprep.subr.mxu0 0.0
        %2591 = vmatpush1.msra.mxu0 %v2318
        %2592 = vmatprep.subr.mxu0 0.0
        %2593 = vmatpush2.msra.mxu0 0.0
        %2594 = vmatprep.subr.mxu0 0.0
        %2595 = vmatpush2.msra.mxu0 0.0
        %2596 = vmatprep.subr.mxu0 0.0
        %2597 = vmatpush2.msra.mxu0 0.0
        %2598 = vmatprep.subr.mxu0 0.0
        %2599 = vmatpush2.msra.mxu0 0.0
        %2600 = vmatprep.subr.mxu0 0.0
        %2601 = vmatpush2.msra.mxu0 0.0
        %2602 = vmatprep.subr.mxu0 0.0
        %2603 = vmatpush2.msra.mxu0 0.0
        %2604 = vmatprep.subr.mxu0 0.0
        %2605 = vmatpush2.msra.mxu0 0.0
        %2606 = vmatprep.subr.mxu0 0.0
        %2607 = vmatpush2.msra.mxu0 0.0
        %2608 = vmatprep.subr.mxu0 0.0
        %2609 = vmatpush2.msra.mxu0 0.0
        %2610 = vmatprep.subr.mxu0 0.0
        %2611 = vmatpush2.msra.mxu0 0.0
        %2612 = vmatprep.subr.mxu0 0.0
        %2613 = vmatpush2.msra.mxu0 0.0
        %2614 = vmatprep.subr.mxu0 0.0
        %2615 = vmatpush2.msra.mxu0 0.0
        %2616 = vmatprep.subr.mxu0 0.0
        %2617 = vmatpush2.msra.mxu0 0.0
        %2618 = vmatprep.subr.mxu0 0.0
        %2619 = vmatpush2.msra.mxu0 0.0
        %2620 = vmatprep.subr.mxu0 0.0
        %2621 = vmatpush2.msra.mxu0 0.0
        %2622 = vmatprep.subr.mxu0 0.0
        %2623 = vmatpush2.msra.mxu0 0.0
        %2624 = vmatprep.mubr.f32.mxu0 0.0
        %2625 = vmatmul.mubr.f32.gmra.mxu0 %v2558
        %v2626 = vpop.f32.mrf.mxu0
        %v2627 = vadd.f32 0.0, %v2626
        %v2628 = vpop.f32.mrf.mxu0
        %2629 = vdwg.mxu0
        %vm2630 = vcmask 56320
        %v2631 = vsel %vm2630, %v2405, -inf
        %2632 = vmax.xlane.f32.xlu0 %v2631
        %v2633 = vpop.xlane.xlu0 %2632
        %v2634 = vsel %vm2630, %v2479, -inf
        %2635 = vmax.xlane.f32.xlu0 %v2634
        %v2636 = vpop.xlane.xlu0 %2635
        %v2637 = vsel %vm2630, %v2553, -inf
        %2638 = vmax.xlane.f32.xlu0 %v2637
        %v2639 = vpop.xlane.xlu0 %2638
        %v2640 = vsel %vm2630, %v2627, -inf
        %2641 = vmax.xlane.f32.xlu0 %v2640
        %v2642 = vpop.xlane.xlu0 %2641
        %v2643 = vsub.f32 %v2405, %v2633
        %v2644 = vsub.f32 %v2479, %v2636
        %v2645 = vsub.f32 %v2553, %v2639
        %v2646 = vsub.f32 %v2627, %v2642
        %v2647 = vmul.f32 %v2643, 1.442695
        %v2648 = vpow.pop %v2647
        %v2649 = vmul.f32 %v2644, 1.442695
        %v2650 = vpow.pop %v2649
        %v2651 = vmul.f32 %v2645, 1.442695
        %v2652 = vpow.pop %v2651
        %v2653 = vmul.f32 %v2646, 1.442695
        %v2654 = vpow.pop %v2653
        %v2655 = vsel %vm2630, %v2648, 0.0
        %2656 = vadd.xlane.f32.xlu0 %v2655
        %v2657 = vpop.xlane.xlu0 %2656
        %v2658 = vsel %vm2630, %v2650, 0.0
        %2659 = vadd.xlane.f32.xlu0 %v2658
        %v2660 = vpop.xlane.xlu0 %2659
        %v2661 = vsel %vm2630, %v2652, 0.0
        %2662 = vadd.xlane.f32.xlu0 %v2661
        %v2663 = vpop.xlane.xlu0 %2662
        %v2664 = vsel %vm2630, %v2654, 0.0
        %2665 = vadd.xlane.f32.xlu0 %v2664
        %v2666 = vpop.xlane.xlu0 %2665
        %v2667 = vrcp.pop %v2657
        %v2668 = vrcp.pop %v2660
        %v2669 = vrcp.pop %v2663
        %v2670 = vrcp.pop %v2666
        %v2671 = vmul.f32 %v2648, %v2667
        %v2672 = vmul.f32 %v2650, %v2668
        %v2673 = vmul.f32 %v2652, %v2669
        %v2674 = vmul.f32 %v2654, %v2670
        %2675 = vrot.lane.b32.xlu0 %v2193, 64
        %v2676 = vpop.permute.xlu0 %2675
        %2677 = vrot.lane.b32.xlu0 %v2198, 64
        %v2678 = vpop.permute.xlu0 %2677
        %2679 = vrot.lane.b32.xlu0 %v2201, 64
        %v2680 = vpop.permute.xlu0 %2679
        %2681 = vrot.lane.b32.xlu0 %v2204, 64
        %v2682 = vpop.permute.xlu0 %2681
        %2687 = vxpose.xlu0.b32.start [1/16] %v2676, 128
        %2688 = vxpose.xlu0.b32.cont [2/16] 0.0, 128
        %2689 = vxpose.xlu0.b32.cont [3/16] 0.0, 128
        %2690 = vxpose.xlu0.b32.cont [4/16] 0.0, 128
        %2691 = vxpose.xlu0.b32.cont [5/16] 0.0, 128
        %2692 = vxpose.xlu0.b32.cont [6/16] 0.0, 128
        %2693 = vxpose.xlu0.b32.cont [7/16] 0.0, 128
        %2694 = vxpose.xlu0.b32.cont [8/16] 0.0, 128
        %2695 = vxpose.xlu0.b32.cont [9/16] 0.0, 128
        %2696 = vxpose.xlu0.b32.cont [10/16] 0.0, 128
        %2697 = vxpose.xlu0.b32.cont [11/16] 0.0, 128
        %2698 = vxpose.xlu0.b32.cont [12/16] 0.0, 128
        %2699 = vxpose.xlu0.b32.cont [13/16] 0.0, 128
        %2700 = vxpose.xlu0.b32.cont [14/16] 0.0, 128
        %2701 = vxpose.xlu0.b32.cont [15/16] 0.0, 128
        %2702 = vxpose.xlu0.b32.end [16/16] 0.0, 128
        %v2703 = vpop.trf.xlu0
        %v2704 = vpop.trf.xlu0
        %v2705 = vpop.trf.xlu0
        %v2706 = vpop.trf.xlu0
        %v2707 = vpop.trf.xlu0
        %v2708 = vpop.trf.xlu0
        %v2709 = vpop.trf.xlu0
        %v2710 = vpop.trf.xlu0
        %v2711 = vpop.trf.xlu0
        %v2712 = vpop.trf.xlu0
        %v2713 = vpop.trf.xlu0
        %v2714 = vpop.trf.xlu0
        %v2715 = vpop.trf.xlu0
        %v2716 = vpop.trf.xlu0
        %v2717 = vpop.trf.xlu0
        %v2718 = vpop.trf.xlu0
        %2719 = vxpose.xlu0.b32.start [1/16] %v2678, 128
        %2720 = vxpose.xlu0.b32.cont [2/16] 0.0, 128
        %2721 = vxpose.xlu0.b32.cont [3/16] 0.0, 128
        %2722 = vxpose.xlu0.b32.cont [4/16] 0.0, 128
        %2723 = vxpose.xlu0.b32.cont [5/16] 0.0, 128
        %2724 = vxpose.xlu0.b32.cont [6/16] 0.0, 128
        %2725 = vxpose.xlu0.b32.cont [7/16] 0.0, 128
        %2726 = vxpose.xlu0.b32.cont [8/16] 0.0, 128
        %2727 = vxpose.xlu0.b32.cont [9/16] 0.0, 128
        %2728 = vxpose.xlu0.b32.cont [10/16] 0.0, 128
        %2729 = vxpose.xlu0.b32.cont [11/16] 0.0, 128
        %2730 = vxpose.xlu0.b32.cont [12/16] 0.0, 128
        %2731 = vxpose.xlu0.b32.cont [13/16] 0.0, 128
        %2732 = vxpose.xlu0.b32.cont [14/16] 0.0, 128
        %2733 = vxpose.xlu0.b32.cont [15/16] 0.0, 128
        %2734 = vxpose.xlu0.b32.end [16/16] 0.0, 128
        %v2735 = vpop.trf.xlu0
        %v2736 = vpop.trf.xlu0
        %v2737 = vpop.trf.xlu0
        %v2738 = vpop.trf.xlu0
        %v2739 = vpop.trf.xlu0
        %v2740 = vpop.trf.xlu0
        %v2741 = vpop.trf.xlu0
        %v2742 = vpop.trf.xlu0
        %v2743 = vpop.trf.xlu0
        %v2744 = vpop.trf.xlu0
        %v2745 = vpop.trf.xlu0
        %v2746 = vpop.trf.xlu0
        %v2747 = vpop.trf.xlu0
        %v2748 = vpop.trf.xlu0
        %v2749 = vpop.trf.xlu0
        %v2750 = vpop.trf.xlu0
        %2751 = vxpose.xlu0.b32.start [1/16] %v2680, 128
        %2752 = vxpose.xlu0.b32.cont [2/16] 0.0, 128
        %2753 = vxpose.xlu0.b32.cont [3/16] 0.0, 128
        %2754 = vxpose.xlu0.b32.cont [4/16] 0.0, 128
        %2755 = vxpose.xlu0.b32.cont [5/16] 0.0, 128
        %2756 = vxpose.xlu0.b32.cont [6/16] 0.0, 128
        %2757 = vxpose.xlu0.b32.cont [7/16] 0.0, 128
        %2758 = vxpose.xlu0.b32.cont [8/16] 0.0, 128
        %2759 = vxpose.xlu0.b32.cont [9/16] 0.0, 128
        %2760 = vxpose.xlu0.b32.cont [10/16] 0.0, 128
        %2761 = vxpose.xlu0.b32.cont [11/16] 0.0, 128
        %2762 = vxpose.xlu0.b32.cont [12/16] 0.0, 128
        %2763 = vxpose.xlu0.b32.cont [13/16] 0.0, 128
        %2764 = vxpose.xlu0.b32.cont [14/16] 0.0, 128
        %2765 = vxpose.xlu0.b32.cont [15/16] 0.0, 128
        %2766 = vxpose.xlu0.b32.end [16/16] 0.0, 128
        %v2767 = vpop.trf.xlu0
        %v2768 = vpop.trf.xlu0
        %v2769 = vpop.trf.xlu0
        %v2770 = vpop.trf.xlu0
        %v2771 = vpop.trf.xlu0
        %v2772 = vpop.trf.xlu0
        %v2773 = vpop.trf.xlu0
        %v2774 = vpop.trf.xlu0
        %v2775 = vpop.trf.xlu0
        %v2776 = vpop.trf.xlu0
        %v2777 = vpop.trf.xlu0
        %v2778 = vpop.trf.xlu0
        %v2779 = vpop.trf.xlu0
        %v2780 = vpop.trf.xlu0
        %v2781 = vpop.trf.xlu0
        %v2782 = vpop.trf.xlu0
        %2783 = vxpose.xlu0.b32.start [1/16] %v2682, 128
        %2784 = vxpose.xlu0.b32.cont [2/16] 0.0, 128
        %2785 = vxpose.xlu0.b32.cont [3/16] 0.0, 128
        %2786 = vxpose.xlu0.b32.cont [4/16] 0.0, 128
        %2787 = vxpose.xlu0.b32.cont [5/16] 0.0, 128
        %2788 = vxpose.xlu0.b32.cont [6/16] 0.0, 128
        %2789 = vxpose.xlu0.b32.cont [7/16] 0.0, 128
        %2790 = vxpose.xlu0.b32.cont [8/16] 0.0, 128
        %2791 = vxpose.xlu0.b32.cont [9/16] 0.0, 128
        %2792 = vxpose.xlu0.b32.cont [10/16] 0.0, 128
        %2793 = vxpose.xlu0.b32.cont [11/16] 0.0, 128
        %2794 = vxpose.xlu0.b32.cont [12/16] 0.0, 128
        %2795 = vxpose.xlu0.b32.cont [13/16] 0.0, 128
        %2796 = vxpose.xlu0.b32.cont [14/16] 0.0, 128
        %2797 = vxpose.xlu0.b32.cont [15/16] 0.0, 128
        %2798 = vxpose.xlu0.b32.end [16/16] 0.0, 128
        %v2799 = vpop.trf.xlu0
        %v2800 = vpop.trf.xlu0
        %v2801 = vpop.trf.xlu0
        %v2802 = vpop.trf.xlu0
        %v2803 = vpop.trf.xlu0
        %v2804 = vpop.trf.xlu0
        %v2805 = vpop.trf.xlu0
        %v2806 = vpop.trf.xlu0
        %v2807 = vpop.trf.xlu0
        %v2808 = vpop.trf.xlu0
        %v2809 = vpop.trf.xlu0
        %v2810 = vpop.trf.xlu0
        %v2811 = vpop.trf.xlu0
        %v2812 = vpop.trf.xlu0
        %v2813 = vpop.trf.xlu0
        %v2814 = vpop.trf.xlu0
        %v2816 = vsel %vm2630, %v2703, 0
        %v2819 = vsel %vm2630, %v2704, 0
        %v2822 = vsel %vm2630, %v2671, 0
        %2824 = vmatprep.subr.mxu0 0.0
        %2825 = vmatpush1.xpose.msra.mxu0 0.0
        %2826 = vmatprep.subr.mxu0 0.0
        %2827 = vmatpush1.xpose.msra.mxu0 0.0
        %2828 = vmatprep.subr.mxu0 0.0
        %2829 = vmatpush1.xpose.msra.mxu0 0.0
        %2830 = vmatprep.subr.mxu0 0.0
        %2831 = vmatpush1.xpose.msra.mxu0 0.0
        %2832 = vmatprep.subr.mxu0 0.0
        %2833 = vmatpush1.xpose.msra.mxu0 0.0
        %2834 = vmatprep.subr.mxu0 0.0
        %2835 = vmatpush1.xpose.msra.mxu0 0.0
        %2836 = vmatprep.subr.mxu0 0.0
        %2837 = vmatpush1.xpose.msra.mxu0 0.0
        %2838 = vmatprep.subr.mxu0 0.0
        %2839 = vmatpush1.xpose.msra.mxu0 0.0
        %2840 = vmatprep.subr.mxu0 0.0
        %2841 = vmatpush1.xpose.msra.mxu0 0.0
        %2842 = vmatprep.subr.mxu0 0.0
        %2843 = vmatpush1.xpose.msra.mxu0 0.0
        %2844 = vmatprep.subr.mxu0 0.0
        %2845 = vmatpush1.xpose.msra.mxu0 0.0
        %2846 = vmatprep.subr.mxu0 0.0
        %2847 = vmatpush1.xpose.msra.mxu0 0.0
        %2848 = vmatprep.subr.mxu0 0.0
        %2849 = vmatpush1.xpose.msra.mxu0 0.0
        %2850 = vmatprep.subr.mxu0 0.0
        %2851 = vmatpush1.xpose.msra.mxu0 0.0
        %2852 = vmatprep.subr.mxu0 0.0
        %2853 = vmatpush1.xpose.msra.mxu0 0.0
        %2854 = vmatprep.subr.mxu0 0.0
        %2855 = vmatpush1.xpose.msra.mxu0 %v2822
        %2856 = vmatprep.subr.mxu0 0.0
        %2857 = vmatpush2.xpose.msra.mxu0 0.0
        %2858 = vmatprep.subr.mxu0 0.0
        %2859 = vmatpush2.xpose.msra.mxu0 0.0
        %2860 = vmatprep.subr.mxu0 0.0
        %2861 = vmatpush2.xpose.msra.mxu0 0.0
        %2862 = vmatprep.subr.mxu0 0.0
        %2863 = vmatpush2.xpose.msra.mxu0 0.0
        %2864 = vmatprep.subr.mxu0 0.0
        %2865 = vmatpush2.xpose.msra.mxu0 0.0
        %2866 = vmatprep.subr.mxu0 0.0
        %2867 = vmatpush2.xpose.msra.mxu0 0.0
        %2868 = vmatprep.subr.mxu0 0.0
        %2869 = vmatpush2.xpose.msra.mxu0 0.0
        %2870 = vmatprep.subr.mxu0 0.0
        %2871 = vmatpush2.xpose.msra.mxu0 0.0
        %2872 = vmatprep.subr.mxu0 0.0
        %2873 = vmatpush2.xpose.msra.mxu0 0.0
        %2874 = vmatprep.subr.mxu0 0.0
        %2875 = vmatpush2.xpose.msra.mxu0 0.0
        %2876 = vmatprep.subr.mxu0 0.0
        %2877 = vmatpush2.xpose.msra.mxu0 0.0
        %2878 = vmatprep.subr.mxu0 0.0
        %2879 = vmatpush2.xpose.msra.mxu0 0.0
        %2880 = vmatprep.subr.mxu0 0.0
        %2881 = vmatpush2.xpose.msra.mxu0 0.0
        %2882 = vmatprep.subr.mxu0 0.0
        %2883 = vmatpush2.xpose.msra.mxu0 0.0
        %2884 = vmatprep.subr.mxu0 0.0
        %2885 = vmatpush2.xpose.msra.mxu0 0.0
        %2886 = vmatprep.subr.mxu0 0.0
        %2887 = vmatpush2.xpose.msra.mxu0 0.0
        %2888 = vmatprep.mubr.f32.mxu0 0.0
        %2889 = vmatmul.mubr.f32.gmra.mxu0 %v2816
        %v2890 = vpop.f32.mrf.mxu0
        %v2891 = vadd.f32 0.0, %v2890
        %v2892 = vpop.f32.mrf.mxu0
        %2893 = vmatprep.mubr.f32.mxu0 0.0
        %2894 = vmatmul.mubr.f32.gmra.mxu0 %v2819
        %v2895 = vpop.f32.mrf.mxu0
        %v2896 = vadd.f32 0.0, %v2895
        %v2897 = vpop.f32.mrf.mxu0
        %2898 = vdwg.mxu0
        %v2900 = vsel %vm2630, %v2735, 0
        %v2903 = vsel %vm2630, %v2736, 0
        %v2906 = vsel %vm2630, %v2672, 0
        %2908 = vmatprep.subr.mxu0 0.0
        %2909 = vmatpush1.xpose.msra.mxu0 0.0
        %2910 = vmatprep.subr.mxu0 0.0
        %2911 = vmatpush1.xpose.msra.mxu0 0.0
        %2912 = vmatprep.subr.mxu0 0.0
        %2913 = vmatpush1.xpose.msra.mxu0 0.0
        %2914 = vmatprep.subr.mxu0 0.0
        %2915 = vmatpush1.xpose.msra.mxu0 0.0
        %2916 = vmatprep.subr.mxu0 0.0
        %2917 = vmatpush1.xpose.msra.mxu0 0.0
        %2918 = vmatprep.subr.mxu0 0.0
        %2919 = vmatpush1.xpose.msra.mxu0 0.0
        %2920 = vmatprep.subr.mxu0 0.0
        %2921 = vmatpush1.xpose.msra.mxu0 0.0
        %2922 = vmatprep.subr.mxu0 0.0
        %2923 = vmatpush1.xpose.msra.mxu0 0.0
        %2924 = vmatprep.subr.mxu0 0.0
        %2925 = vmatpush1.xpose.msra.mxu0 0.0
        %2926 = vmatprep.subr.mxu0 0.0
        %2927 = vmatpush1.xpose.msra.mxu0 0.0
        %2928 = vmatprep.subr.mxu0 0.0
        %2929 = vmatpush1.xpose.msra.mxu0 0.0
        %2930 = vmatprep.subr.mxu0 0.0
        %2931 = vmatpush1.xpose.msra.mxu0 0.0
        %2932 = vmatprep.subr.mxu0 0.0
        %2933 = vmatpush1.xpose.msra.mxu0 0.0
        %2934 = vmatprep.subr.mxu0 0.0
        %2935 = vmatpush1.xpose.msra.mxu0 0.0
        %2936 = vmatprep.subr.mxu0 0.0
        %2937 = vmatpush1.xpose.msra.mxu0 0.0
        %2938 = vmatprep.subr.mxu0 0.0
        %2939 = vmatpush1.xpose.msra.mxu0 %v2906
        %2940 = vmatprep.subr.mxu0 0.0
        %2941 = vmatpush2.xpose.msra.mxu0 0.0
        %2942 = vmatprep.subr.mxu0 0.0
        %2943 = vmatpush2.xpose.msra.mxu0 0.0
        %2944 = vmatprep.subr.mxu0 0.0
        %2945 = vmatpush2.xpose.msra.mxu0 0.0
        %2946 = vmatprep.subr.mxu0 0.0
        %2947 = vmatpush2.xpose.msra.mxu0 0.0
        %2948 = vmatprep.subr.mxu0 0.0
        %2949 = vmatpush2.xpose.msra.mxu0 0.0
        %2950 = vmatprep.subr.mxu0 0.0
        %2951 = vmatpush2.xpose.msra.mxu0 0.0
        %2952 = vmatprep.subr.mxu0 0.0
        %2953 = vmatpush2.xpose.msra.mxu0 0.0
        %2954 = vmatprep.subr.mxu0 0.0
        %2955 = vmatpush2.xpose.msra.mxu0 0.0
        %2956 = vmatprep.subr.mxu0 0.0
        %2957 = vmatpush2.xpose.msra.mxu0 0.0
        %2958 = vmatprep.subr.mxu0 0.0
        %2959 = vmatpush2.xpose.msra.mxu0 0.0
        %2960 = vmatprep.subr.mxu0 0.0
        %2961 = vmatpush2.xpose.msra.mxu0 0.0
        %2962 = vmatprep.subr.mxu0 0.0
        %2963 = vmatpush2.xpose.msra.mxu0 0.0
        %2964 = vmatprep.subr.mxu0 0.0
        %2965 = vmatpush2.xpose.msra.mxu0 0.0
        %2966 = vmatprep.subr.mxu0 0.0
        %2967 = vmatpush2.xpose.msra.mxu0 0.0
        %2968 = vmatprep.subr.mxu0 0.0
        %2969 = vmatpush2.xpose.msra.mxu0 0.0
        %2970 = vmatprep.subr.mxu0 0.0
        %2971 = vmatpush2.xpose.msra.mxu0 0.0
        %2972 = vmatprep.mubr.f32.mxu0 0.0
        %2973 = vmatmul.mubr.f32.gmra.mxu0 %v2900
        %v2974 = vpop.f32.mrf.mxu0
        %v2975 = vadd.f32 0.0, %v2974
        %v2976 = vpop.f32.mrf.mxu0
        %2977 = vmatprep.mubr.f32.mxu0 0.0
        %2978 = vmatmul.mubr.f32.gmra.mxu0 %v2903
        %v2979 = vpop.f32.mrf.mxu0
        %v2980 = vadd.f32 0.0, %v2979
        %v2981 = vpop.f32.mrf.mxu0
        %2982 = vdwg.mxu0
        %v2984 = vsel %vm2630, %v2767, 0
        %v2987 = vsel %vm2630, %v2768, 0
        %v2990 = vsel %vm2630, %v2673, 0
        %2992 = vmatprep.subr.mxu0 0.0
        %2993 = vmatpush1.xpose.msra.mxu0 0.0
        %2994 = vmatprep.subr.mxu0 0.0
        %2995 = vmatpush1.xpose.msra.mxu0 0.0
        %2996 = vmatprep.subr.mxu0 0.0
        %2997 = vmatpush1.xpose.msra.mxu0 0.0
        %2998 = vmatprep.subr.mxu0 0.0
        %2999 = vmatpush1.xpose.msra.mxu0 0.0
        %3000 = vmatprep.subr.mxu0 0.0
        %3001 = vmatpush1.xpose.msra.mxu0 0.0
        %3002 = vmatprep.subr.mxu0 0.0
        %3003 = vmatpush1.xpose.msra.mxu0 0.0
        %3004 = vmatprep.subr.mxu0 0.0
        %3005 = vmatpush1.xpose.msra.mxu0 0.0
        %3006 = vmatprep.subr.mxu0 0.0
        %3007 = vmatpush1.xpose.msra.mxu0 0.0
        %3008 = vmatprep.subr.mxu0 0.0
        %3009 = vmatpush1.xpose.msra.mxu0 0.0
        %3010 = vmatprep.subr.mxu0 0.0
        %3011 = vmatpush1.xpose.msra.mxu0 0.0
        %3012 = vmatprep.subr.mxu0 0.0
        %3013 = vmatpush1.xpose.msra.mxu0 0.0
        %3014 = vmatprep.subr.mxu0 0.0
        %3015 = vmatpush1.xpose.msra.mxu0 0.0
        %3016 = vmatprep.subr.mxu0 0.0
        %3017 = vmatpush1.xpose.msra.mxu0 0.0
        %3018 = vmatprep.subr.mxu0 0.0
        %3019 = vmatpush1.xpose.msra.mxu0 0.0
        %3020 = vmatprep.subr.mxu0 0.0
        %3021 = vmatpush1.xpose.msra.mxu0 0.0
        %3022 = vmatprep.subr.mxu0 0.0
        %3023 = vmatpush1.xpose.msra.mxu0 %v2990
        %3024 = vmatprep.subr.mxu0 0.0
        %3025 = vmatpush2.xpose.msra.mxu0 0.0
        %3026 = vmatprep.subr.mxu0 0.0
        %3027 = vmatpush2.xpose.msra.mxu0 0.0
        %3028 = vmatprep.subr.mxu0 0.0
        %3029 = vmatpush2.xpose.msra.mxu0 0.0
        %3030 = vmatprep.subr.mxu0 0.0
        %3031 = vmatpush2.xpose.msra.mxu0 0.0
        %3032 = vmatprep.subr.mxu0 0.0
        %3033 = vmatpush2.xpose.msra.mxu0 0.0
        %3034 = vmatprep.subr.mxu0 0.0
        %3035 = vmatpush2.xpose.msra.mxu0 0.0
        %3036 = vmatprep.subr.mxu0 0.0
        %3037 = vmatpush2.xpose.msra.mxu0 0.0
        %3038 = vmatprep.subr.mxu0 0.0
        %3039 = vmatpush2.xpose.msra.mxu0 0.0
        %3040 = vmatprep.subr.mxu0 0.0
        %3041 = vmatpush2.xpose.msra.mxu0 0.0
        %3042 = vmatprep.subr.mxu0 0.0
        %3043 = vmatpush2.xpose.msra.mxu0 0.0
        %3044 = vmatprep.subr.mxu0 0.0
        %3045 = vmatpush2.xpose.msra.mxu0 0.0
        %3046 = vmatprep.subr.mxu0 0.0
        %3047 = vmatpush2.xpose.msra.mxu0 0.0
        %3048 = vmatprep.subr.mxu0 0.0
        %3049 = vmatpush2.xpose.msra.mxu0 0.0
        %3050 = vmatprep.subr.mxu0 0.0
        %3051 = vmatpush2.xpose.msra.mxu0 0.0
        %3052 = vmatprep.subr.mxu0 0.0
        %3053 = vmatpush2.xpose.msra.mxu0 0.0
        %3054 = vmatprep.subr.mxu0 0.0
        %3055 = vmatpush2.xpose.msra.mxu0 0.0
        %3056 = vmatprep.mubr.f32.mxu0 0.0
        %3057 = vmatmul.mubr.f32.gmra.mxu0 %v2984
        %v3058 = vpop.f32.mrf.mxu0
        %v3059 = vadd.f32 0.0, %v3058
        %v3060 = vpop.f32.mrf.mxu0
        %3061 = vmatprep.mubr.f32.mxu0 0.0
        %3062 = vmatmul.mubr.f32.gmra.mxu0 %v2987
        %v3063 = vpop.f32.mrf.mxu0
        %v3064 = vadd.f32 0.0, %v3063
        %v3065 = vpop.f32.mrf.mxu0
        %3066 = vdwg.mxu0
        %v3068 = vsel %vm2630, %v2799, 0
        %v3071 = vsel %vm2630, %v2800, 0
        %v3074 = vsel %vm2630, %v2674, 0
        %3076 = vmatprep.subr.mxu0 0.0
        %3077 = vmatpush1.xpose.msra.mxu0 0.0
        %3078 = vmatprep.subr.mxu0 0.0
        %3079 = vmatpush1.xpose.msra.mxu0 0.0
        %3080 = vmatprep.subr.mxu0 0.0
        %3081 = vmatpush1.xpose.msra.mxu0 0.0
        %3082 = vmatprep.subr.mxu0 0.0
        %3083 = vmatpush1.xpose.msra.mxu0 0.0
        %3084 = vmatprep.subr.mxu0 0.0
        %3085 = vmatpush1.xpose.msra.mxu0 0.0
        %3086 = vmatprep.subr.mxu0 0.0
        %3087 = vmatpush1.xpose.msra.mxu0 0.0
        %3088 = vmatprep.subr.mxu0 0.0
        %3089 = vmatpush1.xpose.msra.mxu0 0.0
        %3090 = vmatprep.subr.mxu0 0.0
        %3091 = vmatpush1.xpose.msra.mxu0 0.0
        %3092 = vmatprep.subr.mxu0 0.0
        %3093 = vmatpush1.xpose.msra.mxu0 0.0
        %3094 = vmatprep.subr.mxu0 0.0
        %3095 = vmatpush1.xpose.msra.mxu0 0.0
        %3096 = vmatprep.subr.mxu0 0.0
        %3097 = vmatpush1.xpose.msra.mxu0 0.0
        %3098 = vmatprep.subr.mxu0 0.0
        %3099 = vmatpush1.xpose.msra.mxu0 0.0
        %3100 = vmatprep.subr.mxu0 0.0
        %3101 = vmatpush1.xpose.msra.mxu0 0.0
        %3102 = vmatprep.subr.mxu0 0.0
        %3103 = vmatpush1.xpose.msra.mxu0 0.0
        %3104 = vmatprep.subr.mxu0 0.0
        %3105 = vmatpush1.xpose.msra.mxu0 0.0
        %3106 = vmatprep.subr.mxu0 0.0
        %3107 = vmatpush1.xpose.msra.mxu0 %v3074
        %3108 = vmatprep.subr.mxu0 0.0
        %3109 = vmatpush2.xpose.msra.mxu0 0.0
        %3110 = vmatprep.subr.mxu0 0.0
        %3111 = vmatpush2.xpose.msra.mxu0 0.0
        %3112 = vmatprep.subr.mxu0 0.0
        %3113 = vmatpush2.xpose.msra.mxu0 0.0
        %3114 = vmatprep.subr.mxu0 0.0
        %3115 = vmatpush2.xpose.msra.mxu0 0.0
        %3116 = vmatprep.subr.mxu0 0.0
        %3117 = vmatpush2.xpose.msra.mxu0 0.0
        %3118 = vmatprep.subr.mxu0 0.0
        %3119 = vmatpush2.xpose.msra.mxu0 0.0
        %3120 = vmatprep.subr.mxu0 0.0
        %3121 = vmatpush2.xpose.msra.mxu0 0.0
        %3122 = vmatprep.subr.mxu0 0.0
        %3123 = vmatpush2.xpose.msra.mxu0 0.0
        %3124 = vmatprep.subr.mxu0 0.0
        %3125 = vmatpush2.xpose.msra.mxu0 0.0
        %3126 = vmatprep.subr.mxu0 0.0
        %3127 = vmatpush2.xpose.msra.mxu0 0.0
        %3128 = vmatprep.subr.mxu0 0.0
        %3129 = vmatpush2.xpose.msra.mxu0 0.0
        %3130 = vmatprep.subr.mxu0 0.0
        %3131 = vmatpush2.xpose.msra.mxu0 0.0
        %3132 = vmatprep.subr.mxu0 0.0
        %3133 = vmatpush2.xpose.msra.mxu0 0.0
        %3134 = vmatprep.subr.mxu0 0.0
        %3135 = vmatpush2.xpose.msra.mxu0 0.0
        %3136 = vmatprep.subr.mxu0 0.0
        %3137 = vmatpush2.xpose.msra.mxu0 0.0
        %3138 = vmatprep.subr.mxu0 0.0
        %3139 = vmatpush2.xpose.msra.mxu0 0.0
        %3140 = vmatprep.mubr.f32.mxu0 0.0
        %3141 = vmatmul.mubr.f32.gmra.mxu0 %v3068
        %v3142 = vpop.f32.mrf.mxu0
        %v3143 = vadd.f32 0.0, %v3142
        %v3144 = vpop.f32.mrf.mxu0
        %3145 = vmatprep.mubr.f32.mxu0 0.0
        %3146 = vmatmul.mubr.f32.gmra.mxu0 %v3071
        %v3147 = vpop.f32.mrf.mxu0
        %v3148 = vadd.f32 0.0, %v3147
        %v3149 = vpop.f32.mrf.mxu0
        %3150 = vdwg.mxu0
        %3151 = vxpose.xlu0.b32.start [1/16] %v2891, 128
        %3152 = vxpose.xlu0.b32.cont [2/16] %v2896, 128
        %3153 = vxpose.xlu0.b32.cont [3/16] 0.0, 128
        %3154 = vxpose.xlu0.b32.cont [4/16] 0.0, 128
        %3155 = vxpose.xlu0.b32.cont [5/16] 0.0, 128
        %3156 = vxpose.xlu0.b32.cont [6/16] 0.0, 128
        %3157 = vxpose.xlu0.b32.cont [7/16] 0.0, 128
        %3158 = vxpose.xlu0.b32.cont [8/16] 0.0, 128
        %3159 = vxpose.xlu0.b32.cont [9/16] 0.0, 128
        %3160 = vxpose.xlu0.b32.cont [10/16] 0.0, 128
        %3161 = vxpose.xlu0.b32.cont [11/16] 0.0, 128
        %3162 = vxpose.xlu0.b32.cont [12/16] 0.0, 128
        %3163 = vxpose.xlu0.b32.cont [13/16] 0.0, 128
        %3164 = vxpose.xlu0.b32.cont [14/16] 0.0, 128
        %3165 = vxpose.xlu0.b32.cont [15/16] 0.0, 128
        %3166 = vxpose.xlu0.b32.end [16/16] 0.0, 128
        %v3167 = vpop.trf.xlu0
        %v3168 = vpop.trf.xlu0
        %v3169 = vpop.trf.xlu0
        %v3170 = vpop.trf.xlu0
        %v3171 = vpop.trf.xlu0
        %v3172 = vpop.trf.xlu0
        %v3173 = vpop.trf.xlu0
        %v3174 = vpop.trf.xlu0
        %v3175 = vpop.trf.xlu0
        %v3176 = vpop.trf.xlu0
        %v3177 = vpop.trf.xlu0
        %v3178 = vpop.trf.xlu0
        %v3179 = vpop.trf.xlu0
        %v3180 = vpop.trf.xlu0
        %v3181 = vpop.trf.xlu0
        %v3182 = vpop.trf.xlu0
        %3183 = vxpose.xlu0.b32.start [1/16] %v2975, 128
        %3184 = vxpose.xlu0.b32.cont [2/16] %v2980, 128
        %3185 = vxpose.xlu0.b32.cont [3/16] 0.0, 128
        %3186 = vxpose.xlu0.b32.cont [4/16] 0.0, 128
        %3187 = vxpose.xlu0.b32.cont [5/16] 0.0, 128
        %3188 = vxpose.xlu0.b32.cont [6/16] 0.0, 128
        %3189 = vxpose.xlu0.b32.cont [7/16] 0.0, 128
        %3190 = vxpose.xlu0.b32.cont [8/16] 0.0, 128
        %3191 = vxpose.xlu0.b32.cont [9/16] 0.0, 128
        %3192 = vxpose.xlu0.b32.cont [10/16] 0.0, 128
        %3193 = vxpose.xlu0.b32.cont [11/16] 0.0, 128
        %3194 = vxpose.xlu0.b32.cont [12/16] 0.0, 128
        %3195 = vxpose.xlu0.b32.cont [13/16] 0.0, 128
        %3196 = vxpose.xlu0.b32.cont [14/16] 0.0, 128
        %3197 = vxpose.xlu0.b32.cont [15/16] 0.0, 128
        %3198 = vxpose.xlu0.b32.end [16/16] 0.0, 128
        %v3199 = vpop.trf.xlu0
        %v3200 = vpop.trf.xlu0
        %v3201 = vpop.trf.xlu0
        %v3202 = vpop.trf.xlu0
        %v3203 = vpop.trf.xlu0
        %v3204 = vpop.trf.xlu0
        %v3205 = vpop.trf.xlu0
        %v3206 = vpop.trf.xlu0
        %v3207 = vpop.trf.xlu0
        %v3208 = vpop.trf.xlu0
        %v3209 = vpop.trf.xlu0
        %v3210 = vpop.trf.xlu0
        %v3211 = vpop.trf.xlu0
        %v3212 = vpop.trf.xlu0
        %v3213 = vpop.trf.xlu0
        %v3214 = vpop.trf.xlu0
        %3215 = vxpose.xlu0.b32.start [1/16] %v3059, 128
        %3216 = vxpose.xlu0.b32.cont [2/16] %v3064, 128
        %3217 = vxpose.xlu0.b32.cont [3/16] 0.0, 128
        %3218 = vxpose.xlu0.b32.cont [4/16] 0.0, 128
        %3219 = vxpose.xlu0.b32.cont [5/16] 0.0, 128
        %3220 = vxpose.xlu0.b32.cont [6/16] 0.0, 128
        %3221 = vxpose.xlu0.b32.cont [7/16] 0.0, 128
        %3222 = vxpose.xlu0.b32.cont [8/16] 0.0, 128
        %3223 = vxpose.xlu0.b32.cont [9/16] 0.0, 128
        %3224 = vxpose.xlu0.b32.cont [10/16] 0.0, 128
        %3225 = vxpose.xlu0.b32.cont [11/16] 0.0, 128
        %3226 = vxpose.xlu0.b32.cont [12/16] 0.0, 128
        %3227 = vxpose.xlu0.b32.cont [13/16] 0.0, 128
        %3228 = vxpose.xlu0.b32.cont [14/16] 0.0, 128
        %3229 = vxpose.xlu0.b32.cont [15/16] 0.0, 128
        %3230 = vxpose.xlu0.b32.end [16/16] 0.0, 128
        %v3231 = vpop.trf.xlu0
        %v3232 = vpop.trf.xlu0
        %v3233 = vpop.trf.xlu0
        %v3234 = vpop.trf.xlu0
        %v3235 = vpop.trf.xlu0
        %v3236 = vpop.trf.xlu0
        %v3237 = vpop.trf.xlu0
        %v3238 = vpop.trf.xlu0
        %v3239 = vpop.trf.xlu0
        %v3240 = vpop.trf.xlu0
        %v3241 = vpop.trf.xlu0
        %v3242 = vpop.trf.xlu0
        %v3243 = vpop.trf.xlu0
        %v3244 = vpop.trf.xlu0
        %v3245 = vpop.trf.xlu0
        %v3246 = vpop.trf.xlu0
        %3247 = vxpose.xlu0.b32.start [1/16] %v3143, 128
        %3248 = vxpose.xlu0.b32.cont [2/16] %v3148, 128
        %3249 = vxpose.xlu0.b32.cont [3/16] 0.0, 128
        %3250 = vxpose.xlu0.b32.cont [4/16] 0.0, 128
        %3251 = vxpose.xlu0.b32.cont [5/16] 0.0, 128
        %3252 = vxpose.xlu0.b32.cont [6/16] 0.0, 128
        %3253 = vxpose.xlu0.b32.cont [7/16] 0.0, 128
        %3254 = vxpose.xlu0.b32.cont [8/16] 0.0, 128
        %3255 = vxpose.xlu0.b32.cont [9/16] 0.0, 128
        %3256 = vxpose.xlu0.b32.cont [10/16] 0.0, 128
        %3257 = vxpose.xlu0.b32.cont [11/16] 0.0, 128
        %3258 = vxpose.xlu0.b32.cont [12/16] 0.0, 128
        %3259 = vxpose.xlu0.b32.cont [13/16] 0.0, 128
        %3260 = vxpose.xlu0.b32.cont [14/16] 0.0, 128
        %3261 = vxpose.xlu0.b32.cont [15/16] 0.0, 128
        %3262 = vxpose.xlu0.b32.end [16/16] 0.0, 128
        %v3263 = vpop.trf.xlu0
        %v3264 = vpop.trf.xlu0
        %v3265 = vpop.trf.xlu0
        %v3266 = vpop.trf.xlu0
        %v3267 = vpop.trf.xlu0
        %v3268 = vpop.trf.xlu0
        %v3269 = vpop.trf.xlu0
        %v3270 = vpop.trf.xlu0
        %v3271 = vpop.trf.xlu0
        %v3272 = vpop.trf.xlu0
        %v3273 = vpop.trf.xlu0
        %v3274 = vpop.trf.xlu0
        %v3275 = vpop.trf.xlu0
        %v3276 = vpop.trf.xlu0
        %v3277 = vpop.trf.xlu0
        %v3278 = vpop.trf.xlu0
        %v3279 = vcombine.low %v3167, %v3231
        %v3280 = vcombine.high %v3167, %v3231
        %v3282 = vunpack.c.l.s4 1983009808
        %v3283 = vunpack.c.0.s8 %v3282
        %v3284 = vlaneseq
        %v3285 = vshrl.u32 %v3284, 7
        %v3286 = vsub.s32 %v3283, %v3285
        %v3287 = vrot.slane %v3279, %v3286
        %v3289 = vunpack.c.l.s4 1983009808
        %v3290 = vunpack.c.0.s8 %v3289
        %v3291 = vlaneseq
        %v3292 = vshrl.u32 %v3291, 7
        %v3293 = vsub.s32 %v3290, %v3292
        %v3294 = vrot.slane %v3280, %v3293
        %v3295 = vcombine.low %v3199, %v3263
        %v3296 = vcombine.high %v3199, %v3263
        %v3298 = vunpack.c.l.s4 1983009808
        %v3299 = vunpack.c.0.s8 %v3298
        %v3300 = vlaneseq
        %v3301 = vshrl.u32 %v3300, 7
        %v3302 = vsub.s32 %v3299, %v3301
        %v3303 = vrot.slane %v3295, %v3302
        %v3305 = vunpack.c.l.s4 1983009808
        %v3306 = vunpack.c.0.s8 %v3305
        %v3307 = vlaneseq
        %v3308 = vshrl.u32 %v3307, 7
        %v3309 = vsub.s32 %v3306, %v3308
        %v3310 = vrot.slane %v3296, %v3309
        %v3311 = vcombine.low %v3287, %v3303
        %v3312 = vcombine.high %v3287, %v3303
        %v3314 = vunpack.c.l.s4 1934713408
        %v3315 = vunpack.c.0.s8 %v3314
        %v3316 = vlaneseq
        %v3317 = vshrl.u32 %v3316, 7
        %v3318 = vsub.s32 %v3315, %v3317
        %v3319 = vrot.slane %v3311, %v3318
        %v3321 = vunpack.c.l.s4 1934713408
        %v3322 = vunpack.c.0.s8 %v3321
        %v3323 = vlaneseq
        %v3324 = vshrl.u32 %v3323, 7
        %v3325 = vsub.s32 %v3322, %v3324
        %v3326 = vrot.slane %v3312, %v3325
        %v3327 = vcombine.low %v3294, %v3310
        %v3328 = vcombine.high %v3294, %v3310
        %v3330 = vunpack.c.l.s4 1934713408
        %v3331 = vunpack.c.0.s8 %v3330
        %v3332 = vlaneseq
        %v3333 = vshrl.u32 %v3332, 7
        %v3334 = vsub.s32 %v3331, %v3333
        %v3335 = vrot.slane %v3327, %v3334
        %v3337 = vunpack.c.l.s4 1934713408
        %v3338 = vunpack.c.0.s8 %v3337
        %v3339 = vlaneseq
        %v3340 = vshrl.u32 %v3339, 7
        %v3341 = vsub.s32 %v3338, %v3340
        %v3342 = vrot.slane %v3328, %v3341
        %v3343 = vcombine.high %v3319, 0.0
        %v3344 = vcombine.high %v3326, 0.0
        %v3345 = vcombine.high %v3335, 0.0
        %v3346 = vcombine.high %v3342, 0.0
        %v3347 = vcombine.low %v3319, %v3326
        %v3349 = vunpack.c.l.s4 1983009808
        %v3350 = vunpack.c.0.s8 %v3349
        %v3351 = vlaneseq
        %v3352 = vshrl.u32 %v3351, 7
        %v3353 = vsub.s32 %v3350, %v3352
        %v3354 = vrot.slane %v3347, %v3353
        %v3355 = vcombine.low %v3343, %v3344
        %v3357 = vunpack.c.l.s4 1983009808
        %v3358 = vunpack.c.0.s8 %v3357
        %v3359 = vlaneseq
        %v3360 = vshrl.u32 %v3359, 7
        %v3361 = vsub.s32 %v3358, %v3360
        %v3362 = vrot.slane %v3355, %v3361
        %v3363 = vcombine.low %v3335, %v3342
        %v3365 = vunpack.c.l.s4 1983009808
        %v3366 = vunpack.c.0.s8 %v3365
        %v3367 = vlaneseq
        %v3368 = vshrl.u32 %v3367, 7
        %v3369 = vsub.s32 %v3366, %v3368
        %v3370 = vrot.slane %v3363, %v3369
        %v3371 = vcombine.low %v3345, %v3346
        %v3373 = vunpack.c.l.s4 1983009808
        %v3374 = vunpack.c.0.s8 %v3373
        %v3375 = vlaneseq
        %v3376 = vshrl.u32 %v3375, 7
        %v3377 = vsub.s32 %v3374, %v3376
        %v3378 = vrot.slane %v3371, %v3377
        %v3379 = vcombine.low %v3354, %v3362
        %v3380 = vcombine.high %v3354, %v3362
        %v3382 = vunpack.c.l.s4 1934713408
        %v3383 = vunpack.c.0.s8 %v3382
        %v3384 = vlaneseq
        %v3385 = vshrl.u32 %v3384, 7
        %v3386 = vsub.s32 %v3383, %v3385
        %v3387 = vrot.slane %v3379, %v3386
        %v3389 = vunpack.c.l.s4 1934713408
        %v3390 = vunpack.c.0.s8 %v3389
        %v3391 = vlaneseq
        %v3392 = vshrl.u32 %v3391, 7
        %v3393 = vsub.s32 %v3390, %v3392
        %v3394 = vrot.slane %v3380, %v3393
        %v3395 = vcombine.low %v3370, %v3378
        %v3396 = vcombine.high %v3370, %v3378
        %v3398 = vunpack.c.l.s4 1934713408
        %v3399 = vunpack.c.0.s8 %v3398
        %v3400 = vlaneseq
        %v3401 = vshrl.u32 %v3400, 7
        %v3402 = vsub.s32 %v3399, %v3401
        %v3403 = vrot.slane %v3395, %v3402
        %v3405 = vunpack.c.l.s4 1934713408
        %v3406 = vunpack.c.0.s8 %v3405
        %v3407 = vlaneseq
        %v3408 = vshrl.u32 %v3407, 7
        %v3409 = vsub.s32 %v3406, %v3408
        %v3410 = vrot.slane %v3396, %v3409
        %v3411 = vcombine.low %v3387, %v3403
        %v3412 = vcombine.high %v3387, %v3403
        %v3413 = vcombine.low %v3394, %v3410
        %v3414 = vcombine.high %v3394, %v3410
        %3416 = vrot.lane.b32.xlu0 %v3412, 16
        %v3417 = vpop.permute.xlu0 %3416
        %3420 = vrot.lane.b32.xlu0 %v3413, 32
        %v3421 = vpop.permute.xlu0 %3420
        %3424 = vrot.lane.b32.xlu0 %v3414, 48
        %v3425 = vpop.permute.xlu0 %3424
        %v3427 = vsel %vm918, %v3411, %v3417
        %v3428 = vsel %vm521, %v3427, %v3421
        %v3429 = vsel %vm2018, %v3428, %v3425
        %s3430 = scalar_lea.vmem %s9, 64
        %v3431 = vld [vmem:[%s3430] sm:$0xff]
        %v3432 = vld [vmem:[%s3430 + $0x8] sm:$0xff]
        %v3433 = vld [vmem:[%s3430 + $0x10] sm:$0xff]
        %v3434 = vld [vmem:[%s3430 + $0x18] sm:$0xff]
        %v3435 = vld [vmem:[%s3430 + $0x20] sm:$0xff]
        %v3436 = vld [vmem:[%s3430 + $0x28] sm:$0xff]
        %v3437 = vld [vmem:[%s3430 + $0x30] sm:$0xff]
        %v3438 = vld [vmem:[%s3430 + $0x38] sm:$0xff]
        %s3439 = scalar_lea.vmem %s10, 1
        %v3440 = vld [vmem:[%s3439] sm:$0x1]
        %v3442 = vlaneseq
        %v3443 = vshrl.u32 %v3442, 7
        %v3444 = vsub.s32 0, %v3443
        %v3445 = vrot.slane %v3440, %v3444
        %v3448 = vsel %vm2035, %v3429, 0
        %3450 = vmatprep.subr.mxu0 0.0
        %3451 = vmatpush1.msra.mxu0 0.0
        %3452 = vmatprep.subr.mxu0 0.0
        %3453 = vmatpush1.msra.mxu0 0.0
        %3454 = vmatprep.subr.mxu0 0.0
        %3455 = vmatpush1.msra.mxu0 0.0
        %3456 = vmatprep.subr.mxu0 0.0
        %3457 = vmatpush1.msra.mxu0 0.0
        %3458 = vmatprep.subr.mxu0 0.0
        %3459 = vmatpush1.msra.mxu0 0.0
        %3460 = vmatprep.subr.mxu0 0.0
        %3461 = vmatpush1.msra.mxu0 0.0
        %3462 = vmatprep.subr.mxu0 0.0
        %3463 = vmatpush1.msra.mxu0 0.0
        %3464 = vmatprep.subr.mxu0 0.0
        %3465 = vmatpush1.msra.mxu0 0.0
        %3466 = vmatprep.subr.mxu0 0.0
        %3467 = vmatpush1.msra.mxu0 %v3438
        %3468 = vmatprep.subr.mxu0 0.0
        %3469 = vmatpush1.msra.mxu0 %v3437
        %3470 = vmatprep.subr.mxu0 0.0
        %3471 = vmatpush1.msra.mxu0 %v3436
        %3472 = vmatprep.subr.mxu0 0.0
        %3473 = vmatpush1.msra.mxu0 %v3435
        %3474 = vmatprep.subr.mxu0 0.0
        %3475 = vmatpush1.msra.mxu0 %v3434
        %3476 = vmatprep.subr.mxu0 0.0
        %3477 = vmatpush1.msra.mxu0 %v3433
        %3478 = vmatprep.subr.mxu0 0.0
        %3479 = vmatpush1.msra.mxu0 %v3432
        %3480 = vmatprep.subr.mxu0 0.0
        %3481 = vmatpush1.msra.mxu0 %v3431
        %3482 = vmatprep.subr.mxu0 0.0
        %3483 = vmatpush2.msra.mxu0 0.0
        %3484 = vmatprep.subr.mxu0 0.0
        %3485 = vmatpush2.msra.mxu0 0.0
        %3486 = vmatprep.subr.mxu0 0.0
        %3487 = vmatpush2.msra.mxu0 0.0
        %3488 = vmatprep.subr.mxu0 0.0
        %3489 = vmatpush2.msra.mxu0 0.0
        %3490 = vmatprep.subr.mxu0 0.0
        %3491 = vmatpush2.msra.mxu0 0.0
        %3492 = vmatprep.subr.mxu0 0.0
        %3493 = vmatpush2.msra.mxu0 0.0
        %3494 = vmatprep.subr.mxu0 0.0
        %3495 = vmatpush2.msra.mxu0 0.0
        %3496 = vmatprep.subr.mxu0 0.0
        %3497 = vmatpush2.msra.mxu0 0.0
        %3498 = vmatprep.subr.mxu0 0.0
        %3499 = vmatpush2.msra.mxu0 0.0
        %3500 = vmatprep.subr.mxu0 0.0
        %3501 = vmatpush2.msra.mxu0 0.0
        %3502 = vmatprep.subr.mxu0 0.0
        %3503 = vmatpush2.msra.mxu0 0.0
        %3504 = vmatprep.subr.mxu0 0.0
        %3505 = vmatpush2.msra.mxu0 0.0
        %3506 = vmatprep.subr.mxu0 0.0
        %3507 = vmatpush2.msra.mxu0 0.0
        %3508 = vmatprep.subr.mxu0 0.0
        %3509 = vmatpush2.msra.mxu0 0.0
        %3510 = vmatprep.subr.mxu0 0.0
        %3511 = vmatpush2.msra.mxu0 0.0
        %3512 = vmatprep.subr.mxu0 0.0
        %3513 = vmatpush2.msra.mxu0 0.0
        %3514 = vmatprep.mubr.f32.mxu0 0.0
        %3515 = vmatmul.mubr.f32.gmra.mxu0 %v3448
        %v3516 = vpop.f32.mrf.mxu0
        %v3517 = vadd.f32 %v3445, %v3516
        %v3518 = vpop.f32.mrf.mxu0
        %3519 = vdwg.mxu0
        %v3520 = vld [vmem:[%s486] sm:$0x7]
        %s3521 = scalar_lea.vmem %s7, 64
        %v3522 = vld [vmem:[%s3521] sm:$0xff]
        %v3523 = vld [vmem:[%s3521 + $0x8] sm:$0xff]
        %v3524 = vld [vmem:[%s3521 + $0x10] sm:$0xff]
        %v3525 = vld [vmem:[%s3521 + $0x18] sm:$0xff]
        %s3526 = scalar_lea.vmem %s8, 2
        %v3527 = vld [vmem:[%s3526] sm:$0x1]
        %v3529 = vlaneseq
        %v3530 = vshrl.u32 %v3529, 7
        %v3531 = vsub.s32 0, %v3530
        %v3532 = vrot.slane %v3527, %v3531
        %v3535 = vsel %vm521, %v3520, 0
        %3537 = vmatprep.subr.mxu0 0.0
        %3538 = vmatpush1.msra.mxu0 0.0
        %3539 = vmatprep.subr.mxu0 0.0
        %3540 = vmatpush1.msra.mxu0 0.0
        %3541 = vmatprep.subr.mxu0 0.0
        %3542 = vmatpush1.msra.mxu0 0.0
        %3543 = vmatprep.subr.mxu0 0.0
        %3544 = vmatpush1.msra.mxu0 0.0
        %3545 = vmatprep.subr.mxu0 0.0
        %3546 = vmatpush1.msra.mxu0 0.0
        %3547 = vmatprep.subr.mxu0 0.0
        %3548 = vmatpush1.msra.mxu0 0.0
        %3549 = vmatprep.subr.mxu0 0.0
        %3550 = vmatpush1.msra.mxu0 0.0
        %3551 = vmatprep.subr.mxu0 0.0
        %3552 = vmatpush1.msra.mxu0 0.0
        %3553 = vmatprep.subr.mxu0 0.0
        %3554 = vmatpush1.msra.mxu0 0.0
        %3555 = vmatprep.subr.mxu0 0.0
        %3556 = vmatpush1.msra.mxu0 0.0
        %3557 = vmatprep.subr.mxu0 0.0
        %3558 = vmatpush1.msra.mxu0 0.0
        %3559 = vmatprep.subr.mxu0 0.0
        %3560 = vmatpush1.msra.mxu0 0.0
        %3561 = vmatprep.subr.mxu0 0.0
        %3562 = vmatpush1.msra.mxu0 %v3525
        %3563 = vmatprep.subr.mxu0 0.0
        %3564 = vmatpush1.msra.mxu0 %v3524
        %3565 = vmatprep.subr.mxu0 0.0
        %3566 = vmatpush1.msra.mxu0 %v3523
        %3567 = vmatprep.subr.mxu0 0.0
        %3568 = vmatpush1.msra.mxu0 %v3522
        %3569 = vmatprep.subr.mxu0 0.0
        %3570 = vmatpush2.msra.mxu0 0.0
        %3571 = vmatprep.subr.mxu0 0.0
        %3572 = vmatpush2.msra.mxu0 0.0
        %3573 = vmatprep.subr.mxu0 0.0
        %3574 = vmatpush2.msra.mxu0 0.0
        %3575 = vmatprep.subr.mxu0 0.0
        %3576 = vmatpush2.msra.mxu0 0.0
        %3577 = vmatprep.subr.mxu0 0.0
        %3578 = vmatpush2.msra.mxu0 0.0
        %3579 = vmatprep.subr.mxu0 0.0
        %3580 = vmatpush2.msra.mxu0 0.0
        %3581 = vmatprep.subr.mxu0 0.0
        %3582 = vmatpush2.msra.mxu0 0.0
        %3583 = vmatprep.subr.mxu0 0.0
        %3584 = vmatpush2.msra.mxu0 0.0
        %3585 = vmatprep.subr.mxu0 0.0
        %3586 = vmatpush2.msra.mxu0 0.0
        %3587 = vmatprep.subr.mxu0 0.0
        %3588 = vmatpush2.msra.mxu0 0.0
        %3589 = vmatprep.subr.mxu0 0.0
        %3590 = vmatpush2.msra.mxu0 0.0
        %3591 = vmatprep.subr.mxu0 0.0
        %3592 = vmatpush2.msra.mxu0 0.0
        %3593 = vmatprep.subr.mxu0 0.0
        %3594 = vmatpush2.msra.mxu0 0.0
        %3595 = vmatprep.subr.mxu0 0.0
        %3596 = vmatpush2.msra.mxu0 0.0
        %3597 = vmatprep.subr.mxu0 0.0
        %3598 = vmatpush2.msra.mxu0 0.0
        %3599 = vmatprep.subr.mxu0 0.0
        %3600 = vmatpush2.msra.mxu0 0.0
        %3601 = vmatprep.mubr.f32.mxu0 0.0
        %3602 = vmatmul.mubr.f32.gmra.mxu0 %v3535
        %v3603 = vpop.f32.mrf.mxu0
        %v3604 = vadd.f32 %v3532, %v3603
        %v3605 = vpop.f32.mrf.mxu0
        %3606 = vdwg.mxu0
        %3608 = vrot.lane.b32.xlu0 %v667, 112
        %v3609 = vpop.permute.xlu0 %3608
        %3610 = vrot.lane.b32.xlu0 %v667, 96
        %v3611 = vpop.permute.xlu0 %3610
        %3612 = vrot.lane.b32.xlu0 %v667, 80
        %v3613 = vpop.permute.xlu0 %3612
        %3615 = vrot.lane.b32.xlu0 %v3604, 112
        %v3616 = vpop.permute.xlu0 %3615
        %3618 = vrot.lane.b32.xlu0 %v3604, 96
        %v3619 = vpop.permute.xlu0 %3618
        %3621 = vrot.lane.b32.xlu0 %v3604, 80
        %v3622 = vpop.permute.xlu0 %3621
        %3624 = vxpose.xlu0.b32.start [1/16] %v3604, 128
        %3625 = vxpose.xlu0.b32.cont [2/16] 0.0, 128
        %3626 = vxpose.xlu0.b32.cont [3/16] 0.0, 128
        %3627 = vxpose.xlu0.b32.cont [4/16] 0.0, 128
        %3628 = vxpose.xlu0.b32.cont [5/16] 0.0, 128
        %3629 = vxpose.xlu0.b32.cont [6/16] 0.0, 128
        %3630 = vxpose.xlu0.b32.cont [7/16] 0.0, 128
        %3631 = vxpose.xlu0.b32.cont [8/16] 0.0, 128
        %3632 = vxpose.xlu0.b32.cont [9/16] 0.0, 128
        %3633 = vxpose.xlu0.b32.cont [10/16] 0.0, 128
        %3634 = vxpose.xlu0.b32.cont [11/16] 0.0, 128
        %3635 = vxpose.xlu0.b32.cont [12/16] 0.0, 128
        %3636 = vxpose.xlu0.b32.cont [13/16] 0.0, 128
        %3637 = vxpose.xlu0.b32.cont [14/16] 0.0, 128
        %3638 = vxpose.xlu0.b32.cont [15/16] 0.0, 128
        %3639 = vxpose.xlu0.b32.end [16/16] 0.0, 128
        %v3640 = vpop.trf.xlu0
        %v3641 = vpop.trf.xlu0
        %v3642 = vpop.trf.xlu0
        %v3643 = vpop.trf.xlu0
        %v3644 = vpop.trf.xlu0
        %v3645 = vpop.trf.xlu0
        %v3646 = vpop.trf.xlu0
        %v3647 = vpop.trf.xlu0
        %v3648 = vpop.trf.xlu0
        %v3649 = vpop.trf.xlu0
        %v3650 = vpop.trf.xlu0
        %v3651 = vpop.trf.xlu0
        %v3652 = vpop.trf.xlu0
        %v3653 = vpop.trf.xlu0
        %v3654 = vpop.trf.xlu0
        %v3655 = vpop.trf.xlu0
        %3656 = vxpose.xlu0.b32.start [1/16] %v3616, 128
        %3657 = vxpose.xlu0.b32.cont [2/16] 0.0, 128
        %3658 = vxpose.xlu0.b32.cont [3/16] 0.0, 128
        %3659 = vxpose.xlu0.b32.cont [4/16] 0.0, 128
        %3660 = vxpose.xlu0.b32.cont [5/16] 0.0, 128
        %3661 = vxpose.xlu0.b32.cont [6/16] 0.0, 128
        %3662 = vxpose.xlu0.b32.cont [7/16] 0.0, 128
        %3663 = vxpose.xlu0.b32.cont [8/16] 0.0, 128
        %3664 = vxpose.xlu0.b32.cont [9/16] 0.0, 128
        %3665 = vxpose.xlu0.b32.cont [10/16] 0.0, 128
        %3666 = vxpose.xlu0.b32.cont [11/16] 0.0, 128
        %3667 = vxpose.xlu0.b32.cont [12/16] 0.0, 128
        %3668 = vxpose.xlu0.b32.cont [13/16] 0.0, 128
        %3669 = vxpose.xlu0.b32.cont [14/16] 0.0, 128
        %3670 = vxpose.xlu0.b32.cont [15/16] 0.0, 128
        %3671 = vxpose.xlu0.b32.end [16/16] 0.0, 128
        %v3672 = vpop.trf.xlu0
        %v3673 = vpop.trf.xlu0
        %v3674 = vpop.trf.xlu0
        %v3675 = vpop.trf.xlu0
        %v3676 = vpop.trf.xlu0
        %v3677 = vpop.trf.xlu0
        %v3678 = vpop.trf.xlu0
        %v3679 = vpop.trf.xlu0
        %v3680 = vpop.trf.xlu0
        %v3681 = vpop.trf.xlu0
        %v3682 = vpop.trf.xlu0
        %v3683 = vpop.trf.xlu0
        %v3684 = vpop.trf.xlu0
        %v3685 = vpop.trf.xlu0
        %v3686 = vpop.trf.xlu0
        %v3687 = vpop.trf.xlu0
        %3688 = vxpose.xlu0.b32.start [1/16] %v3619, 128
        %3689 = vxpose.xlu0.b32.cont [2/16] 0.0, 128
        %3690 = vxpose.xlu0.b32.cont [3/16] 0.0, 128
        %3691 = vxpose.xlu0.b32.cont [4/16] 0.0, 128
        %3692 = vxpose.xlu0.b32.cont [5/16] 0.0, 128
        %3693 = vxpose.xlu0.b32.cont [6/16] 0.0, 128
        %3694 = vxpose.xlu0.b32.cont [7/16] 0.0, 128
        %3695 = vxpose.xlu0.b32.cont [8/16] 0.0, 128
        %3696 = vxpose.xlu0.b32.cont [9/16] 0.0, 128
        %3697 = vxpose.xlu0.b32.cont [10/16] 0.0, 128
        %3698 = vxpose.xlu0.b32.cont [11/16] 0.0, 128
        %3699 = vxpose.xlu0.b32.cont [12/16] 0.0, 128
        %3700 = vxpose.xlu0.b32.cont [13/16] 0.0, 128
        %3701 = vxpose.xlu0.b32.cont [14/16] 0.0, 128
        %3702 = vxpose.xlu0.b32.cont [15/16] 0.0, 128
        %3703 = vxpose.xlu0.b32.end [16/16] 0.0, 128
        %v3704 = vpop.trf.xlu0
        %v3705 = vpop.trf.xlu0
        %v3706 = vpop.trf.xlu0
        %v3707 = vpop.trf.xlu0
        %v3708 = vpop.trf.xlu0
        %v3709 = vpop.trf.xlu0
        %v3710 = vpop.trf.xlu0
        %v3711 = vpop.trf.xlu0
        %v3712 = vpop.trf.xlu0
        %v3713 = vpop.trf.xlu0
        %v3714 = vpop.trf.xlu0
        %v3715 = vpop.trf.xlu0
        %v3716 = vpop.trf.xlu0
        %v3717 = vpop.trf.xlu0
        %v3718 = vpop.trf.xlu0
        %v3719 = vpop.trf.xlu0
        %3720 = vxpose.xlu0.b32.start [1/16] %v3622, 128
        %3721 = vxpose.xlu0.b32.cont [2/16] 0.0, 128
        %3722 = vxpose.xlu0.b32.cont [3/16] 0.0, 128
        %3723 = vxpose.xlu0.b32.cont [4/16] 0.0, 128
        %3724 = vxpose.xlu0.b32.cont [5/16] 0.0, 128
        %3725 = vxpose.xlu0.b32.cont [6/16] 0.0, 128
        %3726 = vxpose.xlu0.b32.cont [7/16] 0.0, 128
        %3727 = vxpose.xlu0.b32.cont [8/16] 0.0, 128
        %3728 = vxpose.xlu0.b32.cont [9/16] 0.0, 128
        %3729 = vxpose.xlu0.b32.cont [10/16] 0.0, 128
        %3730 = vxpose.xlu0.b32.cont [11/16] 0.0, 128
        %3731 = vxpose.xlu0.b32.cont [12/16] 0.0, 128
        %3732 = vxpose.xlu0.b32.cont [13/16] 0.0, 128
        %3733 = vxpose.xlu0.b32.cont [14/16] 0.0, 128
        %3734 = vxpose.xlu0.b32.cont [15/16] 0.0, 128
        %3735 = vxpose.xlu0.b32.end [16/16] 0.0, 128
        %v3736 = vpop.trf.xlu0
        %v3737 = vpop.trf.xlu0
        %v3738 = vpop.trf.xlu0
        %v3739 = vpop.trf.xlu0
        %v3740 = vpop.trf.xlu0
        %v3741 = vpop.trf.xlu0
        %v3742 = vpop.trf.xlu0
        %v3743 = vpop.trf.xlu0
        %v3744 = vpop.trf.xlu0
        %v3745 = vpop.trf.xlu0
        %v3746 = vpop.trf.xlu0
        %v3747 = vpop.trf.xlu0
        %v3748 = vpop.trf.xlu0
        %v3749 = vpop.trf.xlu0
        %v3750 = vpop.trf.xlu0
        %v3751 = vpop.trf.xlu0
        %v3752 = vsel %vm918, %v667, 0
        %3754 = vmatprep.subr.mxu0 0.0
        %3755 = vmatpush1.msra.mxu0 0.0
        %3756 = vmatprep.subr.mxu0 0.0
        %3757 = vmatpush1.msra.mxu0 0.0
        %3758 = vmatprep.subr.mxu0 0.0
        %3759 = vmatpush1.msra.mxu0 0.0
        %3760 = vmatprep.subr.mxu0 0.0
        %3761 = vmatpush1.msra.mxu0 0.0
        %3762 = vmatprep.subr.mxu0 0.0
        %3763 = vmatpush1.msra.mxu0 0.0
        %3764 = vmatprep.subr.mxu0 0.0
        %3765 = vmatpush1.msra.mxu0 0.0
        %3766 = vmatprep.subr.mxu0 0.0
        %3767 = vmatpush1.msra.mxu0 0.0
        %3768 = vmatprep.subr.mxu0 0.0
        %3769 = vmatpush1.msra.mxu0 0.0
        %3770 = vmatprep.subr.mxu0 0.0
        %3771 = vmatpush1.msra.mxu0 0.0
        %3772 = vmatprep.subr.mxu0 0.0
        %3773 = vmatpush1.msra.mxu0 0.0
        %3774 = vmatprep.subr.mxu0 0.0
        %3775 = vmatpush1.msra.mxu0 0.0
        %3776 = vmatprep.subr.mxu0 0.0
        %3777 = vmatpush1.msra.mxu0 0.0
        %3778 = vmatprep.subr.mxu0 0.0
        %3779 = vmatpush1.msra.mxu0 0.0
        %3780 = vmatprep.subr.mxu0 0.0
        %3781 = vmatpush1.msra.mxu0 0.0
        %3782 = vmatprep.subr.mxu0 0.0
        %3783 = vmatpush1.msra.mxu0 %v3641
        %3784 = vmatprep.subr.mxu0 0.0
        %3785 = vmatpush1.msra.mxu0 %v3640
        %3786 = vmatprep.subr.mxu0 0.0
        %3787 = vmatpush2.msra.mxu0 0.0
        %3788 = vmatprep.subr.mxu0 0.0
        %3789 = vmatpush2.msra.mxu0 0.0
        %3790 = vmatprep.subr.mxu0 0.0
        %3791 = vmatpush2.msra.mxu0 0.0
        %3792 = vmatprep.subr.mxu0 0.0
        %3793 = vmatpush2.msra.mxu0 0.0
        %3794 = vmatprep.subr.mxu0 0.0
        %3795 = vmatpush2.msra.mxu0 0.0
        %3796 = vmatprep.subr.mxu0 0.0
        %3797 = vmatpush2.msra.mxu0 0.0
        %3798 = vmatprep.subr.mxu0 0.0
        %3799 = vmatpush2.msra.mxu0 0.0
        %3800 = vmatprep.subr.mxu0 0.0
        %3801 = vmatpush2.msra.mxu0 0.0
        %3802 = vmatprep.subr.mxu0 0.0
        %3803 = vmatpush2.msra.mxu0 0.0
        %3804 = vmatprep.subr.mxu0 0.0
        %3805 = vmatpush2.msra.mxu0 0.0
        %3806 = vmatprep.subr.mxu0 0.0
        %3807 = vmatpush2.msra.mxu0 0.0
        %3808 = vmatprep.subr.mxu0 0.0
        %3809 = vmatpush2.msra.mxu0 0.0
        %3810 = vmatprep.subr.mxu0 0.0
        %3811 = vmatpush2.msra.mxu0 0.0
        %3812 = vmatprep.subr.mxu0 0.0
        %3813 = vmatpush2.msra.mxu0 0.0
        %3814 = vmatprep.subr.mxu0 0.0
        %3815 = vmatpush2.msra.mxu0 0.0
        %3816 = vmatprep.subr.mxu0 0.0
        %3817 = vmatpush2.msra.mxu0 0.0
        %3818 = vmatprep.mubr.f32.mxu0 0.0
        %3819 = vmatmul.mubr.f32.gmra.mxu0 %v3752
        %v3820 = vpop.f32.mrf.mxu0
        %v3821 = vadd.f32 0.0, %v3820
        %v3822 = vpop.f32.mrf.mxu0
        %3823 = vdwg.mxu0
        %v3824 = vsel %vm918, %v3609, 0
        %3826 = vmatprep.subr.mxu0 0.0
        %3827 = vmatpush1.msra.mxu0 0.0
        %3828 = vmatprep.subr.mxu0 0.0
        %3829 = vmatpush1.msra.mxu0 0.0
        %3830 = vmatprep.subr.mxu0 0.0
        %3831 = vmatpush1.msra.mxu0 0.0
        %3832 = vmatprep.subr.mxu0 0.0
        %3833 = vmatpush1.msra.mxu0 0.0
        %3834 = vmatprep.subr.mxu0 0.0
        %3835 = vmatpush1.msra.mxu0 0.0
        %3836 = vmatprep.subr.mxu0 0.0
        %3837 = vmatpush1.msra.mxu0 0.0
        %3838 = vmatprep.subr.mxu0 0.0
        %3839 = vmatpush1.msra.mxu0 0.0
        %3840 = vmatprep.subr.mxu0 0.0
        %3841 = vmatpush1.msra.mxu0 0.0
        %3842 = vmatprep.subr.mxu0 0.0
        %3843 = vmatpush1.msra.mxu0 0.0
        %3844 = vmatprep.subr.mxu0 0.0
        %3845 = vmatpush1.msra.mxu0 0.0
        %3846 = vmatprep.subr.mxu0 0.0
        %3847 = vmatpush1.msra.mxu0 0.0
        %3848 = vmatprep.subr.mxu0 0.0
        %3849 = vmatpush1.msra.mxu0 0.0
        %3850 = vmatprep.subr.mxu0 0.0
        %3851 = vmatpush1.msra.mxu0 0.0
        %3852 = vmatprep.subr.mxu0 0.0
        %3853 = vmatpush1.msra.mxu0 0.0
        %3854 = vmatprep.subr.mxu0 0.0
        %3855 = vmatpush1.msra.mxu0 %v3673
        %3856 = vmatprep.subr.mxu0 0.0
        %3857 = vmatpush1.msra.mxu0 %v3672
        %3858 = vmatprep.subr.mxu0 0.0
        %3859 = vmatpush2.msra.mxu0 0.0
        %3860 = vmatprep.subr.mxu0 0.0
        %3861 = vmatpush2.msra.mxu0 0.0
        %3862 = vmatprep.subr.mxu0 0.0
        %3863 = vmatpush2.msra.mxu0 0.0
        %3864 = vmatprep.subr.mxu0 0.0
        %3865 = vmatpush2.msra.mxu0 0.0
        %3866 = vmatprep.subr.mxu0 0.0
        %3867 = vmatpush2.msra.mxu0 0.0
        %3868 = vmatprep.subr.mxu0 0.0
        %3869 = vmatpush2.msra.mxu0 0.0
        %3870 = vmatprep.subr.mxu0 0.0
        %3871 = vmatpush2.msra.mxu0 0.0
        %3872 = vmatprep.subr.mxu0 0.0
        %3873 = vmatpush2.msra.mxu0 0.0
        %3874 = vmatprep.subr.mxu0 0.0
        %3875 = vmatpush2.msra.mxu0 0.0
        %3876 = vmatprep.subr.mxu0 0.0
        %3877 = vmatpush2.msra.mxu0 0.0
        %3878 = vmatprep.subr.mxu0 0.0
        %3879 = vmatpush2.msra.mxu0 0.0
        %3880 = vmatprep.subr.mxu0 0.0
        %3881 = vmatpush2.msra.mxu0 0.0
        %3882 = vmatprep.subr.mxu0 0.0
        %3883 = vmatpush2.msra.mxu0 0.0
        %3884 = vmatprep.subr.mxu0 0.0
        %3885 = vmatpush2.msra.mxu0 0.0
        %3886 = vmatprep.subr.mxu0 0.0
        %3887 = vmatpush2.msra.mxu0 0.0
        %3888 = vmatprep.subr.mxu0 0.0
        %3889 = vmatpush2.msra.mxu0 0.0
        %3890 = vmatprep.mubr.f32.mxu0 0.0
        %3891 = vmatmul.mubr.f32.gmra.mxu0 %v3824
        %v3892 = vpop.f32.mrf.mxu0
        %v3893 = vadd.f32 0.0, %v3892
        %v3894 = vpop.f32.mrf.mxu0
        %3895 = vdwg.mxu0
        %v3896 = vsel %vm918, %v3611, 0
        %3898 = vmatprep.subr.mxu0 0.0
        %3899 = vmatpush1.msra.mxu0 0.0
        %3900 = vmatprep.subr.mxu0 0.0
        %3901 = vmatpush1.msra.mxu0 0.0
        %3902 = vmatprep.subr.mxu0 0.0
        %3903 = vmatpush1.msra.mxu0 0.0
        %3904 = vmatprep.subr.mxu0 0.0
        %3905 = vmatpush1.msra.mxu0 0.0
        %3906 = vmatprep.subr.mxu0 0.0
        %3907 = vmatpush1.msra.mxu0 0.0
        %3908 = vmatprep.subr.mxu0 0.0
        %3909 = vmatpush1.msra.mxu0 0.0
        %3910 = vmatprep.subr.mxu0 0.0
        %3911 = vmatpush1.msra.mxu0 0.0
        %3912 = vmatprep.subr.mxu0 0.0
        %3913 = vmatpush1.msra.mxu0 0.0
        %3914 = vmatprep.subr.mxu0 0.0
        %3915 = vmatpush1.msra.mxu0 0.0
        %3916 = vmatprep.subr.mxu0 0.0
        %3917 = vmatpush1.msra.mxu0 0.0
        %3918 = vmatprep.subr.mxu0 0.0
        %3919 = vmatpush1.msra.mxu0 0.0
        %3920 = vmatprep.subr.mxu0 0.0
        %3921 = vmatpush1.msra.mxu0 0.0
        %3922 = vmatprep.subr.mxu0 0.0
        %3923 = vmatpush1.msra.mxu0 0.0
        %3924 = vmatprep.subr.mxu0 0.0
        %3925 = vmatpush1.msra.mxu0 0.0
        %3926 = vmatprep.subr.mxu0 0.0
        %3927 = vmatpush1.msra.mxu0 %v3705
        %3928 = vmatprep.subr.mxu0 0.0
        %3929 = vmatpush1.msra.mxu0 %v3704
        %3930 = vmatprep.subr.mxu0 0.0
        %3931 = vmatpush2.msra.mxu0 0.0
        %3932 = vmatprep.subr.mxu0 0.0
        %3933 = vmatpush2.msra.mxu0 0.0
        %3934 = vmatprep.subr.mxu0 0.0
        %3935 = vmatpush2.msra.mxu0 0.0
        %3936 = vmatprep.subr.mxu0 0.0
        %3937 = vmatpush2.msra.mxu0 0.0
        %3938 = vmatprep.subr.mxu0 0.0
        %3939 = vmatpush2.msra.mxu0 0.0
        %3940 = vmatprep.subr.mxu0 0.0
        %3941 = vmatpush2.msra.mxu0 0.0
        %3942 = vmatprep.subr.mxu0 0.0
        %3943 = vmatpush2.msra.mxu0 0.0
        %3944 = vmatprep.subr.mxu0 0.0
        %3945 = vmatpush2.msra.mxu0 0.0
        %3946 = vmatprep.subr.mxu0 0.0
        %3947 = vmatpush2.msra.mxu0 0.0
        %3948 = vmatprep.subr.mxu0 0.0
        %3949 = vmatpush2.msra.mxu0 0.0
        %3950 = vmatprep.subr.mxu0 0.0
        %3951 = vmatpush2.msra.mxu0 0.0
        %3952 = vmatprep.subr.mxu0 0.0
        %3953 = vmatpush2.msra.mxu0 0.0
        %3954 = vmatprep.subr.mxu0 0.0
        %3955 = vmatpush2.msra.mxu0 0.0
        %3956 = vmatprep.subr.mxu0 0.0
        %3957 = vmatpush2.msra.mxu0 0.0
        %3958 = vmatprep.subr.mxu0 0.0
        %3959 = vmatpush2.msra.mxu0 0.0
        %3960 = vmatprep.subr.mxu0 0.0
        %3961 = vmatpush2.msra.mxu0 0.0
        %3962 = vmatprep.mubr.f32.mxu0 0.0
        %3963 = vmatmul.mubr.f32.gmra.mxu0 %v3896
        %v3964 = vpop.f32.mrf.mxu0
        %v3965 = vadd.f32 0.0, %v3964
        %v3966 = vpop.f32.mrf.mxu0
        %3967 = vdwg.mxu0
        %v3968 = vsel %vm918, %v3613, 0
        %3970 = vmatprep.subr.mxu0 0.0
        %3971 = vmatpush1.msra.mxu0 0.0
        %3972 = vmatprep.subr.mxu0 0.0
        %3973 = vmatpush1.msra.mxu0 0.0
        %3974 = vmatprep.subr.mxu0 0.0
        %3975 = vmatpush1.msra.mxu0 0.0
        %3976 = vmatprep.subr.mxu0 0.0
        %3977 = vmatpush1.msra.mxu0 0.0
        %3978 = vmatprep.subr.mxu0 0.0
        %3979 = vmatpush1.msra.mxu0 0.0
        %3980 = vmatprep.subr.mxu0 0.0
        %3981 = vmatpush1.msra.mxu0 0.0
        %3982 = vmatprep.subr.mxu0 0.0
        %3983 = vmatpush1.msra.mxu0 0.0
        %3984 = vmatprep.subr.mxu0 0.0
        %3985 = vmatpush1.msra.mxu0 0.0
        %3986 = vmatprep.subr.mxu0 0.0
        %3987 = vmatpush1.msra.mxu0 0.0
        %3988 = vmatprep.subr.mxu0 0.0
        %3989 = vmatpush1.msra.mxu0 0.0
        %3990 = vmatprep.subr.mxu0 0.0
        %3991 = vmatpush1.msra.mxu0 0.0
        %3992 = vmatprep.subr.mxu0 0.0
        %3993 = vmatpush1.msra.mxu0 0.0
        %3994 = vmatprep.subr.mxu0 0.0
        %3995 = vmatpush1.msra.mxu0 0.0
        %3996 = vmatprep.subr.mxu0 0.0
        %3997 = vmatpush1.msra.mxu0 0.0
        %3998 = vmatprep.subr.mxu0 0.0
        %3999 = vmatpush1.msra.mxu0 %v3737
        %4000 = vmatprep.subr.mxu0 0.0
        %4001 = vmatpush1.msra.mxu0 %v3736
        %4002 = vmatprep.subr.mxu0 0.0
        %4003 = vmatpush2.msra.mxu0 0.0
        %4004 = vmatprep.subr.mxu0 0.0
        %4005 = vmatpush2.msra.mxu0 0.0
        %4006 = vmatprep.subr.mxu0 0.0
        %4007 = vmatpush2.msra.mxu0 0.0
        %4008 = vmatprep.subr.mxu0 0.0
        %4009 = vmatpush2.msra.mxu0 0.0
        %4010 = vmatprep.subr.mxu0 0.0
        %4011 = vmatpush2.msra.mxu0 0.0
        %4012 = vmatprep.subr.mxu0 0.0
        %4013 = vmatpush2.msra.mxu0 0.0
        %4014 = vmatprep.subr.mxu0 0.0
        %4015 = vmatpush2.msra.mxu0 0.0
        %4016 = vmatprep.subr.mxu0 0.0
        %4017 = vmatpush2.msra.mxu0 0.0
        %4018 = vmatprep.subr.mxu0 0.0
        %4019 = vmatpush2.msra.mxu0 0.0
        %4020 = vmatprep.subr.mxu0 0.0
        %4021 = vmatpush2.msra.mxu0 0.0
        %4022 = vmatprep.subr.mxu0 0.0
        %4023 = vmatpush2.msra.mxu0 0.0
        %4024 = vmatprep.subr.mxu0 0.0
        %4025 = vmatpush2.msra.mxu0 0.0
        %4026 = vmatprep.subr.mxu0 0.0
        %4027 = vmatpush2.msra.mxu0 0.0
        %4028 = vmatprep.subr.mxu0 0.0
        %4029 = vmatpush2.msra.mxu0 0.0
        %4030 = vmatprep.subr.mxu0 0.0
        %4031 = vmatpush2.msra.mxu0 0.0
        %4032 = vmatprep.subr.mxu0 0.0
        %4033 = vmatpush2.msra.mxu0 0.0
        %4034 = vmatprep.mubr.f32.mxu0 0.0
        %4035 = vmatmul.mubr.f32.gmra.mxu0 %v3968
        %v4036 = vpop.f32.mrf.mxu0
        %v4037 = vadd.f32 0.0, %v4036
        %v4038 = vpop.f32.mrf.mxu0
        %4039 = vdwg.mxu0
        %vm4040 = vcmask 23552
        %v4041 = vsel %vm4040, %v3821, -inf
        %4042 = vmax.xlane.f32.xlu0 %v4041
        %v4043 = vpop.xlane.xlu0 %4042
        %v4044 = vsel %vm4040, %v3893, -inf
        %4045 = vmax.xlane.f32.xlu0 %v4044
        %v4046 = vpop.xlane.xlu0 %4045
        %v4047 = vsel %vm4040, %v3965, -inf
        %4048 = vmax.xlane.f32.xlu0 %v4047
        %v4049 = vpop.xlane.xlu0 %4048
        %v4050 = vsel %vm4040, %v4037, -inf
        %4051 = vmax.xlane.f32.xlu0 %v4050
        %v4052 = vpop.xlane.xlu0 %4051
        %v4053 = vsub.f32 %v3821, %v4043
        %v4054 = vsub.f32 %v3893, %v4046
        %v4055 = vsub.f32 %v3965, %v4049
        %v4056 = vsub.f32 %v4037, %v4052
        %v4057 = vmul.f32 %v4053, 1.442695
        %v4058 = vpow.pop %v4057
        %v4059 = vmul.f32 %v4054, 1.442695
        %v4060 = vpow.pop %v4059
        %v4061 = vmul.f32 %v4055, 1.442695
        %v4062 = vpow.pop %v4061
        %v4063 = vmul.f32 %v4056, 1.442695
        %v4064 = vpow.pop %v4063
        %v4065 = vsel %vm4040, %v4058, 0.0
        %4066 = vadd.xlane.f32.xlu0 %v4065
        %v4067 = vpop.xlane.xlu0 %4066
        %v4068 = vsel %vm4040, %v4060, 0.0
        %4069 = vadd.xlane.f32.xlu0 %v4068
        %v4070 = vpop.xlane.xlu0 %4069
        %v4071 = vsel %vm4040, %v4062, 0.0
        %4072 = vadd.xlane.f32.xlu0 %v4071
        %v4073 = vpop.xlane.xlu0 %4072
        %v4074 = vsel %vm4040, %v4064, 0.0
        %4075 = vadd.xlane.f32.xlu0 %v4074
        %v4076 = vpop.xlane.xlu0 %4075
        %v4077 = vrcp.pop %v4067
        %v4078 = vrcp.pop %v4070
        %v4079 = vrcp.pop %v4073
        %v4080 = vrcp.pop %v4076
        %v4081 = vmul.f32 %v4058, %v4077
        %v4082 = vmul.f32 %v4060, %v4078
        %v4083 = vmul.f32 %v4062, %v4079
        %v4084 = vmul.f32 %v4064, %v4080
        %4085 = vrot.lane.b32.xlu0 %v3604, 64
        %v4086 = vpop.permute.xlu0 %4085
        %4087 = vrot.lane.b32.xlu0 %v3616, 64
        %v4088 = vpop.permute.xlu0 %4087
        %4089 = vrot.lane.b32.xlu0 %v3619, 64
        %v4090 = vpop.permute.xlu0 %4089
        %4091 = vrot.lane.b32.xlu0 %v3622, 64
        %v4092 = vpop.permute.xlu0 %4091
        %4097 = vxpose.xlu0.b32.start [1/16] %v4086, 128
        %4098 = vxpose.xlu0.b32.cont [2/16] 0.0, 128
        %4099 = vxpose.xlu0.b32.cont [3/16] 0.0, 128
        %4100 = vxpose.xlu0.b32.cont [4/16] 0.0, 128
        %4101 = vxpose.xlu0.b32.cont [5/16] 0.0, 128
        %4102 = vxpose.xlu0.b32.cont [6/16] 0.0, 128
        %4103 = vxpose.xlu0.b32.cont [7/16] 0.0, 128
        %4104 = vxpose.xlu0.b32.cont [8/16] 0.0, 128
        %4105 = vxpose.xlu0.b32.cont [9/16] 0.0, 128
        %4106 = vxpose.xlu0.b32.cont [10/16] 0.0, 128
        %4107 = vxpose.xlu0.b32.cont [11/16] 0.0, 128
        %4108 = vxpose.xlu0.b32.cont [12/16] 0.0, 128
        %4109 = vxpose.xlu0.b32.cont [13/16] 0.0, 128
        %4110 = vxpose.xlu0.b32.cont [14/16] 0.0, 128
        %4111 = vxpose.xlu0.b32.cont [15/16] 0.0, 128
        %4112 = vxpose.xlu0.b32.end [16/16] 0.0, 128
        %v4113 = vpop.trf.xlu0
        %v4114 = vpop.trf.xlu0
        %v4115 = vpop.trf.xlu0
        %v4116 = vpop.trf.xlu0
        %v4117 = vpop.trf.xlu0
        %v4118 = vpop.trf.xlu0
        %v4119 = vpop.trf.xlu0
        %v4120 = vpop.trf.xlu0
        %v4121 = vpop.trf.xlu0
        %v4122 = vpop.trf.xlu0
        %v4123 = vpop.trf.xlu0
        %v4124 = vpop.trf.xlu0
        %v4125 = vpop.trf.xlu0
        %v4126 = vpop.trf.xlu0
        %v4127 = vpop.trf.xlu0
        %v4128 = vpop.trf.xlu0
        %4129 = vxpose.xlu0.b32.start [1/16] %v4088, 128
        %4130 = vxpose.xlu0.b32.cont [2/16] 0.0, 128
        %4131 = vxpose.xlu0.b32.cont [3/16] 0.0, 128
        %4132 = vxpose.xlu0.b32.cont [4/16] 0.0, 128
        %4133 = vxpose.xlu0.b32.cont [5/16] 0.0, 128
        %4134 = vxpose.xlu0.b32.cont [6/16] 0.0, 128
        %4135 = vxpose.xlu0.b32.cont [7/16] 0.0, 128
        %4136 = vxpose.xlu0.b32.cont [8/16] 0.0, 128
        %4137 = vxpose.xlu0.b32.cont [9/16] 0.0, 128
        %4138 = vxpose.xlu0.b32.cont [10/16] 0.0, 128
        %4139 = vxpose.xlu0.b32.cont [11/16] 0.0, 128
        %4140 = vxpose.xlu0.b32.cont [12/16] 0.0, 128
        %4141 = vxpose.xlu0.b32.cont [13/16] 0.0, 128
        %4142 = vxpose.xlu0.b32.cont [14/16] 0.0, 128
        %4143 = vxpose.xlu0.b32.cont [15/16] 0.0, 128
        %4144 = vxpose.xlu0.b32.end [16/16] 0.0, 128
        %v4145 = vpop.trf.xlu0
        %v4146 = vpop.trf.xlu0
        %v4147 = vpop.trf.xlu0
        %v4148 = vpop.trf.xlu0
        %v4149 = vpop.trf.xlu0
        %v4150 = vpop.trf.xlu0
        %v4151 = vpop.trf.xlu0
        %v4152 = vpop.trf.xlu0
        %v4153 = vpop.trf.xlu0
        %v4154 = vpop.trf.xlu0
        %v4155 = vpop.trf.xlu0
        %v4156 = vpop.trf.xlu0
        %v4157 = vpop.trf.xlu0
        %v4158 = vpop.trf.xlu0
        %v4159 = vpop.trf.xlu0
        %v4160 = vpop.trf.xlu0
        %4161 = vxpose.xlu0.b32.start [1/16] %v4090, 128
        %4162 = vxpose.xlu0.b32.cont [2/16] 0.0, 128
        %4163 = vxpose.xlu0.b32.cont [3/16] 0.0, 128
        %4164 = vxpose.xlu0.b32.cont [4/16] 0.0, 128
        %4165 = vxpose.xlu0.b32.cont [5/16] 0.0, 128
        %4166 = vxpose.xlu0.b32.cont [6/16] 0.0, 128
        %4167 = vxpose.xlu0.b32.cont [7/16] 0.0, 128
        %4168 = vxpose.xlu0.b32.cont [8/16] 0.0, 128
        %4169 = vxpose.xlu0.b32.cont [9/16] 0.0, 128
        %4170 = vxpose.xlu0.b32.cont [10/16] 0.0, 128
        %4171 = vxpose.xlu0.b32.cont [11/16] 0.0, 128
        %4172 = vxpose.xlu0.b32.cont [12/16] 0.0, 128
        %4173 = vxpose.xlu0.b32.cont [13/16] 0.0, 128
        %4174 = vxpose.xlu0.b32.cont [14/16] 0.0, 128
        %4175 = vxpose.xlu0.b32.cont [15/16] 0.0, 128
        %4176 = vxpose.xlu0.b32.end [16/16] 0.0, 128
        %v4177 = vpop.trf.xlu0
        %v4178 = vpop.trf.xlu0
        %v4179 = vpop.trf.xlu0
        %v4180 = vpop.trf.xlu0
        %v4181 = vpop.trf.xlu0
        %v4182 = vpop.trf.xlu0
        %v4183 = vpop.trf.xlu0
        %v4184 = vpop.trf.xlu0
        %v4185 = vpop.trf.xlu0
        %v4186 = vpop.trf.xlu0
        %v4187 = vpop.trf.xlu0
        %v4188 = vpop.trf.xlu0
        %v4189 = vpop.trf.xlu0
        %v4190 = vpop.trf.xlu0
        %v4191 = vpop.trf.xlu0
        %v4192 = vpop.trf.xlu0
        %4193 = vxpose.xlu0.b32.start [1/16] %v4092, 128
        %4194 = vxpose.xlu0.b32.cont [2/16] 0.0, 128
        %4195 = vxpose.xlu0.b32.cont [3/16] 0.0, 128
        %4196 = vxpose.xlu0.b32.cont [4/16] 0.0, 128
        %4197 = vxpose.xlu0.b32.cont [5/16] 0.0, 128
        %4198 = vxpose.xlu0.b32.cont [6/16] 0.0, 128
        %4199 = vxpose.xlu0.b32.cont [7/16] 0.0, 128
        %4200 = vxpose.xlu0.b32.cont [8/16] 0.0, 128
        %4201 = vxpose.xlu0.b32.cont [9/16] 0.0, 128
        %4202 = vxpose.xlu0.b32.cont [10/16] 0.0, 128
        %4203 = vxpose.xlu0.b32.cont [11/16] 0.0, 128
        %4204 = vxpose.xlu0.b32.cont [12/16] 0.0, 128
        %4205 = vxpose.xlu0.b32.cont [13/16] 0.0, 128
        %4206 = vxpose.xlu0.b32.cont [14/16] 0.0, 128
        %4207 = vxpose.xlu0.b32.cont [15/16] 0.0, 128
        %4208 = vxpose.xlu0.b32.end [16/16] 0.0, 128
        %v4209 = vpop.trf.xlu0
        %v4210 = vpop.trf.xlu0
        %v4211 = vpop.trf.xlu0
        %v4212 = vpop.trf.xlu0
        %v4213 = vpop.trf.xlu0
        %v4214 = vpop.trf.xlu0
        %v4215 = vpop.trf.xlu0
        %v4216 = vpop.trf.xlu0
        %v4217 = vpop.trf.xlu0
        %v4218 = vpop.trf.xlu0
        %v4219 = vpop.trf.xlu0
        %v4220 = vpop.trf.xlu0
        %v4221 = vpop.trf.xlu0
        %v4222 = vpop.trf.xlu0
        %v4223 = vpop.trf.xlu0
        %v4224 = vpop.trf.xlu0
        %v4226 = vsel %vm4040, %v4113, 0
        %v4229 = vsel %vm4040, %v4114, 0
        %v4232 = vsel %vm4040, %v4081, 0
        %4234 = vmatprep.subr.mxu0 0.0
        %4235 = vmatpush1.xpose.msra.mxu0 0.0
        %4236 = vmatprep.subr.mxu0 0.0
        %4237 = vmatpush1.xpose.msra.mxu0 0.0
        %4238 = vmatprep.subr.mxu0 0.0
        %4239 = vmatpush1.xpose.msra.mxu0 0.0
        %4240 = vmatprep.subr.mxu0 0.0
        %4241 = vmatpush1.xpose.msra.mxu0 0.0
        %4242 = vmatprep.subr.mxu0 0.0
        %4243 = vmatpush1.xpose.msra.mxu0 0.0
        %4244 = vmatprep.subr.mxu0 0.0
        %4245 = vmatpush1.xpose.msra.mxu0 0.0
        %4246 = vmatprep.subr.mxu0 0.0
        %4247 = vmatpush1.xpose.msra.mxu0 0.0
        %4248 = vmatprep.subr.mxu0 0.0
        %4249 = vmatpush1.xpose.msra.mxu0 0.0
        %4250 = vmatprep.subr.mxu0 0.0
        %4251 = vmatpush1.xpose.msra.mxu0 0.0
        %4252 = vmatprep.subr.mxu0 0.0
        %4253 = vmatpush1.xpose.msra.mxu0 0.0
        %4254 = vmatprep.subr.mxu0 0.0
        %4255 = vmatpush1.xpose.msra.mxu0 0.0
        %4256 = vmatprep.subr.mxu0 0.0
        %4257 = vmatpush1.xpose.msra.mxu0 0.0
        %4258 = vmatprep.subr.mxu0 0.0
        %4259 = vmatpush1.xpose.msra.mxu0 0.0
        %4260 = vmatprep.subr.mxu0 0.0
        %4261 = vmatpush1.xpose.msra.mxu0 0.0
        %4262 = vmatprep.subr.mxu0 0.0
        %4263 = vmatpush1.xpose.msra.mxu0 0.0
        %4264 = vmatprep.subr.mxu0 0.0
        %4265 = vmatpush1.xpose.msra.mxu0 %v4232
        %4266 = vmatprep.subr.mxu0 0.0
        %4267 = vmatpush2.xpose.msra.mxu0 0.0
        %4268 = vmatprep.subr.mxu0 0.0
        %4269 = vmatpush2.xpose.msra.mxu0 0.0
        %4270 = vmatprep.subr.mxu0 0.0
        %4271 = vmatpush2.xpose.msra.mxu0 0.0
        %4272 = vmatprep.subr.mxu0 0.0
        %4273 = vmatpush2.xpose.msra.mxu0 0.0
        %4274 = vmatprep.subr.mxu0 0.0
        %4275 = vmatpush2.xpose.msra.mxu0 0.0
        %4276 = vmatprep.subr.mxu0 0.0
        %4277 = vmatpush2.xpose.msra.mxu0 0.0
        %4278 = vmatprep.subr.mxu0 0.0
        %4279 = vmatpush2.xpose.msra.mxu0 0.0
        %4280 = vmatprep.subr.mxu0 0.0
        %4281 = vmatpush2.xpose.msra.mxu0 0.0
        %4282 = vmatprep.subr.mxu0 0.0
        %4283 = vmatpush2.xpose.msra.mxu0 0.0
        %4284 = vmatprep.subr.mxu0 0.0
        %4285 = vmatpush2.xpose.msra.mxu0 0.0
        %4286 = vmatprep.subr.mxu0 0.0
        %4287 = vmatpush2.xpose.msra.mxu0 0.0
        %4288 = vmatprep.subr.mxu0 0.0
        %4289 = vmatpush2.xpose.msra.mxu0 0.0
        %4290 = vmatprep.subr.mxu0 0.0
        %4291 = vmatpush2.xpose.msra.mxu0 0.0
        %4292 = vmatprep.subr.mxu0 0.0
        %4293 = vmatpush2.xpose.msra.mxu0 0.0
        %4294 = vmatprep.subr.mxu0 0.0
        %4295 = vmatpush2.xpose.msra.mxu0 0.0
        %4296 = vmatprep.subr.mxu0 0.0
        %4297 = vmatpush2.xpose.msra.mxu0 0.0
        %4298 = vmatprep.mubr.f32.mxu0 0.0
        %4299 = vmatmul.mubr.f32.gmra.mxu0 %v4226
        %v4300 = vpop.f32.mrf.mxu0
        %v4301 = vadd.f32 0.0, %v4300
        %v4302 = vpop.f32.mrf.mxu0
        %4303 = vmatprep.mubr.f32.mxu0 0.0
        %4304 = vmatmul.mubr.f32.gmra.mxu0 %v4229
        %v4305 = vpop.f32.mrf.mxu0
        %v4306 = vadd.f32 0.0, %v4305
        %v4307 = vpop.f32.mrf.mxu0
        %4308 = vdwg.mxu0
        %v4310 = vsel %vm4040, %v4145, 0
        %v4313 = vsel %vm4040, %v4146, 0
        %v4316 = vsel %vm4040, %v4082, 0
        %4318 = vmatprep.subr.mxu0 0.0
        %4319 = vmatpush1.xpose.msra.mxu0 0.0
        %4320 = vmatprep.subr.mxu0 0.0
        %4321 = vmatpush1.xpose.msra.mxu0 0.0
        %4322 = vmatprep.subr.mxu0 0.0
        %4323 = vmatpush1.xpose.msra.mxu0 0.0
        %4324 = vmatprep.subr.mxu0 0.0
        %4325 = vmatpush1.xpose.msra.mxu0 0.0
        %4326 = vmatprep.subr.mxu0 0.0
        %4327 = vmatpush1.xpose.msra.mxu0 0.0
        %4328 = vmatprep.subr.mxu0 0.0
        %4329 = vmatpush1.xpose.msra.mxu0 0.0
        %4330 = vmatprep.subr.mxu0 0.0
        %4331 = vmatpush1.xpose.msra.mxu0 0.0
        %4332 = vmatprep.subr.mxu0 0.0
        %4333 = vmatpush1.xpose.msra.mxu0 0.0
        %4334 = vmatprep.subr.mxu0 0.0
        %4335 = vmatpush1.xpose.msra.mxu0 0.0
        %4336 = vmatprep.subr.mxu0 0.0
        %4337 = vmatpush1.xpose.msra.mxu0 0.0
        %4338 = vmatprep.subr.mxu0 0.0
        %4339 = vmatpush1.xpose.msra.mxu0 0.0
        %4340 = vmatprep.subr.mxu0 0.0
        %4341 = vmatpush1.xpose.msra.mxu0 0.0
        %4342 = vmatprep.subr.mxu0 0.0
        %4343 = vmatpush1.xpose.msra.mxu0 0.0
        %4344 = vmatprep.subr.mxu0 0.0
        %4345 = vmatpush1.xpose.msra.mxu0 0.0
        %4346 = vmatprep.subr.mxu0 0.0
        %4347 = vmatpush1.xpose.msra.mxu0 0.0
        %4348 = vmatprep.subr.mxu0 0.0
        %4349 = vmatpush1.xpose.msra.mxu0 %v4316
        %4350 = vmatprep.subr.mxu0 0.0
        %4351 = vmatpush2.xpose.msra.mxu0 0.0
        %4352 = vmatprep.subr.mxu0 0.0
        %4353 = vmatpush2.xpose.msra.mxu0 0.0
        %4354 = vmatprep.subr.mxu0 0.0
        %4355 = vmatpush2.xpose.msra.mxu0 0.0
        %4356 = vmatprep.subr.mxu0 0.0
        %4357 = vmatpush2.xpose.msra.mxu0 0.0
        %4358 = vmatprep.subr.mxu0 0.0
        %4359 = vmatpush2.xpose.msra.mxu0 0.0
        %4360 = vmatprep.subr.mxu0 0.0
        %4361 = vmatpush2.xpose.msra.mxu0 0.0
        %4362 = vmatprep.subr.mxu0 0.0
        %4363 = vmatpush2.xpose.msra.mxu0 0.0
        %4364 = vmatprep.subr.mxu0 0.0
        %4365 = vmatpush2.xpose.msra.mxu0 0.0
        %4366 = vmatprep.subr.mxu0 0.0
        %4367 = vmatpush2.xpose.msra.mxu0 0.0
        %4368 = vmatprep.subr.mxu0 0.0
        %4369 = vmatpush2.xpose.msra.mxu0 0.0
        %4370 = vmatprep.subr.mxu0 0.0
        %4371 = vmatpush2.xpose.msra.mxu0 0.0
        %4372 = vmatprep.subr.mxu0 0.0
        %4373 = vmatpush2.xpose.msra.mxu0 0.0
        %4374 = vmatprep.subr.mxu0 0.0
        %4375 = vmatpush2.xpose.msra.mxu0 0.0
        %4376 = vmatprep.subr.mxu0 0.0
        %4377 = vmatpush2.xpose.msra.mxu0 0.0
        %4378 = vmatprep.subr.mxu0 0.0
        %4379 = vmatpush2.xpose.msra.mxu0 0.0
        %4380 = vmatprep.subr.mxu0 0.0
        %4381 = vmatpush2.xpose.msra.mxu0 0.0
        %4382 = vmatprep.mubr.f32.mxu0 0.0
        %4383 = vmatmul.mubr.f32.gmra.mxu0 %v4310
        %v4384 = vpop.f32.mrf.mxu0
        %v4385 = vadd.f32 0.0, %v4384
        %v4386 = vpop.f32.mrf.mxu0
        %4387 = vmatprep.mubr.f32.mxu0 0.0
        %4388 = vmatmul.mubr.f32.gmra.mxu0 %v4313
        %v4389 = vpop.f32.mrf.mxu0
        %v4390 = vadd.f32 0.0, %v4389
        %v4391 = vpop.f32.mrf.mxu0
        %4392 = vdwg.mxu0
        %v4394 = vsel %vm4040, %v4177, 0
        %v4397 = vsel %vm4040, %v4178, 0
        %v4400 = vsel %vm4040, %v4083, 0
        %4402 = vmatprep.subr.mxu0 0.0
        %4403 = vmatpush1.xpose.msra.mxu0 0.0
        %4404 = vmatprep.subr.mxu0 0.0
        %4405 = vmatpush1.xpose.msra.mxu0 0.0
        %4406 = vmatprep.subr.mxu0 0.0
        %4407 = vmatpush1.xpose.msra.mxu0 0.0
        %4408 = vmatprep.subr.mxu0 0.0
        %4409 = vmatpush1.xpose.msra.mxu0 0.0
        %4410 = vmatprep.subr.mxu0 0.0
        %4411 = vmatpush1.xpose.msra.mxu0 0.0
        %4412 = vmatprep.subr.mxu0 0.0
        %4413 = vmatpush1.xpose.msra.mxu0 0.0
        %4414 = vmatprep.subr.mxu0 0.0
        %4415 = vmatpush1.xpose.msra.mxu0 0.0
        %4416 = vmatprep.subr.mxu0 0.0
        %4417 = vmatpush1.xpose.msra.mxu0 0.0
        %4418 = vmatprep.subr.mxu0 0.0
        %4419 = vmatpush1.xpose.msra.mxu0 0.0
        %4420 = vmatprep.subr.mxu0 0.0
        %4421 = vmatpush1.xpose.msra.mxu0 0.0
        %4422 = vmatprep.subr.mxu0 0.0
        %4423 = vmatpush1.xpose.msra.mxu0 0.0
        %4424 = vmatprep.subr.mxu0 0.0
        %4425 = vmatpush1.xpose.msra.mxu0 0.0
        %4426 = vmatprep.subr.mxu0 0.0
        %4427 = vmatpush1.xpose.msra.mxu0 0.0
        %4428 = vmatprep.subr.mxu0 0.0
        %4429 = vmatpush1.xpose.msra.mxu0 0.0
        %4430 = vmatprep.subr.mxu0 0.0
        %4431 = vmatpush1.xpose.msra.mxu0 0.0
        %4432 = vmatprep.subr.mxu0 0.0
        %4433 = vmatpush1.xpose.msra.mxu0 %v4400
        %4434 = vmatprep.subr.mxu0 0.0
        %4435 = vmatpush2.xpose.msra.mxu0 0.0
        %4436 = vmatprep.subr.mxu0 0.0
        %4437 = vmatpush2.xpose.msra.mxu0 0.0
        %4438 = vmatprep.subr.mxu0 0.0
        %4439 = vmatpush2.xpose.msra.mxu0 0.0
        %4440 = vmatprep.subr.mxu0 0.0
        %4441 = vmatpush2.xpose.msra.mxu0 0.0
        %4442 = vmatprep.subr.mxu0 0.0
        %4443 = vmatpush2.xpose.msra.mxu0 0.0
        %4444 = vmatprep.subr.mxu0 0.0
        %4445 = vmatpush2.xpose.msra.mxu0 0.0
        %4446 = vmatprep.subr.mxu0 0.0
        %4447 = vmatpush2.xpose.msra.mxu0 0.0
        %4448 = vmatprep.subr.mxu0 0.0
        %4449 = vmatpush2.xpose.msra.mxu0 0.0
        %4450 = vmatprep.subr.mxu0 0.0
        %4451 = vmatpush2.xpose.msra.mxu0 0.0
        %4452 = vmatprep.subr.mxu0 0.0
        %4453 = vmatpush2.xpose.msra.mxu0 0.0
        %4454 = vmatprep.subr.mxu0 0.0
        %4455 = vmatpush2.xpose.msra.mxu0 0.0
        %4456 = vmatprep.subr.mxu0 0.0
        %4457 = vmatpush2.xpose.msra.mxu0 0.0
        %4458 = vmatprep.subr.mxu0 0.0
        %4459 = vmatpush2.xpose.msra.mxu0 0.0
        %4460 = vmatprep.subr.mxu0 0.0
        %4461 = vmatpush2.xpose.msra.mxu0 0.0
        %4462 = vmatprep.subr.mxu0 0.0
        %4463 = vmatpush2.xpose.msra.mxu0 0.0
        %4464 = vmatprep.subr.mxu0 0.0
        %4465 = vmatpush2.xpose.msra.mxu0 0.0
        %4466 = vmatprep.mubr.f32.mxu0 0.0
        %4467 = vmatmul.mubr.f32.gmra.mxu0 %v4394
        %v4468 = vpop.f32.mrf.mxu0
        %v4469 = vadd.f32 0.0, %v4468
        %v4470 = vpop.f32.mrf.mxu0
        %4471 = vmatprep.mubr.f32.mxu0 0.0
        %4472 = vmatmul.mubr.f32.gmra.mxu0 %v4397
        %v4473 = vpop.f32.mrf.mxu0
        %v4474 = vadd.f32 0.0, %v4473
        %v4475 = vpop.f32.mrf.mxu0
        %4476 = vdwg.mxu0
        %v4478 = vsel %vm4040, %v4209, 0
        %v4481 = vsel %vm4040, %v4210, 0
        %v4484 = vsel %vm4040, %v4084, 0
        %4486 = vmatprep.subr.mxu0 0.0
        %4487 = vmatpush1.xpose.msra.mxu0 0.0
        %4488 = vmatprep.subr.mxu0 0.0
        %4489 = vmatpush1.xpose.msra.mxu0 0.0
        %4490 = vmatprep.subr.mxu0 0.0
        %4491 = vmatpush1.xpose.msra.mxu0 0.0
        %4492 = vmatprep.subr.mxu0 0.0
        %4493 = vmatpush1.xpose.msra.mxu0 0.0
        %4494 = vmatprep.subr.mxu0 0.0
        %4495 = vmatpush1.xpose.msra.mxu0 0.0
        %4496 = vmatprep.subr.mxu0 0.0
        %4497 = vmatpush1.xpose.msra.mxu0 0.0
        %4498 = vmatprep.subr.mxu0 0.0
        %4499 = vmatpush1.xpose.msra.mxu0 0.0
        %4500 = vmatprep.subr.mxu0 0.0
        %4501 = vmatpush1.xpose.msra.mxu0 0.0
        %4502 = vmatprep.subr.mxu0 0.0
        %4503 = vmatpush1.xpose.msra.mxu0 0.0
        %4504 = vmatprep.subr.mxu0 0.0
        %4505 = vmatpush1.xpose.msra.mxu0 0.0
        %4506 = vmatprep.subr.mxu0 0.0
        %4507 = vmatpush1.xpose.msra.mxu0 0.0
        %4508 = vmatprep.subr.mxu0 0.0
        %4509 = vmatpush1.xpose.msra.mxu0 0.0
        %4510 = vmatprep.subr.mxu0 0.0
        %4511 = vmatpush1.xpose.msra.mxu0 0.0
        %4512 = vmatprep.subr.mxu0 0.0
        %4513 = vmatpush1.xpose.msra.mxu0 0.0
        %4514 = vmatprep.subr.mxu0 0.0
        %4515 = vmatpush1.xpose.msra.mxu0 0.0
        %4516 = vmatprep.subr.mxu0 0.0
        %4517 = vmatpush1.xpose.msra.mxu0 %v4484
        %4518 = vmatprep.subr.mxu0 0.0
        %4519 = vmatpush2.xpose.msra.mxu0 0.0
        %4520 = vmatprep.subr.mxu0 0.0
        %4521 = vmatpush2.xpose.msra.mxu0 0.0
        %4522 = vmatprep.subr.mxu0 0.0
        %4523 = vmatpush2.xpose.msra.mxu0 0.0
        %4524 = vmatprep.subr.mxu0 0.0
        %4525 = vmatpush2.xpose.msra.mxu0 0.0
        %4526 = vmatprep.subr.mxu0 0.0
        %4527 = vmatpush2.xpose.msra.mxu0 0.0
        %4528 = vmatprep.subr.mxu0 0.0
        %4529 = vmatpush2.xpose.msra.mxu0 0.0
        %4530 = vmatprep.subr.mxu0 0.0
        %4531 = vmatpush2.xpose.msra.mxu0 0.0
        %4532 = vmatprep.subr.mxu0 0.0
        %4533 = vmatpush2.xpose.msra.mxu0 0.0
        %4534 = vmatprep.subr.mxu0 0.0
        %4535 = vmatpush2.xpose.msra.mxu0 0.0
        %4536 = vmatprep.subr.mxu0 0.0
        %4537 = vmatpush2.xpose.msra.mxu0 0.0
        %4538 = vmatprep.subr.mxu0 0.0
        %4539 = vmatpush2.xpose.msra.mxu0 0.0
        %4540 = vmatprep.subr.mxu0 0.0
        %4541 = vmatpush2.xpose.msra.mxu0 0.0
        %4542 = vmatprep.subr.mxu0 0.0
        %4543 = vmatpush2.xpose.msra.mxu0 0.0
        %4544 = vmatprep.subr.mxu0 0.0
        %4545 = vmatpush2.xpose.msra.mxu0 0.0
        %4546 = vmatprep.subr.mxu0 0.0
        %4547 = vmatpush2.xpose.msra.mxu0 0.0
        %4548 = vmatprep.subr.mxu0 0.0
        %4549 = vmatpush2.xpose.msra.mxu0 0.0
        %4550 = vmatprep.mubr.f32.mxu0 0.0
        %4551 = vmatmul.mubr.f32.gmra.mxu0 %v4478
        %v4552 = vpop.f32.mrf.mxu0
        %v4553 = vadd.f32 0.0, %v4552
        %v4554 = vpop.f32.mrf.mxu0
        %4555 = vmatprep.mubr.f32.mxu0 0.0
        %4556 = vmatmul.mubr.f32.gmra.mxu0 %v4481
        %v4557 = vpop.f32.mrf.mxu0
        %v4558 = vadd.f32 0.0, %v4557
        %v4559 = vpop.f32.mrf.mxu0
        %4560 = vdwg.mxu0
        %4561 = vxpose.xlu0.b32.start [1/16] %v4301, 128
        %4562 = vxpose.xlu0.b32.cont [2/16] %v4306, 128
        %4563 = vxpose.xlu0.b32.cont [3/16] 0.0, 128
        %4564 = vxpose.xlu0.b32.cont [4/16] 0.0, 128
        %4565 = vxpose.xlu0.b32.cont [5/16] 0.0, 128
        %4566 = vxpose.xlu0.b32.cont [6/16] 0.0, 128
        %4567 = vxpose.xlu0.b32.cont [7/16] 0.0, 128
        %4568 = vxpose.xlu0.b32.cont [8/16] 0.0, 128
        %4569 = vxpose.xlu0.b32.cont [9/16] 0.0, 128
        %4570 = vxpose.xlu0.b32.cont [10/16] 0.0, 128
        %4571 = vxpose.xlu0.b32.cont [11/16] 0.0, 128
        %4572 = vxpose.xlu0.b32.cont [12/16] 0.0, 128
        %4573 = vxpose.xlu0.b32.cont [13/16] 0.0, 128
        %4574 = vxpose.xlu0.b32.cont [14/16] 0.0, 128
        %4575 = vxpose.xlu0.b32.cont [15/16] 0.0, 128
        %4576 = vxpose.xlu0.b32.end [16/16] 0.0, 128
        %v4577 = vpop.trf.xlu0
        %v4578 = vpop.trf.xlu0
        %v4579 = vpop.trf.xlu0
        %v4580 = vpop.trf.xlu0
        %v4581 = vpop.trf.xlu0
        %v4582 = vpop.trf.xlu0
        %v4583 = vpop.trf.xlu0
        %v4584 = vpop.trf.xlu0
        %v4585 = vpop.trf.xlu0
        %v4586 = vpop.trf.xlu0
        %v4587 = vpop.trf.xlu0
        %v4588 = vpop.trf.xlu0
        %v4589 = vpop.trf.xlu0
        %v4590 = vpop.trf.xlu0
        %v4591 = vpop.trf.xlu0
        %v4592 = vpop.trf.xlu0
        %4593 = vxpose.xlu0.b32.start [1/16] %v4385, 128
        %4594 = vxpose.xlu0.b32.cont [2/16] %v4390, 128
        %4595 = vxpose.xlu0.b32.cont [3/16] 0.0, 128
        %4596 = vxpose.xlu0.b32.cont [4/16] 0.0, 128
        %4597 = vxpose.xlu0.b32.cont [5/16] 0.0, 128
        %4598 = vxpose.xlu0.b32.cont [6/16] 0.0, 128
        %4599 = vxpose.xlu0.b32.cont [7/16] 0.0, 128
        %4600 = vxpose.xlu0.b32.cont [8/16] 0.0, 128
        %4601 = vxpose.xlu0.b32.cont [9/16] 0.0, 128
        %4602 = vxpose.xlu0.b32.cont [10/16] 0.0, 128
        %4603 = vxpose.xlu0.b32.cont [11/16] 0.0, 128
        %4604 = vxpose.xlu0.b32.cont [12/16] 0.0, 128
        %4605 = vxpose.xlu0.b32.cont [13/16] 0.0, 128
        %4606 = vxpose.xlu0.b32.cont [14/16] 0.0, 128
        %4607 = vxpose.xlu0.b32.cont [15/16] 0.0, 128
        %4608 = vxpose.xlu0.b32.end [16/16] 0.0, 128
        %v4609 = vpop.trf.xlu0
        %v4610 = vpop.trf.xlu0
        %v4611 = vpop.trf.xlu0
        %v4612 = vpop.trf.xlu0
        %v4613 = vpop.trf.xlu0
        %v4614 = vpop.trf.xlu0
        %v4615 = vpop.trf.xlu0
        %v4616 = vpop.trf.xlu0
        %v4617 = vpop.trf.xlu0
        %v4618 = vpop.trf.xlu0
        %v4619 = vpop.trf.xlu0
        %v4620 = vpop.trf.xlu0
        %v4621 = vpop.trf.xlu0
        %v4622 = vpop.trf.xlu0
        %v4623 = vpop.trf.xlu0
        %v4624 = vpop.trf.xlu0
        %4625 = vxpose.xlu0.b32.start [1/16] %v4469, 128
        %4626 = vxpose.xlu0.b32.cont [2/16] %v4474, 128
        %4627 = vxpose.xlu0.b32.cont [3/16] 0.0, 128
        %4628 = vxpose.xlu0.b32.cont [4/16] 0.0, 128
        %4629 = vxpose.xlu0.b32.cont [5/16] 0.0, 128
        %4630 = vxpose.xlu0.b32.cont [6/16] 0.0, 128
        %4631 = vxpose.xlu0.b32.cont [7/16] 0.0, 128
        %4632 = vxpose.xlu0.b32.cont [8/16] 0.0, 128
        %4633 = vxpose.xlu0.b32.cont [9/16] 0.0, 128
        %4634 = vxpose.xlu0.b32.cont [10/16] 0.0, 128
        %4635 = vxpose.xlu0.b32.cont [11/16] 0.0, 128
        %4636 = vxpose.xlu0.b32.cont [12/16] 0.0, 128
        %4637 = vxpose.xlu0.b32.cont [13/16] 0.0, 128
        %4638 = vxpose.xlu0.b32.cont [14/16] 0.0, 128
        %4639 = vxpose.xlu0.b32.cont [15/16] 0.0, 128
        %4640 = vxpose.xlu0.b32.end [16/16] 0.0, 128
        %v4641 = vpop.trf.xlu0
        %v4642 = vpop.trf.xlu0
        %v4643 = vpop.trf.xlu0
        %v4644 = vpop.trf.xlu0
        %v4645 = vpop.trf.xlu0
        %v4646 = vpop.trf.xlu0
        %v4647 = vpop.trf.xlu0
        %v4648 = vpop.trf.xlu0
        %v4649 = vpop.trf.xlu0
        %v4650 = vpop.trf.xlu0
        %v4651 = vpop.trf.xlu0
        %v4652 = vpop.trf.xlu0
        %v4653 = vpop.trf.xlu0
        %v4654 = vpop.trf.xlu0
        %v4655 = vpop.trf.xlu0
        %v4656 = vpop.trf.xlu0
        %4657 = vxpose.xlu0.b32.start [1/16] %v4553, 128
        %4658 = vxpose.xlu0.b32.cont [2/16] %v4558, 128
        %4659 = vxpose.xlu0.b32.cont [3/16] 0.0, 128
        %4660 = vxpose.xlu0.b32.cont [4/16] 0.0, 128
        %4661 = vxpose.xlu0.b32.cont [5/16] 0.0, 128
        %4662 = vxpose.xlu0.b32.cont [6/16] 0.0, 128
        %4663 = vxpose.xlu0.b32.cont [7/16] 0.0, 128
        %4664 = vxpose.xlu0.b32.cont [8/16] 0.0, 128
        %4665 = vxpose.xlu0.b32.cont [9/16] 0.0, 128
        %4666 = vxpose.xlu0.b32.cont [10/16] 0.0, 128
        %4667 = vxpose.xlu0.b32.cont [11/16] 0.0, 128
        %4668 = vxpose.xlu0.b32.cont [12/16] 0.0, 128
        %4669 = vxpose.xlu0.b32.cont [13/16] 0.0, 128
        %4670 = vxpose.xlu0.b32.cont [14/16] 0.0, 128
        %4671 = vxpose.xlu0.b32.cont [15/16] 0.0, 128
        %4672 = vxpose.xlu0.b32.end [16/16] 0.0, 128
        %v4673 = vpop.trf.xlu0
        %v4674 = vpop.trf.xlu0
        %v4675 = vpop.trf.xlu0
        %v4676 = vpop.trf.xlu0
        %v4677 = vpop.trf.xlu0
        %v4678 = vpop.trf.xlu0
        %v4679 = vpop.trf.xlu0
        %v4680 = vpop.trf.xlu0
        %v4681 = vpop.trf.xlu0
        %v4682 = vpop.trf.xlu0
        %v4683 = vpop.trf.xlu0
        %v4684 = vpop.trf.xlu0
        %v4685 = vpop.trf.xlu0
        %v4686 = vpop.trf.xlu0
        %v4687 = vpop.trf.xlu0
        %v4688 = vpop.trf.xlu0
        %v4689 = vcombine.low %v4577, %v4641
        %v4690 = vcombine.high %v4577, %v4641
        %v4692 = vunpack.c.l.s4 1983009808
        %v4693 = vunpack.c.0.s8 %v4692
        %v4694 = vlaneseq
        %v4695 = vshrl.u32 %v4694, 7
        %v4696 = vsub.s32 %v4693, %v4695
        %v4697 = vrot.slane %v4689, %v4696
        %v4699 = vunpack.c.l.s4 1983009808
        %v4700 = vunpack.c.0.s8 %v4699
        %v4701 = vlaneseq
        %v4702 = vshrl.u32 %v4701, 7
        %v4703 = vsub.s32 %v4700, %v4702
        %v4704 = vrot.slane %v4690, %v4703
        %v4705 = vcombine.low %v4609, %v4673
        %v4706 = vcombine.high %v4609, %v4673
        %v4708 = vunpack.c.l.s4 1983009808
        %v4709 = vunpack.c.0.s8 %v4708
        %v4710 = vlaneseq
        %v4711 = vshrl.u32 %v4710, 7
        %v4712 = vsub.s32 %v4709, %v4711
        %v4713 = vrot.slane %v4705, %v4712
        %v4715 = vunpack.c.l.s4 1983009808
        %v4716 = vunpack.c.0.s8 %v4715
        %v4717 = vlaneseq
        %v4718 = vshrl.u32 %v4717, 7
        %v4719 = vsub.s32 %v4716, %v4718
        %v4720 = vrot.slane %v4706, %v4719
        %v4721 = vcombine.low %v4697, %v4713
        %v4722 = vcombine.high %v4697, %v4713
        %v4724 = vunpack.c.l.s4 1934713408
        %v4725 = vunpack.c.0.s8 %v4724
        %v4726 = vlaneseq
        %v4727 = vshrl.u32 %v4726, 7
        %v4728 = vsub.s32 %v4725, %v4727
        %v4729 = vrot.slane %v4721, %v4728
        %v4731 = vunpack.c.l.s4 1934713408
        %v4732 = vunpack.c.0.s8 %v4731
        %v4733 = vlaneseq
        %v4734 = vshrl.u32 %v4733, 7
        %v4735 = vsub.s32 %v4732, %v4734
        %v4736 = vrot.slane %v4722, %v4735
        %v4737 = vcombine.low %v4704, %v4720
        %v4738 = vcombine.high %v4704, %v4720
        %v4740 = vunpack.c.l.s4 1934713408
        %v4741 = vunpack.c.0.s8 %v4740
        %v4742 = vlaneseq
        %v4743 = vshrl.u32 %v4742, 7
        %v4744 = vsub.s32 %v4741, %v4743
        %v4745 = vrot.slane %v4737, %v4744
        %v4747 = vunpack.c.l.s4 1934713408
        %v4748 = vunpack.c.0.s8 %v4747
        %v4749 = vlaneseq
        %v4750 = vshrl.u32 %v4749, 7
        %v4751 = vsub.s32 %v4748, %v4750
        %v4752 = vrot.slane %v4738, %v4751
        %v4753 = vcombine.high %v4729, 0.0
        %v4754 = vcombine.high %v4736, 0.0
        %v4755 = vcombine.high %v4745, 0.0
        %v4756 = vcombine.high %v4752, 0.0
        %v4757 = vcombine.low %v4729, %v4736
        %v4759 = vunpack.c.l.s4 1983009808
        %v4760 = vunpack.c.0.s8 %v4759
        %v4761 = vlaneseq
        %v4762 = vshrl.u32 %v4761, 7
        %v4763 = vsub.s32 %v4760, %v4762
        %v4764 = vrot.slane %v4757, %v4763
        %v4765 = vcombine.low %v4753, %v4754
        %v4767 = vunpack.c.l.s4 1983009808
        %v4768 = vunpack.c.0.s8 %v4767
        %v4769 = vlaneseq
        %v4770 = vshrl.u32 %v4769, 7
        %v4771 = vsub.s32 %v4768, %v4770
        %v4772 = vrot.slane %v4765, %v4771
        %v4773 = vcombine.low %v4745, %v4752
        %v4775 = vunpack.c.l.s4 1983009808
        %v4776 = vunpack.c.0.s8 %v4775
        %v4777 = vlaneseq
        %v4778 = vshrl.u32 %v4777, 7
        %v4779 = vsub.s32 %v4776, %v4778
        %v4780 = vrot.slane %v4773, %v4779
        %v4781 = vcombine.low %v4755, %v4756
        %v4783 = vunpack.c.l.s4 1983009808
        %v4784 = vunpack.c.0.s8 %v4783
        %v4785 = vlaneseq
        %v4786 = vshrl.u32 %v4785, 7
        %v4787 = vsub.s32 %v4784, %v4786
        %v4788 = vrot.slane %v4781, %v4787
        %v4789 = vcombine.low %v4764, %v4772
        %v4790 = vcombine.high %v4764, %v4772
        %v4792 = vunpack.c.l.s4 1934713408
        %v4793 = vunpack.c.0.s8 %v4792
        %v4794 = vlaneseq
        %v4795 = vshrl.u32 %v4794, 7
        %v4796 = vsub.s32 %v4793, %v4795
        %v4797 = vrot.slane %v4789, %v4796
        %v4799 = vunpack.c.l.s4 1934713408
        %v4800 = vunpack.c.0.s8 %v4799
        %v4801 = vlaneseq
        %v4802 = vshrl.u32 %v4801, 7
        %v4803 = vsub.s32 %v4800, %v4802
        %v4804 = vrot.slane %v4790, %v4803
        %v4805 = vcombine.low %v4780, %v4788
        %v4806 = vcombine.high %v4780, %v4788
        %v4808 = vunpack.c.l.s4 1934713408
        %v4809 = vunpack.c.0.s8 %v4808
        %v4810 = vlaneseq
        %v4811 = vshrl.u32 %v4810, 7
        %v4812 = vsub.s32 %v4809, %v4811
        %v4813 = vrot.slane %v4805, %v4812
        %v4815 = vunpack.c.l.s4 1934713408
        %v4816 = vunpack.c.0.s8 %v4815
        %v4817 = vlaneseq
        %v4818 = vshrl.u32 %v4817, 7
        %v4819 = vsub.s32 %v4816, %v4818
        %v4820 = vrot.slane %v4806, %v4819
        %v4821 = vcombine.low %v4797, %v4813
        %v4822 = vcombine.high %v4797, %v4813
        %v4823 = vcombine.low %v4804, %v4820
        %v4824 = vcombine.high %v4804, %v4820
        %4826 = vrot.lane.b32.xlu0 %v4822, 16
        %v4827 = vpop.permute.xlu0 %4826
        %4830 = vrot.lane.b32.xlu0 %v4823, 32
        %v4831 = vpop.permute.xlu0 %4830
        %4834 = vrot.lane.b32.xlu0 %v4824, 48
        %v4835 = vpop.permute.xlu0 %4834
        %v4837 = vsel %vm918, %v4821, %v4827
        %v4838 = vsel %vm521, %v4837, %v4831
        %v4839 = vsel %vm2018, %v4838, %v4835
        %s4840 = scalar_lea.vmem %s9, 128
        %v4841 = vld [vmem:[%s4840] sm:$0xff]
        %v4842 = vld [vmem:[%s4840 + $0x8] sm:$0xff]
        %v4843 = vld [vmem:[%s4840 + $0x10] sm:$0xff]
        %v4844 = vld [vmem:[%s4840 + $0x18] sm:$0xff]
        %v4845 = vld [vmem:[%s4840 + $0x20] sm:$0xff]
        %v4846 = vld [vmem:[%s4840 + $0x28] sm:$0xff]
        %v4847 = vld [vmem:[%s4840 + $0x30] sm:$0xff]
        %v4848 = vld [vmem:[%s4840 + $0x38] sm:$0xff]
        %s4849 = scalar_lea.vmem %s10, 2
        %v4850 = vld [vmem:[%s4849] sm:$0x1]
        %v4852 = vlaneseq
        %v4853 = vshrl.u32 %v4852, 7
        %v4854 = vsub.s32 0, %v4853
        %v4855 = vrot.slane %v4850, %v4854
        %v4858 = vsel %vm2035, %v4839, 0
        %4860 = vmatprep.subr.mxu0 0.0
        %4861 = vmatpush1.msra.mxu0 0.0
        %4862 = vmatprep.subr.mxu0 0.0
        %4863 = vmatpush1.msra.mxu0 0.0
        %4864 = vmatprep.subr.mxu0 0.0
        %4865 = vmatpush1.msra.mxu0 0.0
        %4866 = vmatprep.subr.mxu0 0.0
        %4867 = vmatpush1.msra.mxu0 0.0
        %4868 = vmatprep.subr.mxu0 0.0
        %4869 = vmatpush1.msra.mxu0 0.0
        %4870 = vmatprep.subr.mxu0 0.0
        %4871 = vmatpush1.msra.mxu0 0.0
        %4872 = vmatprep.subr.mxu0 0.0
        %4873 = vmatpush1.msra.mxu0 0.0
        %4874 = vmatprep.subr.mxu0 0.0
        %4875 = vmatpush1.msra.mxu0 0.0
        %4876 = vmatprep.subr.mxu0 0.0
        %4877 = vmatpush1.msra.mxu0 %v4848
        %4878 = vmatprep.subr.mxu0 0.0
        %4879 = vmatpush1.msra.mxu0 %v4847
        %4880 = vmatprep.subr.mxu0 0.0
        %4881 = vmatpush1.msra.mxu0 %v4846
        %4882 = vmatprep.subr.mxu0 0.0
        %4883 = vmatpush1.msra.mxu0 %v4845
        %4884 = vmatprep.subr.mxu0 0.0
        %4885 = vmatpush1.msra.mxu0 %v4844
        %4886 = vmatprep.subr.mxu0 0.0
        %4887 = vmatpush1.msra.mxu0 %v4843
        %4888 = vmatprep.subr.mxu0 0.0
        %4889 = vmatpush1.msra.mxu0 %v4842
        %4890 = vmatprep.subr.mxu0 0.0
        %4891 = vmatpush1.msra.mxu0 %v4841
        %4892 = vmatprep.subr.mxu0 0.0
        %4893 = vmatpush2.msra.mxu0 0.0
        %4894 = vmatprep.subr.mxu0 0.0
        %4895 = vmatpush2.msra.mxu0 0.0
        %4896 = vmatprep.subr.mxu0 0.0
        %4897 = vmatpush2.msra.mxu0 0.0
        %4898 = vmatprep.subr.mxu0 0.0
        %4899 = vmatpush2.msra.mxu0 0.0
        %4900 = vmatprep.subr.mxu0 0.0
        %4901 = vmatpush2.msra.mxu0 0.0
        %4902 = vmatprep.subr.mxu0 0.0
        %4903 = vmatpush2.msra.mxu0 0.0
        %4904 = vmatprep.subr.mxu0 0.0
        %4905 = vmatpush2.msra.mxu0 0.0
        %4906 = vmatprep.subr.mxu0 0.0
        %4907 = vmatpush2.msra.mxu0 0.0
        %4908 = vmatprep.subr.mxu0 0.0
        %4909 = vmatpush2.msra.mxu0 0.0
        %4910 = vmatprep.subr.mxu0 0.0
        %4911 = vmatpush2.msra.mxu0 0.0
        %4912 = vmatprep.subr.mxu0 0.0
        %4913 = vmatpush2.msra.mxu0 0.0
        %4914 = vmatprep.subr.mxu0 0.0
        %4915 = vmatpush2.msra.mxu0 0.0
        %4916 = vmatprep.subr.mxu0 0.0
        %4917 = vmatpush2.msra.mxu0 0.0
        %4918 = vmatprep.subr.mxu0 0.0
        %4919 = vmatpush2.msra.mxu0 0.0
        %4920 = vmatprep.subr.mxu0 0.0
        %4921 = vmatpush2.msra.mxu0 0.0
        %4922 = vmatprep.subr.mxu0 0.0
        %4923 = vmatpush2.msra.mxu0 0.0
        %4924 = vmatprep.mubr.f32.mxu0 0.0
        %4925 = vmatmul.mubr.f32.gmra.mxu0 %v4858
        %v4926 = vpop.f32.mrf.mxu0
        %v4927 = vadd.f32 %v4855, %v4926
        %v4928 = vpop.f32.mrf.mxu0
        %4929 = vdwg.mxu0
        %v4930 = vld [vmem:[%s490] sm:$0x7]
        %s4931 = scalar_lea.vmem %s7, 96
        %v4932 = vld [vmem:[%s4931] sm:$0xff]
        %v4933 = vld [vmem:[%s4931 + $0x8] sm:$0xff]
        %v4934 = vld [vmem:[%s4931 + $0x10] sm:$0xff]
        %v4935 = vld [vmem:[%s4931 + $0x18] sm:$0xff]
        %s4936 = scalar_lea.vmem %s8, 3
        %v4937 = vld [vmem:[%s4936] sm:$0x1]
        %v4939 = vlaneseq
        %v4940 = vshrl.u32 %v4939, 7
        %v4941 = vsub.s32 0, %v4940
        %v4942 = vrot.slane %v4937, %v4941
        %v4945 = vsel %vm521, %v4930, 0
        %4947 = vmatprep.subr.mxu0 0.0
        %4948 = vmatpush1.msra.mxu0 0.0
        %4949 = vmatprep.subr.mxu0 0.0
        %4950 = vmatpush1.msra.mxu0 0.0
        %4951 = vmatprep.subr.mxu0 0.0
        %4952 = vmatpush1.msra.mxu0 0.0
        %4953 = vmatprep.subr.mxu0 0.0
        %4954 = vmatpush1.msra.mxu0 0.0
        %4955 = vmatprep.subr.mxu0 0.0
        %4956 = vmatpush1.msra.mxu0 0.0
        %4957 = vmatprep.subr.mxu0 0.0
        %4958 = vmatpush1.msra.mxu0 0.0
        %4959 = vmatprep.subr.mxu0 0.0
        %4960 = vmatpush1.msra.mxu0 0.0
        %4961 = vmatprep.subr.mxu0 0.0
        %4962 = vmatpush1.msra.mxu0 0.0
        %4963 = vmatprep.subr.mxu0 0.0
        %4964 = vmatpush1.msra.mxu0 0.0
        %4965 = vmatprep.subr.mxu0 0.0
        %4966 = vmatpush1.msra.mxu0 0.0
        %4967 = vmatprep.subr.mxu0 0.0
        %4968 = vmatpush1.msra.mxu0 0.0
        %4969 = vmatprep.subr.mxu0 0.0
        %4970 = vmatpush1.msra.mxu0 0.0
        %4971 = vmatprep.subr.mxu0 0.0
        %4972 = vmatpush1.msra.mxu0 %v4935
        %4973 = vmatprep.subr.mxu0 0.0
        %4974 = vmatpush1.msra.mxu0 %v4934
        %4975 = vmatprep.subr.mxu0 0.0
        %4976 = vmatpush1.msra.mxu0 %v4933
        %4977 = vmatprep.subr.mxu0 0.0
        %4978 = vmatpush1.msra.mxu0 %v4932
        %4979 = vmatprep.subr.mxu0 0.0
        %4980 = vmatpush2.msra.mxu0 0.0
        %4981 = vmatprep.subr.mxu0 0.0
        %4982 = vmatpush2.msra.mxu0 0.0
        %4983 = vmatprep.subr.mxu0 0.0
        %4984 = vmatpush2.msra.mxu0 0.0
        %4985 = vmatprep.subr.mxu0 0.0
        %4986 = vmatpush2.msra.mxu0 0.0
        %4987 = vmatprep.subr.mxu0 0.0
        %4988 = vmatpush2.msra.mxu0 0.0
        %4989 = vmatprep.subr.mxu0 0.0
        %4990 = vmatpush2.msra.mxu0 0.0
        %4991 = vmatprep.subr.mxu0 0.0
        %4992 = vmatpush2.msra.mxu0 0.0
        %4993 = vmatprep.subr.mxu0 0.0
        %4994 = vmatpush2.msra.mxu0 0.0
        %4995 = vmatprep.subr.mxu0 0.0
        %4996 = vmatpush2.msra.mxu0 0.0
        %4997 = vmatprep.subr.mxu0 0.0
        %4998 = vmatpush2.msra.mxu0 0.0
        %4999 = vmatprep.subr.mxu0 0.0
        %5000 = vmatpush2.msra.mxu0 0.0
        %5001 = vmatprep.subr.mxu0 0.0
        %5002 = vmatpush2.msra.mxu0 0.0
        %5003 = vmatprep.subr.mxu0 0.0
        %5004 = vmatpush2.msra.mxu0 0.0
        %5005 = vmatprep.subr.mxu0 0.0
        %5006 = vmatpush2.msra.mxu0 0.0
        %5007 = vmatprep.subr.mxu0 0.0
        %5008 = vmatpush2.msra.mxu0 0.0
        %5009 = vmatprep.subr.mxu0 0.0
        %5010 = vmatpush2.msra.mxu0 0.0
        %5011 = vmatprep.mubr.f32.mxu0 0.0
        %5012 = vmatmul.mubr.f32.gmra.mxu0 %v4945
        %v5013 = vpop.f32.mrf.mxu0
        %v5014 = vadd.f32 %v4942, %v5013
        %v5015 = vpop.f32.mrf.mxu0
        %5016 = vdwg.mxu0
        %5018 = vrot.lane.b32.xlu0 %v5014, 112
        %v5019 = vpop.permute.xlu0 %5018
        %5021 = vrot.lane.b32.xlu0 %v5014, 96
        %v5022 = vpop.permute.xlu0 %5021
        %5024 = vrot.lane.b32.xlu0 %v5014, 80
        %v5025 = vpop.permute.xlu0 %5024
        %5027 = vxpose.xlu0.b32.start [1/16] %v5014, 128
        %5028 = vxpose.xlu0.b32.cont [2/16] 0.0, 128
        %5029 = vxpose.xlu0.b32.cont [3/16] 0.0, 128
        %5030 = vxpose.xlu0.b32.cont [4/16] 0.0, 128
        %5031 = vxpose.xlu0.b32.cont [5/16] 0.0, 128
        %5032 = vxpose.xlu0.b32.cont [6/16] 0.0, 128
        %5033 = vxpose.xlu0.b32.cont [7/16] 0.0, 128
        %5034 = vxpose.xlu0.b32.cont [8/16] 0.0, 128
        %5035 = vxpose.xlu0.b32.cont [9/16] 0.0, 128
        %5036 = vxpose.xlu0.b32.cont [10/16] 0.0, 128
        %5037 = vxpose.xlu0.b32.cont [11/16] 0.0, 128
        %5038 = vxpose.xlu0.b32.cont [12/16] 0.0, 128
        %5039 = vxpose.xlu0.b32.cont [13/16] 0.0, 128
        %5040 = vxpose.xlu0.b32.cont [14/16] 0.0, 128
        %5041 = vxpose.xlu0.b32.cont [15/16] 0.0, 128
        %5042 = vxpose.xlu0.b32.end [16/16] 0.0, 128
        %v5043 = vpop.trf.xlu0
        %v5044 = vpop.trf.xlu0
        %v5045 = vpop.trf.xlu0
        %v5046 = vpop.trf.xlu0
        %v5047 = vpop.trf.xlu0
        %v5048 = vpop.trf.xlu0
        %v5049 = vpop.trf.xlu0
        %v5050 = vpop.trf.xlu0
        %v5051 = vpop.trf.xlu0
        %v5052 = vpop.trf.xlu0
        %v5053 = vpop.trf.xlu0
        %v5054 = vpop.trf.xlu0
        %v5055 = vpop.trf.xlu0
        %v5056 = vpop.trf.xlu0
        %v5057 = vpop.trf.xlu0
        %v5058 = vpop.trf.xlu0
        %5059 = vxpose.xlu0.b32.start [1/16] %v5019, 128
        %5060 = vxpose.xlu0.b32.cont [2/16] 0.0, 128
        %5061 = vxpose.xlu0.b32.cont [3/16] 0.0, 128
        %5062 = vxpose.xlu0.b32.cont [4/16] 0.0, 128
        %5063 = vxpose.xlu0.b32.cont [5/16] 0.0, 128
        %5064 = vxpose.xlu0.b32.cont [6/16] 0.0, 128
        %5065 = vxpose.xlu0.b32.cont [7/16] 0.0, 128
        %5066 = vxpose.xlu0.b32.cont [8/16] 0.0, 128
        %5067 = vxpose.xlu0.b32.cont [9/16] 0.0, 128
        %5068 = vxpose.xlu0.b32.cont [10/16] 0.0, 128
        %5069 = vxpose.xlu0.b32.cont [11/16] 0.0, 128
        %5070 = vxpose.xlu0.b32.cont [12/16] 0.0, 128
        %5071 = vxpose.xlu0.b32.cont [13/16] 0.0, 128
        %5072 = vxpose.xlu0.b32.cont [14/16] 0.0, 128
        %5073 = vxpose.xlu0.b32.cont [15/16] 0.0, 128
        %5074 = vxpose.xlu0.b32.end [16/16] 0.0, 128
        %v5075 = vpop.trf.xlu0
        %v5076 = vpop.trf.xlu0
        %v5077 = vpop.trf.xlu0
        %v5078 = vpop.trf.xlu0
        %v5079 = vpop.trf.xlu0
        %v5080 = vpop.trf.xlu0
        %v5081 = vpop.trf.xlu0
        %v5082 = vpop.trf.xlu0
        %v5083 = vpop.trf.xlu0
        %v5084 = vpop.trf.xlu0
        %v5085 = vpop.trf.xlu0
        %v5086 = vpop.trf.xlu0
        %v5087 = vpop.trf.xlu0
        %v5088 = vpop.trf.xlu0
        %v5089 = vpop.trf.xlu0
        %v5090 = vpop.trf.xlu0
        %5091 = vxpose.xlu0.b32.start [1/16] %v5022, 128
        %5092 = vxpose.xlu0.b32.cont [2/16] 0.0, 128
        %5093 = vxpose.xlu0.b32.cont [3/16] 0.0, 128
        %5094 = vxpose.xlu0.b32.cont [4/16] 0.0, 128
        %5095 = vxpose.xlu0.b32.cont [5/16] 0.0, 128
        %5096 = vxpose.xlu0.b32.cont [6/16] 0.0, 128
        %5097 = vxpose.xlu0.b32.cont [7/16] 0.0, 128
        %5098 = vxpose.xlu0.b32.cont [8/16] 0.0, 128
        %5099 = vxpose.xlu0.b32.cont [9/16] 0.0, 128
        %5100 = vxpose.xlu0.b32.cont [10/16] 0.0, 128
        %5101 = vxpose.xlu0.b32.cont [11/16] 0.0, 128
        %5102 = vxpose.xlu0.b32.cont [12/16] 0.0, 128
        %5103 = vxpose.xlu0.b32.cont [13/16] 0.0, 128
        %5104 = vxpose.xlu0.b32.cont [14/16] 0.0, 128
        %5105 = vxpose.xlu0.b32.cont [15/16] 0.0, 128
        %5106 = vxpose.xlu0.b32.end [16/16] 0.0, 128
        %v5107 = vpop.trf.xlu0
        %v5108 = vpop.trf.xlu0
        %v5109 = vpop.trf.xlu0
        %v5110 = vpop.trf.xlu0
        %v5111 = vpop.trf.xlu0
        %v5112 = vpop.trf.xlu0
        %v5113 = vpop.trf.xlu0
        %v5114 = vpop.trf.xlu0
        %v5115 = vpop.trf.xlu0
        %v5116 = vpop.trf.xlu0
        %v5117 = vpop.trf.xlu0
        %v5118 = vpop.trf.xlu0
        %v5119 = vpop.trf.xlu0
        %v5120 = vpop.trf.xlu0
        %v5121 = vpop.trf.xlu0
        %v5122 = vpop.trf.xlu0
        %5123 = vxpose.xlu0.b32.start [1/16] %v5025, 128
        %5124 = vxpose.xlu0.b32.cont [2/16] 0.0, 128
        %5125 = vxpose.xlu0.b32.cont [3/16] 0.0, 128
        %5126 = vxpose.xlu0.b32.cont [4/16] 0.0, 128
        %5127 = vxpose.xlu0.b32.cont [5/16] 0.0, 128
        %5128 = vxpose.xlu0.b32.cont [6/16] 0.0, 128
        %5129 = vxpose.xlu0.b32.cont [7/16] 0.0, 128
        %5130 = vxpose.xlu0.b32.cont [8/16] 0.0, 128
        %5131 = vxpose.xlu0.b32.cont [9/16] 0.0, 128
        %5132 = vxpose.xlu0.b32.cont [10/16] 0.0, 128
        %5133 = vxpose.xlu0.b32.cont [11/16] 0.0, 128
        %5134 = vxpose.xlu0.b32.cont [12/16] 0.0, 128
        %5135 = vxpose.xlu0.b32.cont [13/16] 0.0, 128
        %5136 = vxpose.xlu0.b32.cont [14/16] 0.0, 128
        %5137 = vxpose.xlu0.b32.cont [15/16] 0.0, 128
        %5138 = vxpose.xlu0.b32.end [16/16] 0.0, 128
        %v5139 = vpop.trf.xlu0
        %v5140 = vpop.trf.xlu0
        %v5141 = vpop.trf.xlu0
        %v5142 = vpop.trf.xlu0
        %v5143 = vpop.trf.xlu0
        %v5144 = vpop.trf.xlu0
        %v5145 = vpop.trf.xlu0
        %v5146 = vpop.trf.xlu0
        %v5147 = vpop.trf.xlu0
        %v5148 = vpop.trf.xlu0
        %v5149 = vpop.trf.xlu0
        %v5150 = vpop.trf.xlu0
        %v5151 = vpop.trf.xlu0
        %v5152 = vpop.trf.xlu0
        %v5153 = vpop.trf.xlu0
        %v5154 = vpop.trf.xlu0
        %5155 = vrot.lane.b32.xlu0 %v667, 64
        %v5156 = vpop.permute.xlu0 %5155
        %v5157 = vsel %vm918, %v5156, 0
        %5159 = vmatprep.subr.mxu0 0.0
        %5160 = vmatpush1.msra.mxu0 0.0
        %5161 = vmatprep.subr.mxu0 0.0
        %5162 = vmatpush1.msra.mxu0 0.0
        %5163 = vmatprep.subr.mxu0 0.0
        %5164 = vmatpush1.msra.mxu0 0.0
        %5165 = vmatprep.subr.mxu0 0.0
        %5166 = vmatpush1.msra.mxu0 0.0
        %5167 = vmatprep.subr.mxu0 0.0
        %5168 = vmatpush1.msra.mxu0 0.0
        %5169 = vmatprep.subr.mxu0 0.0
        %5170 = vmatpush1.msra.mxu0 0.0
        %5171 = vmatprep.subr.mxu0 0.0
        %5172 = vmatpush1.msra.mxu0 0.0
        %5173 = vmatprep.subr.mxu0 0.0
        %5174 = vmatpush1.msra.mxu0 0.0
        %5175 = vmatprep.subr.mxu0 0.0
        %5176 = vmatpush1.msra.mxu0 0.0
        %5177 = vmatprep.subr.mxu0 0.0
        %5178 = vmatpush1.msra.mxu0 0.0
        %5179 = vmatprep.subr.mxu0 0.0
        %5180 = vmatpush1.msra.mxu0 0.0
        %5181 = vmatprep.subr.mxu0 0.0
        %5182 = vmatpush1.msra.mxu0 0.0
        %5183 = vmatprep.subr.mxu0 0.0
        %5184 = vmatpush1.msra.mxu0 0.0
        %5185 = vmatprep.subr.mxu0 0.0
        %5186 = vmatpush1.msra.mxu0 0.0
        %5187 = vmatprep.subr.mxu0 0.0
        %5188 = vmatpush1.msra.mxu0 %v5044
        %5189 = vmatprep.subr.mxu0 0.0
        %5190 = vmatpush1.msra.mxu0 %v5043
        %5191 = vmatprep.subr.mxu0 0.0
        %5192 = vmatpush2.msra.mxu0 0.0
        %5193 = vmatprep.subr.mxu0 0.0
        %5194 = vmatpush2.msra.mxu0 0.0
        %5195 = vmatprep.subr.mxu0 0.0
        %5196 = vmatpush2.msra.mxu0 0.0
        %5197 = vmatprep.subr.mxu0 0.0
        %5198 = vmatpush2.msra.mxu0 0.0
        %5199 = vmatprep.subr.mxu0 0.0
        %5200 = vmatpush2.msra.mxu0 0.0
        %5201 = vmatprep.subr.mxu0 0.0
        %5202 = vmatpush2.msra.mxu0 0.0
        %5203 = vmatprep.subr.mxu0 0.0
        %5204 = vmatpush2.msra.mxu0 0.0
        %5205 = vmatprep.subr.mxu0 0.0
        %5206 = vmatpush2.msra.mxu0 0.0
        %5207 = vmatprep.subr.mxu0 0.0
        %5208 = vmatpush2.msra.mxu0 0.0
        %5209 = vmatprep.subr.mxu0 0.0
        %5210 = vmatpush2.msra.mxu0 0.0
        %5211 = vmatprep.subr.mxu0 0.0
        %5212 = vmatpush2.msra.mxu0 0.0
        %5213 = vmatprep.subr.mxu0 0.0
        %5214 = vmatpush2.msra.mxu0 0.0
        %5215 = vmatprep.subr.mxu0 0.0
        %5216 = vmatpush2.msra.mxu0 0.0
        %5217 = vmatprep.subr.mxu0 0.0
        %5218 = vmatpush2.msra.mxu0 0.0
        %5219 = vmatprep.subr.mxu0 0.0
        %5220 = vmatpush2.msra.mxu0 0.0
        %5221 = vmatprep.subr.mxu0 0.0
        %5222 = vmatpush2.msra.mxu0 0.0
        %5223 = vmatprep.mubr.f32.mxu0 0.0
        %5224 = vmatmul.mubr.f32.gmra.mxu0 %v5157
        %v5225 = vpop.f32.mrf.mxu0
        %v5226 = vadd.f32 0.0, %v5225
        %v5227 = vpop.f32.mrf.mxu0
        %5228 = vdwg.mxu0
        %5229 = vrot.lane.b32.xlu0 %v3609, 64
        %v5230 = vpop.permute.xlu0 %5229
        %v5231 = vsel %vm918, %v5230, 0
        %5233 = vmatprep.subr.mxu0 0.0
        %5234 = vmatpush1.msra.mxu0 0.0
        %5235 = vmatprep.subr.mxu0 0.0
        %5236 = vmatpush1.msra.mxu0 0.0
        %5237 = vmatprep.subr.mxu0 0.0
        %5238 = vmatpush1.msra.mxu0 0.0
        %5239 = vmatprep.subr.mxu0 0.0
        %5240 = vmatpush1.msra.mxu0 0.0
        %5241 = vmatprep.subr.mxu0 0.0
        %5242 = vmatpush1.msra.mxu0 0.0
        %5243 = vmatprep.subr.mxu0 0.0
        %5244 = vmatpush1.msra.mxu0 0.0
        %5245 = vmatprep.subr.mxu0 0.0
        %5246 = vmatpush1.msra.mxu0 0.0
        %5247 = vmatprep.subr.mxu0 0.0
        %5248 = vmatpush1.msra.mxu0 0.0
        %5249 = vmatprep.subr.mxu0 0.0
        %5250 = vmatpush1.msra.mxu0 0.0
        %5251 = vmatprep.subr.mxu0 0.0
        %5252 = vmatpush1.msra.mxu0 0.0
        %5253 = vmatprep.subr.mxu0 0.0
        %5254 = vmatpush1.msra.mxu0 0.0
        %5255 = vmatprep.subr.mxu0 0.0
        %5256 = vmatpush1.msra.mxu0 0.0
        %5257 = vmatprep.subr.mxu0 0.0
        %5258 = vmatpush1.msra.mxu0 0.0
        %5259 = vmatprep.subr.mxu0 0.0
        %5260 = vmatpush1.msra.mxu0 0.0
        %5261 = vmatprep.subr.mxu0 0.0
        %5262 = vmatpush1.msra.mxu0 %v5076
        %5263 = vmatprep.subr.mxu0 0.0
        %5264 = vmatpush1.msra.mxu0 %v5075
        %5265 = vmatprep.subr.mxu0 0.0
        %5266 = vmatpush2.msra.mxu0 0.0
        %5267 = vmatprep.subr.mxu0 0.0
        %5268 = vmatpush2.msra.mxu0 0.0
        %5269 = vmatprep.subr.mxu0 0.0
        %5270 = vmatpush2.msra.mxu0 0.0
        %5271 = vmatprep.subr.mxu0 0.0
        %5272 = vmatpush2.msra.mxu0 0.0
        %5273 = vmatprep.subr.mxu0 0.0
        %5274 = vmatpush2.msra.mxu0 0.0
        %5275 = vmatprep.subr.mxu0 0.0
        %5276 = vmatpush2.msra.mxu0 0.0
        %5277 = vmatprep.subr.mxu0 0.0
        %5278 = vmatpush2.msra.mxu0 0.0
        %5279 = vmatprep.subr.mxu0 0.0
        %5280 = vmatpush2.msra.mxu0 0.0
        %5281 = vmatprep.subr.mxu0 0.0
        %5282 = vmatpush2.msra.mxu0 0.0
        %5283 = vmatprep.subr.mxu0 0.0
        %5284 = vmatpush2.msra.mxu0 0.0
        %5285 = vmatprep.subr.mxu0 0.0
        %5286 = vmatpush2.msra.mxu0 0.0
        %5287 = vmatprep.subr.mxu0 0.0
        %5288 = vmatpush2.msra.mxu0 0.0
        %5289 = vmatprep.subr.mxu0 0.0
        %5290 = vmatpush2.msra.mxu0 0.0
        %5291 = vmatprep.subr.mxu0 0.0
        %5292 = vmatpush2.msra.mxu0 0.0
        %5293 = vmatprep.subr.mxu0 0.0
        %5294 = vmatpush2.msra.mxu0 0.0
        %5295 = vmatprep.subr.mxu0 0.0
        %5296 = vmatpush2.msra.mxu0 0.0
        %5297 = vmatprep.mubr.f32.mxu0 0.0
        %5298 = vmatmul.mubr.f32.gmra.mxu0 %v5231
        %v5299 = vpop.f32.mrf.mxu0
        %v5300 = vadd.f32 0.0, %v5299
        %v5301 = vpop.f32.mrf.mxu0
        %5302 = vdwg.mxu0
        %5303 = vrot.lane.b32.xlu0 %v3611, 64
        %v5304 = vpop.permute.xlu0 %5303
        %v5305 = vsel %vm918, %v5304, 0
        %5307 = vmatprep.subr.mxu0 0.0
        %5308 = vmatpush1.msra.mxu0 0.0
        %5309 = vmatprep.subr.mxu0 0.0
        %5310 = vmatpush1.msra.mxu0 0.0
        %5311 = vmatprep.subr.mxu0 0.0
        %5312 = vmatpush1.msra.mxu0 0.0
        %5313 = vmatprep.subr.mxu0 0.0
        %5314 = vmatpush1.msra.mxu0 0.0
        %5315 = vmatprep.subr.mxu0 0.0
        %5316 = vmatpush1.msra.mxu0 0.0
        %5317 = vmatprep.subr.mxu0 0.0
        %5318 = vmatpush1.msra.mxu0 0.0
        %5319 = vmatprep.subr.mxu0 0.0
        %5320 = vmatpush1.msra.mxu0 0.0
        %5321 = vmatprep.subr.mxu0 0.0
        %5322 = vmatpush1.msra.mxu0 0.0
        %5323 = vmatprep.subr.mxu0 0.0
        %5324 = vmatpush1.msra.mxu0 0.0
        %5325 = vmatprep.subr.mxu0 0.0
        %5326 = vmatpush1.msra.mxu0 0.0
        %5327 = vmatprep.subr.mxu0 0.0
        %5328 = vmatpush1.msra.mxu0 0.0
        %5329 = vmatprep.subr.mxu0 0.0
        %5330 = vmatpush1.msra.mxu0 0.0
        %5331 = vmatprep.subr.mxu0 0.0
        %5332 = vmatpush1.msra.mxu0 0.0
        %5333 = vmatprep.subr.mxu0 0.0
        %5334 = vmatpush1.msra.mxu0 0.0
        %5335 = vmatprep.subr.mxu0 0.0
        %5336 = vmatpush1.msra.mxu0 %v5108
        %5337 = vmatprep.subr.mxu0 0.0
        %5338 = vmatpush1.msra.mxu0 %v5107
        %5339 = vmatprep.subr.mxu0 0.0
        %5340 = vmatpush2.msra.mxu0 0.0
        %5341 = vmatprep.subr.mxu0 0.0
        %5342 = vmatpush2.msra.mxu0 0.0
        %5343 = vmatprep.subr.mxu0 0.0
        %5344 = vmatpush2.msra.mxu0 0.0
        %5345 = vmatprep.subr.mxu0 0.0
        %5346 = vmatpush2.msra.mxu0 0.0
        %5347 = vmatprep.subr.mxu0 0.0
        %5348 = vmatpush2.msra.mxu0 0.0
        %5349 = vmatprep.subr.mxu0 0.0
        %5350 = vmatpush2.msra.mxu0 0.0
        %5351 = vmatprep.subr.mxu0 0.0
        %5352 = vmatpush2.msra.mxu0 0.0
        %5353 = vmatprep.subr.mxu0 0.0
        %5354 = vmatpush2.msra.mxu0 0.0
        %5355 = vmatprep.subr.mxu0 0.0
        %5356 = vmatpush2.msra.mxu0 0.0
        %5357 = vmatprep.subr.mxu0 0.0
        %5358 = vmatpush2.msra.mxu0 0.0
        %5359 = vmatprep.subr.mxu0 0.0
        %5360 = vmatpush2.msra.mxu0 0.0
        %5361 = vmatprep.subr.mxu0 0.0
        %5362 = vmatpush2.msra.mxu0 0.0
        %5363 = vmatprep.subr.mxu0 0.0
        %5364 = vmatpush2.msra.mxu0 0.0
        %5365 = vmatprep.subr.mxu0 0.0
        %5366 = vmatpush2.msra.mxu0 0.0
        %5367 = vmatprep.subr.mxu0 0.0
        %5368 = vmatpush2.msra.mxu0 0.0
        %5369 = vmatprep.subr.mxu0 0.0
        %5370 = vmatpush2.msra.mxu0 0.0
        %5371 = vmatprep.mubr.f32.mxu0 0.0
        %5372 = vmatmul.mubr.f32.gmra.mxu0 %v5305
        %v5373 = vpop.f32.mrf.mxu0
        %v5374 = vadd.f32 0.0, %v5373
        %v5375 = vpop.f32.mrf.mxu0
        %5376 = vdwg.mxu0
        %5377 = vrot.lane.b32.xlu0 %v3613, 64
        %v5378 = vpop.permute.xlu0 %5377
        %v5379 = vsel %vm918, %v5378, 0
        %5381 = vmatprep.subr.mxu0 0.0
        %5382 = vmatpush1.msra.mxu0 0.0
        %5383 = vmatprep.subr.mxu0 0.0
        %5384 = vmatpush1.msra.mxu0 0.0
        %5385 = vmatprep.subr.mxu0 0.0
        %5386 = vmatpush1.msra.mxu0 0.0
        %5387 = vmatprep.subr.mxu0 0.0
        %5388 = vmatpush1.msra.mxu0 0.0
        %5389 = vmatprep.subr.mxu0 0.0
        %5390 = vmatpush1.msra.mxu0 0.0
        %5391 = vmatprep.subr.mxu0 0.0
        %5392 = vmatpush1.msra.mxu0 0.0
        %5393 = vmatprep.subr.mxu0 0.0
        %5394 = vmatpush1.msra.mxu0 0.0
        %5395 = vmatprep.subr.mxu0 0.0
        %5396 = vmatpush1.msra.mxu0 0.0
        %5397 = vmatprep.subr.mxu0 0.0
        %5398 = vmatpush1.msra.mxu0 0.0
        %5399 = vmatprep.subr.mxu0 0.0
        %5400 = vmatpush1.msra.mxu0 0.0
        %5401 = vmatprep.subr.mxu0 0.0
        %5402 = vmatpush1.msra.mxu0 0.0
        %5403 = vmatprep.subr.mxu0 0.0
        %5404 = vmatpush1.msra.mxu0 0.0
        %5405 = vmatprep.subr.mxu0 0.0
        %5406 = vmatpush1.msra.mxu0 0.0
        %5407 = vmatprep.subr.mxu0 0.0
        %5408 = vmatpush1.msra.mxu0 0.0
        %5409 = vmatprep.subr.mxu0 0.0
        %5410 = vmatpush1.msra.mxu0 %v5140
        %5411 = vmatprep.subr.mxu0 0.0
        %5412 = vmatpush1.msra.mxu0 %v5139
        %5413 = vmatprep.subr.mxu0 0.0
        %5414 = vmatpush2.msra.mxu0 0.0
        %5415 = vmatprep.subr.mxu0 0.0
        %5416 = vmatpush2.msra.mxu0 0.0
        %5417 = vmatprep.subr.mxu0 0.0
        %5418 = vmatpush2.msra.mxu0 0.0
        %5419 = vmatprep.subr.mxu0 0.0
        %5420 = vmatpush2.msra.mxu0 0.0
        %5421 = vmatprep.subr.mxu0 0.0
        %5422 = vmatpush2.msra.mxu0 0.0
        %5423 = vmatprep.subr.mxu0 0.0
        %5424 = vmatpush2.msra.mxu0 0.0
        %5425 = vmatprep.subr.mxu0 0.0
        %5426 = vmatpush2.msra.mxu0 0.0
        %5427 = vmatprep.subr.mxu0 0.0
        %5428 = vmatpush2.msra.mxu0 0.0
        %5429 = vmatprep.subr.mxu0 0.0
        %5430 = vmatpush2.msra.mxu0 0.0
        %5431 = vmatprep.subr.mxu0 0.0
        %5432 = vmatpush2.msra.mxu0 0.0
        %5433 = vmatprep.subr.mxu0 0.0
        %5434 = vmatpush2.msra.mxu0 0.0
        %5435 = vmatprep.subr.mxu0 0.0
        %5436 = vmatpush2.msra.mxu0 0.0
        %5437 = vmatprep.subr.mxu0 0.0
        %5438 = vmatpush2.msra.mxu0 0.0
        %5439 = vmatprep.subr.mxu0 0.0
        %5440 = vmatpush2.msra.mxu0 0.0
        %5441 = vmatprep.subr.mxu0 0.0
        %5442 = vmatpush2.msra.mxu0 0.0
        %5443 = vmatprep.subr.mxu0 0.0
        %5444 = vmatpush2.msra.mxu0 0.0
        %5445 = vmatprep.mubr.f32.mxu0 0.0
        %5446 = vmatmul.mubr.f32.gmra.mxu0 %v5379
        %v5447 = vpop.f32.mrf.mxu0
        %v5448 = vadd.f32 0.0, %v5447
        %v5449 = vpop.f32.mrf.mxu0
        %5450 = vdwg.mxu0
        %v5451 = vsel %vm4040, %v5226, -inf
        %5452 = vmax.xlane.f32.xlu0 %v5451
        %v5453 = vpop.xlane.xlu0 %5452
        %v5454 = vsel %vm4040, %v5300, -inf
        %5455 = vmax.xlane.f32.xlu0 %v5454
        %v5456 = vpop.xlane.xlu0 %5455
        %v5457 = vsel %vm4040, %v5374, -inf
        %5458 = vmax.xlane.f32.xlu0 %v5457
        %v5459 = vpop.xlane.xlu0 %5458
        %v5460 = vsel %vm4040, %v5448, -inf
        %5461 = vmax.xlane.f32.xlu0 %v5460
        %v5462 = vpop.xlane.xlu0 %5461
        %v5463 = vsub.f32 %v5226, %v5453
        %v5464 = vsub.f32 %v5300, %v5456
        %v5465 = vsub.f32 %v5374, %v5459
        %v5466 = vsub.f32 %v5448, %v5462
        %v5467 = vmul.f32 %v5463, 1.442695
        %v5468 = vpow.pop %v5467
        %v5469 = vmul.f32 %v5464, 1.442695
        %v5470 = vpow.pop %v5469
        %v5471 = vmul.f32 %v5465, 1.442695
        %v5472 = vpow.pop %v5471
        %v5473 = vmul.f32 %v5466, 1.442695
        %v5474 = vpow.pop %v5473
        %v5475 = vsel %vm4040, %v5468, 0.0
        %5476 = vadd.xlane.f32.xlu0 %v5475
        %v5477 = vpop.xlane.xlu0 %5476
        %v5478 = vsel %vm4040, %v5470, 0.0
        %5479 = vadd.xlane.f32.xlu0 %v5478
        %v5480 = vpop.xlane.xlu0 %5479
        %v5481 = vsel %vm4040, %v5472, 0.0
        %5482 = vadd.xlane.f32.xlu0 %v5481
        %v5483 = vpop.xlane.xlu0 %5482
        %v5484 = vsel %vm4040, %v5474, 0.0
        %5485 = vadd.xlane.f32.xlu0 %v5484
        %v5486 = vpop.xlane.xlu0 %5485
        %v5487 = vrcp.pop %v5477
        %v5488 = vrcp.pop %v5480
        %v5489 = vrcp.pop %v5483
        %v5490 = vrcp.pop %v5486
        %v5491 = vmul.f32 %v5468, %v5487
        %v5492 = vmul.f32 %v5470, %v5488
        %v5493 = vmul.f32 %v5472, %v5489
        %v5494 = vmul.f32 %v5474, %v5490
        %5495 = vrot.lane.b32.xlu0 %v5014, 64
        %v5496 = vpop.permute.xlu0 %5495
        %5497 = vrot.lane.b32.xlu0 %v5019, 64
        %v5498 = vpop.permute.xlu0 %5497
        %5499 = vrot.lane.b32.xlu0 %v5022, 64
        %v5500 = vpop.permute.xlu0 %5499
        %5501 = vrot.lane.b32.xlu0 %v5025, 64
        %v5502 = vpop.permute.xlu0 %5501
        %5507 = vxpose.xlu0.b32.start [1/16] %v5496, 128
        %5508 = vxpose.xlu0.b32.cont [2/16] 0.0, 128
        %5509 = vxpose.xlu0.b32.cont [3/16] 0.0, 128
        %5510 = vxpose.xlu0.b32.cont [4/16] 0.0, 128
        %5511 = vxpose.xlu0.b32.cont [5/16] 0.0, 128
        %5512 = vxpose.xlu0.b32.cont [6/16] 0.0, 128
        %5513 = vxpose.xlu0.b32.cont [7/16] 0.0, 128
        %5514 = vxpose.xlu0.b32.cont [8/16] 0.0, 128
        %5515 = vxpose.xlu0.b32.cont [9/16] 0.0, 128
        %5516 = vxpose.xlu0.b32.cont [10/16] 0.0, 128
        %5517 = vxpose.xlu0.b32.cont [11/16] 0.0, 128
        %5518 = vxpose.xlu0.b32.cont [12/16] 0.0, 128
        %5519 = vxpose.xlu0.b32.cont [13/16] 0.0, 128
        %5520 = vxpose.xlu0.b32.cont [14/16] 0.0, 128
        %5521 = vxpose.xlu0.b32.cont [15/16] 0.0, 128
        %5522 = vxpose.xlu0.b32.end [16/16] 0.0, 128
        %v5523 = vpop.trf.xlu0
        %v5524 = vpop.trf.xlu0
        %v5525 = vpop.trf.xlu0
        %v5526 = vpop.trf.xlu0
        %v5527 = vpop.trf.xlu0
        %v5528 = vpop.trf.xlu0
        %v5529 = vpop.trf.xlu0
        %v5530 = vpop.trf.xlu0
        %v5531 = vpop.trf.xlu0
        %v5532 = vpop.trf.xlu0
        %v5533 = vpop.trf.xlu0
        %v5534 = vpop.trf.xlu0
        %v5535 = vpop.trf.xlu0
        %v5536 = vpop.trf.xlu0
        %v5537 = vpop.trf.xlu0
        %v5538 = vpop.trf.xlu0
        %5539 = vxpose.xlu0.b32.start [1/16] %v5498, 128
        %5540 = vxpose.xlu0.b32.cont [2/16] 0.0, 128
        %5541 = vxpose.xlu0.b32.cont [3/16] 0.0, 128
        %5542 = vxpose.xlu0.b32.cont [4/16] 0.0, 128
        %5543 = vxpose.xlu0.b32.cont [5/16] 0.0, 128
        %5544 = vxpose.xlu0.b32.cont [6/16] 0.0, 128
        %5545 = vxpose.xlu0.b32.cont [7/16] 0.0, 128
        %5546 = vxpose.xlu0.b32.cont [8/16] 0.0, 128
        %5547 = vxpose.xlu0.b32.cont [9/16] 0.0, 128
        %5548 = vxpose.xlu0.b32.cont [10/16] 0.0, 128
        %5549 = vxpose.xlu0.b32.cont [11/16] 0.0, 128
        %5550 = vxpose.xlu0.b32.cont [12/16] 0.0, 128
        %5551 = vxpose.xlu0.b32.cont [13/16] 0.0, 128
        %5552 = vxpose.xlu0.b32.cont [14/16] 0.0, 128
        %5553 = vxpose.xlu0.b32.cont [15/16] 0.0, 128
        %5554 = vxpose.xlu0.b32.end [16/16] 0.0, 128
        %v5555 = vpop.trf.xlu0
        %v5556 = vpop.trf.xlu0
        %v5557 = vpop.trf.xlu0
        %v5558 = vpop.trf.xlu0
        %v5559 = vpop.trf.xlu0
        %v5560 = vpop.trf.xlu0
        %v5561 = vpop.trf.xlu0
        %v5562 = vpop.trf.xlu0
        %v5563 = vpop.trf.xlu0
        %v5564 = vpop.trf.xlu0
        %v5565 = vpop.trf.xlu0
        %v5566 = vpop.trf.xlu0
        %v5567 = vpop.trf.xlu0
        %v5568 = vpop.trf.xlu0
        %v5569 = vpop.trf.xlu0
        %v5570 = vpop.trf.xlu0
        %5571 = vxpose.xlu0.b32.start [1/16] %v5500, 128
        %5572 = vxpose.xlu0.b32.cont [2/16] 0.0, 128
        %5573 = vxpose.xlu0.b32.cont [3/16] 0.0, 128
        %5574 = vxpose.xlu0.b32.cont [4/16] 0.0, 128
        %5575 = vxpose.xlu0.b32.cont [5/16] 0.0, 128
        %5576 = vxpose.xlu0.b32.cont [6/16] 0.0, 128
        %5577 = vxpose.xlu0.b32.cont [7/16] 0.0, 128
        %5578 = vxpose.xlu0.b32.cont [8/16] 0.0, 128
        %5579 = vxpose.xlu0.b32.cont [9/16] 0.0, 128
        %5580 = vxpose.xlu0.b32.cont [10/16] 0.0, 128
        %5581 = vxpose.xlu0.b32.cont [11/16] 0.0, 128
        %5582 = vxpose.xlu0.b32.cont [12/16] 0.0, 128
        %5583 = vxpose.xlu0.b32.cont [13/16] 0.0, 128
        %5584 = vxpose.xlu0.b32.cont [14/16] 0.0, 128
        %5585 = vxpose.xlu0.b32.cont [15/16] 0.0, 128
        %5586 = vxpose.xlu0.b32.end [16/16] 0.0, 128
        %v5587 = vpop.trf.xlu0
        %v5588 = vpop.trf.xlu0
        %v5589 = vpop.trf.xlu0
        %v5590 = vpop.trf.xlu0
        %v5591 = vpop.trf.xlu0
        %v5592 = vpop.trf.xlu0
        %v5593 = vpop.trf.xlu0
        %v5594 = vpop.trf.xlu0
        %v5595 = vpop.trf.xlu0
        %v5596 = vpop.trf.xlu0
        %v5597 = vpop.trf.xlu0
        %v5598 = vpop.trf.xlu0
        %v5599 = vpop.trf.xlu0
        %v5600 = vpop.trf.xlu0
        %v5601 = vpop.trf.xlu0
        %v5602 = vpop.trf.xlu0
        %5603 = vxpose.xlu0.b32.start [1/16] %v5502, 128
        %5604 = vxpose.xlu0.b32.cont [2/16] 0.0, 128
        %5605 = vxpose.xlu0.b32.cont [3/16] 0.0, 128
        %5606 = vxpose.xlu0.b32.cont [4/16] 0.0, 128
        %5607 = vxpose.xlu0.b32.cont [5/16] 0.0, 128
        %5608 = vxpose.xlu0.b32.cont [6/16] 0.0, 128
        %5609 = vxpose.xlu0.b32.cont [7/16] 0.0, 128
        %5610 = vxpose.xlu0.b32.cont [8/16] 0.0, 128
        %5611 = vxpose.xlu0.b32.cont [9/16] 0.0, 128
        %5612 = vxpose.xlu0.b32.cont [10/16] 0.0, 128
        %5613 = vxpose.xlu0.b32.cont [11/16] 0.0, 128
        %5614 = vxpose.xlu0.b32.cont [12/16] 0.0, 128
        %5615 = vxpose.xlu0.b32.cont [13/16] 0.0, 128
        %5616 = vxpose.xlu0.b32.cont [14/16] 0.0, 128
        %5617 = vxpose.xlu0.b32.cont [15/16] 0.0, 128
        %5618 = vxpose.xlu0.b32.end [16/16] 0.0, 128
        %v5619 = vpop.trf.xlu0
        %v5620 = vpop.trf.xlu0
        %v5621 = vpop.trf.xlu0
        %v5622 = vpop.trf.xlu0
        %v5623 = vpop.trf.xlu0
        %v5624 = vpop.trf.xlu0
        %v5625 = vpop.trf.xlu0
        %v5626 = vpop.trf.xlu0
        %v5627 = vpop.trf.xlu0
        %v5628 = vpop.trf.xlu0
        %v5629 = vpop.trf.xlu0
        %v5630 = vpop.trf.xlu0
        %v5631 = vpop.trf.xlu0
        %v5632 = vpop.trf.xlu0
        %v5633 = vpop.trf.xlu0
        %v5634 = vpop.trf.xlu0
        %v5636 = vsel %vm4040, %v5523, 0
        %v5639 = vsel %vm4040, %v5524, 0
        %v5642 = vsel %vm4040, %v5491, 0
        %5644 = vmatprep.subr.mxu0 0.0
        %5645 = vmatpush1.xpose.msra.mxu0 0.0
        %5646 = vmatprep.subr.mxu0 0.0
        %5647 = vmatpush1.xpose.msra.mxu0 0.0
        %5648 = vmatprep.subr.mxu0 0.0
        %5649 = vmatpush1.xpose.msra.mxu0 0.0
        %5650 = vmatprep.subr.mxu0 0.0
        %5651 = vmatpush1.xpose.msra.mxu0 0.0
        %5652 = vmatprep.subr.mxu0 0.0
        %5653 = vmatpush1.xpose.msra.mxu0 0.0
        %5654 = vmatprep.subr.mxu0 0.0
        %5655 = vmatpush1.xpose.msra.mxu0 0.0
        %5656 = vmatprep.subr.mxu0 0.0
        %5657 = vmatpush1.xpose.msra.mxu0 0.0
        %5658 = vmatprep.subr.mxu0 0.0
        %5659 = vmatpush1.xpose.msra.mxu0 0.0
        %5660 = vmatprep.subr.mxu0 0.0
        %5661 = vmatpush1.xpose.msra.mxu0 0.0
        %5662 = vmatprep.subr.mxu0 0.0
        %5663 = vmatpush1.xpose.msra.mxu0 0.0
        %5664 = vmatprep.subr.mxu0 0.0
        %5665 = vmatpush1.xpose.msra.mxu0 0.0
        %5666 = vmatprep.subr.mxu0 0.0
        %5667 = vmatpush1.xpose.msra.mxu0 0.0
        %5668 = vmatprep.subr.mxu0 0.0
        %5669 = vmatpush1.xpose.msra.mxu0 0.0
        %5670 = vmatprep.subr.mxu0 0.0
        %5671 = vmatpush1.xpose.msra.mxu0 0.0
        %5672 = vmatprep.subr.mxu0 0.0
        %5673 = vmatpush1.xpose.msra.mxu0 0.0
        %5674 = vmatprep.subr.mxu0 0.0
        %5675 = vmatpush1.xpose.msra.mxu0 %v5642
        %5676 = vmatprep.subr.mxu0 0.0
        %5677 = vmatpush2.xpose.msra.mxu0 0.0
        %5678 = vmatprep.subr.mxu0 0.0
        %5679 = vmatpush2.xpose.msra.mxu0 0.0
        %5680 = vmatprep.subr.mxu0 0.0
        %5681 = vmatpush2.xpose.msra.mxu0 0.0
        %5682 = vmatprep.subr.mxu0 0.0
        %5683 = vmatpush2.xpose.msra.mxu0 0.0
        %5684 = vmatprep.subr.mxu0 0.0
        %5685 = vmatpush2.xpose.msra.mxu0 0.0
        %5686 = vmatprep.subr.mxu0 0.0
        %5687 = vmatpush2.xpose.msra.mxu0 0.0
        %5688 = vmatprep.subr.mxu0 0.0
        %5689 = vmatpush2.xpose.msra.mxu0 0.0
        %5690 = vmatprep.subr.mxu0 0.0
        %5691 = vmatpush2.xpose.msra.mxu0 0.0
        %5692 = vmatprep.subr.mxu0 0.0
        %5693 = vmatpush2.xpose.msra.mxu0 0.0
        %5694 = vmatprep.subr.mxu0 0.0
        %5695 = vmatpush2.xpose.msra.mxu0 0.0
        %5696 = vmatprep.subr.mxu0 0.0
        %5697 = vmatpush2.xpose.msra.mxu0 0.0
        %5698 = vmatprep.subr.mxu0 0.0
        %5699 = vmatpush2.xpose.msra.mxu0 0.0
        %5700 = vmatprep.subr.mxu0 0.0
        %5701 = vmatpush2.xpose.msra.mxu0 0.0
        %5702 = vmatprep.subr.mxu0 0.0
        %5703 = vmatpush2.xpose.msra.mxu0 0.0
        %5704 = vmatprep.subr.mxu0 0.0
        %5705 = vmatpush2.xpose.msra.mxu0 0.0
        %5706 = vmatprep.subr.mxu0 0.0
        %5707 = vmatpush2.xpose.msra.mxu0 0.0
        %5708 = vmatprep.mubr.f32.mxu0 0.0
        %5709 = vmatmul.mubr.f32.gmra.mxu0 %v5636
        %v5710 = vpop.f32.mrf.mxu0
        %v5711 = vadd.f32 0.0, %v5710
        %v5712 = vpop.f32.mrf.mxu0
        %5713 = vmatprep.mubr.f32.mxu0 0.0
        %5714 = vmatmul.mubr.f32.gmra.mxu0 %v5639
        %v5715 = vpop.f32.mrf.mxu0
        %v5716 = vadd.f32 0.0, %v5715
        %v5717 = vpop.f32.mrf.mxu0
        %5718 = vdwg.mxu0
        %v5720 = vsel %vm4040, %v5555, 0
        %v5723 = vsel %vm4040, %v5556, 0
        %v5726 = vsel %vm4040, %v5492, 0
        %5728 = vmatprep.subr.mxu0 0.0
        %5729 = vmatpush1.xpose.msra.mxu0 0.0
        %5730 = vmatprep.subr.mxu0 0.0
        %5731 = vmatpush1.xpose.msra.mxu0 0.0
        %5732 = vmatprep.subr.mxu0 0.0
        %5733 = vmatpush1.xpose.msra.mxu0 0.0
        %5734 = vmatprep.subr.mxu0 0.0
        %5735 = vmatpush1.xpose.msra.mxu0 0.0
        %5736 = vmatprep.subr.mxu0 0.0
        %5737 = vmatpush1.xpose.msra.mxu0 0.0
        %5738 = vmatprep.subr.mxu0 0.0
        %5739 = vmatpush1.xpose.msra.mxu0 0.0
        %5740 = vmatprep.subr.mxu0 0.0
        %5741 = vmatpush1.xpose.msra.mxu0 0.0
        %5742 = vmatprep.subr.mxu0 0.0
        %5743 = vmatpush1.xpose.msra.mxu0 0.0
        %5744 = vmatprep.subr.mxu0 0.0
        %5745 = vmatpush1.xpose.msra.mxu0 0.0
        %5746 = vmatprep.subr.mxu0 0.0
        %5747 = vmatpush1.xpose.msra.mxu0 0.0
        %5748 = vmatprep.subr.mxu0 0.0
        %5749 = vmatpush1.xpose.msra.mxu0 0.0
        %5750 = vmatprep.subr.mxu0 0.0
        %5751 = vmatpush1.xpose.msra.mxu0 0.0
        %5752 = vmatprep.subr.mxu0 0.0
        %5753 = vmatpush1.xpose.msra.mxu0 0.0
        %5754 = vmatprep.subr.mxu0 0.0
        %5755 = vmatpush1.xpose.msra.mxu0 0.0
        %5756 = vmatprep.subr.mxu0 0.0
        %5757 = vmatpush1.xpose.msra.mxu0 0.0
        %5758 = vmatprep.subr.mxu0 0.0
        %5759 = vmatpush1.xpose.msra.mxu0 %v5726
        %5760 = vmatprep.subr.mxu0 0.0
        %5761 = vmatpush2.xpose.msra.mxu0 0.0
        %5762 = vmatprep.subr.mxu0 0.0
        %5763 = vmatpush2.xpose.msra.mxu0 0.0
        %5764 = vmatprep.subr.mxu0 0.0
        %5765 = vmatpush2.xpose.msra.mxu0 0.0
        %5766 = vmatprep.subr.mxu0 0.0
        %5767 = vmatpush2.xpose.msra.mxu0 0.0
        %5768 = vmatprep.subr.mxu0 0.0
        %5769 = vmatpush2.xpose.msra.mxu0 0.0
        %5770 = vmatprep.subr.mxu0 0.0
        %5771 = vmatpush2.xpose.msra.mxu0 0.0
        %5772 = vmatprep.subr.mxu0 0.0
        %5773 = vmatpush2.xpose.msra.mxu0 0.0
        %5774 = vmatprep.subr.mxu0 0.0
        %5775 = vmatpush2.xpose.msra.mxu0 0.0
        %5776 = vmatprep.subr.mxu0 0.0
        %5777 = vmatpush2.xpose.msra.mxu0 0.0
        %5778 = vmatprep.subr.mxu0 0.0
        %5779 = vmatpush2.xpose.msra.mxu0 0.0
        %5780 = vmatprep.subr.mxu0 0.0
        %5781 = vmatpush2.xpose.msra.mxu0 0.0
        %5782 = vmatprep.subr.mxu0 0.0
        %5783 = vmatpush2.xpose.msra.mxu0 0.0
        %5784 = vmatprep.subr.mxu0 0.0
        %5785 = vmatpush2.xpose.msra.mxu0 0.0
        %5786 = vmatprep.subr.mxu0 0.0
        %5787 = vmatpush2.xpose.msra.mxu0 0.0
        %5788 = vmatprep.subr.mxu0 0.0
        %5789 = vmatpush2.xpose.msra.mxu0 0.0
        %5790 = vmatprep.subr.mxu0 0.0
        %5791 = vmatpush2.xpose.msra.mxu0 0.0
        %5792 = vmatprep.mubr.f32.mxu0 0.0
        %5793 = vmatmul.mubr.f32.gmra.mxu0 %v5720
        %v5794 = vpop.f32.mrf.mxu0
        %v5795 = vadd.f32 0.0, %v5794
        %v5796 = vpop.f32.mrf.mxu0
        %5797 = vmatprep.mubr.f32.mxu0 0.0
        %5798 = vmatmul.mubr.f32.gmra.mxu0 %v5723
        %v5799 = vpop.f32.mrf.mxu0
        %v5800 = vadd.f32 0.0, %v5799
        %v5801 = vpop.f32.mrf.mxu0
        %5802 = vdwg.mxu0
        %v5804 = vsel %vm4040, %v5587, 0
        %v5807 = vsel %vm4040, %v5588, 0
        %v5810 = vsel %vm4040, %v5493, 0
        %5812 = vmatprep.subr.mxu0 0.0
        %5813 = vmatpush1.xpose.msra.mxu0 0.0
        %5814 = vmatprep.subr.mxu0 0.0
        %5815 = vmatpush1.xpose.msra.mxu0 0.0
        %5816 = vmatprep.subr.mxu0 0.0
        %5817 = vmatpush1.xpose.msra.mxu0 0.0
        %5818 = vmatprep.subr.mxu0 0.0
        %5819 = vmatpush1.xpose.msra.mxu0 0.0
        %5820 = vmatprep.subr.mxu0 0.0
        %5821 = vmatpush1.xpose.msra.mxu0 0.0
        %5822 = vmatprep.subr.mxu0 0.0
        %5823 = vmatpush1.xpose.msra.mxu0 0.0
        %5824 = vmatprep.subr.mxu0 0.0
        %5825 = vmatpush1.xpose.msra.mxu0 0.0
        %5826 = vmatprep.subr.mxu0 0.0
        %5827 = vmatpush1.xpose.msra.mxu0 0.0
        %5828 = vmatprep.subr.mxu0 0.0
        %5829 = vmatpush1.xpose.msra.mxu0 0.0
        %5830 = vmatprep.subr.mxu0 0.0
        %5831 = vmatpush1.xpose.msra.mxu0 0.0
        %5832 = vmatprep.subr.mxu0 0.0
        %5833 = vmatpush1.xpose.msra.mxu0 0.0
        %5834 = vmatprep.subr.mxu0 0.0
        %5835 = vmatpush1.xpose.msra.mxu0 0.0
        %5836 = vmatprep.subr.mxu0 0.0
        %5837 = vmatpush1.xpose.msra.mxu0 0.0
        %5838 = vmatprep.subr.mxu0 0.0
        %5839 = vmatpush1.xpose.msra.mxu0 0.0
        %5840 = vmatprep.subr.mxu0 0.0
        %5841 = vmatpush1.xpose.msra.mxu0 0.0
        %5842 = vmatprep.subr.mxu0 0.0
        %5843 = vmatpush1.xpose.msra.mxu0 %v5810
        %5844 = vmatprep.subr.mxu0 0.0
        %5845 = vmatpush2.xpose.msra.mxu0 0.0
        %5846 = vmatprep.subr.mxu0 0.0
        %5847 = vmatpush2.xpose.msra.mxu0 0.0
        %5848 = vmatprep.subr.mxu0 0.0
        %5849 = vmatpush2.xpose.msra.mxu0 0.0
        %5850 = vmatprep.subr.mxu0 0.0
        %5851 = vmatpush2.xpose.msra.mxu0 0.0
        %5852 = vmatprep.subr.mxu0 0.0
        %5853 = vmatpush2.xpose.msra.mxu0 0.0
        %5854 = vmatprep.subr.mxu0 0.0
        %5855 = vmatpush2.xpose.msra.mxu0 0.0
        %5856 = vmatprep.subr.mxu0 0.0
        %5857 = vmatpush2.xpose.msra.mxu0 0.0
        %5858 = vmatprep.subr.mxu0 0.0
        %5859 = vmatpush2.xpose.msra.mxu0 0.0
        %5860 = vmatprep.subr.mxu0 0.0
        %5861 = vmatpush2.xpose.msra.mxu0 0.0
        %5862 = vmatprep.subr.mxu0 0.0
        %5863 = vmatpush2.xpose.msra.mxu0 0.0
        %5864 = vmatprep.subr.mxu0 0.0
        %5865 = vmatpush2.xpose.msra.mxu0 0.0
        %5866 = vmatprep.subr.mxu0 0.0
        %5867 = vmatpush2.xpose.msra.mxu0 0.0
        %5868 = vmatprep.subr.mxu0 0.0
        %5869 = vmatpush2.xpose.msra.mxu0 0.0
        %5870 = vmatprep.subr.mxu0 0.0
        %5871 = vmatpush2.xpose.msra.mxu0 0.0
        %5872 = vmatprep.subr.mxu0 0.0
        %5873 = vmatpush2.xpose.msra.mxu0 0.0
        %5874 = vmatprep.subr.mxu0 0.0
        %5875 = vmatpush2.xpose.msra.mxu0 0.0
        %5876 = vmatprep.mubr.f32.mxu0 0.0
        %5877 = vmatmul.mubr.f32.gmra.mxu0 %v5804
        %v5878 = vpop.f32.mrf.mxu0
        %v5879 = vadd.f32 0.0, %v5878
        %v5880 = vpop.f32.mrf.mxu0
        %5881 = vmatprep.mubr.f32.mxu0 0.0
        %5882 = vmatmul.mubr.f32.gmra.mxu0 %v5807
        %v5883 = vpop.f32.mrf.mxu0
        %v5884 = vadd.f32 0.0, %v5883
        %v5885 = vpop.f32.mrf.mxu0
        %5886 = vdwg.mxu0
        %v5888 = vsel %vm4040, %v5619, 0
        %v5891 = vsel %vm4040, %v5620, 0
        %v5894 = vsel %vm4040, %v5494, 0
        %5896 = vmatprep.subr.mxu0 0.0
        %5897 = vmatpush1.xpose.msra.mxu0 0.0
        %5898 = vmatprep.subr.mxu0 0.0
        %5899 = vmatpush1.xpose.msra.mxu0 0.0
        %5900 = vmatprep.subr.mxu0 0.0
        %5901 = vmatpush1.xpose.msra.mxu0 0.0
        %5902 = vmatprep.subr.mxu0 0.0
        %5903 = vmatpush1.xpose.msra.mxu0 0.0
        %5904 = vmatprep.subr.mxu0 0.0
        %5905 = vmatpush1.xpose.msra.mxu0 0.0
        %5906 = vmatprep.subr.mxu0 0.0
        %5907 = vmatpush1.xpose.msra.mxu0 0.0
        %5908 = vmatprep.subr.mxu0 0.0
        %5909 = vmatpush1.xpose.msra.mxu0 0.0
        %5910 = vmatprep.subr.mxu0 0.0
        %5911 = vmatpush1.xpose.msra.mxu0 0.0
        %5912 = vmatprep.subr.mxu0 0.0
        %5913 = vmatpush1.xpose.msra.mxu0 0.0
        %5914 = vmatprep.subr.mxu0 0.0
        %5915 = vmatpush1.xpose.msra.mxu0 0.0
        %5916 = vmatprep.subr.mxu0 0.0
        %5917 = vmatpush1.xpose.msra.mxu0 0.0
        %5918 = vmatprep.subr.mxu0 0.0
        %5919 = vmatpush1.xpose.msra.mxu0 0.0
        %5920 = vmatprep.subr.mxu0 0.0
        %5921 = vmatpush1.xpose.msra.mxu0 0.0
        %5922 = vmatprep.subr.mxu0 0.0
        %5923 = vmatpush1.xpose.msra.mxu0 0.0
        %5924 = vmatprep.subr.mxu0 0.0
        %5925 = vmatpush1.xpose.msra.mxu0 0.0
        %5926 = vmatprep.subr.mxu0 0.0
        %5927 = vmatpush1.xpose.msra.mxu0 %v5894
        %5928 = vmatprep.subr.mxu0 0.0
        %5929 = vmatpush2.xpose.msra.mxu0 0.0
        %5930 = vmatprep.subr.mxu0 0.0
        %5931 = vmatpush2.xpose.msra.mxu0 0.0
        %5932 = vmatprep.subr.mxu0 0.0
        %5933 = vmatpush2.xpose.msra.mxu0 0.0
        %5934 = vmatprep.subr.mxu0 0.0
        %5935 = vmatpush2.xpose.msra.mxu0 0.0
        %5936 = vmatprep.subr.mxu0 0.0
        %5937 = vmatpush2.xpose.msra.mxu0 0.0
        %5938 = vmatprep.subr.mxu0 0.0
        %5939 = vmatpush2.xpose.msra.mxu0 0.0
        %5940 = vmatprep.subr.mxu0 0.0
        %5941 = vmatpush2.xpose.msra.mxu0 0.0
        %5942 = vmatprep.subr.mxu0 0.0
        %5943 = vmatpush2.xpose.msra.mxu0 0.0
        %5944 = vmatprep.subr.mxu0 0.0
        %5945 = vmatpush2.xpose.msra.mxu0 0.0
        %5946 = vmatprep.subr.mxu0 0.0
        %5947 = vmatpush2.xpose.msra.mxu0 0.0
        %5948 = vmatprep.subr.mxu0 0.0
        %5949 = vmatpush2.xpose.msra.mxu0 0.0
        %5950 = vmatprep.subr.mxu0 0.0
        %5951 = vmatpush2.xpose.msra.mxu0 0.0
        %5952 = vmatprep.subr.mxu0 0.0
        %5953 = vmatpush2.xpose.msra.mxu0 0.0
        %5954 = vmatprep.subr.mxu0 0.0
        %5955 = vmatpush2.xpose.msra.mxu0 0.0
        %5956 = vmatprep.subr.mxu0 0.0
        %5957 = vmatpush2.xpose.msra.mxu0 0.0
        %5958 = vmatprep.subr.mxu0 0.0
        %5959 = vmatpush2.xpose.msra.mxu0 0.0
        %5960 = vmatprep.mubr.f32.mxu0 0.0
        %5961 = vmatmul.mubr.f32.gmra.mxu0 %v5888
        %v5962 = vpop.f32.mrf.mxu0
        %v5963 = vadd.f32 0.0, %v5962
        %v5964 = vpop.f32.mrf.mxu0
        %5965 = vmatprep.mubr.f32.mxu0 0.0
        %5966 = vmatmul.mubr.f32.gmra.mxu0 %v5891
        %v5967 = vpop.f32.mrf.mxu0
        %v5968 = vadd.f32 0.0, %v5967
        %v5969 = vpop.f32.mrf.mxu0
        %5970 = vdwg.mxu0
        %5971 = vxpose.xlu0.b32.start [1/16] %v5711, 128
        %5972 = vxpose.xlu0.b32.cont [2/16] %v5716, 128
        %5973 = vxpose.xlu0.b32.cont [3/16] 0.0, 128
        %5974 = vxpose.xlu0.b32.cont [4/16] 0.0, 128
        %5975 = vxpose.xlu0.b32.cont [5/16] 0.0, 128
        %5976 = vxpose.xlu0.b32.cont [6/16] 0.0, 128
        %5977 = vxpose.xlu0.b32.cont [7/16] 0.0, 128
        %5978 = vxpose.xlu0.b32.cont [8/16] 0.0, 128
        %5979 = vxpose.xlu0.b32.cont [9/16] 0.0, 128
        %5980 = vxpose.xlu0.b32.cont [10/16] 0.0, 128
        %5981 = vxpose.xlu0.b32.cont [11/16] 0.0, 128
        %5982 = vxpose.xlu0.b32.cont [12/16] 0.0, 128
        %5983 = vxpose.xlu0.b32.cont [13/16] 0.0, 128
        %5984 = vxpose.xlu0.b32.cont [14/16] 0.0, 128
        %5985 = vxpose.xlu0.b32.cont [15/16] 0.0, 128
        %5986 = vxpose.xlu0.b32.end [16/16] 0.0, 128
        %v5987 = vpop.trf.xlu0
        %v5988 = vpop.trf.xlu0
        %v5989 = vpop.trf.xlu0
        %v5990 = vpop.trf.xlu0
        %v5991 = vpop.trf.xlu0
        %v5992 = vpop.trf.xlu0
        %v5993 = vpop.trf.xlu0
        %v5994 = vpop.trf.xlu0
        %v5995 = vpop.trf.xlu0
        %v5996 = vpop.trf.xlu0
        %v5997 = vpop.trf.xlu0
        %v5998 = vpop.trf.xlu0
        %v5999 = vpop.trf.xlu0
        %v6000 = vpop.trf.xlu0
        %v6001 = vpop.trf.xlu0
        %v6002 = vpop.trf.xlu0
        %6003 = vxpose.xlu0.b32.start [1/16] %v5795, 128
        %6004 = vxpose.xlu0.b32.cont [2/16] %v5800, 128
        %6005 = vxpose.xlu0.b32.cont [3/16] 0.0, 128
        %6006 = vxpose.xlu0.b32.cont [4/16] 0.0, 128
        %6007 = vxpose.xlu0.b32.cont [5/16] 0.0, 128
        %6008 = vxpose.xlu0.b32.cont [6/16] 0.0, 128
        %6009 = vxpose.xlu0.b32.cont [7/16] 0.0, 128
        %6010 = vxpose.xlu0.b32.cont [8/16] 0.0, 128
        %6011 = vxpose.xlu0.b32.cont [9/16] 0.0, 128
        %6012 = vxpose.xlu0.b32.cont [10/16] 0.0, 128
        %6013 = vxpose.xlu0.b32.cont [11/16] 0.0, 128
        %6014 = vxpose.xlu0.b32.cont [12/16] 0.0, 128
        %6015 = vxpose.xlu0.b32.cont [13/16] 0.0, 128
        %6016 = vxpose.xlu0.b32.cont [14/16] 0.0, 128
        %6017 = vxpose.xlu0.b32.cont [15/16] 0.0, 128
        %6018 = vxpose.xlu0.b32.end [16/16] 0.0, 128
        %v6019 = vpop.trf.xlu0
        %v6020 = vpop.trf.xlu0
        %v6021 = vpop.trf.xlu0
        %v6022 = vpop.trf.xlu0
        %v6023 = vpop.trf.xlu0
        %v6024 = vpop.trf.xlu0
        %v6025 = vpop.trf.xlu0
        %v6026 = vpop.trf.xlu0
        %v6027 = vpop.trf.xlu0
        %v6028 = vpop.trf.xlu0
        %v6029 = vpop.trf.xlu0
        %v6030 = vpop.trf.xlu0
        %v6031 = vpop.trf.xlu0
        %v6032 = vpop.trf.xlu0
        %v6033 = vpop.trf.xlu0
        %v6034 = vpop.trf.xlu0
        %6035 = vxpose.xlu0.b32.start [1/16] %v5879, 128
        %6036 = vxpose.xlu0.b32.cont [2/16] %v5884, 128
        %6037 = vxpose.xlu0.b32.cont [3/16] 0.0, 128
        %6038 = vxpose.xlu0.b32.cont [4/16] 0.0, 128
        %6039 = vxpose.xlu0.b32.cont [5/16] 0.0, 128
        %6040 = vxpose.xlu0.b32.cont [6/16] 0.0, 128
        %6041 = vxpose.xlu0.b32.cont [7/16] 0.0, 128
        %6042 = vxpose.xlu0.b32.cont [8/16] 0.0, 128
        %6043 = vxpose.xlu0.b32.cont [9/16] 0.0, 128
        %6044 = vxpose.xlu0.b32.cont [10/16] 0.0, 128
        %6045 = vxpose.xlu0.b32.cont [11/16] 0.0, 128
        %6046 = vxpose.xlu0.b32.cont [12/16] 0.0, 128
        %6047 = vxpose.xlu0.b32.cont [13/16] 0.0, 128
        %6048 = vxpose.xlu0.b32.cont [14/16] 0.0, 128
        %6049 = vxpose.xlu0.b32.cont [15/16] 0.0, 128
        %6050 = vxpose.xlu0.b32.end [16/16] 0.0, 128
        %v6051 = vpop.trf.xlu0
        %v6052 = vpop.trf.xlu0
        %v6053 = vpop.trf.xlu0
        %v6054 = vpop.trf.xlu0
        %v6055 = vpop.trf.xlu0
        %v6056 = vpop.trf.xlu0
        %v6057 = vpop.trf.xlu0
        %v6058 = vpop.trf.xlu0
        %v6059 = vpop.trf.xlu0
        %v6060 = vpop.trf.xlu0
        %v6061 = vpop.trf.xlu0
        %v6062 = vpop.trf.xlu0
        %v6063 = vpop.trf.xlu0
        %v6064 = vpop.trf.xlu0
        %v6065 = vpop.trf.xlu0
        %v6066 = vpop.trf.xlu0
        %6067 = vxpose.xlu0.b32.start [1/16] %v5963, 128
        %6068 = vxpose.xlu0.b32.cont [2/16] %v5968, 128
        %6069 = vxpose.xlu0.b32.cont [3/16] 0.0, 128
        %6070 = vxpose.xlu0.b32.cont [4/16] 0.0, 128
        %6071 = vxpose.xlu0.b32.cont [5/16] 0.0, 128
        %6072 = vxpose.xlu0.b32.cont [6/16] 0.0, 128
        %6073 = vxpose.xlu0.b32.cont [7/16] 0.0, 128
        %6074 = vxpose.xlu0.b32.cont [8/16] 0.0, 128
        %6075 = vxpose.xlu0.b32.cont [9/16] 0.0, 128
        %6076 = vxpose.xlu0.b32.cont [10/16] 0.0, 128
        %6077 = vxpose.xlu0.b32.cont [11/16] 0.0, 128
        %6078 = vxpose.xlu0.b32.cont [12/16] 0.0, 128
        %6079 = vxpose.xlu0.b32.cont [13/16] 0.0, 128
        %6080 = vxpose.xlu0.b32.cont [14/16] 0.0, 128
        %6081 = vxpose.xlu0.b32.cont [15/16] 0.0, 128
        %6082 = vxpose.xlu0.b32.end [16/16] 0.0, 128
        %v6083 = vpop.trf.xlu0
        %v6084 = vpop.trf.xlu0
        %v6085 = vpop.trf.xlu0
        %v6086 = vpop.trf.xlu0
        %v6087 = vpop.trf.xlu0
        %v6088 = vpop.trf.xlu0
        %v6089 = vpop.trf.xlu0
        %v6090 = vpop.trf.xlu0
        %v6091 = vpop.trf.xlu0
        %v6092 = vpop.trf.xlu0
        %v6093 = vpop.trf.xlu0
        %v6094 = vpop.trf.xlu0
        %v6095 = vpop.trf.xlu0
        %v6096 = vpop.trf.xlu0
        %v6097 = vpop.trf.xlu0
        %v6098 = vpop.trf.xlu0
        %v6099 = vcombine.low %v5987, %v6051
        %v6100 = vcombine.high %v5987, %v6051
        %v6102 = vunpack.c.l.s4 1983009808
        %v6103 = vunpack.c.0.s8 %v6102
        %v6104 = vlaneseq
        %v6105 = vshrl.u32 %v6104, 7
        %v6106 = vsub.s32 %v6103, %v6105
        %v6107 = vrot.slane %v6099, %v6106
        %v6109 = vunpack.c.l.s4 1983009808
        %v6110 = vunpack.c.0.s8 %v6109
        %v6111 = vlaneseq
        %v6112 = vshrl.u32 %v6111, 7
        %v6113 = vsub.s32 %v6110, %v6112
        %v6114 = vrot.slane %v6100, %v6113
        %v6115 = vcombine.low %v6019, %v6083
        %v6116 = vcombine.high %v6019, %v6083
        %v6118 = vunpack.c.l.s4 1983009808
        %v6119 = vunpack.c.0.s8 %v6118
        %v6120 = vlaneseq
        %v6121 = vshrl.u32 %v6120, 7
        %v6122 = vsub.s32 %v6119, %v6121
        %v6123 = vrot.slane %v6115, %v6122
        %v6125 = vunpack.c.l.s4 1983009808
        %v6126 = vunpack.c.0.s8 %v6125
        %v6127 = vlaneseq
        %v6128 = vshrl.u32 %v6127, 7
        %v6129 = vsub.s32 %v6126, %v6128
        %v6130 = vrot.slane %v6116, %v6129
        %v6131 = vcombine.low %v6107, %v6123
        %v6132 = vcombine.high %v6107, %v6123
        %v6134 = vunpack.c.l.s4 1934713408
        %v6135 = vunpack.c.0.s8 %v6134
        %v6136 = vlaneseq
        %v6137 = vshrl.u32 %v6136, 7
        %v6138 = vsub.s32 %v6135, %v6137
        %v6139 = vrot.slane %v6131, %v6138
        %v6141 = vunpack.c.l.s4 1934713408
        %v6142 = vunpack.c.0.s8 %v6141
        %v6143 = vlaneseq
        %v6144 = vshrl.u32 %v6143, 7
        %v6145 = vsub.s32 %v6142, %v6144
        %v6146 = vrot.slane %v6132, %v6145
        %v6147 = vcombine.low %v6114, %v6130
        %v6148 = vcombine.high %v6114, %v6130
        %v6150 = vunpack.c.l.s4 1934713408
        %v6151 = vunpack.c.0.s8 %v6150
        %v6152 = vlaneseq
        %v6153 = vshrl.u32 %v6152, 7
        %v6154 = vsub.s32 %v6151, %v6153
        %v6155 = vrot.slane %v6147, %v6154
        %v6157 = vunpack.c.l.s4 1934713408
        %v6158 = vunpack.c.0.s8 %v6157
        %v6159 = vlaneseq
        %v6160 = vshrl.u32 %v6159, 7
        %v6161 = vsub.s32 %v6158, %v6160
        %v6162 = vrot.slane %v6148, %v6161
        %v6163 = vcombine.high %v6139, 0.0
        %v6164 = vcombine.high %v6146, 0.0
        %v6165 = vcombine.high %v6155, 0.0
        %v6166 = vcombine.high %v6162, 0.0
        %v6167 = vcombine.low %v6139, %v6146
        %v6169 = vunpack.c.l.s4 1983009808
        %v6170 = vunpack.c.0.s8 %v6169
        %v6171 = vlaneseq
        %v6172 = vshrl.u32 %v6171, 7
        %v6173 = vsub.s32 %v6170, %v6172
        %v6174 = vrot.slane %v6167, %v6173
        %v6175 = vcombine.low %v6163, %v6164
        %v6177 = vunpack.c.l.s4 1983009808
        %v6178 = vunpack.c.0.s8 %v6177
        %v6179 = vlaneseq
        %v6180 = vshrl.u32 %v6179, 7
        %v6181 = vsub.s32 %v6178, %v6180
        %v6182 = vrot.slane %v6175, %v6181
        %v6183 = vcombine.low %v6155, %v6162
        %v6185 = vunpack.c.l.s4 1983009808
        %v6186 = vunpack.c.0.s8 %v6185
        %v6187 = vlaneseq
        %v6188 = vshrl.u32 %v6187, 7
        %v6189 = vsub.s32 %v6186, %v6188
        %v6190 = vrot.slane %v6183, %v6189
        %v6191 = vcombine.low %v6165, %v6166
        %v6193 = vunpack.c.l.s4 1983009808
        %v6194 = vunpack.c.0.s8 %v6193
        %v6195 = vlaneseq
        %v6196 = vshrl.u32 %v6195, 7
        %v6197 = vsub.s32 %v6194, %v6196
        %v6198 = vrot.slane %v6191, %v6197
        %v6199 = vcombine.low %v6174, %v6182
        %v6200 = vcombine.high %v6174, %v6182
        %v6202 = vunpack.c.l.s4 1934713408
        %v6203 = vunpack.c.0.s8 %v6202
        %v6204 = vlaneseq
        %v6205 = vshrl.u32 %v6204, 7
        %v6206 = vsub.s32 %v6203, %v6205
        %v6207 = vrot.slane %v6199, %v6206
        %v6209 = vunpack.c.l.s4 1934713408
        %v6210 = vunpack.c.0.s8 %v6209
        %v6211 = vlaneseq
        %v6212 = vshrl.u32 %v6211, 7
        %v6213 = vsub.s32 %v6210, %v6212
        %v6214 = vrot.slane %v6200, %v6213
        %v6215 = vcombine.low %v6190, %v6198
        %v6216 = vcombine.high %v6190, %v6198
        %v6218 = vunpack.c.l.s4 1934713408
        %v6219 = vunpack.c.0.s8 %v6218
        %v6220 = vlaneseq
        %v6221 = vshrl.u32 %v6220, 7
        %v6222 = vsub.s32 %v6219, %v6221
        %v6223 = vrot.slane %v6215, %v6222
        %v6225 = vunpack.c.l.s4 1934713408
        %v6226 = vunpack.c.0.s8 %v6225
        %v6227 = vlaneseq
        %v6228 = vshrl.u32 %v6227, 7
        %v6229 = vsub.s32 %v6226, %v6228
        %v6230 = vrot.slane %v6216, %v6229
        %v6231 = vcombine.low %v6207, %v6223
        %v6232 = vcombine.high %v6207, %v6223
        %v6233 = vcombine.low %v6214, %v6230
        %v6234 = vcombine.high %v6214, %v6230
        %6236 = vrot.lane.b32.xlu0 %v6232, 16
        %v6237 = vpop.permute.xlu0 %6236
        %6240 = vrot.lane.b32.xlu0 %v6233, 32
        %v6241 = vpop.permute.xlu0 %6240
        %6244 = vrot.lane.b32.xlu0 %v6234, 48
        %v6245 = vpop.permute.xlu0 %6244
        %v6247 = vsel %vm918, %v6231, %v6237
        %v6248 = vsel %vm521, %v6247, %v6241
        %v6249 = vsel %vm2018, %v6248, %v6245
        %s6250 = scalar_lea.vmem %s9, 192
        %v6251 = vld [vmem:[%s6250] sm:$0xff]
        %v6252 = vld [vmem:[%s6250 + $0x8] sm:$0xff]
        %v6253 = vld [vmem:[%s6250 + $0x10] sm:$0xff]
        %v6254 = vld [vmem:[%s6250 + $0x18] sm:$0xff]
        %v6255 = vld [vmem:[%s6250 + $0x20] sm:$0xff]
        %v6256 = vld [vmem:[%s6250 + $0x28] sm:$0xff]
        %v6257 = vld [vmem:[%s6250 + $0x30] sm:$0xff]
        %v6258 = vld [vmem:[%s6250 + $0x38] sm:$0xff]
        %s6259 = scalar_lea.vmem %s10, 3
        %v6260 = vld [vmem:[%s6259] sm:$0x1]
        %v6262 = vlaneseq
        %v6263 = vshrl.u32 %v6262, 7
        %v6264 = vsub.s32 0, %v6263
        %v6265 = vrot.slane %v6260, %v6264
        %v6268 = vsel %vm2035, %v6249, 0
        %6270 = vmatprep.subr.mxu0 0.0
        %6271 = vmatpush1.msra.mxu0 0.0
        %6272 = vmatprep.subr.mxu0 0.0
        %6273 = vmatpush1.msra.mxu0 0.0
        %6274 = vmatprep.subr.mxu0 0.0
        %6275 = vmatpush1.msra.mxu0 0.0
        %6276 = vmatprep.subr.mxu0 0.0
        %6277 = vmatpush1.msra.mxu0 0.0
        %6278 = vmatprep.subr.mxu0 0.0
        %6279 = vmatpush1.msra.mxu0 0.0
        %6280 = vmatprep.subr.mxu0 0.0
        %6281 = vmatpush1.msra.mxu0 0.0
        %6282 = vmatprep.subr.mxu0 0.0
        %6283 = vmatpush1.msra.mxu0 0.0
        %6284 = vmatprep.subr.mxu0 0.0
        %6285 = vmatpush1.msra.mxu0 0.0
        %6286 = vmatprep.subr.mxu0 0.0
        %6287 = vmatpush1.msra.mxu0 %v6258
        %6288 = vmatprep.subr.mxu0 0.0
        %6289 = vmatpush1.msra.mxu0 %v6257
        %6290 = vmatprep.subr.mxu0 0.0
        %6291 = vmatpush1.msra.mxu0 %v6256
        %6292 = vmatprep.subr.mxu0 0.0
        %6293 = vmatpush1.msra.mxu0 %v6255
        %6294 = vmatprep.subr.mxu0 0.0
        %6295 = vmatpush1.msra.mxu0 %v6254
        %6296 = vmatprep.subr.mxu0 0.0
        %6297 = vmatpush1.msra.mxu0 %v6253
        %6298 = vmatprep.subr.mxu0 0.0
        %6299 = vmatpush1.msra.mxu0 %v6252
        %6300 = vmatprep.subr.mxu0 0.0
        %6301 = vmatpush1.msra.mxu0 %v6251
        %6302 = vmatprep.subr.mxu0 0.0
        %6303 = vmatpush2.msra.mxu0 0.0
        %6304 = vmatprep.subr.mxu0 0.0
        %6305 = vmatpush2.msra.mxu0 0.0
        %6306 = vmatprep.subr.mxu0 0.0
        %6307 = vmatpush2.msra.mxu0 0.0
        %6308 = vmatprep.subr.mxu0 0.0
        %6309 = vmatpush2.msra.mxu0 0.0
        %6310 = vmatprep.subr.mxu0 0.0
        %6311 = vmatpush2.msra.mxu0 0.0
        %6312 = vmatprep.subr.mxu0 0.0
        %6313 = vmatpush2.msra.mxu0 0.0
        %6314 = vmatprep.subr.mxu0 0.0
        %6315 = vmatpush2.msra.mxu0 0.0
        %6316 = vmatprep.subr.mxu0 0.0
        %6317 = vmatpush2.msra.mxu0 0.0
        %6318 = vmatprep.subr.mxu0 0.0
        %6319 = vmatpush2.msra.mxu0 0.0
        %6320 = vmatprep.subr.mxu0 0.0
        %6321 = vmatpush2.msra.mxu0 0.0
        %6322 = vmatprep.subr.mxu0 0.0
        %6323 = vmatpush2.msra.mxu0 0.0
        %6324 = vmatprep.subr.mxu0 0.0
        %6325 = vmatpush2.msra.mxu0 0.0
        %6326 = vmatprep.subr.mxu0 0.0
        %6327 = vmatpush2.msra.mxu0 0.0
        %6328 = vmatprep.subr.mxu0 0.0
        %6329 = vmatpush2.msra.mxu0 0.0
        %6330 = vmatprep.subr.mxu0 0.0
        %6331 = vmatpush2.msra.mxu0 0.0
        %6332 = vmatprep.subr.mxu0 0.0
        %6333 = vmatpush2.msra.mxu0 0.0
        %6334 = vmatprep.mubr.f32.mxu0 0.0
        %6335 = vmatmul.mubr.f32.gmra.mxu0 %v6268
        %v6336 = vpop.f32.mrf.mxu0
        %v6337 = vadd.f32 %v6265, %v6336
        %v6338 = vpop.f32.mrf.mxu0
        %6339 = vdwg.mxu0
        %s6340 = scalar_lea.vmem %s7, 128
        %v6341 = vld [vmem:[%s6340] sm:$0xff]
        %v6342 = vld [vmem:[%s6340 + $0x8] sm:$0xff]
        %v6343 = vld [vmem:[%s6340 + $0x10] sm:$0xff]
        %v6344 = vld [vmem:[%s6340 + $0x18] sm:$0xff]
        %s6345 = scalar_lea.vmem %s8, 4
        %v6346 = vld [vmem:[%s6345] sm:$0x1]
        %v6348 = vlaneseq
        %v6349 = vshrl.u32 %v6348, 7
        %v6350 = vsub.s32 0, %v6349
        %v6351 = vrot.slane %v6346, %v6350
        %v6354 = vsel %vm521, %v2106, 0
        %v6357 = vsel %vm521, %v3517, 0
        %v6360 = vsel %vm521, %v4927, 0
        %v6363 = vsel %vm521, %v6337, 0
        %6365 = vmatprep.subr.mxu0 0.0
        %6366 = vmatpush1.msra.mxu0 0.0
        %6367 = vmatprep.subr.mxu0 0.0
        %6368 = vmatpush1.msra.mxu0 0.0
        %6369 = vmatprep.subr.mxu0 0.0
        %6370 = vmatpush1.msra.mxu0 0.0
        %6371 = vmatprep.subr.mxu0 0.0
        %6372 = vmatpush1.msra.mxu0 0.0
        %6373 = vmatprep.subr.mxu0 0.0
        %6374 = vmatpush1.msra.mxu0 0.0
        %6375 = vmatprep.subr.mxu0 0.0
        %6376 = vmatpush1.msra.mxu0 0.0
        %6377 = vmatprep.subr.mxu0 0.0
        %6378 = vmatpush1.msra.mxu0 0.0
        %6379 = vmatprep.subr.mxu0 0.0
        %6380 = vmatpush1.msra.mxu0 0.0
        %6381 = vmatprep.subr.mxu0 0.0
        %6382 = vmatpush1.msra.mxu0 0.0
        %6383 = vmatprep.subr.mxu0 0.0
        %6384 = vmatpush1.msra.mxu0 0.0
        %6385 = vmatprep.subr.mxu0 0.0
        %6386 = vmatpush1.msra.mxu0 0.0
        %6387 = vmatprep.subr.mxu0 0.0
        %6388 = vmatpush1.msra.mxu0 0.0
        %6389 = vmatprep.subr.mxu0 0.0
        %6390 = vmatpush1.msra.mxu0 %v6344
        %6391 = vmatprep.subr.mxu0 0.0
        %6392 = vmatpush1.msra.mxu0 %v6343
        %6393 = vmatprep.subr.mxu0 0.0
        %6394 = vmatpush1.msra.mxu0 %v6342
        %6395 = vmatprep.subr.mxu0 0.0
        %6396 = vmatpush1.msra.mxu0 %v6341
        %6397 = vmatprep.subr.mxu0 0.0
        %6398 = vmatpush2.msra.mxu0 0.0
        %6399 = vmatprep.subr.mxu0 0.0
        %6400 = vmatpush2.msra.mxu0 0.0
        %6401 = vmatprep.subr.mxu0 0.0
        %6402 = vmatpush2.msra.mxu0 0.0
        %6403 = vmatprep.subr.mxu0 0.0
        %6404 = vmatpush2.msra.mxu0 0.0
        %6405 = vmatprep.subr.mxu0 0.0
        %6406 = vmatpush2.msra.mxu0 0.0
        %6407 = vmatprep.subr.mxu0 0.0
        %6408 = vmatpush2.msra.mxu0 0.0
        %6409 = vmatprep.subr.mxu0 0.0
        %6410 = vmatpush2.msra.mxu0 0.0
        %6411 = vmatprep.subr.mxu0 0.0
        %6412 = vmatpush2.msra.mxu0 0.0
        %6413 = vmatprep.subr.mxu0 0.0
        %6414 = vmatpush2.msra.mxu0 0.0
        %6415 = vmatprep.subr.mxu0 0.0
        %6416 = vmatpush2.msra.mxu0 0.0
        %6417 = vmatprep.subr.mxu0 0.0
        %6418 = vmatpush2.msra.mxu0 0.0
        %6419 = vmatprep.subr.mxu0 0.0
        %6420 = vmatpush2.msra.mxu0 0.0
        %6421 = vmatprep.subr.mxu0 0.0
        %6422 = vmatpush2.msra.mxu0 0.0
        %6423 = vmatprep.subr.mxu0 0.0
        %6424 = vmatpush2.msra.mxu0 0.0
        %6425 = vmatprep.subr.mxu0 0.0
        %6426 = vmatpush2.msra.mxu0 0.0
        %6427 = vmatprep.subr.mxu0 0.0
        %6428 = vmatpush2.msra.mxu0 0.0
        %6429 = vmatprep.mubr.f32.mxu0 0.0
        %6430 = vmatmul.mubr.f32.gmra.mxu0 %v6354
        %v6431 = vpop.f32.mrf.mxu0
        %v6432 = vadd.f32 %v6351, %v6431
        %v6433 = vpop.f32.mrf.mxu0
        %6434 = vmatprep.mubr.f32.mxu0 0.0
        %6435 = vmatmul.mubr.f32.gmra.mxu0 %v6357
        %v6436 = vpop.f32.mrf.mxu0
        %v6437 = vadd.f32 %v6351, %v6436
        %v6438 = vpop.f32.mrf.mxu0
        %6439 = vmatprep.mubr.f32.mxu0 0.0
        %6440 = vmatmul.mubr.f32.gmra.mxu0 %v6360
        %v6441 = vpop.f32.mrf.mxu0
        %v6442 = vadd.f32 %v6351, %v6441
        %v6443 = vpop.f32.mrf.mxu0
        %6444 = vmatprep.mubr.f32.mxu0 0.0
        %6445 = vmatmul.mubr.f32.gmra.mxu0 %v6363
        %v6446 = vpop.f32.mrf.mxu0
        %v6447 = vadd.f32 %v6351, %v6446
        %v6448 = vpop.f32.mrf.mxu0
        %6449 = vdwg.mxu0
        %6451 = vrot.lane.b32.xlu0 %v668, 112
        %v6452 = vpop.permute.xlu0 %6451
        %6453 = vrot.lane.b32.xlu0 %v668, 96
        %v6454 = vpop.permute.xlu0 %6453
        %6455 = vrot.lane.b32.xlu0 %v668, 80
        %v6456 = vpop.permute.xlu0 %6455
        %6461 = vrot.lane.b32.xlu0 %v6432, 112
        %v6462 = vpop.permute.xlu0 %6461
        %6463 = vrot.lane.b32.xlu0 %v6437, 112
        %v6464 = vpop.permute.xlu0 %6463
        %6465 = vrot.lane.b32.xlu0 %v6442, 112
        %v6466 = vpop.permute.xlu0 %6465
        %6467 = vrot.lane.b32.xlu0 %v6447, 112
        %v6468 = vpop.permute.xlu0 %6467
        %6473 = vrot.lane.b32.xlu0 %v6432, 96
        %v6474 = vpop.permute.xlu0 %6473
        %6475 = vrot.lane.b32.xlu0 %v6437, 96
        %v6476 = vpop.permute.xlu0 %6475
        %6477 = vrot.lane.b32.xlu0 %v6442, 96
        %v6478 = vpop.permute.xlu0 %6477
        %6479 = vrot.lane.b32.xlu0 %v6447, 96
        %v6480 = vpop.permute.xlu0 %6479
        %6485 = vrot.lane.b32.xlu0 %v6432, 80
        %v6486 = vpop.permute.xlu0 %6485
        %6487 = vrot.lane.b32.xlu0 %v6437, 80
        %v6488 = vpop.permute.xlu0 %6487
        %6489 = vrot.lane.b32.xlu0 %v6442, 80
        %v6490 = vpop.permute.xlu0 %6489
        %6491 = vrot.lane.b32.xlu0 %v6447, 80
        %v6492 = vpop.permute.xlu0 %6491
        %6497 = vxpose.xlu0.b32.start [1/16] %v6432, 128
        %6498 = vxpose.xlu0.b32.cont [2/16] %v6437, 128
        %6499 = vxpose.xlu0.b32.cont [3/16] %v6442, 128
        %6500 = vxpose.xlu0.b32.cont [4/16] %v6447, 128
        %6501 = vxpose.xlu0.b32.cont [5/16] 0.0, 128
        %6502 = vxpose.xlu0.b32.cont [6/16] 0.0, 128
        %6503 = vxpose.xlu0.b32.cont [7/16] 0.0, 128
        %6504 = vxpose.xlu0.b32.cont [8/16] 0.0, 128
        %6505 = vxpose.xlu0.b32.cont [9/16] 0.0, 128
        %6506 = vxpose.xlu0.b32.cont [10/16] 0.0, 128
        %6507 = vxpose.xlu0.b32.cont [11/16] 0.0, 128
        %6508 = vxpose.xlu0.b32.cont [12/16] 0.0, 128
        %6509 = vxpose.xlu0.b32.cont [13/16] 0.0, 128
        %6510 = vxpose.xlu0.b32.cont [14/16] 0.0, 128
        %6511 = vxpose.xlu0.b32.cont [15/16] 0.0, 128
        %6512 = vxpose.xlu0.b32.end [16/16] 0.0, 128
        %v6513 = vpop.trf.xlu0
        %v6514 = vpop.trf.xlu0
        %v6515 = vpop.trf.xlu0
        %v6516 = vpop.trf.xlu0
        %v6517 = vpop.trf.xlu0
        %v6518 = vpop.trf.xlu0
        %v6519 = vpop.trf.xlu0
        %v6520 = vpop.trf.xlu0
        %v6521 = vpop.trf.xlu0
        %v6522 = vpop.trf.xlu0
        %v6523 = vpop.trf.xlu0
        %v6524 = vpop.trf.xlu0
        %v6525 = vpop.trf.xlu0
        %v6526 = vpop.trf.xlu0
        %v6527 = vpop.trf.xlu0
        %v6528 = vpop.trf.xlu0
        %6529 = vxpose.xlu0.b32.start [1/16] %v6462, 128
        %6530 = vxpose.xlu0.b32.cont [2/16] %v6464, 128
        %6531 = vxpose.xlu0.b32.cont [3/16] %v6466, 128
        %6532 = vxpose.xlu0.b32.cont [4/16] %v6468, 128
        %6533 = vxpose.xlu0.b32.cont [5/16] 0.0, 128
        %6534 = vxpose.xlu0.b32.cont [6/16] 0.0, 128
        %6535 = vxpose.xlu0.b32.cont [7/16] 0.0, 128
        %6536 = vxpose.xlu0.b32.cont [8/16] 0.0, 128
        %6537 = vxpose.xlu0.b32.cont [9/16] 0.0, 128
        %6538 = vxpose.xlu0.b32.cont [10/16] 0.0, 128
        %6539 = vxpose.xlu0.b32.cont [11/16] 0.0, 128
        %6540 = vxpose.xlu0.b32.cont [12/16] 0.0, 128
        %6541 = vxpose.xlu0.b32.cont [13/16] 0.0, 128
        %6542 = vxpose.xlu0.b32.cont [14/16] 0.0, 128
        %6543 = vxpose.xlu0.b32.cont [15/16] 0.0, 128
        %6544 = vxpose.xlu0.b32.end [16/16] 0.0, 128
        %v6545 = vpop.trf.xlu0
        %v6546 = vpop.trf.xlu0
        %v6547 = vpop.trf.xlu0
        %v6548 = vpop.trf.xlu0
        %v6549 = vpop.trf.xlu0
        %v6550 = vpop.trf.xlu0
        %v6551 = vpop.trf.xlu0
        %v6552 = vpop.trf.xlu0
        %v6553 = vpop.trf.xlu0
        %v6554 = vpop.trf.xlu0
        %v6555 = vpop.trf.xlu0
        %v6556 = vpop.trf.xlu0
        %v6557 = vpop.trf.xlu0
        %v6558 = vpop.trf.xlu0
        %v6559 = vpop.trf.xlu0
        %v6560 = vpop.trf.xlu0
        %6561 = vxpose.xlu0.b32.start [1/16] %v6474, 128
        %6562 = vxpose.xlu0.b32.cont [2/16] %v6476, 128
        %6563 = vxpose.xlu0.b32.cont [3/16] %v6478, 128
        %6564 = vxpose.xlu0.b32.cont [4/16] %v6480, 128
        %6565 = vxpose.xlu0.b32.cont [5/16] 0.0, 128
        %6566 = vxpose.xlu0.b32.cont [6/16] 0.0, 128
        %6567 = vxpose.xlu0.b32.cont [7/16] 0.0, 128
        %6568 = vxpose.xlu0.b32.cont [8/16] 0.0, 128
        %6569 = vxpose.xlu0.b32.cont [9/16] 0.0, 128
        %6570 = vxpose.xlu0.b32.cont [10/16] 0.0, 128
        %6571 = vxpose.xlu0.b32.cont [11/16] 0.0, 128
        %6572 = vxpose.xlu0.b32.cont [12/16] 0.0, 128
        %6573 = vxpose.xlu0.b32.cont [13/16] 0.0, 128
        %6574 = vxpose.xlu0.b32.cont [14/16] 0.0, 128
        %6575 = vxpose.xlu0.b32.cont [15/16] 0.0, 128
        %6576 = vxpose.xlu0.b32.end [16/16] 0.0, 128
        %v6577 = vpop.trf.xlu0
        %v6578 = vpop.trf.xlu0
        %v6579 = vpop.trf.xlu0
        %v6580 = vpop.trf.xlu0
        %v6581 = vpop.trf.xlu0
        %v6582 = vpop.trf.xlu0
        %v6583 = vpop.trf.xlu0
        %v6584 = vpop.trf.xlu0
        %v6585 = vpop.trf.xlu0
        %v6586 = vpop.trf.xlu0
        %v6587 = vpop.trf.xlu0
        %v6588 = vpop.trf.xlu0
        %v6589 = vpop.trf.xlu0
        %v6590 = vpop.trf.xlu0
        %v6591 = vpop.trf.xlu0
        %v6592 = vpop.trf.xlu0
        %6593 = vxpose.xlu0.b32.start [1/16] %v6486, 128
        %6594 = vxpose.xlu0.b32.cont [2/16] %v6488, 128
        %6595 = vxpose.xlu0.b32.cont [3/16] %v6490, 128
        %6596 = vxpose.xlu0.b32.cont [4/16] %v6492, 128
        %6597 = vxpose.xlu0.b32.cont [5/16] 0.0, 128
        %6598 = vxpose.xlu0.b32.cont [6/16] 0.0, 128
        %6599 = vxpose.xlu0.b32.cont [7/16] 0.0, 128
        %6600 = vxpose.xlu0.b32.cont [8/16] 0.0, 128
        %6601 = vxpose.xlu0.b32.cont [9/16] 0.0, 128
        %6602 = vxpose.xlu0.b32.cont [10/16] 0.0, 128
        %6603 = vxpose.xlu0.b32.cont [11/16] 0.0, 128
        %6604 = vxpose.xlu0.b32.cont [12/16] 0.0, 128
        %6605 = vxpose.xlu0.b32.cont [13/16] 0.0, 128
        %6606 = vxpose.xlu0.b32.cont [14/16] 0.0, 128
        %6607 = vxpose.xlu0.b32.cont [15/16] 0.0, 128
        %6608 = vxpose.xlu0.b32.end [16/16] 0.0, 128
        %v6609 = vpop.trf.xlu0
        %v6610 = vpop.trf.xlu0
        %v6611 = vpop.trf.xlu0
        %v6612 = vpop.trf.xlu0
        %v6613 = vpop.trf.xlu0
        %v6614 = vpop.trf.xlu0
        %v6615 = vpop.trf.xlu0
        %v6616 = vpop.trf.xlu0
        %v6617 = vpop.trf.xlu0
        %v6618 = vpop.trf.xlu0
        %v6619 = vpop.trf.xlu0
        %v6620 = vpop.trf.xlu0
        %v6621 = vpop.trf.xlu0
        %v6622 = vpop.trf.xlu0
        %v6623 = vpop.trf.xlu0
        %v6624 = vpop.trf.xlu0
        %v6625 = vsel %vm918, %v668, 0
        %6627 = vmatprep.subr.mxu0 0.0
        %6628 = vmatpush1.msra.mxu0 0.0
        %6629 = vmatprep.subr.mxu0 0.0
        %6630 = vmatpush1.msra.mxu0 0.0
        %6631 = vmatprep.subr.mxu0 0.0
        %6632 = vmatpush1.msra.mxu0 0.0
        %6633 = vmatprep.subr.mxu0 0.0
        %6634 = vmatpush1.msra.mxu0 0.0
        %6635 = vmatprep.subr.mxu0 0.0
        %6636 = vmatpush1.msra.mxu0 0.0
        %6637 = vmatprep.subr.mxu0 0.0
        %6638 = vmatpush1.msra.mxu0 0.0
        %6639 = vmatprep.subr.mxu0 0.0
        %6640 = vmatpush1.msra.mxu0 0.0
        %6641 = vmatprep.subr.mxu0 0.0
        %6642 = vmatpush1.msra.mxu0 0.0
        %6643 = vmatprep.subr.mxu0 0.0
        %6644 = vmatpush1.msra.mxu0 0.0
        %6645 = vmatprep.subr.mxu0 0.0
        %6646 = vmatpush1.msra.mxu0 0.0
        %6647 = vmatprep.subr.mxu0 0.0
        %6648 = vmatpush1.msra.mxu0 0.0
        %6649 = vmatprep.subr.mxu0 0.0
        %6650 = vmatpush1.msra.mxu0 0.0
        %6651 = vmatprep.subr.mxu0 0.0
        %6652 = vmatpush1.msra.mxu0 0.0
        %6653 = vmatprep.subr.mxu0 0.0
        %6654 = vmatpush1.msra.mxu0 0.0
        %6655 = vmatprep.subr.mxu0 0.0
        %6656 = vmatpush1.msra.mxu0 %v6514
        %6657 = vmatprep.subr.mxu0 0.0
        %6658 = vmatpush1.msra.mxu0 %v6513
        %6659 = vmatprep.subr.mxu0 0.0
        %6660 = vmatpush2.msra.mxu0 0.0
        %6661 = vmatprep.subr.mxu0 0.0
        %6662 = vmatpush2.msra.mxu0 0.0
        %6663 = vmatprep.subr.mxu0 0.0
        %6664 = vmatpush2.msra.mxu0 0.0
        %6665 = vmatprep.subr.mxu0 0.0
        %6666 = vmatpush2.msra.mxu0 0.0
        %6667 = vmatprep.subr.mxu0 0.0
        %6668 = vmatpush2.msra.mxu0 0.0
        %6669 = vmatprep.subr.mxu0 0.0
        %6670 = vmatpush2.msra.mxu0 0.0
        %6671 = vmatprep.subr.mxu0 0.0
        %6672 = vmatpush2.msra.mxu0 0.0
        %6673 = vmatprep.subr.mxu0 0.0
        %6674 = vmatpush2.msra.mxu0 0.0
        %6675 = vmatprep.subr.mxu0 0.0
        %6676 = vmatpush2.msra.mxu0 0.0
        %6677 = vmatprep.subr.mxu0 0.0
        %6678 = vmatpush2.msra.mxu0 0.0
        %6679 = vmatprep.subr.mxu0 0.0
        %6680 = vmatpush2.msra.mxu0 0.0
        %6681 = vmatprep.subr.mxu0 0.0
        %6682 = vmatpush2.msra.mxu0 0.0
        %6683 = vmatprep.subr.mxu0 0.0
        %6684 = vmatpush2.msra.mxu0 0.0
        %6685 = vmatprep.subr.mxu0 0.0
        %6686 = vmatpush2.msra.mxu0 0.0
        %6687 = vmatprep.subr.mxu0 0.0
        %6688 = vmatpush2.msra.mxu0 0.0
        %6689 = vmatprep.subr.mxu0 0.0
        %6690 = vmatpush2.msra.mxu0 0.0
        %6691 = vmatprep.mubr.f32.mxu0 0.0
        %6692 = vmatmul.mubr.f32.gmra.mxu0 %v6625
        %v6693 = vpop.f32.mrf.mxu0
        %v6694 = vadd.f32 0.0, %v6693
        %v6695 = vpop.f32.mrf.mxu0
        %6696 = vdwg.mxu0
        %v6697 = vsel %vm918, %v6452, 0
        %6699 = vmatprep.subr.mxu0 0.0
        %6700 = vmatpush1.msra.mxu0 0.0
        %6701 = vmatprep.subr.mxu0 0.0
        %6702 = vmatpush1.msra.mxu0 0.0
        %6703 = vmatprep.subr.mxu0 0.0
        %6704 = vmatpush1.msra.mxu0 0.0
        %6705 = vmatprep.subr.mxu0 0.0
        %6706 = vmatpush1.msra.mxu0 0.0
        %6707 = vmatprep.subr.mxu0 0.0
        %6708 = vmatpush1.msra.mxu0 0.0
        %6709 = vmatprep.subr.mxu0 0.0
        %6710 = vmatpush1.msra.mxu0 0.0
        %6711 = vmatprep.subr.mxu0 0.0
        %6712 = vmatpush1.msra.mxu0 0.0
        %6713 = vmatprep.subr.mxu0 0.0
        %6714 = vmatpush1.msra.mxu0 0.0
        %6715 = vmatprep.subr.mxu0 0.0
        %6716 = vmatpush1.msra.mxu0 0.0
        %6717 = vmatprep.subr.mxu0 0.0
        %6718 = vmatpush1.msra.mxu0 0.0
        %6719 = vmatprep.subr.mxu0 0.0
        %6720 = vmatpush1.msra.mxu0 0.0
        %6721 = vmatprep.subr.mxu0 0.0
        %6722 = vmatpush1.msra.mxu0 0.0
        %6723 = vmatprep.subr.mxu0 0.0
        %6724 = vmatpush1.msra.mxu0 0.0
        %6725 = vmatprep.subr.mxu0 0.0
        %6726 = vmatpush1.msra.mxu0 0.0
        %6727 = vmatprep.subr.mxu0 0.0
        %6728 = vmatpush1.msra.mxu0 %v6546
        %6729 = vmatprep.subr.mxu0 0.0
        %6730 = vmatpush1.msra.mxu0 %v6545
        %6731 = vmatprep.subr.mxu0 0.0
        %6732 = vmatpush2.msra.mxu0 0.0
        %6733 = vmatprep.subr.mxu0 0.0
        %6734 = vmatpush2.msra.mxu0 0.0
        %6735 = vmatprep.subr.mxu0 0.0
        %6736 = vmatpush2.msra.mxu0 0.0
        %6737 = vmatprep.subr.mxu0 0.0
        %6738 = vmatpush2.msra.mxu0 0.0
        %6739 = vmatprep.subr.mxu0 0.0
        %6740 = vmatpush2.msra.mxu0 0.0
        %6741 = vmatprep.subr.mxu0 0.0
        %6742 = vmatpush2.msra.mxu0 0.0
        %6743 = vmatprep.subr.mxu0 0.0
        %6744 = vmatpush2.msra.mxu0 0.0
        %6745 = vmatprep.subr.mxu0 0.0
        %6746 = vmatpush2.msra.mxu0 0.0
        %6747 = vmatprep.subr.mxu0 0.0
        %6748 = vmatpush2.msra.mxu0 0.0
        %6749 = vmatprep.subr.mxu0 0.0
        %6750 = vmatpush2.msra.mxu0 0.0
        %6751 = vmatprep.subr.mxu0 0.0
        %6752 = vmatpush2.msra.mxu0 0.0
        %6753 = vmatprep.subr.mxu0 0.0
        %6754 = vmatpush2.msra.mxu0 0.0
        %6755 = vmatprep.subr.mxu0 0.0
        %6756 = vmatpush2.msra.mxu0 0.0
        %6757 = vmatprep.subr.mxu0 0.0
        %6758 = vmatpush2.msra.mxu0 0.0
        %6759 = vmatprep.subr.mxu0 0.0
        %6760 = vmatpush2.msra.mxu0 0.0
        %6761 = vmatprep.subr.mxu0 0.0
        %6762 = vmatpush2.msra.mxu0 0.0
        %6763 = vmatprep.mubr.f32.mxu0 0.0
        %6764 = vmatmul.mubr.f32.gmra.mxu0 %v6697
        %v6765 = vpop.f32.mrf.mxu0
        %v6766 = vadd.f32 0.0, %v6765
        %v6767 = vpop.f32.mrf.mxu0
        %6768 = vdwg.mxu0
        %v6769 = vsel %vm918, %v6454, 0
        %6771 = vmatprep.subr.mxu0 0.0
        %6772 = vmatpush1.msra.mxu0 0.0
        %6773 = vmatprep.subr.mxu0 0.0
        %6774 = vmatpush1.msra.mxu0 0.0
        %6775 = vmatprep.subr.mxu0 0.0
        %6776 = vmatpush1.msra.mxu0 0.0
        %6777 = vmatprep.subr.mxu0 0.0
        %6778 = vmatpush1.msra.mxu0 0.0
        %6779 = vmatprep.subr.mxu0 0.0
        %6780 = vmatpush1.msra.mxu0 0.0
        %6781 = vmatprep.subr.mxu0 0.0
        %6782 = vmatpush1.msra.mxu0 0.0
        %6783 = vmatprep.subr.mxu0 0.0
        %6784 = vmatpush1.msra.mxu0 0.0
        %6785 = vmatprep.subr.mxu0 0.0
        %6786 = vmatpush1.msra.mxu0 0.0
        %6787 = vmatprep.subr.mxu0 0.0
        %6788 = vmatpush1.msra.mxu0 0.0
        %6789 = vmatprep.subr.mxu0 0.0
        %6790 = vmatpush1.msra.mxu0 0.0
        %6791 = vmatprep.subr.mxu0 0.0
        %6792 = vmatpush1.msra.mxu0 0.0
        %6793 = vmatprep.subr.mxu0 0.0
        %6794 = vmatpush1.msra.mxu0 0.0
        %6795 = vmatprep.subr.mxu0 0.0
        %6796 = vmatpush1.msra.mxu0 0.0
        %6797 = vmatprep.subr.mxu0 0.0
        %6798 = vmatpush1.msra.mxu0 0.0
        %6799 = vmatprep.subr.mxu0 0.0
        %6800 = vmatpush1.msra.mxu0 %v6578
        %6801 = vmatprep.subr.mxu0 0.0
        %6802 = vmatpush1.msra.mxu0 %v6577
        %6803 = vmatprep.subr.mxu0 0.0
        %6804 = vmatpush2.msra.mxu0 0.0
        %6805 = vmatprep.subr.mxu0 0.0
        %6806 = vmatpush2.msra.mxu0 0.0
        %6807 = vmatprep.subr.mxu0 0.0
        %6808 = vmatpush2.msra.mxu0 0.0
        %6809 = vmatprep.subr.mxu0 0.0
        %6810 = vmatpush2.msra.mxu0 0.0
        %6811 = vmatprep.subr.mxu0 0.0
        %6812 = vmatpush2.msra.mxu0 0.0
        %6813 = vmatprep.subr.mxu0 0.0
        %6814 = vmatpush2.msra.mxu0 0.0
        %6815 = vmatprep.subr.mxu0 0.0
        %6816 = vmatpush2.msra.mxu0 0.0
        %6817 = vmatprep.subr.mxu0 0.0
        %6818 = vmatpush2.msra.mxu0 0.0
        %6819 = vmatprep.subr.mxu0 0.0
        %6820 = vmatpush2.msra.mxu0 0.0
        %6821 = vmatprep.subr.mxu0 0.0
        %6822 = vmatpush2.msra.mxu0 0.0
        %6823 = vmatprep.subr.mxu0 0.0
        %6824 = vmatpush2.msra.mxu0 0.0
        %6825 = vmatprep.subr.mxu0 0.0
        %6826 = vmatpush2.msra.mxu0 0.0
        %6827 = vmatprep.subr.mxu0 0.0
        %6828 = vmatpush2.msra.mxu0 0.0
        %6829 = vmatprep.subr.mxu0 0.0
        %6830 = vmatpush2.msra.mxu0 0.0
        %6831 = vmatprep.subr.mxu0 0.0
        %6832 = vmatpush2.msra.mxu0 0.0
        %6833 = vmatprep.subr.mxu0 0.0
        %6834 = vmatpush2.msra.mxu0 0.0
        %6835 = vmatprep.mubr.f32.mxu0 0.0
        %6836 = vmatmul.mubr.f32.gmra.mxu0 %v6769
        %v6837 = vpop.f32.mrf.mxu0
        %v6838 = vadd.f32 0.0, %v6837
        %v6839 = vpop.f32.mrf.mxu0
        %6840 = vdwg.mxu0
        %v6841 = vsel %vm918, %v6456, 0
        %6843 = vmatprep.subr.mxu0 0.0
        %6844 = vmatpush1.msra.mxu0 0.0
        %6845 = vmatprep.subr.mxu0 0.0
        %6846 = vmatpush1.msra.mxu0 0.0
        %6847 = vmatprep.subr.mxu0 0.0
        %6848 = vmatpush1.msra.mxu0 0.0
        %6849 = vmatprep.subr.mxu0 0.0
        %6850 = vmatpush1.msra.mxu0 0.0
        %6851 = vmatprep.subr.mxu0 0.0
        %6852 = vmatpush1.msra.mxu0 0.0
        %6853 = vmatprep.subr.mxu0 0.0
        %6854 = vmatpush1.msra.mxu0 0.0
        %6855 = vmatprep.subr.mxu0 0.0
        %6856 = vmatpush1.msra.mxu0 0.0
        %6857 = vmatprep.subr.mxu0 0.0
        %6858 = vmatpush1.msra.mxu0 0.0
        %6859 = vmatprep.subr.mxu0 0.0
        %6860 = vmatpush1.msra.mxu0 0.0
        %6861 = vmatprep.subr.mxu0 0.0
        %6862 = vmatpush1.msra.mxu0 0.0
        %6863 = vmatprep.subr.mxu0 0.0
        %6864 = vmatpush1.msra.mxu0 0.0
        %6865 = vmatprep.subr.mxu0 0.0
        %6866 = vmatpush1.msra.mxu0 0.0
        %6867 = vmatprep.subr.mxu0 0.0
        %6868 = vmatpush1.msra.mxu0 0.0
        %6869 = vmatprep.subr.mxu0 0.0
        %6870 = vmatpush1.msra.mxu0 0.0
        %6871 = vmatprep.subr.mxu0 0.0
        %6872 = vmatpush1.msra.mxu0 %v6610
        %6873 = vmatprep.subr.mxu0 0.0
        %6874 = vmatpush1.msra.mxu0 %v6609
        %6875 = vmatprep.subr.mxu0 0.0
        %6876 = vmatpush2.msra.mxu0 0.0
        %6877 = vmatprep.subr.mxu0 0.0
        %6878 = vmatpush2.msra.mxu0 0.0
        %6879 = vmatprep.subr.mxu0 0.0
        %6880 = vmatpush2.msra.mxu0 0.0
        %6881 = vmatprep.subr.mxu0 0.0
        %6882 = vmatpush2.msra.mxu0 0.0
        %6883 = vmatprep.subr.mxu0 0.0
        %6884 = vmatpush2.msra.mxu0 0.0
        %6885 = vmatprep.subr.mxu0 0.0
        %6886 = vmatpush2.msra.mxu0 0.0
        %6887 = vmatprep.subr.mxu0 0.0
        %6888 = vmatpush2.msra.mxu0 0.0
        %6889 = vmatprep.subr.mxu0 0.0
        %6890 = vmatpush2.msra.mxu0 0.0
        %6891 = vmatprep.subr.mxu0 0.0
        %6892 = vmatpush2.msra.mxu0 0.0
        %6893 = vmatprep.subr.mxu0 0.0
        %6894 = vmatpush2.msra.mxu0 0.0
        %6895 = vmatprep.subr.mxu0 0.0
        %6896 = vmatpush2.msra.mxu0 0.0
        %6897 = vmatprep.subr.mxu0 0.0
        %6898 = vmatpush2.msra.mxu0 0.0
        %6899 = vmatprep.subr.mxu0 0.0
        %6900 = vmatpush2.msra.mxu0 0.0
        %6901 = vmatprep.subr.mxu0 0.0
        %6902 = vmatpush2.msra.mxu0 0.0
        %6903 = vmatprep.subr.mxu0 0.0
        %6904 = vmatpush2.msra.mxu0 0.0
        %6905 = vmatprep.subr.mxu0 0.0
        %6906 = vmatpush2.msra.mxu0 0.0
        %6907 = vmatprep.mubr.f32.mxu0 0.0
        %6908 = vmatmul.mubr.f32.gmra.mxu0 %v6841
        %v6909 = vpop.f32.mrf.mxu0
        %v6910 = vadd.f32 0.0, %v6909
        %v6911 = vpop.f32.mrf.mxu0
        %6912 = vdwg.mxu0
        %v6913 = vsel %vm521, %v6694, -inf
        %6914 = vmax.xlane.f32.xlu0 %v6913
        %v6915 = vpop.xlane.xlu0 %6914
        %v6916 = vsel %vm521, %v6766, -inf
        %6917 = vmax.xlane.f32.xlu0 %v6916
        %v6918 = vpop.xlane.xlu0 %6917
        %v6919 = vsel %vm521, %v6838, -inf
        %6920 = vmax.xlane.f32.xlu0 %v6919
        %v6921 = vpop.xlane.xlu0 %6920
        %v6922 = vsel %vm521, %v6910, -inf
        %6923 = vmax.xlane.f32.xlu0 %v6922
        %v6924 = vpop.xlane.xlu0 %6923
        %v6925 = vsub.f32 %v6694, %v6915
        %v6926 = vsub.f32 %v6766, %v6918
        %v6927 = vsub.f32 %v6838, %v6921
        %v6928 = vsub.f32 %v6910, %v6924
        %v6929 = vmul.f32 %v6925, 1.442695
        %v6930 = vpow.pop %v6929
        %v6931 = vmul.f32 %v6926, 1.442695
        %v6932 = vpow.pop %v6931
        %v6933 = vmul.f32 %v6927, 1.442695
        %v6934 = vpow.pop %v6933
        %v6935 = vmul.f32 %v6928, 1.442695
        %v6936 = vpow.pop %v6935
        %v6937 = vsel %vm521, %v6930, 0.0
        %6938 = vadd.xlane.f32.xlu0 %v6937
        %v6939 = vpop.xlane.xlu0 %6938
        %v6940 = vsel %vm521, %v6932, 0.0
        %6941 = vadd.xlane.f32.xlu0 %v6940
        %v6942 = vpop.xlane.xlu0 %6941
        %v6943 = vsel %vm521, %v6934, 0.0
        %6944 = vadd.xlane.f32.xlu0 %v6943
        %v6945 = vpop.xlane.xlu0 %6944
        %v6946 = vsel %vm521, %v6936, 0.0
        %6947 = vadd.xlane.f32.xlu0 %v6946
        %v6948 = vpop.xlane.xlu0 %6947
        %v6949 = vrcp.pop %v6939
        %v6950 = vrcp.pop %v6942
        %v6951 = vrcp.pop %v6945
        %v6952 = vrcp.pop %v6948
        %v6953 = vmul.f32 %v6930, %v6949
        %v6954 = vmul.f32 %v6932, %v6950
        %v6955 = vmul.f32 %v6934, %v6951
        %v6956 = vmul.f32 %v6936, %v6952
        %6957 = vrot.lane.b32.xlu0 %v6432, 64
        %v6958 = vpop.permute.xlu0 %6957
        %6959 = vrot.lane.b32.xlu0 %v6437, 64
        %v6960 = vpop.permute.xlu0 %6959
        %6961 = vrot.lane.b32.xlu0 %v6442, 64
        %v6962 = vpop.permute.xlu0 %6961
        %6963 = vrot.lane.b32.xlu0 %v6447, 64
        %v6964 = vpop.permute.xlu0 %6963
        %6965 = vrot.lane.b32.xlu0 %v6462, 64
        %v6966 = vpop.permute.xlu0 %6965
        %6967 = vrot.lane.b32.xlu0 %v6464, 64
        %v6968 = vpop.permute.xlu0 %6967
        %6969 = vrot.lane.b32.xlu0 %v6466, 64
        %v6970 = vpop.permute.xlu0 %6969
        %6971 = vrot.lane.b32.xlu0 %v6468, 64
        %v6972 = vpop.permute.xlu0 %6971
        %6973 = vrot.lane.b32.xlu0 %v6474, 64
        %v6974 = vpop.permute.xlu0 %6973
        %6975 = vrot.lane.b32.xlu0 %v6476, 64
        %v6976 = vpop.permute.xlu0 %6975
        %6977 = vrot.lane.b32.xlu0 %v6478, 64
        %v6978 = vpop.permute.xlu0 %6977
        %6979 = vrot.lane.b32.xlu0 %v6480, 64
        %v6980 = vpop.permute.xlu0 %6979
        %6981 = vrot.lane.b32.xlu0 %v6486, 64
        %v6982 = vpop.permute.xlu0 %6981
        %6983 = vrot.lane.b32.xlu0 %v6488, 64
        %v6984 = vpop.permute.xlu0 %6983
        %6985 = vrot.lane.b32.xlu0 %v6490, 64
        %v6986 = vpop.permute.xlu0 %6985
        %6987 = vrot.lane.b32.xlu0 %v6492, 64
        %v6988 = vpop.permute.xlu0 %6987
        %7005 = vxpose.xlu0.b32.start [1/16] %v6958, 128
        %7006 = vxpose.xlu0.b32.cont [2/16] %v6960, 128
        %7007 = vxpose.xlu0.b32.cont [3/16] %v6962, 128
        %7008 = vxpose.xlu0.b32.cont [4/16] %v6964, 128
        %7009 = vxpose.xlu0.b32.cont [5/16] 0.0, 128
        %7010 = vxpose.xlu0.b32.cont [6/16] 0.0, 128
        %7011 = vxpose.xlu0.b32.cont [7/16] 0.0, 128
        %7012 = vxpose.xlu0.b32.cont [8/16] 0.0, 128
        %7013 = vxpose.xlu0.b32.cont [9/16] 0.0, 128
        %7014 = vxpose.xlu0.b32.cont [10/16] 0.0, 128
        %7015 = vxpose.xlu0.b32.cont [11/16] 0.0, 128
        %7016 = vxpose.xlu0.b32.cont [12/16] 0.0, 128
        %7017 = vxpose.xlu0.b32.cont [13/16] 0.0, 128
        %7018 = vxpose.xlu0.b32.cont [14/16] 0.0, 128
        %7019 = vxpose.xlu0.b32.cont [15/16] 0.0, 128
        %7020 = vxpose.xlu0.b32.end [16/16] 0.0, 128
        %v7021 = vpop.trf.xlu0
        %v7022 = vpop.trf.xlu0
        %v7023 = vpop.trf.xlu0
        %v7024 = vpop.trf.xlu0
        %v7025 = vpop.trf.xlu0
        %v7026 = vpop.trf.xlu0
        %v7027 = vpop.trf.xlu0
        %v7028 = vpop.trf.xlu0
        %v7029 = vpop.trf.xlu0
        %v7030 = vpop.trf.xlu0
        %v7031 = vpop.trf.xlu0
        %v7032 = vpop.trf.xlu0
        %v7033 = vpop.trf.xlu0
        %v7034 = vpop.trf.xlu0
        %v7035 = vpop.trf.xlu0
        %v7036 = vpop.trf.xlu0
        %7037 = vxpose.xlu0.b32.start [1/16] %v6966, 128
        %7038 = vxpose.xlu0.b32.cont [2/16] %v6968, 128
        %7039 = vxpose.xlu0.b32.cont [3/16] %v6970, 128
        %7040 = vxpose.xlu0.b32.cont [4/16] %v6972, 128
        %7041 = vxpose.xlu0.b32.cont [5/16] 0.0, 128
        %7042 = vxpose.xlu0.b32.cont [6/16] 0.0, 128
        %7043 = vxpose.xlu0.b32.cont [7/16] 0.0, 128
        %7044 = vxpose.xlu0.b32.cont [8/16] 0.0, 128
        %7045 = vxpose.xlu0.b32.cont [9/16] 0.0, 128
        %7046 = vxpose.xlu0.b32.cont [10/16] 0.0, 128
        %7047 = vxpose.xlu0.b32.cont [11/16] 0.0, 128
        %7048 = vxpose.xlu0.b32.cont [12/16] 0.0, 128
        %7049 = vxpose.xlu0.b32.cont [13/16] 0.0, 128
        %7050 = vxpose.xlu0.b32.cont [14/16] 0.0, 128
        %7051 = vxpose.xlu0.b32.cont [15/16] 0.0, 128
        %7052 = vxpose.xlu0.b32.end [16/16] 0.0, 128
        %v7053 = vpop.trf.xlu0
        %v7054 = vpop.trf.xlu0
        %v7055 = vpop.trf.xlu0
        %v7056 = vpop.trf.xlu0
        %v7057 = vpop.trf.xlu0
        %v7058 = vpop.trf.xlu0
        %v7059 = vpop.trf.xlu0
        %v7060 = vpop.trf.xlu0
        %v7061 = vpop.trf.xlu0
        %v7062 = vpop.trf.xlu0
        %v7063 = vpop.trf.xlu0
        %v7064 = vpop.trf.xlu0
        %v7065 = vpop.trf.xlu0
        %v7066 = vpop.trf.xlu0
        %v7067 = vpop.trf.xlu0
        %v7068 = vpop.trf.xlu0
        %7069 = vxpose.xlu0.b32.start [1/16] %v6974, 128
        %7070 = vxpose.xlu0.b32.cont [2/16] %v6976, 128
        %7071 = vxpose.xlu0.b32.cont [3/16] %v6978, 128
        %7072 = vxpose.xlu0.b32.cont [4/16] %v6980, 128
        %7073 = vxpose.xlu0.b32.cont [5/16] 0.0, 128
        %7074 = vxpose.xlu0.b32.cont [6/16] 0.0, 128
        %7075 = vxpose.xlu0.b32.cont [7/16] 0.0, 128
        %7076 = vxpose.xlu0.b32.cont [8/16] 0.0, 128
        %7077 = vxpose.xlu0.b32.cont [9/16] 0.0, 128
        %7078 = vxpose.xlu0.b32.cont [10/16] 0.0, 128
        %7079 = vxpose.xlu0.b32.cont [11/16] 0.0, 128
        %7080 = vxpose.xlu0.b32.cont [12/16] 0.0, 128
        %7081 = vxpose.xlu0.b32.cont [13/16] 0.0, 128
        %7082 = vxpose.xlu0.b32.cont [14/16] 0.0, 128
        %7083 = vxpose.xlu0.b32.cont [15/16] 0.0, 128
        %7084 = vxpose.xlu0.b32.end [16/16] 0.0, 128
        %v7085 = vpop.trf.xlu0
        %v7086 = vpop.trf.xlu0
        %v7087 = vpop.trf.xlu0
        %v7088 = vpop.trf.xlu0
        %v7089 = vpop.trf.xlu0
        %v7090 = vpop.trf.xlu0
        %v7091 = vpop.trf.xlu0
        %v7092 = vpop.trf.xlu0
        %v7093 = vpop.trf.xlu0
        %v7094 = vpop.trf.xlu0
        %v7095 = vpop.trf.xlu0
        %v7096 = vpop.trf.xlu0
        %v7097 = vpop.trf.xlu0
        %v7098 = vpop.trf.xlu0
        %v7099 = vpop.trf.xlu0
        %v7100 = vpop.trf.xlu0
        %7101 = vxpose.xlu0.b32.start [1/16] %v6982, 128
        %7102 = vxpose.xlu0.b32.cont [2/16] %v6984, 128
        %7103 = vxpose.xlu0.b32.cont [3/16] %v6986, 128
        %7104 = vxpose.xlu0.b32.cont [4/16] %v6988, 128
        %7105 = vxpose.xlu0.b32.cont [5/16] 0.0, 128
        %7106 = vxpose.xlu0.b32.cont [6/16] 0.0, 128
        %7107 = vxpose.xlu0.b32.cont [7/16] 0.0, 128
        %7108 = vxpose.xlu0.b32.cont [8/16] 0.0, 128
        %7109 = vxpose.xlu0.b32.cont [9/16] 0.0, 128
        %7110 = vxpose.xlu0.b32.cont [10/16] 0.0, 128
        %7111 = vxpose.xlu0.b32.cont [11/16] 0.0, 128
        %7112 = vxpose.xlu0.b32.cont [12/16] 0.0, 128
        %7113 = vxpose.xlu0.b32.cont [13/16] 0.0, 128
        %7114 = vxpose.xlu0.b32.cont [14/16] 0.0, 128
        %7115 = vxpose.xlu0.b32.cont [15/16] 0.0, 128
        %7116 = vxpose.xlu0.b32.end [16/16] 0.0, 128
        %v7117 = vpop.trf.xlu0
        %v7118 = vpop.trf.xlu0
        %v7119 = vpop.trf.xlu0
        %v7120 = vpop.trf.xlu0
        %v7121 = vpop.trf.xlu0
        %v7122 = vpop.trf.xlu0
        %v7123 = vpop.trf.xlu0
        %v7124 = vpop.trf.xlu0
        %v7125 = vpop.trf.xlu0
        %v7126 = vpop.trf.xlu0
        %v7127 = vpop.trf.xlu0
        %v7128 = vpop.trf.xlu0
        %v7129 = vpop.trf.xlu0
        %v7130 = vpop.trf.xlu0
        %v7131 = vpop.trf.xlu0
        %v7132 = vpop.trf.xlu0
        %v7134 = vsel %vm521, %v7021, 0
        %v7137 = vsel %vm521, %v7022, 0
        %v7140 = vsel %vm521, %v6953, 0
        %7142 = vmatprep.subr.mxu0 0.0
        %7143 = vmatpush1.xpose.msra.mxu0 0.0
        %7144 = vmatprep.subr.mxu0 0.0
        %7145 = vmatpush1.xpose.msra.mxu0 0.0
        %7146 = vmatprep.subr.mxu0 0.0
        %7147 = vmatpush1.xpose.msra.mxu0 0.0
        %7148 = vmatprep.subr.mxu0 0.0
        %7149 = vmatpush1.xpose.msra.mxu0 0.0
        %7150 = vmatprep.subr.mxu0 0.0
        %7151 = vmatpush1.xpose.msra.mxu0 0.0
        %7152 = vmatprep.subr.mxu0 0.0
        %7153 = vmatpush1.xpose.msra.mxu0 0.0
        %7154 = vmatprep.subr.mxu0 0.0
        %7155 = vmatpush1.xpose.msra.mxu0 0.0
        %7156 = vmatprep.subr.mxu0 0.0
        %7157 = vmatpush1.xpose.msra.mxu0 0.0
        %7158 = vmatprep.subr.mxu0 0.0
        %7159 = vmatpush1.xpose.msra.mxu0 0.0
        %7160 = vmatprep.subr.mxu0 0.0
        %7161 = vmatpush1.xpose.msra.mxu0 0.0
        %7162 = vmatprep.subr.mxu0 0.0
        %7163 = vmatpush1.xpose.msra.mxu0 0.0
        %7164 = vmatprep.subr.mxu0 0.0
        %7165 = vmatpush1.xpose.msra.mxu0 0.0
        %7166 = vmatprep.subr.mxu0 0.0
        %7167 = vmatpush1.xpose.msra.mxu0 0.0
        %7168 = vmatprep.subr.mxu0 0.0
        %7169 = vmatpush1.xpose.msra.mxu0 0.0
        %7170 = vmatprep.subr.mxu0 0.0
        %7171 = vmatpush1.xpose.msra.mxu0 0.0
        %7172 = vmatprep.subr.mxu0 0.0
        %7173 = vmatpush1.xpose.msra.mxu0 %v7140
        %7174 = vmatprep.subr.mxu0 0.0
        %7175 = vmatpush2.xpose.msra.mxu0 0.0
        %7176 = vmatprep.subr.mxu0 0.0
        %7177 = vmatpush2.xpose.msra.mxu0 0.0
        %7178 = vmatprep.subr.mxu0 0.0
        %7179 = vmatpush2.xpose.msra.mxu0 0.0
        %7180 = vmatprep.subr.mxu0 0.0
        %7181 = vmatpush2.xpose.msra.mxu0 0.0
        %7182 = vmatprep.subr.mxu0 0.0
        %7183 = vmatpush2.xpose.msra.mxu0 0.0
        %7184 = vmatprep.subr.mxu0 0.0
        %7185 = vmatpush2.xpose.msra.mxu0 0.0
        %7186 = vmatprep.subr.mxu0 0.0
        %7187 = vmatpush2.xpose.msra.mxu0 0.0
        %7188 = vmatprep.subr.mxu0 0.0
        %7189 = vmatpush2.xpose.msra.mxu0 0.0
        %7190 = vmatprep.subr.mxu0 0.0
        %7191 = vmatpush2.xpose.msra.mxu0 0.0
        %7192 = vmatprep.subr.mxu0 0.0
        %7193 = vmatpush2.xpose.msra.mxu0 0.0
        %7194 = vmatprep.subr.mxu0 0.0
        %7195 = vmatpush2.xpose.msra.mxu0 0.0
        %7196 = vmatprep.subr.mxu0 0.0
        %7197 = vmatpush2.xpose.msra.mxu0 0.0
        %7198 = vmatprep.subr.mxu0 0.0
        %7199 = vmatpush2.xpose.msra.mxu0 0.0
        %7200 = vmatprep.subr.mxu0 0.0
        %7201 = vmatpush2.xpose.msra.mxu0 0.0
        %7202 = vmatprep.subr.mxu0 0.0
        %7203 = vmatpush2.xpose.msra.mxu0 0.0
        %7204 = vmatprep.subr.mxu0 0.0
        %7205 = vmatpush2.xpose.msra.mxu0 0.0
        %7206 = vmatprep.mubr.f32.mxu0 0.0
        %7207 = vmatmul.mubr.f32.gmra.mxu0 %v7134
        %v7208 = vpop.f32.mrf.mxu0
        %v7209 = vadd.f32 0.0, %v7208
        %v7210 = vpop.f32.mrf.mxu0
        %7211 = vmatprep.mubr.f32.mxu0 0.0
        %7212 = vmatmul.mubr.f32.gmra.mxu0 %v7137
        %v7213 = vpop.f32.mrf.mxu0
        %v7214 = vadd.f32 0.0, %v7213
        %v7215 = vpop.f32.mrf.mxu0
        %7216 = vdwg.mxu0
        %v7218 = vsel %vm521, %v7053, 0
        %v7221 = vsel %vm521, %v7054, 0
        %v7224 = vsel %vm521, %v6954, 0
        %7226 = vmatprep.subr.mxu0 0.0
        %7227 = vmatpush1.xpose.msra.mxu0 0.0
        %7228 = vmatprep.subr.mxu0 0.0
        %7229 = vmatpush1.xpose.msra.mxu0 0.0
        %7230 = vmatprep.subr.mxu0 0.0
        %7231 = vmatpush1.xpose.msra.mxu0 0.0
        %7232 = vmatprep.subr.mxu0 0.0
        %7233 = vmatpush1.xpose.msra.mxu0 0.0
        %7234 = vmatprep.subr.mxu0 0.0
        %7235 = vmatpush1.xpose.msra.mxu0 0.0
        %7236 = vmatprep.subr.mxu0 0.0
        %7237 = vmatpush1.xpose.msra.mxu0 0.0
        %7238 = vmatprep.subr.mxu0 0.0
        %7239 = vmatpush1.xpose.msra.mxu0 0.0
        %7240 = vmatprep.subr.mxu0 0.0
        %7241 = vmatpush1.xpose.msra.mxu0 0.0
        %7242 = vmatprep.subr.mxu0 0.0
        %7243 = vmatpush1.xpose.msra.mxu0 0.0
        %7244 = vmatprep.subr.mxu0 0.0
        %7245 = vmatpush1.xpose.msra.mxu0 0.0
        %7246 = vmatprep.subr.mxu0 0.0
        %7247 = vmatpush1.xpose.msra.mxu0 0.0
        %7248 = vmatprep.subr.mxu0 0.0
        %7249 = vmatpush1.xpose.msra.mxu0 0.0
        %7250 = vmatprep.subr.mxu0 0.0
        %7251 = vmatpush1.xpose.msra.mxu0 0.0
        %7252 = vmatprep.subr.mxu0 0.0
        %7253 = vmatpush1.xpose.msra.mxu0 0.0
        %7254 = vmatprep.subr.mxu0 0.0
        %7255 = vmatpush1.xpose.msra.mxu0 0.0
        %7256 = vmatprep.subr.mxu0 0.0
        %7257 = vmatpush1.xpose.msra.mxu0 %v7224
        %7258 = vmatprep.subr.mxu0 0.0
        %7259 = vmatpush2.xpose.msra.mxu0 0.0
        %7260 = vmatprep.subr.mxu0 0.0
        %7261 = vmatpush2.xpose.msra.mxu0 0.0
        %7262 = vmatprep.subr.mxu0 0.0
        %7263 = vmatpush2.xpose.msra.mxu0 0.0
        %7264 = vmatprep.subr.mxu0 0.0
        %7265 = vmatpush2.xpose.msra.mxu0 0.0
        %7266 = vmatprep.subr.mxu0 0.0
        %7267 = vmatpush2.xpose.msra.mxu0 0.0
        %7268 = vmatprep.subr.mxu0 0.0
        %7269 = vmatpush2.xpose.msra.mxu0 0.0
        %7270 = vmatprep.subr.mxu0 0.0
        %7271 = vmatpush2.xpose.msra.mxu0 0.0
        %7272 = vmatprep.subr.mxu0 0.0
        %7273 = vmatpush2.xpose.msra.mxu0 0.0
        %7274 = vmatprep.subr.mxu0 0.0
        %7275 = vmatpush2.xpose.msra.mxu0 0.0
        %7276 = vmatprep.subr.mxu0 0.0
        %7277 = vmatpush2.xpose.msra.mxu0 0.0
        %7278 = vmatprep.subr.mxu0 0.0
        %7279 = vmatpush2.xpose.msra.mxu0 0.0
        %7280 = vmatprep.subr.mxu0 0.0
        %7281 = vmatpush2.xpose.msra.mxu0 0.0
        %7282 = vmatprep.subr.mxu0 0.0
        %7283 = vmatpush2.xpose.msra.mxu0 0.0
        %7284 = vmatprep.subr.mxu0 0.0
        %7285 = vmatpush2.xpose.msra.mxu0 0.0
        %7286 = vmatprep.subr.mxu0 0.0
        %7287 = vmatpush2.xpose.msra.mxu0 0.0
        %7288 = vmatprep.subr.mxu0 0.0
        %7289 = vmatpush2.xpose.msra.mxu0 0.0
        %7290 = vmatprep.mubr.f32.mxu0 0.0
        %7291 = vmatmul.mubr.f32.gmra.mxu0 %v7218
        %v7292 = vpop.f32.mrf.mxu0
        %v7293 = vadd.f32 0.0, %v7292
        %v7294 = vpop.f32.mrf.mxu0
        %7295 = vmatprep.mubr.f32.mxu0 0.0
        %7296 = vmatmul.mubr.f32.gmra.mxu0 %v7221
        %v7297 = vpop.f32.mrf.mxu0
        %v7298 = vadd.f32 0.0, %v7297
        %v7299 = vpop.f32.mrf.mxu0
        %7300 = vdwg.mxu0
        %v7302 = vsel %vm521, %v7085, 0
        %v7305 = vsel %vm521, %v7086, 0
        %v7308 = vsel %vm521, %v6955, 0
        %7310 = vmatprep.subr.mxu0 0.0
        %7311 = vmatpush1.xpose.msra.mxu0 0.0
        %7312 = vmatprep.subr.mxu0 0.0
        %7313 = vmatpush1.xpose.msra.mxu0 0.0
        %7314 = vmatprep.subr.mxu0 0.0
        %7315 = vmatpush1.xpose.msra.mxu0 0.0
        %7316 = vmatprep.subr.mxu0 0.0
        %7317 = vmatpush1.xpose.msra.mxu0 0.0
        %7318 = vmatprep.subr.mxu0 0.0
        %7319 = vmatpush1.xpose.msra.mxu0 0.0
        %7320 = vmatprep.subr.mxu0 0.0
        %7321 = vmatpush1.xpose.msra.mxu0 0.0
        %7322 = vmatprep.subr.mxu0 0.0
        %7323 = vmatpush1.xpose.msra.mxu0 0.0
        %7324 = vmatprep.subr.mxu0 0.0
        %7325 = vmatpush1.xpose.msra.mxu0 0.0
        %7326 = vmatprep.subr.mxu0 0.0
        %7327 = vmatpush1.xpose.msra.mxu0 0.0
        %7328 = vmatprep.subr.mxu0 0.0
        %7329 = vmatpush1.xpose.msra.mxu0 0.0
        %7330 = vmatprep.subr.mxu0 0.0
        %7331 = vmatpush1.xpose.msra.mxu0 0.0
        %7332 = vmatprep.subr.mxu0 0.0
        %7333 = vmatpush1.xpose.msra.mxu0 0.0
        %7334 = vmatprep.subr.mxu0 0.0
        %7335 = vmatpush1.xpose.msra.mxu0 0.0
        %7336 = vmatprep.subr.mxu0 0.0
        %7337 = vmatpush1.xpose.msra.mxu0 0.0
        %7338 = vmatprep.subr.mxu0 0.0
        %7339 = vmatpush1.xpose.msra.mxu0 0.0
        %7340 = vmatprep.subr.mxu0 0.0
        %7341 = vmatpush1.xpose.msra.mxu0 %v7308
        %7342 = vmatprep.subr.mxu0 0.0
        %7343 = vmatpush2.xpose.msra.mxu0 0.0
        %7344 = vmatprep.subr.mxu0 0.0
        %7345 = vmatpush2.xpose.msra.mxu0 0.0
        %7346 = vmatprep.subr.mxu0 0.0
        %7347 = vmatpush2.xpose.msra.mxu0 0.0
        %7348 = vmatprep.subr.mxu0 0.0
        %7349 = vmatpush2.xpose.msra.mxu0 0.0
        %7350 = vmatprep.subr.mxu0 0.0
        %7351 = vmatpush2.xpose.msra.mxu0 0.0
        %7352 = vmatprep.subr.mxu0 0.0
        %7353 = vmatpush2.xpose.msra.mxu0 0.0
        %7354 = vmatprep.subr.mxu0 0.0
        %7355 = vmatpush2.xpose.msra.mxu0 0.0
        %7356 = vmatprep.subr.mxu0 0.0
        %7357 = vmatpush2.xpose.msra.mxu0 0.0
        %7358 = vmatprep.subr.mxu0 0.0
        %7359 = vmatpush2.xpose.msra.mxu0 0.0
        %7360 = vmatprep.subr.mxu0 0.0
        %7361 = vmatpush2.xpose.msra.mxu0 0.0
        %7362 = vmatprep.subr.mxu0 0.0
        %7363 = vmatpush2.xpose.msra.mxu0 0.0
        %7364 = vmatprep.subr.mxu0 0.0
        %7365 = vmatpush2.xpose.msra.mxu0 0.0
        %7366 = vmatprep.subr.mxu0 0.0
        %7367 = vmatpush2.xpose.msra.mxu0 0.0
        %7368 = vmatprep.subr.mxu0 0.0
        %7369 = vmatpush2.xpose.msra.mxu0 0.0
        %7370 = vmatprep.subr.mxu0 0.0
        %7371 = vmatpush2.xpose.msra.mxu0 0.0
        %7372 = vmatprep.subr.mxu0 0.0
        %7373 = vmatpush2.xpose.msra.mxu0 0.0
        %7374 = vmatprep.mubr.f32.mxu0 0.0
        %7375 = vmatmul.mubr.f32.gmra.mxu0 %v7302
        %v7376 = vpop.f32.mrf.mxu0
        %v7377 = vadd.f32 0.0, %v7376
        %v7378 = vpop.f32.mrf.mxu0
        %7379 = vmatprep.mubr.f32.mxu0 0.0
        %7380 = vmatmul.mubr.f32.gmra.mxu0 %v7305
        %v7381 = vpop.f32.mrf.mxu0
        %v7382 = vadd.f32 0.0, %v7381
        %v7383 = vpop.f32.mrf.mxu0
        %7384 = vdwg.mxu0
        %v7386 = vsel %vm521, %v7117, 0
        %v7389 = vsel %vm521, %v7118, 0
        %v7392 = vsel %vm521, %v6956, 0
        %7394 = vmatprep.subr.mxu0 0.0
        %7395 = vmatpush1.xpose.msra.mxu0 0.0
        %7396 = vmatprep.subr.mxu0 0.0
        %7397 = vmatpush1.xpose.msra.mxu0 0.0
        %7398 = vmatprep.subr.mxu0 0.0
        %7399 = vmatpush1.xpose.msra.mxu0 0.0
        %7400 = vmatprep.subr.mxu0 0.0
        %7401 = vmatpush1.xpose.msra.mxu0 0.0
        %7402 = vmatprep.subr.mxu0 0.0
        %7403 = vmatpush1.xpose.msra.mxu0 0.0
        %7404 = vmatprep.subr.mxu0 0.0
        %7405 = vmatpush1.xpose.msra.mxu0 0.0
        %7406 = vmatprep.subr.mxu0 0.0
        %7407 = vmatpush1.xpose.msra.mxu0 0.0
        %7408 = vmatprep.subr.mxu0 0.0
        %7409 = vmatpush1.xpose.msra.mxu0 0.0
        %7410 = vmatprep.subr.mxu0 0.0
        %7411 = vmatpush1.xpose.msra.mxu0 0.0
        %7412 = vmatprep.subr.mxu0 0.0
        %7413 = vmatpush1.xpose.msra.mxu0 0.0
        %7414 = vmatprep.subr.mxu0 0.0
        %7415 = vmatpush1.xpose.msra.mxu0 0.0
        %7416 = vmatprep.subr.mxu0 0.0
        %7417 = vmatpush1.xpose.msra.mxu0 0.0
        %7418 = vmatprep.subr.mxu0 0.0
        %7419 = vmatpush1.xpose.msra.mxu0 0.0
        %7420 = vmatprep.subr.mxu0 0.0
        %7421 = vmatpush1.xpose.msra.mxu0 0.0
        %7422 = vmatprep.subr.mxu0 0.0
        %7423 = vmatpush1.xpose.msra.mxu0 0.0
        %7424 = vmatprep.subr.mxu0 0.0
        %7425 = vmatpush1.xpose.msra.mxu0 %v7392
        %7426 = vmatprep.subr.mxu0 0.0
        %7427 = vmatpush2.xpose.msra.mxu0 0.0
        %7428 = vmatprep.subr.mxu0 0.0
        %7429 = vmatpush2.xpose.msra.mxu0 0.0
        %7430 = vmatprep.subr.mxu0 0.0
        %7431 = vmatpush2.xpose.msra.mxu0 0.0
        %7432 = vmatprep.subr.mxu0 0.0
        %7433 = vmatpush2.xpose.msra.mxu0 0.0
        %7434 = vmatprep.subr.mxu0 0.0
        %7435 = vmatpush2.xpose.msra.mxu0 0.0
        %7436 = vmatprep.subr.mxu0 0.0
        %7437 = vmatpush2.xpose.msra.mxu0 0.0
        %7438 = vmatprep.subr.mxu0 0.0
        %7439 = vmatpush2.xpose.msra.mxu0 0.0
        %7440 = vmatprep.subr.mxu0 0.0
        %7441 = vmatpush2.xpose.msra.mxu0 0.0
        %7442 = vmatprep.subr.mxu0 0.0
        %7443 = vmatpush2.xpose.msra.mxu0 0.0
        %7444 = vmatprep.subr.mxu0 0.0
        %7445 = vmatpush2.xpose.msra.mxu0 0.0
        %7446 = vmatprep.subr.mxu0 0.0
        %7447 = vmatpush2.xpose.msra.mxu0 0.0
        %7448 = vmatprep.subr.mxu0 0.0
        %7449 = vmatpush2.xpose.msra.mxu0 0.0
        %7450 = vmatprep.subr.mxu0 0.0
        %7451 = vmatpush2.xpose.msra.mxu0 0.0
        %7452 = vmatprep.subr.mxu0 0.0
        %7453 = vmatpush2.xpose.msra.mxu0 0.0
        %7454 = vmatprep.subr.mxu0 0.0
        %7455 = vmatpush2.xpose.msra.mxu0 0.0
        %7456 = vmatprep.subr.mxu0 0.0
        %7457 = vmatpush2.xpose.msra.mxu0 0.0
        %7458 = vmatprep.mubr.f32.mxu0 0.0
        %7459 = vmatmul.mubr.f32.gmra.mxu0 %v7386
        %v7460 = vpop.f32.mrf.mxu0
        %v7461 = vadd.f32 0.0, %v7460
        %v7462 = vpop.f32.mrf.mxu0
        %7463 = vmatprep.mubr.f32.mxu0 0.0
        %7464 = vmatmul.mubr.f32.gmra.mxu0 %v7389
        %v7465 = vpop.f32.mrf.mxu0
        %v7466 = vadd.f32 0.0, %v7465
        %v7467 = vpop.f32.mrf.mxu0
        %7468 = vdwg.mxu0
        %7469 = vxpose.xlu0.b32.start [1/16] %v7209, 128
        %7470 = vxpose.xlu0.b32.cont [2/16] %v7214, 128
        %7471 = vxpose.xlu0.b32.cont [3/16] 0.0, 128
        %7472 = vxpose.xlu0.b32.cont [4/16] 0.0, 128
        %7473 = vxpose.xlu0.b32.cont [5/16] 0.0, 128
        %7474 = vxpose.xlu0.b32.cont [6/16] 0.0, 128
        %7475 = vxpose.xlu0.b32.cont [7/16] 0.0, 128
        %7476 = vxpose.xlu0.b32.cont [8/16] 0.0, 128
        %7477 = vxpose.xlu0.b32.cont [9/16] 0.0, 128
        %7478 = vxpose.xlu0.b32.cont [10/16] 0.0, 128
        %7479 = vxpose.xlu0.b32.cont [11/16] 0.0, 128
        %7480 = vxpose.xlu0.b32.cont [12/16] 0.0, 128
        %7481 = vxpose.xlu0.b32.cont [13/16] 0.0, 128
        %7482 = vxpose.xlu0.b32.cont [14/16] 0.0, 128
        %7483 = vxpose.xlu0.b32.cont [15/16] 0.0, 128
        %7484 = vxpose.xlu0.b32.end [16/16] 0.0, 128
        %v7485 = vpop.trf.xlu0
        %v7486 = vpop.trf.xlu0
        %v7487 = vpop.trf.xlu0
        %v7488 = vpop.trf.xlu0
        %v7489 = vpop.trf.xlu0
        %v7490 = vpop.trf.xlu0
        %v7491 = vpop.trf.xlu0
        %v7492 = vpop.trf.xlu0
        %v7493 = vpop.trf.xlu0
        %v7494 = vpop.trf.xlu0
        %v7495 = vpop.trf.xlu0
        %v7496 = vpop.trf.xlu0
        %v7497 = vpop.trf.xlu0
        %v7498 = vpop.trf.xlu0
        %v7499 = vpop.trf.xlu0
        %v7500 = vpop.trf.xlu0
        %7501 = vxpose.xlu0.b32.start [1/16] %v7293, 128
        %7502 = vxpose.xlu0.b32.cont [2/16] %v7298, 128
        %7503 = vxpose.xlu0.b32.cont [3/16] 0.0, 128
        %7504 = vxpose.xlu0.b32.cont [4/16] 0.0, 128
        %7505 = vxpose.xlu0.b32.cont [5/16] 0.0, 128
        %7506 = vxpose.xlu0.b32.cont [6/16] 0.0, 128
        %7507 = vxpose.xlu0.b32.cont [7/16] 0.0, 128
        %7508 = vxpose.xlu0.b32.cont [8/16] 0.0, 128
        %7509 = vxpose.xlu0.b32.cont [9/16] 0.0, 128
        %7510 = vxpose.xlu0.b32.cont [10/16] 0.0, 128
        %7511 = vxpose.xlu0.b32.cont [11/16] 0.0, 128
        %7512 = vxpose.xlu0.b32.cont [12/16] 0.0, 128
        %7513 = vxpose.xlu0.b32.cont [13/16] 0.0, 128
        %7514 = vxpose.xlu0.b32.cont [14/16] 0.0, 128
        %7515 = vxpose.xlu0.b32.cont [15/16] 0.0, 128
        %7516 = vxpose.xlu0.b32.end [16/16] 0.0, 128
        %v7517 = vpop.trf.xlu0
        %v7518 = vpop.trf.xlu0
        %v7519 = vpop.trf.xlu0
        %v7520 = vpop.trf.xlu0
        %v7521 = vpop.trf.xlu0
        %v7522 = vpop.trf.xlu0
        %v7523 = vpop.trf.xlu0
        %v7524 = vpop.trf.xlu0
        %v7525 = vpop.trf.xlu0
        %v7526 = vpop.trf.xlu0
        %v7527 = vpop.trf.xlu0
        %v7528 = vpop.trf.xlu0
        %v7529 = vpop.trf.xlu0
        %v7530 = vpop.trf.xlu0
        %v7531 = vpop.trf.xlu0
        %v7532 = vpop.trf.xlu0
        %7533 = vxpose.xlu0.b32.start [1/16] %v7377, 128
        %7534 = vxpose.xlu0.b32.cont [2/16] %v7382, 128
        %7535 = vxpose.xlu0.b32.cont [3/16] 0.0, 128
        %7536 = vxpose.xlu0.b32.cont [4/16] 0.0, 128
        %7537 = vxpose.xlu0.b32.cont [5/16] 0.0, 128
        %7538 = vxpose.xlu0.b32.cont [6/16] 0.0, 128
        %7539 = vxpose.xlu0.b32.cont [7/16] 0.0, 128
        %7540 = vxpose.xlu0.b32.cont [8/16] 0.0, 128
        %7541 = vxpose.xlu0.b32.cont [9/16] 0.0, 128
        %7542 = vxpose.xlu0.b32.cont [10/16] 0.0, 128
        %7543 = vxpose.xlu0.b32.cont [11/16] 0.0, 128
        %7544 = vxpose.xlu0.b32.cont [12/16] 0.0, 128
        %7545 = vxpose.xlu0.b32.cont [13/16] 0.0, 128
        %7546 = vxpose.xlu0.b32.cont [14/16] 0.0, 128
        %7547 = vxpose.xlu0.b32.cont [15/16] 0.0, 128
        %7548 = vxpose.xlu0.b32.end [16/16] 0.0, 128
        %v7549 = vpop.trf.xlu0
        %v7550 = vpop.trf.xlu0
        %v7551 = vpop.trf.xlu0
        %v7552 = vpop.trf.xlu0
        %v7553 = vpop.trf.xlu0
        %v7554 = vpop.trf.xlu0
        %v7555 = vpop.trf.xlu0
        %v7556 = vpop.trf.xlu0
        %v7557 = vpop.trf.xlu0
        %v7558 = vpop.trf.xlu0
        %v7559 = vpop.trf.xlu0
        %v7560 = vpop.trf.xlu0
        %v7561 = vpop.trf.xlu0
        %v7562 = vpop.trf.xlu0
        %v7563 = vpop.trf.xlu0
        %v7564 = vpop.trf.xlu0
        %7565 = vxpose.xlu0.b32.start [1/16] %v7461, 128
        %7566 = vxpose.xlu0.b32.cont [2/16] %v7466, 128
        %7567 = vxpose.xlu0.b32.cont [3/16] 0.0, 128
        %7568 = vxpose.xlu0.b32.cont [4/16] 0.0, 128
        %7569 = vxpose.xlu0.b32.cont [5/16] 0.0, 128
        %7570 = vxpose.xlu0.b32.cont [6/16] 0.0, 128
        %7571 = vxpose.xlu0.b32.cont [7/16] 0.0, 128
        %7572 = vxpose.xlu0.b32.cont [8/16] 0.0, 128
        %7573 = vxpose.xlu0.b32.cont [9/16] 0.0, 128
        %7574 = vxpose.xlu0.b32.cont [10/16] 0.0, 128
        %7575 = vxpose.xlu0.b32.cont [11/16] 0.0, 128
        %7576 = vxpose.xlu0.b32.cont [12/16] 0.0, 128
        %7577 = vxpose.xlu0.b32.cont [13/16] 0.0, 128
        %7578 = vxpose.xlu0.b32.cont [14/16] 0.0, 128
        %7579 = vxpose.xlu0.b32.cont [15/16] 0.0, 128
        %7580 = vxpose.xlu0.b32.end [16/16] 0.0, 128
        %v7581 = vpop.trf.xlu0
        %v7582 = vpop.trf.xlu0
        %v7583 = vpop.trf.xlu0
        %v7584 = vpop.trf.xlu0
        %v7585 = vpop.trf.xlu0
        %v7586 = vpop.trf.xlu0
        %v7587 = vpop.trf.xlu0
        %v7588 = vpop.trf.xlu0
        %v7589 = vpop.trf.xlu0
        %v7590 = vpop.trf.xlu0
        %v7591 = vpop.trf.xlu0
        %v7592 = vpop.trf.xlu0
        %v7593 = vpop.trf.xlu0
        %v7594 = vpop.trf.xlu0
        %v7595 = vpop.trf.xlu0
        %v7596 = vpop.trf.xlu0
        %v7597 = vcombine.low %v7485, %v7549
        %v7598 = vcombine.high %v7485, %v7549
        %v7600 = vunpack.c.l.s4 1983009808
        %v7601 = vunpack.c.0.s8 %v7600
        %v7602 = vlaneseq
        %v7603 = vshrl.u32 %v7602, 7
        %v7604 = vsub.s32 %v7601, %v7603
        %v7605 = vrot.slane %v7597, %v7604
        %v7607 = vunpack.c.l.s4 1983009808
        %v7608 = vunpack.c.0.s8 %v7607
        %v7609 = vlaneseq
        %v7610 = vshrl.u32 %v7609, 7
        %v7611 = vsub.s32 %v7608, %v7610
        %v7612 = vrot.slane %v7598, %v7611
        %v7613 = vcombine.low %v7517, %v7581
        %v7614 = vcombine.high %v7517, %v7581
        %v7616 = vunpack.c.l.s4 1983009808
        %v7617 = vunpack.c.0.s8 %v7616
        %v7618 = vlaneseq
        %v7619 = vshrl.u32 %v7618, 7
        %v7620 = vsub.s32 %v7617, %v7619
        %v7621 = vrot.slane %v7613, %v7620
        %v7623 = vunpack.c.l.s4 1983009808
        %v7624 = vunpack.c.0.s8 %v7623
        %v7625 = vlaneseq
        %v7626 = vshrl.u32 %v7625, 7
        %v7627 = vsub.s32 %v7624, %v7626
        %v7628 = vrot.slane %v7614, %v7627
        %v7629 = vcombine.low %v7605, %v7621
        %v7630 = vcombine.high %v7605, %v7621
        %v7632 = vunpack.c.l.s4 1934713408
        %v7633 = vunpack.c.0.s8 %v7632
        %v7634 = vlaneseq
        %v7635 = vshrl.u32 %v7634, 7
        %v7636 = vsub.s32 %v7633, %v7635
        %v7637 = vrot.slane %v7629, %v7636
        %v7639 = vunpack.c.l.s4 1934713408
        %v7640 = vunpack.c.0.s8 %v7639
        %v7641 = vlaneseq
        %v7642 = vshrl.u32 %v7641, 7
        %v7643 = vsub.s32 %v7640, %v7642
        %v7644 = vrot.slane %v7630, %v7643
        %v7645 = vcombine.low %v7612, %v7628
        %v7646 = vcombine.high %v7612, %v7628
        %v7648 = vunpack.c.l.s4 1934713408
        %v7649 = vunpack.c.0.s8 %v7648
        %v7650 = vlaneseq
        %v7651 = vshrl.u32 %v7650, 7
        %v7652 = vsub.s32 %v7649, %v7651
        %v7653 = vrot.slane %v7645, %v7652
        %v7655 = vunpack.c.l.s4 1934713408
        %v7656 = vunpack.c.0.s8 %v7655
        %v7657 = vlaneseq
        %v7658 = vshrl.u32 %v7657, 7
        %v7659 = vsub.s32 %v7656, %v7658
        %v7660 = vrot.slane %v7646, %v7659
        %v7661 = vcombine.high %v7637, 0.0
        %v7662 = vcombine.high %v7644, 0.0
        %v7663 = vcombine.high %v7653, 0.0
        %v7664 = vcombine.high %v7660, 0.0
        %v7665 = vcombine.low %v7637, %v7644
        %v7667 = vunpack.c.l.s4 1983009808
        %v7668 = vunpack.c.0.s8 %v7667
        %v7669 = vlaneseq
        %v7670 = vshrl.u32 %v7669, 7
        %v7671 = vsub.s32 %v7668, %v7670
        %v7672 = vrot.slane %v7665, %v7671
        %v7673 = vcombine.low %v7661, %v7662
        %v7675 = vunpack.c.l.s4 1983009808
        %v7676 = vunpack.c.0.s8 %v7675
        %v7677 = vlaneseq
        %v7678 = vshrl.u32 %v7677, 7
        %v7679 = vsub.s32 %v7676, %v7678
        %v7680 = vrot.slane %v7673, %v7679
        %v7681 = vcombine.low %v7653, %v7660
        %v7683 = vunpack.c.l.s4 1983009808
        %v7684 = vunpack.c.0.s8 %v7683
        %v7685 = vlaneseq
        %v7686 = vshrl.u32 %v7685, 7
        %v7687 = vsub.s32 %v7684, %v7686
        %v7688 = vrot.slane %v7681, %v7687
        %v7689 = vcombine.low %v7663, %v7664
        %v7691 = vunpack.c.l.s4 1983009808
        %v7692 = vunpack.c.0.s8 %v7691
        %v7693 = vlaneseq
        %v7694 = vshrl.u32 %v7693, 7
        %v7695 = vsub.s32 %v7692, %v7694
        %v7696 = vrot.slane %v7689, %v7695
        %v7697 = vcombine.low %v7672, %v7680
        %v7698 = vcombine.high %v7672, %v7680
        %v7700 = vunpack.c.l.s4 1934713408
        %v7701 = vunpack.c.0.s8 %v7700
        %v7702 = vlaneseq
        %v7703 = vshrl.u32 %v7702, 7
        %v7704 = vsub.s32 %v7701, %v7703
        %v7705 = vrot.slane %v7697, %v7704
        %v7707 = vunpack.c.l.s4 1934713408
        %v7708 = vunpack.c.0.s8 %v7707
        %v7709 = vlaneseq
        %v7710 = vshrl.u32 %v7709, 7
        %v7711 = vsub.s32 %v7708, %v7710
        %v7712 = vrot.slane %v7698, %v7711
        %v7713 = vcombine.low %v7688, %v7696
        %v7714 = vcombine.high %v7688, %v7696
        %v7716 = vunpack.c.l.s4 1934713408
        %v7717 = vunpack.c.0.s8 %v7716
        %v7718 = vlaneseq
        %v7719 = vshrl.u32 %v7718, 7
        %v7720 = vsub.s32 %v7717, %v7719
        %v7721 = vrot.slane %v7713, %v7720
        %v7723 = vunpack.c.l.s4 1934713408
        %v7724 = vunpack.c.0.s8 %v7723
        %v7725 = vlaneseq
        %v7726 = vshrl.u32 %v7725, 7
        %v7727 = vsub.s32 %v7724, %v7726
        %v7728 = vrot.slane %v7714, %v7727
        %v7729 = vcombine.low %v7705, %v7721
        %v7730 = vcombine.high %v7705, %v7721
        %v7731 = vcombine.low %v7712, %v7728
        %v7732 = vcombine.high %v7712, %v7728
        %7734 = vrot.lane.b32.xlu0 %v7730, 16
        %v7735 = vpop.permute.xlu0 %7734
        %7738 = vrot.lane.b32.xlu0 %v7731, 32
        %v7739 = vpop.permute.xlu0 %7738
        %7742 = vrot.lane.b32.xlu0 %v7732, 48
        %v7743 = vpop.permute.xlu0 %7742
        %v7745 = vsel %vm918, %v7729, %v7735
        %v7746 = vsel %vm521, %v7745, %v7739
        %v7747 = vsel %vm2018, %v7746, %v7743
        %s7748 = scalar_lea.vmem %s9, 256
        %v7749 = vld [vmem:[%s7748] sm:$0xff]
        %v7750 = vld [vmem:[%s7748 + $0x8] sm:$0xff]
        %v7751 = vld [vmem:[%s7748 + $0x10] sm:$0xff]
        %v7752 = vld [vmem:[%s7748 + $0x18] sm:$0xff]
        %v7753 = vld [vmem:[%s7748 + $0x20] sm:$0xff]
        %v7754 = vld [vmem:[%s7748 + $0x28] sm:$0xff]
        %v7755 = vld [vmem:[%s7748 + $0x30] sm:$0xff]
        %v7756 = vld [vmem:[%s7748 + $0x38] sm:$0xff]
        %s7757 = scalar_lea.vmem %s10, 4
        %v7758 = vld [vmem:[%s7757] sm:$0x1]
        %v7760 = vlaneseq
        %v7761 = vshrl.u32 %v7760, 7
        %v7762 = vsub.s32 0, %v7761
        %v7763 = vrot.slane %v7758, %v7762
        %v7766 = vsel %vm2035, %v7747, 0
        %7768 = vmatprep.subr.mxu0 0.0
        %7769 = vmatpush1.msra.mxu0 0.0
        %7770 = vmatprep.subr.mxu0 0.0
        %7771 = vmatpush1.msra.mxu0 0.0
        %7772 = vmatprep.subr.mxu0 0.0
        %7773 = vmatpush1.msra.mxu0 0.0
        %7774 = vmatprep.subr.mxu0 0.0
        %7775 = vmatpush1.msra.mxu0 0.0
        %7776 = vmatprep.subr.mxu0 0.0
        %7777 = vmatpush1.msra.mxu0 0.0
        %7778 = vmatprep.subr.mxu0 0.0
        %7779 = vmatpush1.msra.mxu0 0.0
        %7780 = vmatprep.subr.mxu0 0.0
        %7781 = vmatpush1.msra.mxu0 0.0
        %7782 = vmatprep.subr.mxu0 0.0
        %7783 = vmatpush1.msra.mxu0 0.0
        %7784 = vmatprep.subr.mxu0 0.0
        %7785 = vmatpush1.msra.mxu0 %v7756
        %7786 = vmatprep.subr.mxu0 0.0
        %7787 = vmatpush1.msra.mxu0 %v7755
        %7788 = vmatprep.subr.mxu0 0.0
        %7789 = vmatpush1.msra.mxu0 %v7754
        %7790 = vmatprep.subr.mxu0 0.0
        %7791 = vmatpush1.msra.mxu0 %v7753
        %7792 = vmatprep.subr.mxu0 0.0
        %7793 = vmatpush1.msra.mxu0 %v7752
        %7794 = vmatprep.subr.mxu0 0.0
        %7795 = vmatpush1.msra.mxu0 %v7751
        %7796 = vmatprep.subr.mxu0 0.0
        %7797 = vmatpush1.msra.mxu0 %v7750
        %7798 = vmatprep.subr.mxu0 0.0
        %7799 = vmatpush1.msra.mxu0 %v7749
        %7800 = vmatprep.subr.mxu0 0.0
        %7801 = vmatpush2.msra.mxu0 0.0
        %7802 = vmatprep.subr.mxu0 0.0
        %7803 = vmatpush2.msra.mxu0 0.0
        %7804 = vmatprep.subr.mxu0 0.0
        %7805 = vmatpush2.msra.mxu0 0.0
        %7806 = vmatprep.subr.mxu0 0.0
        %7807 = vmatpush2.msra.mxu0 0.0
        %7808 = vmatprep.subr.mxu0 0.0
        %7809 = vmatpush2.msra.mxu0 0.0
        %7810 = vmatprep.subr.mxu0 0.0
        %7811 = vmatpush2.msra.mxu0 0.0
        %7812 = vmatprep.subr.mxu0 0.0
        %7813 = vmatpush2.msra.mxu0 0.0
        %7814 = vmatprep.subr.mxu0 0.0
        %7815 = vmatpush2.msra.mxu0 0.0
        %7816 = vmatprep.subr.mxu0 0.0
        %7817 = vmatpush2.msra.mxu0 0.0
        %7818 = vmatprep.subr.mxu0 0.0
        %7819 = vmatpush2.msra.mxu0 0.0
        %7820 = vmatprep.subr.mxu0 0.0
        %7821 = vmatpush2.msra.mxu0 0.0
        %7822 = vmatprep.subr.mxu0 0.0
        %7823 = vmatpush2.msra.mxu0 0.0
        %7824 = vmatprep.subr.mxu0 0.0
        %7825 = vmatpush2.msra.mxu0 0.0
        %7826 = vmatprep.subr.mxu0 0.0
        %7827 = vmatpush2.msra.mxu0 0.0
        %7828 = vmatprep.subr.mxu0 0.0
        %7829 = vmatpush2.msra.mxu0 0.0
        %7830 = vmatprep.subr.mxu0 0.0
        %7831 = vmatpush2.msra.mxu0 0.0
        %7832 = vmatprep.mubr.f32.mxu0 0.0
        %7833 = vmatmul.mubr.f32.gmra.mxu0 %v7766
        %v7834 = vpop.f32.mrf.mxu0
        %v7835 = vadd.f32 %v7763, %v7834
        %v7836 = vpop.f32.mrf.mxu0
        %7837 = vdwg.mxu0
        %7838 = vst.msk [vmem:[%s462] sm:$0xff] %vm521, %v7835
        %v7839 = vsel %vm521, %v6953, 0.0
        %v7840 = vsel %vm521, %v6954, 0.0
        %v7841 = vadd.f32 %v7839, %v7840
        %v7842 = vsel %vm521, %v6955, 0.0
        %v7843 = vadd.f32 %v7841, %v7842
        %v7844 = vsel %vm521, %v6956, 0.0
        %v7845 = vadd.f32 %v7843, %v7844
        %v7846 = vmul.f32 %v7845, 0.25
        %7847 = vst.msk [vmem:[%s469] sm:$0xff] %vm521, %v7846
        %s7848 = sand.u32 %s294, 1
        %s7849 = scalar_lea.sflag [#allocation3], %s7848
        %s7850 = sand.u32 %s294, 1
        %s7851 = smul.addr %s7850, 8
        %s7852 = scalar_lea.vmem [#allocation2], %s7851
        %s7853 = sand.u32 %s320, 1
        %s7854 = scalar_lea.sflag [#allocation5], %s7853
        %s7855 = sand.u32 %s320, 1
        %s7856 = smul.addr %s7855, 8
        %s7857 = scalar_lea.vmem [#allocation4], %s7856
        // Predicated region
        $region65: #{hierarchical_attn.1} parent=63 // pred_check
          %p7858 = pneg %p304
        $region66: #{hierarchical_attn.1} parent=63 // pred_check_branch
          %7860 = sbr.rel (%p7858) target = $region68
        $region67: #{hierarchical_attn.1} parent=63 // pred_region
          %s7862 = ssub.s32 128, 128
          %7863 = vsyncadd %s7849, %s7862
          %s7864 = smul.addr %s30, 128
          %s7865 = scalar_lea.hbm %s11, %s7864
          %s7867 = sshll.u32 %s7852, 4
          %s7868 = int_to_ptr.vmem [resolvable:$true] %s7867
          %7870 = dma.vmem_to_hbm [thread:$0]  %s7868, 128, %s7865, %s7849
        $region68: #{hierarchical_attn.1} parent=63 // pred_fallthru
          _
        // Predicated region
        $region69: #{hierarchical_attn.1} parent=63 // pred_check
          %p7871 = pneg %p330
        $region70: #{hierarchical_attn.1} parent=63 // pred_check_branch
          %7873 = sbr.rel (%p7871) target = $region72
        $region71: #{hierarchical_attn.1} parent=63 // pred_region
          %s7875 = ssub.s32 128, 128
          %7876 = vsyncadd %s7854, %s7875
          %s7877 = smul.addr %s30, 128
          %s7878 = scalar_lea.hbm %s12, %s7877
          %s7880 = sshll.u32 %s7857, 4
          %s7881 = int_to_ptr.vmem [resolvable:$true] %s7880
          %7883 = dma.vmem_to_hbm [thread:$0]  %s7881, 128, %s7878, %s7854
        $region72: #{hierarchical_attn.1} parent=63 // pred_fallthru
          _
      $region64: #{hierarchical_attn.1} parent=5 // pred_fallthru
        _
      %p7884 = scmp.le.s32.totalorder 2, %s25
      // Predicated region
      $region73: #{hierarchical_attn.1} parent=5 // pred_check
        %p7885 = pneg %p7884
      $region74: #{hierarchical_attn.1} parent=5 // pred_check_branch
        %7887 = sbr.rel (%p7885) target = $region76
      $region75: #{hierarchical_attn.1} parent=5 // pred_region
        %s7888 = ssub.s32 %s25, 2
        // Predicated region
        $region77: #{hierarchical_attn.1} parent=75 // pred_check
          %p7889 = pneg %p310
        $region78: #{hierarchical_attn.1} parent=75 // pred_check_branch
          %7891 = sbr.rel (%p7889) target = $region80
        $region79: #{hierarchical_attn.1} parent=75 // pred_region
          %s7892 = sand.u32 %s295, 1
          %s7893 = scalar_lea.sflag [#allocation3], %s7892
          %s7894 = sand.u32 %s295, 1
          %s7895 = smul.addr %s7894, 8
          %s7896 = scalar_lea.vmem [#allocation2], %s7895
          %7897 = dma.done %s7893, 128
        $region80: #{hierarchical_attn.1} parent=75 // pred_fallthru
          _
        // Predicated region
        $region81: #{hierarchical_attn.1} parent=75 // pred_check
          %p7898 = pneg %p336
        $region82: #{hierarchical_attn.1} parent=75 // pred_check_branch
          %7900 = sbr.rel (%p7898) target = $region84
        $region83: #{hierarchical_attn.1} parent=75 // pred_region
          %s7901 = sand.u32 %s321, 1
          %s7902 = scalar_lea.sflag [#allocation5], %s7901
          %s7903 = sand.u32 %s321, 1
          %s7904 = smul.addr %s7903, 8
          %s7905 = scalar_lea.vmem [#allocation4], %s7904
          %7906 = dma.done %s7902, 128
        $region84: #{hierarchical_attn.1} parent=75 // pred_fallthru
          _
      $region76: #{hierarchical_attn.1} parent=5 // pred_fallthru
        _
    $region6: #{hierarchical_attn.1} parent=1 // loop_footer
      %s29 = sadd.s32 1, %s25
    $region7: #{hierarchical_attn.1} parent=1 // loop_footer_branch
      %24 = sbr.rel target = $region3
    $region8: #{hierarchical_attn.1} parent=1 // loop_exit
      _
    %7907 = vsyncpa [#allocation3], 1
    %s7908 = scalar_lea.sflag [#allocation3], 1
    %7909 = vsyncpa %s7908, 1
    %7910 = vsyncpa [#allocation5], 1
    %s7911 = scalar_lea.sflag [#allocation5], 1
    %7912 = vsyncpa %s7911, 1

</llo_original>
